<compile_context>
chip_gen: v5e
topology: v5e:2x2
jax: 0.10.0
libtpu: 0.0.40
codegen_flags: <defaults>
</compile_context>

<pallas_src>
import jax
import jax.numpy as jnp
from jax.experimental import pallas as pl
from jax.experimental.pallas import tpu as pltpu

KMAX = 7
PAD = KMAX // 2  # 3 -> 'same' padding for the largest kernel


def _ppeg_kernel(xp_ref, w_ref, b_ref, o_ref):
    # xp_ref: (1, H+6, W+6, C)  zero-padded channels-last feature map
    # w_ref : (7, 7, C)         combined per-channel stencil (convs + identity)
    # b_ref : (1, 1, C)         combined bias
    # o_ref : (1, H, W, C)
    _, H, W, C = o_ref.shape
    x = xp_ref[0]                                   # (H+6, W+6, C)
    w = w_ref[...]                                  # (7, 7, C)
    acc = jnp.zeros((H, W, C), jnp.float32)
    for di in range(KMAX):                          # static unroll: 49 VPU fma taps
        for dj in range(KMAX):
            tap = x[di:di + H, dj:dj + W, :]        # (H, W, C) shifted window
            wt = w[di:di + 1, dj:dj + 1, :]         # (1, 1, C) per-channel weight
            acc = acc + tap.astype(jnp.float32) * wt
    o_ref[0] = (acc + b_ref[...]).astype(o_ref.dtype)


def ppeg_forward(x, H, W, w7, b7, w5, b5, w3, b3):
    """x: (B, N, C) with N == H*W; wK: (K, K, C) depthwise weights; bK: (C,)."""
    B, N, C = x.shape
    assert N == H * W
    feat = x.reshape(B, H, W, C)                                     # channels-last
    xp = jnp.pad(feat, ((0, 0), (PAD, PAD), (PAD, PAD), (0, 0)))     # zero 'same' pad

    # Fold the three depthwise convs + the identity branch into one 7x7 stencil.
    w_eff = (w7
             + jnp.pad(w5, ((1, 1), (1, 1), (0, 0)))
             + jnp.pad(w3, ((2, 2), (2, 2), (0, 0))))
    w_eff = w_eff.at[PAD, PAD, :].add(1.0)                           # + cnn_feat
    b_eff = (b7 + b5 + b3).reshape(1, 1, C)

    out = pl.pallas_call(
        _ppeg_kernel,
        out_shape=jax.ShapeDtypeStruct((B, H, W, C), x.dtype),
        grid=(B,),
        in_specs=[
            pl.BlockSpec((1, H + 2 * PAD, W + 2 * PAD, C), lambda b: (b, 0, 0, 0)),
            pl.BlockSpec((KMAX, KMAX, C), lambda b: (0, 0, 0)),
            pl.BlockSpec((1, 1, C), lambda b: (0, 0, 0)),
        ],
        out_specs=pl.BlockSpec((1, H, W, C), lambda b: (b, 0, 0, 0)),
        compiler_params=pltpu.CompilerParams(
            dimension_semantics=("parallel",)),
    )(xp, w_eff, b_eff)
    # TODO(synk): for very large H*W the (1, H+6, W+6, C) block should be tiled
    # along H with a 3-row halo + VMEM accumulator; unnecessary at TransMIL
    # scale (H, W <= ~64, C = 512 -> < 1 MB per block).
    return out.reshape(B, N, C)


# --------------------------------------------------------------------------
# Pure-JAX reference (independent: uses lax depthwise convolutions)
# --------------------------------------------------------------------------
def _ppeg_reference(x, H, W, w7, b7, w5, b5, w3, b3):
    B, N, C = x.shape
    feat = jnp.transpose(x, (0, 2, 1)).reshape(B, C, H, W)

    def dwconv(f, w_kkc, b):
        w = jnp.transpose(w_kkc, (2, 0, 1))[:, None, :, :]           # (C, 1, k, k)
        y = jax.lax.conv_general_dilated(
            f, w, window_strides=(1, 1), padding="SAME",
            dimension_numbers=("NCHW", "OIHW", "NCHW"),
            feature_group_count=C, precision=jax.lax.Precision.HIGHEST)
        return y + b[None, :, None, None]

    out = dwconv(feat, w7, b7) + feat + dwconv(feat, w5, b5) + dwconv(feat, w3, b3)
    return out.reshape(B, C, H * W).transpose(0, 2, 1)


if __name__ == "__main__":
    import numpy as np

    B, H, W, C = 2, 8, 8, 512          # PPEG default dim=512; 8x8 = 64 tokens
    N = H * W

    key = jax.random.PRNGKey(0)
    ks = jax.random.split(key, 7)
    x = jax.random.normal(ks[0], (B, N, C), jnp.float32)

    def dw_init(kw, kb, k):
        # PyTorch Conv2d default init: U(-1/sqrt(fan_in), ...), fan_in = k*k (depthwise)
        bound = 1.0 / float(k)
        w = jax.random.uniform(kw, (k, k, C), jnp.float32, -bound, bound)
        b = jax.random.uniform(kb, (C,), jnp.float32, -bound, bound)
        return w, b

    w7, b7 = dw_init(ks[1], ks[2], 7)
    w5, b5 = dw_init(ks[3], ks[4], 5)
    w3, b3 = dw_init(ks[5], ks[6], 3)

    out = ppeg_forward(x, H, W, w7, b7, w5, b5, w3, b3)
    jax.block_until_ready(out)
    assert out.shape == (B, N, C)

    ref = _ppeg_reference(x, H, W, w7, b7, w5, b5, w3, b3)
    np.testing.assert_allclose(np.asarray(out), np.asarray(ref), atol=1e-3, rtol=1e-3)
    print("KERNEL_OK")
</pallas_src>

<mosaic_0001>
module attributes {stable_mosaic.version = 11 : i64} {
  func.func @_ppeg_kernel(%arg0: i32, %arg1: memref<1x14x14x512xf32, #tpu.memory_space<vmem>>, %arg2: memref<7x7x512xf32, #tpu.memory_space<vmem>>, %arg3: memref<1x1x512xf32, #tpu.memory_space<vmem>>, %arg4: memref<1x8x8x512xf32, #tpu.memory_space<vmem>>) attributes {dimension_semantics = [#tpu.dimension_semantics<parallel>], iteration_bounds = array<i64: 2>, scalar_prefetch = 0 : i64, scratch_operands = 0 : i64, tpu.core_type = #tpu.core_type<tc>, window_params = [{transform_indices = @transform_0, window_bounds = array<i64: 1, 14, 14, 512>}, {pipeline_mode = #tpu.pipeline_mode<synchronous>, transform_indices = @transform_1, window_bounds = array<i64: 7, 7, 512>}, {pipeline_mode = #tpu.pipeline_mode<synchronous>, transform_indices = @transform_2, window_bounds = array<i64: 1, 1, 512>}, {transform_indices = @transform_3, window_bounds = array<i64: 1, 8, 8, 512>}]} {
    %c0 = arith.constant 0 : index
    %c0_0 = arith.constant 0 : index
    %c0_1 = arith.constant 0 : index
    %c0_2 = arith.constant 0 : index
    %0 = vector.load %arg1[%c0, %c0_0, %c0_1, %c0_2] : memref<1x14x14x512xf32, #tpu.memory_space<vmem>>, vector<1x14x14x512xf32>
    %1 = vector.shape_cast %0 : vector<1x14x14x512xf32> to vector<14x14x512xf32>
    %c0_3 = arith.constant 0 : index
    %c0_4 = arith.constant 0 : index
    %c0_5 = arith.constant 0 : index
    %2 = vector.load %arg2[%c0_3, %c0_4, %c0_5] : memref<7x7x512xf32, #tpu.memory_space<vmem>>, vector<7x7x512xf32>
    %cst = arith.constant 0.000000e+00 : f32
    %3 = vector.broadcast %cst : f32 to vector<8x8x512xf32>
    %4 = vector.extract_strided_slice %1 {offsets = [0, 0, 0], sizes = [8, 8, 512], strides = [1, 1, 1]} : vector<14x14x512xf32> to vector<8x8x512xf32>
    %5 = vector.extract_strided_slice %2 {offsets = [0, 0, 0], sizes = [1, 1, 512], strides = [1, 1, 1]} : vector<7x7x512xf32> to vector<1x1x512xf32>
    %6 = vector.broadcast %5 : vector<1x1x512xf32> to vector<8x8x512xf32>
    %7 = arith.mulf %4, %6 : vector<8x8x512xf32>
    %8 = arith.addf %3, %7 : vector<8x8x512xf32>
    %9 = vector.extract_strided_slice %1 {offsets = [0, 1, 0], sizes = [8, 8, 512], strides = [1, 1, 1]} : vector<14x14x512xf32> to vector<8x8x512xf32>
    %10 = vector.extract_strided_slice %2 {offsets = [0, 1, 0], sizes = [1, 1, 512], strides = [1, 1, 1]} : vector<7x7x512xf32> to vector<1x1x512xf32>
    %11 = vector.broadcast %10 : vector<1x1x512xf32> to vector<8x8x512xf32>
    %12 = arith.mulf %9, %11 : vector<8x8x512xf32>
    %13 = arith.addf %8, %12 : vector<8x8x512xf32>
    %14 = vector.extract_strided_slice %1 {offsets = [0, 2, 0], sizes = [8, 8, 512], strides = [1, 1, 1]} : vector<14x14x512xf32> to vector<8x8x512xf32>
    %15 = vector.extract_strided_slice %2 {offsets = [0, 2, 0], sizes = [1, 1, 512], strides = [1, 1, 1]} : vector<7x7x512xf32> to vector<1x1x512xf32>
    %16 = vector.broadcast %15 : vector<1x1x512xf32> to vector<8x8x512xf32>
    %17 = arith.mulf %14, %16 : vector<8x8x512xf32>
    %18 = arith.addf %13, %17 : vector<8x8x512xf32>
    %19 = vector.extract_strided_slice %1 {offsets = [0, 3, 0], sizes = [8, 8, 512], strides = [1, 1, 1]} : vector<14x14x512xf32> to vector<8x8x512xf32>
    %20 = vector.extract_strided_slice %2 {offsets = [0, 3, 0], sizes = [1, 1, 512], strides = [1, 1, 1]} : vector<7x7x512xf32> to vector<1x1x512xf32>
    %21 = vector.broadcast %20 : vector<1x1x512xf32> to vector<8x8x512xf32>
    %22 = arith.mulf %19, %21 : vector<8x8x512xf32>
    %23 = arith.addf %18, %22 : vector<8x8x512xf32>
    %24 = vector.extract_strided_slice %1 {offsets = [0, 4, 0], sizes = [8, 8, 512], strides = [1, 1, 1]} : vector<14x14x512xf32> to vector<8x8x512xf32>
    %25 = vector.extract_strided_slice %2 {offsets = [0, 4, 0], sizes = [1, 1, 512], strides = [1, 1, 1]} : vector<7x7x512xf32> to vector<1x1x512xf32>
    %26 = vector.broadcast %25 : vector<1x1x512xf32> to vector<8x8x512xf32>
    %27 = arith.mulf %24, %26 : vector<8x8x512xf32>
    %28 = arith.addf %23, %27 : vector<8x8x512xf32>
    %29 = vector.extract_strided_slice %1 {offsets = [0, 5, 0], sizes = [8, 8, 512], strides = [1, 1, 1]} : vector<14x14x512xf32> to vector<8x8x512xf32>
    %30 = vector.extract_strided_slice %2 {offsets = [0, 5, 0], sizes = [1, 1, 512], strides = [1, 1, 1]} : vector<7x7x512xf32> to vector<1x1x512xf32>
    %31 = vector.broadcast %30 : vector<1x1x512xf32> to vector<8x8x512xf32>
    %32 = arith.mulf %29, %31 : vector<8x8x512xf32>
    %33 = arith.addf %28, %32 : vector<8x8x512xf32>
    %34 = vector.extract_strided_slice %1 {offsets = [0, 6, 0], sizes = [8, 8, 512], strides = [1, 1, 1]} : vector<14x14x512xf32> to vector<8x8x512xf32>
    %35 = vector.extract_strided_slice %2 {offsets = [0, 6, 0], sizes = [1, 1, 512], strides = [1, 1, 1]} : vector<7x7x512xf32> to vector<1x1x512xf32>
    %36 = vector.broadcast %35 : vector<1x1x512xf32> to vector<8x8x512xf32>
    %37 = arith.mulf %34, %36 : vector<8x8x512xf32>
    %38 = arith.addf %33, %37 : vector<8x8x512xf32>
    %39 = vector.extract_strided_slice %1 {offsets = [1, 0, 0], sizes = [8, 8, 512], strides = [1, 1, 1]} : vector<14x14x512xf32> to vector<8x8x512xf32>
    %40 = vector.extract_strided_slice %2 {offsets = [1, 0, 0], sizes = [1, 1, 512], strides = [1, 1, 1]} : vector<7x7x512xf32> to vector<1x1x512xf32>
    %41 = vector.broadcast %40 : vector<1x1x512xf32> to vector<8x8x512xf32>
    %42 = arith.mulf %39, %41 : vector<8x8x512xf32>
    %43 = arith.addf %38, %42 : vector<8x8x512xf32>
    %44 = vector.extract_strided_slice %1 {offsets = [1, 1, 0], sizes = [8, 8, 512], strides = [1, 1, 1]} : vector<14x14x512xf32> to vector<8x8x512xf32>
    %45 = vector.extract_strided_slice %2 {offsets = [1, 1, 0], sizes = [1, 1, 512], strides = [1, 1, 1]} : vector<7x7x512xf32> to vector<1x1x512xf32>
    %46 = vector.broadcast %45 : vector<1x1x512xf32> to vector<8x8x512xf32>
    %47 = arith.mulf %44, %46 : vector<8x8x512xf32>
    %48 = arith.addf %43, %47 : vector<8x8x512xf32>
    %49 = vector.extract_strided_slice %1 {offsets = [1, 2, 0], sizes = [8, 8, 512], strides = [1, 1, 1]} : vector<14x14x512xf32> to vector<8x8x512xf32>
    %50 = vector.extract_strided_slice %2 {offsets = [1, 2, 0], sizes = [1, 1, 512], strides = [1, 1, 1]} : vector<7x7x512xf32> to vector<1x1x512xf32>
    %51 = vector.broadcast %50 : vector<1x1x512xf32> to vector<8x8x512xf32>
    %52 = arith.mulf %49, %51 : vector<8x8x512xf32>
    %53 = arith.addf %48, %52 : vector<8x8x512xf32>
    %54 = vector.extract_strided_slice %1 {offsets = [1, 3, 0], sizes = [8, 8, 512], strides = [1, 1, 1]} : vector<14x14x512xf32> to vector<8x8x512xf32>
    %55 = vector.extract_strided_slice %2 {offsets = [1, 3, 0], sizes = [1, 1, 512], strides = [1, 1, 1]} : vector<7x7x512xf32> to vector<1x1x512xf32>
    %56 = vector.broadcast %55 : vector<1x1x512xf32> to vector<8x8x512xf32>
    %57 = arith.mulf %54, %56 : vector<8x8x512xf32>
    %58 = arith.addf %53, %57 : vector<8x8x512xf32>
    %59 = vector.extract_strided_slice %1 {offsets = [1, 4, 0], sizes = [8, 8, 512], strides = [1, 1, 1]} : vector<14x14x512xf32> to vector<8x8x512xf32>
    %60 = vector.extract_strided_slice %2 {offsets = [1, 4, 0], sizes = [1, 1, 512], strides = [1, 1, 1]} : vector<7x7x512xf32> to vector<1x1x512xf32>
    %61 = vector.broadcast %60 : vector<1x1x512xf32> to vector<8x8x512xf32>
    %62 = arith.mulf %59, %61 : vector<8x8x512xf32>
    %63 = arith.addf %58, %62 : vector<8x8x512xf32>
    %64 = vector.extract_strided_slice %1 {offsets = [1, 5, 0], sizes = [8, 8, 512], strides = [1, 1, 1]} : vector<14x14x512xf32> to vector<8x8x512xf32>
    %65 = vector.extract_strided_slice %2 {offsets = [1, 5, 0], sizes = [1, 1, 512], strides = [1, 1, 1]} : vector<7x7x512xf32> to vector<1x1x512xf32>
    %66 = vector.broadcast %65 : vector<1x1x512xf32> to vector<8x8x512xf32>
    %67 = arith.mulf %64, %66 : vector<8x8x512xf32>
    %68 = arith.addf %63, %67 : vector<8x8x512xf32>
    %69 = vector.extract_strided_slice %1 {offsets = [1, 6, 0], sizes = [8, 8, 512], strides = [1, 1, 1]} : vector<14x14x512xf32> to vector<8x8x512xf32>
    %70 = vector.extract_strided_slice %2 {offsets = [1, 6, 0], sizes = [1, 1, 512], strides = [1, 1, 1]} : vector<7x7x512xf32> to vector<1x1x512xf32>
    %71 = vector.broadcast %70 : vector<1x1x512xf32> to vector<8x8x512xf32>
    %72 = arith.mulf %69, %71 : vector<8x8x512xf32>
    %73 = arith.addf %68, %72 : vector<8x8x512xf32>
    %74 = vector.extract_strided_slice %1 {offsets = [2, 0, 0], sizes = [8, 8, 512], strides = [1, 1, 1]} : vector<14x14x512xf32> to vector<8x8x512xf32>
    %75 = vector.extract_strided_slice %2 {offsets = [2, 0, 0], sizes = [1, 1, 512], strides = [1, 1, 1]} : vector<7x7x512xf32> to vector<1x1x512xf32>
    %76 = vector.broadcast %75 : vector<1x1x512xf32> to vector<8x8x512xf32>
    %77 = arith.mulf %74, %76 : vector<8x8x512xf32>
    %78 = arith.addf %73, %77 : vector<8x8x512xf32>
    %79 = vector.extract_strided_slice %1 {offsets = [2, 1, 0], sizes = [8, 8, 512], strides = [1, 1, 1]} : vector<14x14x512xf32> to vector<8x8x512xf32>
    %80 = vector.extract_strided_slice %2 {offsets = [2, 1, 0], sizes = [1, 1, 512], strides = [1, 1, 1]} : vector<7x7x512xf32> to vector<1x1x512xf32>
    %81 = vector.broadcast %80 : vector<1x1x512xf32> to vector<8x8x512xf32>
    %82 = arith.mulf %79, %81 : vector<8x8x512xf32>
    %83 = arith.addf %78, %82 : vector<8x8x512xf32>
    %84 = vector.extract_strided_slice %1 {offsets = [2, 2, 0], sizes = [8, 8, 512], strides = [1, 1, 1]} : vector<14x14x512xf32> to vector<8x8x512xf32>
    %85 = vector.extract_strided_slice %2 {offsets = [2, 2, 0], sizes = [1, 1, 512], strides = [1, 1, 1]} : vector<7x7x512xf32> to vector<1x1x512xf32>
    %86 = vector.broadcast %85 : vector<1x1x512xf32> to vector<8x8x512xf32>
    %87 = arith.mulf %84, %86 : vector<8x8x512xf32>
    %88 = arith.addf %83, %87 : vector<8x8x512xf32>
    %89 = vector.extract_strided_slice %1 {offsets = [2, 3, 0], sizes = [8, 8, 512], strides = [1, 1, 1]} : vector<14x14x512xf32> to vector<8x8x512xf32>
    %90 = vector.extract_strided_slice %2 {offsets = [2, 3, 0], sizes = [1, 1, 512], strides = [1, 1, 1]} : vector<7x7x512xf32> to vector<1x1x512xf32>
    %91 = vector.broadcast %90 : vector<1x1x512xf32> to vector<8x8x512xf32>
    %92 = arith.mulf %89, %91 : vector<8x8x512xf32>
    %93 = arith.addf %88, %92 : vector<8x8x512xf32>
    %94 = vector.extract_strided_slice %1 {offsets = [2, 4, 0], sizes = [8, 8, 512], strides = [1, 1, 1]} : vector<14x14x512xf32> to vector<8x8x512xf32>
    %95 = vector.extract_strided_slice %2 {offsets = [2, 4, 0], sizes = [1, 1, 512], strides = [1, 1, 1]} : vector<7x7x512xf32> to vector<1x1x512xf32>
    %96 = vector.broadcast %95 : vector<1x1x512xf32> to vector<8x8x512xf32>
    %97 = arith.mulf %94, %96 : vector<8x8x512xf32>
    %98 = arith.addf %93, %97 : vector<8x8x512xf32>
    %99 = vector.extract_strided_slice %1 {offsets = [2, 5, 0], sizes = [8, 8, 512], strides = [1, 1, 1]} : vector<14x14x512xf32> to vector<8x8x512xf32>
    %100 = vector.extract_strided_slice %2 {offsets = [2, 5, 0], sizes = [1, 1, 512], strides = [1, 1, 1]} : vector<7x7x512xf32> to vector<1x1x512xf32>
    %101 = vector.broadcast %100 : vector<1x1x512xf32> to vector<8x8x512xf32>
    %102 = arith.mulf %99, %101 : vector<8x8x512xf32>
    %103 = arith.addf %98, %102 : vector<8x8x512xf32>
    %104 = vector.extract_strided_slice %1 {offsets = [2, 6, 0], sizes = [8, 8, 512], strides = [1, 1, 1]} : vector<14x14x512xf32> to vector<8x8x512xf32>
    %105 = vector.extract_strided_slice %2 {offsets = [2, 6, 0], sizes = [1, 1, 512], strides = [1, 1, 1]} : vector<7x7x512xf32> to vector<1x1x512xf32>
    %106 = vector.broadcast %105 : vector<1x1x512xf32> to vector<8x8x512xf32>
    %107 = arith.mulf %104, %106 : vector<8x8x512xf32>
    %108 = arith.addf %103, %107 : vector<8x8x512xf32>
    %109 = vector.extract_strided_slice %1 {offsets = [3, 0, 0], sizes = [8, 8, 512], strides = [1, 1, 1]} : vector<14x14x512xf32> to vector<8x8x512xf32>
    %110 = vector.extract_strided_slice %2 {offsets = [3, 0, 0], sizes = [1, 1, 512], strides = [1, 1, 1]} : vector<7x7x512xf32> to vector<1x1x512xf32>
    %111 = vector.broadcast %110 : vector<1x1x512xf32> to vector<8x8x512xf32>
    %112 = arith.mulf %109, %111 : vector<8x8x512xf32>
    %113 = arith.addf %108, %112 : vector<8x8x512xf32>
    %114 = vector.extract_strided_slice %1 {offsets = [3, 1, 0], sizes = [8, 8, 512], strides = [1, 1, 1]} : vector<14x14x512xf32> to vector<8x8x512xf32>
    %115 = vector.extract_strided_slice %2 {offsets = [3, 1, 0], sizes = [1, 1, 512], strides = [1, 1, 1]} : vector<7x7x512xf32> to vector<1x1x512xf32>
    %116 = vector.broadcast %115 : vector<1x1x512xf32> to vector<8x8x512xf32>
    %117 = arith.mulf %114, %116 : vector<8x8x512xf32>
    %118 = arith.addf %113, %117 : vector<8x8x512xf32>
    %119 = vector.extract_strided_slice %1 {offsets = [3, 2, 0], sizes = [8, 8, 512], strides = [1, 1, 1]} : vector<14x14x512xf32> to vector<8x8x512xf32>
    %120 = vector.extract_strided_slice %2 {offsets = [3, 2, 0], sizes = [1, 1, 512], strides = [1, 1, 1]} : vector<7x7x512xf32> to vector<1x1x512xf32>
    %121 = vector.broadcast %120 : vector<1x1x512xf32> to vector<8x8x512xf32>
    %122 = arith.mulf %119, %121 : vector<8x8x512xf32>
    %123 = arith.addf %118, %122 : vector<8x8x512xf32>
    %124 = vector.extract_strided_slice %1 {offsets = [3, 3, 0], sizes = [8, 8, 512], strides = [1, 1, 1]} : vector<14x14x512xf32> to vector<8x8x512xf32>
    %125 = vector.extract_strided_slice %2 {offsets = [3, 3, 0], sizes = [1, 1, 512], strides = [1, 1, 1]} : vector<7x7x512xf32> to vector<1x1x512xf32>
    %126 = vector.broadcast %125 : vector<1x1x512xf32> to vector<8x8x512xf32>
    %127 = arith.mulf %124, %126 : vector<8x8x512xf32>
    %128 = arith.addf %123, %127 : vector<8x8x512xf32>
    %129 = vector.extract_strided_slice %1 {offsets = [3, 4, 0], sizes = [8, 8, 512], strides = [1, 1, 1]} : vector<14x14x512xf32> to vector<8x8x512xf32>
    %130 = vector.extract_strided_slice %2 {offsets = [3, 4, 0], sizes = [1, 1, 512], strides = [1, 1, 1]} : vector<7x7x512xf32> to vector<1x1x512xf32>
    %131 = vector.broadcast %130 : vector<1x1x512xf32> to vector<8x8x512xf32>
    %132 = arith.mulf %129, %131 : vector<8x8x512xf32>
    %133 = arith.addf %128, %132 : vector<8x8x512xf32>
    %134 = vector.extract_strided_slice %1 {offsets = [3, 5, 0], sizes = [8, 8, 512], strides = [1, 1, 1]} : vector<14x14x512xf32> to vector<8x8x512xf32>
    %135 = vector.extract_strided_slice %2 {offsets = [3, 5, 0], sizes = [1, 1, 512], strides = [1, 1, 1]} : vector<7x7x512xf32> to vector<1x1x512xf32>
    %136 = vector.broadcast %135 : vector<1x1x512xf32> to vector<8x8x512xf32>
    %137 = arith.mulf %134, %136 : vector<8x8x512xf32>
    %138 = arith.addf %133, %137 : vector<8x8x512xf32>
    %139 = vector.extract_strided_slice %1 {offsets = [3, 6, 0], sizes = [8, 8, 512], strides = [1, 1, 1]} : vector<14x14x512xf32> to vector<8x8x512xf32>
    %140 = vector.extract_strided_slice %2 {offsets = [3, 6, 0], sizes = [1, 1, 512], strides = [1, 1, 1]} : vector<7x7x512xf32> to vector<1x1x512xf32>
    %141 = vector.broadcast %140 : vector<1x1x512xf32> to vector<8x8x512xf32>
    %142 = arith.mulf %139, %141 : vector<8x8x512xf32>
    %143 = arith.addf %138, %142 : vector<8x8x512xf32>
    %144 = vector.extract_strided_slice %1 {offsets = [4, 0, 0], sizes = [8, 8, 512], strides = [1, 1, 1]} : vector<14x14x512xf32> to vector<8x8x512xf32>
    %145 = vector.extract_strided_slice %2 {offsets = [4, 0, 0], sizes = [1, 1, 512], strides = [1, 1, 1]} : vector<7x7x512xf32> to vector<1x1x512xf32>
    %146 = vector.broadcast %145 : vector<1x1x512xf32> to vector<8x8x512xf32>
    %147 = arith.mulf %144, %146 : vector<8x8x512xf32>
    %148 = arith.addf %143, %147 : vector<8x8x512xf32>
    %149 = vector.extract_strided_slice %1 {offsets = [4, 1, 0], sizes = [8, 8, 512], strides = [1, 1, 1]} : vector<14x14x512xf32> to vector<8x8x512xf32>
    %150 = vector.extract_strided_slice %2 {offsets = [4, 1, 0], sizes = [1, 1, 512], strides = [1, 1, 1]} : vector<7x7x512xf32> to vector<1x1x512xf32>
    %151 = vector.broadcast %150 : vector<1x1x512xf32> to vector<8x8x512xf32>
    %152 = arith.mulf %149, %151 : vector<8x8x512xf32>
    %153 = arith.addf %148, %152 : vector<8x8x512xf32>
    %154 = vector.extract_strided_slice %1 {offsets = [4, 2, 0], sizes = [8, 8, 512], strides = [1, 1, 1]} : vector<14x14x512xf32> to vector<8x8x512xf32>
    %155 = vector.extract_strided_slice %2 {offsets = [4, 2, 0], sizes = [1, 1, 512], strides = [1, 1, 1]} : vector<7x7x512xf32> to vector<1x1x512xf32>
    %156 = vector.broadcast %155 : vector<1x1x512xf32> to vector<8x8x512xf32>
    %157 = arith.mulf %154, %156 : vector<8x8x512xf32>
    %158 = arith.addf %153, %157 : vector<8x8x512xf32>
    %159 = vector.extract_strided_slice %1 {offsets = [4, 3, 0], sizes = [8, 8, 512], strides = [1, 1, 1]} : vector<14x14x512xf32> to vector<8x8x512xf32>
    %160 = vector.extract_strided_slice %2 {offsets = [4, 3, 0], sizes = [1, 1, 512], strides = [1, 1, 1]} : vector<7x7x512xf32> to vector<1x1x512xf32>
    %161 = vector.broadcast %160 : vector<1x1x512xf32> to vector<8x8x512xf32>
    %162 = arith.mulf %159, %161 : vector<8x8x512xf32>
    %163 = arith.addf %158, %162 : vector<8x8x512xf32>
    %164 = vector.extract_strided_slice %1 {offsets = [4, 4, 0], sizes = [8, 8, 512], strides = [1, 1, 1]} : vector<14x14x512xf32> to vector<8x8x512xf32>
    %165 = vector.extract_strided_slice %2 {offsets = [4, 4, 0], sizes = [1, 1, 512], strides = [1, 1, 1]} : vector<7x7x512xf32> to vector<1x1x512xf32>
    %166 = vector.broadcast %165 : vector<1x1x512xf32> to vector<8x8x512xf32>
    %167 = arith.mulf %164, %166 : vector<8x8x512xf32>
    %168 = arith.addf %163, %167 : vector<8x8x512xf32>
    %169 = vector.extract_strided_slice %1 {offsets = [4, 5, 0], sizes = [8, 8, 512], strides = [1, 1, 1]} : vector<14x14x512xf32> to vector<8x8x512xf32>
    %170 = vector.extract_strided_slice %2 {offsets = [4, 5, 0], sizes = [1, 1, 512], strides = [1, 1, 1]} : vector<7x7x512xf32> to vector<1x1x512xf32>
    %171 = vector.broadcast %170 : vector<1x1x512xf32> to vector<8x8x512xf32>
    %172 = arith.mulf %169, %171 : vector<8x8x512xf32>
    %173 = arith.addf %168, %172 : vector<8x8x512xf32>
    %174 = vector.extract_strided_slice %1 {offsets = [4, 6, 0], sizes = [8, 8, 512], strides = [1, 1, 1]} : vector<14x14x512xf32> to vector<8x8x512xf32>
    %175 = vector.extract_strided_slice %2 {offsets = [4, 6, 0], sizes = [1, 1, 512], strides = [1, 1, 1]} : vector<7x7x512xf32> to vector<1x1x512xf32>
    %176 = vector.broadcast %175 : vector<1x1x512xf32> to vector<8x8x512xf32>
    %177 = arith.mulf %174, %176 : vector<8x8x512xf32>
    %178 = arith.addf %173, %177 : vector<8x8x512xf32>
    %179 = vector.extract_strided_slice %1 {offsets = [5, 0, 0], sizes = [8, 8, 512], strides = [1, 1, 1]} : vector<14x14x512xf32> to vector<8x8x512xf32>
    %180 = vector.extract_strided_slice %2 {offsets = [5, 0, 0], sizes = [1, 1, 512], strides = [1, 1, 1]} : vector<7x7x512xf32> to vector<1x1x512xf32>
    %181 = vector.broadcast %180 : vector<1x1x512xf32> to vector<8x8x512xf32>
    %182 = arith.mulf %179, %181 : vector<8x8x512xf32>
    %183 = arith.addf %178, %182 : vector<8x8x512xf32>
    %184 = vector.extract_strided_slice %1 {offsets = [5, 1, 0], sizes = [8, 8, 512], strides = [1, 1, 1]} : vector<14x14x512xf32> to vector<8x8x512xf32>
    %185 = vector.extract_strided_slice %2 {offsets = [5, 1, 0], sizes = [1, 1, 512], strides = [1, 1, 1]} : vector<7x7x512xf32> to vector<1x1x512xf32>
    %186 = vector.broadcast %185 : vector<1x1x512xf32> to vector<8x8x512xf32>
    %187 = arith.mulf %184, %186 : vector<8x8x512xf32>
    %188 = arith.addf %183, %187 : vector<8x8x512xf32>
    %189 = vector.extract_strided_slice %1 {offsets = [5, 2, 0], sizes = [8, 8, 512], strides = [1, 1, 1]} : vector<14x14x512xf32> to vector<8x8x512xf32>
    %190 = vector.extract_strided_slice %2 {offsets = [5, 2, 0], sizes = [1, 1, 512], strides = [1, 1, 1]} : vector<7x7x512xf32> to vector<1x1x512xf32>
    %191 = vector.broadcast %190 : vector<1x1x512xf32> to vector<8x8x512xf32>
    %192 = arith.mulf %189, %191 : vector<8x8x512xf32>
    %193 = arith.addf %188, %192 : vector<8x8x512xf32>
    %194 = vector.extract_strided_slice %1 {offsets = [5, 3, 0], sizes = [8, 8, 512], strides = [1, 1, 1]} : vector<14x14x512xf32> to vector<8x8x512xf32>
    %195 = vector.extract_strided_slice %2 {offsets = [5, 3, 0], sizes = [1, 1, 512], strides = [1, 1, 1]} : vector<7x7x512xf32> to vector<1x1x512xf32>
    %196 = vector.broadcast %195 : vector<1x1x512xf32> to vector<8x8x512xf32>
    %197 = arith.mulf %194, %196 : vector<8x8x512xf32>
    %198 = arith.addf %193, %197 : vector<8x8x512xf32>
    %199 = vector.extract_strided_slice %1 {offsets = [5, 4, 0], sizes = [8, 8, 512], strides = [1, 1, 1]} : vector<14x14x512xf32> to vector<8x8x512xf32>
    %200 = vector.extract_strided_slice %2 {offsets = [5, 4, 0], sizes = [1, 1, 512], strides = [1, 1, 1]} : vector<7x7x512xf32> to vector<1x1x512xf32>
    %201 = vector.broadcast %200 : vector<1x1x512xf32> to vector<8x8x512xf32>
    %202 = arith.mulf %199, %201 : vector<8x8x512xf32>
    %203 = arith.addf %198, %202 : vector<8x8x512xf32>
    %204 = vector.extract_strided_slice %1 {offsets = [5, 5, 0], sizes = [8, 8, 512], strides = [1, 1, 1]} : vector<14x14x512xf32> to vector<8x8x512xf32>
    %205 = vector.extract_strided_slice %2 {offsets = [5, 5, 0], sizes = [1, 1, 512], strides = [1, 1, 1]} : vector<7x7x512xf32> to vector<1x1x512xf32>
    %206 = vector.broadcast %205 : vector<1x1x512xf32> to vector<8x8x512xf32>
    %207 = arith.mulf %204, %206 : vector<8x8x512xf32>
    %208 = arith.addf %203, %207 : vector<8x8x512xf32>
    %209 = vector.extract_strided_slice %1 {offsets = [5, 6, 0], sizes = [8, 8, 512], strides = [1, 1, 1]} : vector<14x14x512xf32> to vector<8x8x512xf32>
    %210 = vector.extract_strided_slice %2 {offsets = [5, 6, 0], sizes = [1, 1, 512], strides = [1, 1, 1]} : vector<7x7x512xf32> to vector<1x1x512xf32>
    %211 = vector.broadcast %210 : vector<1x1x512xf32> to vector<8x8x512xf32>
    %212 = arith.mulf %209, %211 : vector<8x8x512xf32>
    %213 = arith.addf %208, %212 : vector<8x8x512xf32>
    %214 = vector.extract_strided_slice %1 {offsets = [6, 0, 0], sizes = [8, 8, 512], strides = [1, 1, 1]} : vector<14x14x512xf32> to vector<8x8x512xf32>
    %215 = vector.extract_strided_slice %2 {offsets = [6, 0, 0], sizes = [1, 1, 512], strides = [1, 1, 1]} : vector<7x7x512xf32> to vector<1x1x512xf32>
    %216 = vector.broadcast %215 : vector<1x1x512xf32> to vector<8x8x512xf32>
    %217 = arith.mulf %214, %216 : vector<8x8x512xf32>
    %218 = arith.addf %213, %217 : vector<8x8x512xf32>
    %219 = vector.extract_strided_slice %1 {offsets = [6, 1, 0], sizes = [8, 8, 512], strides = [1, 1, 1]} : vector<14x14x512xf32> to vector<8x8x512xf32>
    %220 = vector.extract_strided_slice %2 {offsets = [6, 1, 0], sizes = [1, 1, 512], strides = [1, 1, 1]} : vector<7x7x512xf32> to vector<1x1x512xf32>
    %221 = vector.broadcast %220 : vector<1x1x512xf32> to vector<8x8x512xf32>
    %222 = arith.mulf %219, %221 : vector<8x8x512xf32>
    %223 = arith.addf %218, %222 : vector<8x8x512xf32>
    %224 = vector.extract_strided_slice %1 {offsets = [6, 2, 0], sizes = [8, 8, 512], strides = [1, 1, 1]} : vector<14x14x512xf32> to vector<8x8x512xf32>
    %225 = vector.extract_strided_slice %2 {offsets = [6, 2, 0], sizes = [1, 1, 512], strides = [1, 1, 1]} : vector<7x7x512xf32> to vector<1x1x512xf32>
    %226 = vector.broadcast %225 : vector<1x1x512xf32> to vector<8x8x512xf32>
    %227 = arith.mulf %224, %226 : vector<8x8x512xf32>
    %228 = arith.addf %223, %227 : vector<8x8x512xf32>
    %229 = vector.extract_strided_slice %1 {offsets = [6, 3, 0], sizes = [8, 8, 512], strides = [1, 1, 1]} : vector<14x14x512xf32> to vector<8x8x512xf32>
    %230 = vector.extract_strided_slice %2 {offsets = [6, 3, 0], sizes = [1, 1, 512], strides = [1, 1, 1]} : vector<7x7x512xf32> to vector<1x1x512xf32>
    %231 = vector.broadcast %230 : vector<1x1x512xf32> to vector<8x8x512xf32>
    %232 = arith.mulf %229, %231 : vector<8x8x512xf32>
    %233 = arith.addf %228, %232 : vector<8x8x512xf32>
    %234 = vector.extract_strided_slice %1 {offsets = [6, 4, 0], sizes = [8, 8, 512], strides = [1, 1, 1]} : vector<14x14x512xf32> to vector<8x8x512xf32>
    %235 = vector.extract_strided_slice %2 {offsets = [6, 4, 0], sizes = [1, 1, 512], strides = [1, 1, 1]} : vector<7x7x512xf32> to vector<1x1x512xf32>
    %236 = vector.broadcast %235 : vector<1x1x512xf32> to vector<8x8x512xf32>
    %237 = arith.mulf %234, %236 : vector<8x8x512xf32>
    %238 = arith.addf %233, %237 : vector<8x8x512xf32>
    %239 = vector.extract_strided_slice %1 {offsets = [6, 5, 0], sizes = [8, 8, 512], strides = [1, 1, 1]} : vector<14x14x512xf32> to vector<8x8x512xf32>
    %240 = vector.extract_strided_slice %2 {offsets = [6, 5, 0], sizes = [1, 1, 512], strides = [1, 1, 1]} : vector<7x7x512xf32> to vector<1x1x512xf32>
    %241 = vector.broadcast %240 : vector<1x1x512xf32> to vector<8x8x512xf32>
    %242 = arith.mulf %239, %241 : vector<8x8x512xf32>
    %243 = arith.addf %238, %242 : vector<8x8x512xf32>
    %244 = vector.extract_strided_slice %1 {offsets = [6, 6, 0], sizes = [8, 8, 512], strides = [1, 1, 1]} : vector<14x14x512xf32> to vector<8x8x512xf32>
    %245 = vector.extract_strided_slice %2 {offsets = [6, 6, 0], sizes = [1, 1, 512], strides = [1, 1, 1]} : vector<7x7x512xf32> to vector<1x1x512xf32>
    %246 = vector.broadcast %245 : vector<1x1x512xf32> to vector<8x8x512xf32>
    %247 = arith.mulf %244, %246 : vector<8x8x512xf32>
    %248 = arith.addf %243, %247 : vector<8x8x512xf32>
    %c0_6 = arith.constant 0 : index
    %c0_7 = arith.constant 0 : index
    %c0_8 = arith.constant 0 : index
    %249 = vector.load %arg3[%c0_6, %c0_7, %c0_8] : memref<1x1x512xf32, #tpu.memory_space<vmem>>, vector<1x1x512xf32>
    %250 = vector.broadcast %249 : vector<1x1x512xf32> to vector<8x8x512xf32>
    %251 = arith.addf %248, %250 : vector<8x8x512xf32>
    %c0_9 = arith.constant 0 : index
    %c0_10 = arith.constant 0 : index
    %c0_11 = arith.constant 0 : index
    %c0_12 = arith.constant 0 : index
    %252 = vector.load %arg4[%c0_9, %c0_10, %c0_11, %c0_12] : memref<1x8x8x512xf32, #tpu.memory_space<vmem>>, vector<1x8x8x512xf32>
    %253 = vector.shape_cast %252 : vector<1x8x8x512xf32> to vector<8x8x512xf32>
    %254 = vector.shape_cast %251 : vector<8x8x512xf32> to vector<1x8x8x512xf32>
    tpu.vector_store %arg4[%c0_9, %c0_10, %c0_11, %c0_12], %254 {strides = array<i32>} : memref<1x8x8x512xf32, #tpu.memory_space<vmem>>, vector<1x8x8x512xf32>,
    return
  }
  func.func @transform_0(%arg0: i32) -> (i32, i32, i32, i32) {
    %c0_i32 = arith.constant 0 : i32
    %c0_i32_0 = arith.constant 0 : i32
    %c0_i32_1 = arith.constant 0 : i32
    %c0_i32_2 = arith.constant 0 : i32
    return %arg0, %c0_i32, %c0_i32_0, %c0_i32_1 : i32, i32, i32, i32
  }
  func.func @transform_1(%arg0: i32) -> (i32, i32, i32) {
    %c0_i32 = arith.constant 0 : i32
    %c0_i32_0 = arith.constant 0 : i32
    %c0_i32_1 = arith.constant 0 : i32
    %c0_i32_2 = arith.constant 0 : i32
    return %c0_i32, %c0_i32_0, %c0_i32_1 : i32, i32, i32
  }
  func.func @transform_2(%arg0: i32) -> (i32, i32, i32) {
    %c0_i32 = arith.constant 0 : i32
    %c0_i32_0 = arith.constant 0 : i32
    %c0_i32_1 = arith.constant 0 : i32
    %c0_i32_2 = arith.constant 0 : i32
    return %c0_i32, %c0_i32_0, %c0_i32_1 : i32, i32, i32
  }
  func.func @transform_3(%arg0: i32) -> (i32, i32, i32, i32) {
    %c0_i32 = arith.constant 0 : i32
    %c0_i32_0 = arith.constant 0 : i32
    %c0_i32_1 = arith.constant 0 : i32
    %c0_i32_2 = arith.constant 0 : i32
    return %arg0, %c0_i32, %c0_i32_0, %c0_i32_1 : i32, i32, i32, i32
  }
}

</mosaic_0001>

<llo_original>
// kernel: tpu_custom_call.1
$region0: #{tpu_custom_call.1}
  #allocation0 [shape = 'u32[]', space=smem, size = 0x4, offset = 0x4, fixed_abs, tag = 'smem constant byte address 0x4 - core index']
  #allocation1 [shape = 'u32[72,128]{1,0:T(1,128)}', space=vmem, size = 0x9000, scoped, tag = 'internal scratch']
  %s0 = inlined_call_operand.vmem [shape: f32[2,14,14,512], index: 0, kind: input, shape index: {}]
  %s1 = inlined_call_operand.vmem [shape: f32[7,7,512], index: 1, kind: input, shape index: {}]
  %s2 = inlined_call_operand.vmem [shape: f32[1,1,512], index: 2, kind: input, shape index: {}]
  %s3 = inlined_call_operand.hbm [shape: f32[2,8,8,512], index: 3, kind: output, shape index: {}]
  %s4 = sld [smem:[#allocation0]]
  $region45: #{tpu_custom_call.1} parent=0
    _
  %s6 = ssub.s32 1, %s4
  %s7 = scalar_select 0, %s6, %s4
  $region1: #{tpu_custom_call.1} parent=0
    #allocation2 [shape = 'u8[262144]{0}', space=vmem, size = 0x40000, scoped, tag = 'output window, operand 0']
    #allocation3 [shape = 's32[2]{0}', space=sflag, size = 0x8, scoped, tag = 'scoped memory for tpu_custom_call.1']
    %8 = vsyncpa [#allocation3], 0
    %s9 = scalar_lea.sflag [#allocation3], 1
    %10 = vsyncpa %s9, 0
    loop: start=0, step=1, limit=4
    $region2: #{tpu_custom_call.1} parent=1 // loop_pre_header
      _
    $region3: #{tpu_custom_call.1} parent=1 // loop_header
      %s12 = sphi 0, %s16
      %p13 = scmp.ge.s32.totalorder %s12, 4
      %s22 = sphi 0, %s24
      %s25 = sphi 0, %s22
      %s26 = sphi 0, %s25
      %s42 = sphi 0, %s26
      %s46 = sphi 0, %s46
      %s48 = sphi 0, %s46
      %s49 = sphi 0, %s48
      %s63 = sphi 0, %s49
      %s67 = sphi 0, %s67
      %s69 = sphi 0, %s67
      %s70 = sphi 0, %s69
      %s84 = sphi 0, %s70
      %s90 = sphi 0, %s92
      %s93 = sphi 0, %s90
      %s94 = sphi 0, %s93
      %s110 = sphi 0, %s94
    $region4: #{tpu_custom_call.1} parent=1 // loop_header_branch
      %15 = sbr.rel (%p13) target = $region8
    $region5: #{tpu_custom_call.1} parent=1 // loop_body
      %s17 = ssub.s32 %s12, 1
      %s18 = ssub.s32 %s12, 2
      %s19 = sadd.s32 %s12, 1
      %s20 = ssub.s32 %s12, %s19
      %p21 = scmp.eq.s32.totalorder %s20, 0
      %s23 = sadd.s32 %s22, 1
      %s24 = scalar_select %p21, %s22, %s23
      %p27 = pneg %p21
      %p28 = scmp.eq.s32.totalorder %s12, 1
      %p29 = por %p27, %p28
      %p30 = scmp.ne.s32.totalorder %s22, %s25
      %p31 = scmp.eq.s32.totalorder %s12, 0
      %p32 = por %p30, %p31
      %p33 = scmp.ne.s32.totalorder %s22, %s25
      %p34 = scmp.eq.s32.totalorder %s17, 1
      %p35 = por %p33, %p34
      %p36 = scmp.ne.s32.totalorder %s25, %s26
      %p37 = scmp.eq.s32.totalorder %s17, 0
      %p38 = por %p36, %p37
      %p39 = scmp.ne.s32.totalorder %s25, %s26
      %p40 = scmp.eq.s32.totalorder %s18, 1
      %p41 = por %p39, %p40
      %p43 = scmp.ne.s32.totalorder %s26, %s42
      %p44 = scmp.eq.s32.totalorder %s18, 0
      %p45 = por %p43, %p44
      %s47 = sadd.s32 %s46, 1
      %p50 = scmp.eq.s32.totalorder %s12, 1
      %p51 = scmp.ne.s32.totalorder %s46, %s48
      %p52 = scmp.eq.s32.totalorder %s12, 0
      %p53 = por %p51, %p52
      %p54 = scmp.ne.s32.totalorder %s46, %s48
      %p55 = scmp.eq.s32.totalorder %s17, 1
      %p56 = por %p54, %p55
      %p57 = scmp.ne.s32.totalorder %s48, %s49
      %p58 = scmp.eq.s32.totalorder %s17, 0
      %p59 = por %p57, %p58
      %p60 = scmp.ne.s32.totalorder %s48, %s49
      %p61 = scmp.eq.s32.totalorder %s18, 1
      %p62 = por %p60, %p61
      %p64 = scmp.ne.s32.totalorder %s49, %s63
      %p65 = scmp.eq.s32.totalorder %s18, 0
      %p66 = por %p64, %p65
      %s68 = sadd.s32 %s67, 1
      %p71 = scmp.eq.s32.totalorder %s12, 1
      %p72 = scmp.ne.s32.totalorder %s67, %s69
      %p73 = scmp.eq.s32.totalorder %s12, 0
      %p74 = por %p72, %p73
      %p75 = scmp.ne.s32.totalorder %s67, %s69
      %p76 = scmp.eq.s32.totalorder %s17, 1
      %p77 = por %p75, %p76
      %p78 = scmp.ne.s32.totalorder %s69, %s70
      %p79 = scmp.eq.s32.totalorder %s17, 0
      %p80 = por %p78, %p79
      %p81 = scmp.ne.s32.totalorder %s69, %s70
      %p82 = scmp.eq.s32.totalorder %s18, 1
      %p83 = por %p81, %p82
      %p85 = scmp.ne.s32.totalorder %s70, %s84
      %p86 = scmp.eq.s32.totalorder %s18, 0
      %p87 = por %p85, %p86
      %s88 = ssub.s32 %s12, %s19
      %p89 = scmp.eq.s32.totalorder %s88, 0
      %s91 = sadd.s32 %s90, 1
      %s92 = scalar_select %p89, %s90, %s91
      %p95 = pneg %p89
      %p96 = scmp.eq.s32.totalorder %s12, 1
      %p97 = por %p95, %p96
      %p98 = scmp.ne.s32.totalorder %s90, %s93
      %p99 = scmp.eq.s32.totalorder %s12, 0
      %p100 = por %p98, %p99
      %p101 = scmp.ne.s32.totalorder %s90, %s93
      %p102 = scmp.eq.s32.totalorder %s17, 1
      %p103 = por %p101, %p102
      %p104 = scmp.ne.s32.totalorder %s93, %s94
      %p105 = scmp.eq.s32.totalorder %s17, 0
      %p106 = por %p104, %p105
      %p107 = scmp.ne.s32.totalorder %s93, %s94
      %p108 = scmp.eq.s32.totalorder %s18, 1
      %p109 = por %p107, %p108
      %p111 = scmp.ne.s32.totalorder %s94, %s110
      %p112 = scmp.eq.s32.totalorder %s18, 0
      %p113 = por %p111, %p112
      %p114 = scmp.le.s32.totalorder 1, %s12
      %p115 = scmp.lt.s32.totalorder %s12, 3
      %p116 = pnand %p114, %p115
      %p117 = pneg %p116
      // Predicated region
      $region9: #{tpu_custom_call.1} parent=5 // pred_check
        _
      $region10: #{tpu_custom_call.1} parent=5 // pred_check_branch
        %119 = sbr.rel (%p116) target = $region12
      $region11: #{tpu_custom_call.1} parent=5 // pred_region
        %s120 = ssub.s32 %s12, 1
        // Predicated region
        $region13: #{tpu_custom_call.1} parent=11 // pred_check
          %p121 = pneg %p59
        $region14: #{tpu_custom_call.1} parent=11 // pred_check_branch
          %123 = sbr.rel (%p121) target = $region16
        $region15: #{tpu_custom_call.1} parent=11 // pred_region
          _
        $region16: #{tpu_custom_call.1} parent=11 // pred_fallthru
          _
        // Predicated region
        $region17: #{tpu_custom_call.1} parent=11 // pred_check
          %p124 = pneg %p80
        $region18: #{tpu_custom_call.1} parent=11 // pred_check_branch
          %126 = sbr.rel (%p124) target = $region20
        $region19: #{tpu_custom_call.1} parent=11 // pred_region
          _
        $region20: #{tpu_custom_call.1} parent=11 // pred_fallthru
          _
      $region12: #{tpu_custom_call.1} parent=5 // pred_fallthru
        _
      %p127 = scmp.lt.s32.totalorder %s12, 2
      // Predicated region
      $region21: #{tpu_custom_call.1} parent=5 // pred_check
        %p128 = pneg %p127
      $region22: #{tpu_custom_call.1} parent=5 // pred_check_branch
        %130 = sbr.rel (%p128) target = $region24
      $region23: #{tpu_custom_call.1} parent=5 // pred_region
        // Predicated region
        $region25: #{tpu_custom_call.1} parent=23 // pred_check
          %p131 = pneg %p32
        $region26: #{tpu_custom_call.1} parent=23 // pred_check_branch
          %133 = sbr.rel (%p131) target = $region28
        $region27: #{tpu_custom_call.1} parent=23 // pred_region
          %p134 = scmp.lt.s32.totalorder %s12, 1
          %s135 = scalar_select %p134, %s12, 1
          %s136 = smul.addr %s135, 112
          %s137 = smul.addr %s136, 8
          %s138 = scalar_lea.vmem %s0, %s137
        $region28: #{tpu_custom_call.1} parent=23 // pred_fallthru
          _
      $region24: #{tpu_custom_call.1} parent=5 // pred_fallthru
        _
      %p139 = scmp.le.s32.totalorder 1, %s12
      %p140 = scmp.lt.s32.totalorder %s12, 3
      %p141 = pnand %p139, %p140
      %p142 = pneg %p141
      // Predicated region
      $region29: #{tpu_custom_call.1} parent=5 // pred_check
        _
      $region30: #{tpu_custom_call.1} parent=5 // pred_check_branch
        %144 = sbr.rel (%p141) target = $region32
      $region31: #{tpu_custom_call.1} parent=5 // pred_region
        %s145 = ssub.s32 %s12, 1
        %p146 = scmp.lt.s32.totalorder %s17, 1
        %s147 = scalar_select %p146, %s17, 1
        %s148 = smul.addr %s147, 112
        %s149 = smul.addr %s148, 8
        %s150 = scalar_lea.vmem %s0, %s149
        %p151 = pneg %p38
        %p152 = pneg %p35
        %p153 = pneg %p59
        %p154 = pneg %p56
        %p155 = pneg %p80
        %p156 = pneg %p77
        %p157 = pneg %p106
        %p158 = pneg %p103
        %s159 = sand.u32 %s93, 1
        %s160 = scalar_lea.sflag [#allocation3], %s159
        %s161 = sand.u32 %s93, 1
        %s162 = smul.addr %s161, 256
        %s163 = scalar_lea.vmem [#allocation2], %s162
        %p164 = scmp.lt.s32.totalorder %s17, 1
        %s165 = scalar_select %p164, %s17, 1
        %s166 = smul.addr %s165, 112
        %s167 = smul.addr %s166, 8
        %s168 = scalar_lea.vmem %s0, %s167
        %v169 = vld [vmem:[%s168] sm:$0xff]
        %v170 = vld [vmem:[%s168 + $0x8] sm:$0xff]
        %v171 = vld [vmem:[%s168 + $0x10] sm:$0xff]
        %v172 = vld [vmem:[%s168 + $0x18] sm:$0xff]
        %v173 = vld [vmem:[%s168 + $0x20] sm:$0x3f]
        %v174 = vld [vmem:[%s168 + $0x28] sm:$0x3f]
        %v175 = vld [vmem:[%s168 + $0x30] sm:$0x3f]
        %v176 = vld [vmem:[%s168 + $0x38] sm:$0x3f]
        %v177 = vld [vmem:[%s168 + $0x40] sm:$0xff]
        %v178 = vld [vmem:[%s168 + $0x48] sm:$0xff]
        %v179 = vld [vmem:[%s168 + $0x50] sm:$0xff]
        %v180 = vld [vmem:[%s168 + $0x58] sm:$0xff]
        %v181 = vld [vmem:[%s168 + $0x60] sm:$0x3f]
        %v182 = vld [vmem:[%s168 + $0x68] sm:$0x3f]
        %v183 = vld [vmem:[%s168 + $0x70] sm:$0x3f]
        %v184 = vld [vmem:[%s168 + $0x78] sm:$0x3f]
        %v185 = vld [vmem:[%s168 + $0x80] sm:$0xff]
        %v186 = vld [vmem:[%s168 + $0x88] sm:$0xff]
        %v187 = vld [vmem:[%s168 + $0x90] sm:$0xff]
        %v188 = vld [vmem:[%s168 + $0x98] sm:$0xff]
        %v189 = vld [vmem:[%s168 + $0xa0] sm:$0x3f]
        %v190 = vld [vmem:[%s168 + $0xa8] sm:$0x3f]
        %v191 = vld [vmem:[%s168 + $0xb0] sm:$0x3f]
        %v192 = vld [vmem:[%s168 + $0xb8] sm:$0x3f]
        %v193 = vld [vmem:[%s168 + $0xc0] sm:$0xff]
        %v194 = vld [vmem:[%s168 + $0xc8] sm:$0xff]
        %v195 = vld [vmem:[%s168 + $0xd0] sm:$0xff]
        %v196 = vld [vmem:[%s168 + $0xd8] sm:$0xff]
        %v197 = vld [vmem:[%s168 + $0xe0] sm:$0x3f]
        %v198 = vld [vmem:[%s168 + $0xe8] sm:$0x3f]
        %v199 = vld [vmem:[%s168 + $0xf0] sm:$0x3f]
        %v200 = vld [vmem:[%s168 + $0xf8] sm:$0x3f]
        %v201 = vld [vmem:[%s168 + $0x100] sm:$0xff]
        %v202 = vld [vmem:[%s168 + $0x108] sm:$0xff]
        %v203 = vld [vmem:[%s168 + $0x110] sm:$0xff]
        %v204 = vld [vmem:[%s168 + $0x118] sm:$0xff]
        %v205 = vld [vmem:[%s168 + $0x120] sm:$0x3f]
        %v206 = vld [vmem:[%s168 + $0x128] sm:$0x3f]
        %v207 = vld [vmem:[%s168 + $0x130] sm:$0x3f]
        %v208 = vld [vmem:[%s168 + $0x138] sm:$0x3f]
        %v209 = vld [vmem:[%s168 + $0x140] sm:$0xff]
        %v210 = vld [vmem:[%s168 + $0x148] sm:$0xff]
        %v211 = vld [vmem:[%s168 + $0x150] sm:$0xff]
        %v212 = vld [vmem:[%s168 + $0x158] sm:$0xff]
        %v213 = vld [vmem:[%s168 + $0x160] sm:$0x3f]
        %v214 = vld [vmem:[%s168 + $0x168] sm:$0x3f]
        %v215 = vld [vmem:[%s168 + $0x170] sm:$0x3f]
        %v216 = vld [vmem:[%s168 + $0x178] sm:$0x3f]
        %v217 = vld [vmem:[%s168 + $0x180] sm:$0xff]
        %v218 = vld [vmem:[%s168 + $0x188] sm:$0xff]
        %v219 = vld [vmem:[%s168 + $0x190] sm:$0xff]
        %v220 = vld [vmem:[%s168 + $0x198] sm:$0xff]
        %v221 = vld [vmem:[%s168 + $0x1a0] sm:$0x3f]
        %v222 = vld [vmem:[%s168 + $0x1a8] sm:$0x3f]
        %v223 = vld [vmem:[%s168 + $0x1b0] sm:$0x3f]
        %v224 = vld [vmem:[%s168 + $0x1b8] sm:$0x3f]
        %v225 = vld [vmem:[%s168 + $0x1c0] sm:$0xff]
        %v226 = vld [vmem:[%s168 + $0x1c8] sm:$0xff]
        %v227 = vld [vmem:[%s168 + $0x1d0] sm:$0xff]
        %v228 = vld [vmem:[%s168 + $0x1d8] sm:$0xff]
        %v229 = vld [vmem:[%s168 + $0x1e0] sm:$0x3f]
        %v230 = vld [vmem:[%s168 + $0x1e8] sm:$0x3f]
        %v231 = vld [vmem:[%s168 + $0x1f0] sm:$0x3f]
        %v232 = vld [vmem:[%s168 + $0x1f8] sm:$0x3f]
        %v233 = vld [vmem:[%s168 + $0x200] sm:$0xff]
        %v234 = vld [vmem:[%s168 + $0x208] sm:$0xff]
        %v235 = vld [vmem:[%s168 + $0x210] sm:$0xff]
        %v236 = vld [vmem:[%s168 + $0x218] sm:$0xff]
        %v237 = vld [vmem:[%s168 + $0x220] sm:$0x3f]
        %v238 = vld [vmem:[%s168 + $0x228] sm:$0x3f]
        %v239 = vld [vmem:[%s168 + $0x230] sm:$0x3f]
        %v240 = vld [vmem:[%s168 + $0x238] sm:$0x3f]
        %v241 = vld [vmem:[%s168 + $0x240] sm:$0xff]
        %v242 = vld [vmem:[%s168 + $0x248] sm:$0xff]
        %v243 = vld [vmem:[%s168 + $0x250] sm:$0xff]
        %v244 = vld [vmem:[%s168 + $0x258] sm:$0xff]
        %v245 = vld [vmem:[%s168 + $0x260] sm:$0x3f]
        %v246 = vld [vmem:[%s168 + $0x268] sm:$0x3f]
        %v247 = vld [vmem:[%s168 + $0x270] sm:$0x3f]
        %v248 = vld [vmem:[%s168 + $0x278] sm:$0x3f]
        %v249 = vld [vmem:[%s168 + $0x280] sm:$0xff]
        %v250 = vld [vmem:[%s168 + $0x288] sm:$0xff]
        %v251 = vld [vmem:[%s168 + $0x290] sm:$0xff]
        %v252 = vld [vmem:[%s168 + $0x298] sm:$0xff]
        %v253 = vld [vmem:[%s168 + $0x2a0] sm:$0x3f]
        %v254 = vld [vmem:[%s168 + $0x2a8] sm:$0x3f]
        %v255 = vld [vmem:[%s168 + $0x2b0] sm:$0x3f]
        %v256 = vld [vmem:[%s168 + $0x2b8] sm:$0x3f]
        %v257 = vld [vmem:[%s168 + $0x2c0] sm:$0xff]
        %v258 = vld [vmem:[%s168 + $0x2c8] sm:$0xff]
        %v259 = vld [vmem:[%s168 + $0x2d0] sm:$0xff]
        %v260 = vld [vmem:[%s168 + $0x2d8] sm:$0xff]
        %v261 = vld [vmem:[%s168 + $0x2e0] sm:$0x3f]
        %v262 = vld [vmem:[%s168 + $0x2e8] sm:$0x3f]
        %v263 = vld [vmem:[%s168 + $0x2f0] sm:$0x3f]
        %v264 = vld [vmem:[%s168 + $0x2f8] sm:$0x3f]
        %v265 = vld [vmem:[%s168 + $0x300] sm:$0xff]
        %v266 = vld [vmem:[%s168 + $0x308] sm:$0xff]
        %v267 = vld [vmem:[%s168 + $0x310] sm:$0xff]
        %v268 = vld [vmem:[%s168 + $0x318] sm:$0xff]
        %v269 = vld [vmem:[%s168 + $0x320] sm:$0x3f]
        %v270 = vld [vmem:[%s168 + $0x328] sm:$0x3f]
        %v271 = vld [vmem:[%s168 + $0x330] sm:$0x3f]
        %v272 = vld [vmem:[%s168 + $0x338] sm:$0x3f]
        %v273 = vld [vmem:[%s168 + $0x340] sm:$0xff]
        %v274 = vld [vmem:[%s168 + $0x348] sm:$0xff]
        %v275 = vld [vmem:[%s168 + $0x350] sm:$0xff]
        %v276 = vld [vmem:[%s168 + $0x358] sm:$0xff]
        %v277 = vld [vmem:[%s168 + $0x360] sm:$0x3f]
        %v278 = vld [vmem:[%s168 + $0x368] sm:$0x3f]
        %v279 = vld [vmem:[%s168 + $0x370] sm:$0x3f]
        %v280 = vld [vmem:[%s168 + $0x378] sm:$0x3f]
        %v281 = vld [vmem:[%s1] sm:$0x7f]
        %v282 = vld [vmem:[%s1 + $0x8] sm:$0x7f]
        %v283 = vld [vmem:[%s1 + $0x10] sm:$0x7f]
        %v284 = vld [vmem:[%s1 + $0x18] sm:$0x7f]
        %v285 = vld [vmem:[%s1 + $0x20] sm:$0x7f]
        %v286 = vld [vmem:[%s1 + $0x28] sm:$0x7f]
        %v287 = vld [vmem:[%s1 + $0x30] sm:$0x7f]
        %v288 = vld [vmem:[%s1 + $0x38] sm:$0x7f]
        %v289 = vld [vmem:[%s1 + $0x40] sm:$0x7f]
        %v290 = vld [vmem:[%s1 + $0x48] sm:$0x7f]
        %v291 = vld [vmem:[%s1 + $0x50] sm:$0x7f]
        %v292 = vld [vmem:[%s1 + $0x58] sm:$0x7f]
        %v293 = vld [vmem:[%s1 + $0x60] sm:$0x7f]
        %v294 = vld [vmem:[%s1 + $0x68] sm:$0x7f]
        %v295 = vld [vmem:[%s1 + $0x70] sm:$0x7f]
        %v296 = vld [vmem:[%s1 + $0x78] sm:$0x7f]
        %v297 = vld [vmem:[%s1 + $0x80] sm:$0x7f]
        %v298 = vld [vmem:[%s1 + $0x88] sm:$0x7f]
        %v299 = vld [vmem:[%s1 + $0x90] sm:$0x7f]
        %v300 = vld [vmem:[%s1 + $0x98] sm:$0x7f]
        %v301 = vld [vmem:[%s1 + $0xa0] sm:$0x7f]
        %v302 = vld [vmem:[%s1 + $0xa8] sm:$0x7f]
        %v303 = vld [vmem:[%s1 + $0xb0] sm:$0x7f]
        %v304 = vld [vmem:[%s1 + $0xb8] sm:$0x7f]
        %v305 = vld [vmem:[%s1 + $0xc0] sm:$0x7f]
        %v306 = vld [vmem:[%s1 + $0xc8] sm:$0x7f]
        %v307 = vld [vmem:[%s1 + $0xd0] sm:$0x7f]
        %v308 = vld [vmem:[%s1 + $0xd8] sm:$0x7f]
        %v309 = vperm.slane %v281, 0
        %v310 = vperm.slane %v282, 0
        %v311 = vperm.slane %v283, 0
        %v312 = vperm.slane %v284, 0
        %v313 = vmul.f32 %v169, %v309
        %v314 = vmul.f32 %v170, %v310
        %v315 = vmul.f32 %v171, %v311
        %v316 = vmul.f32 %v172, %v312
        %v317 = vmul.f32 %v177, %v309
        %v318 = vmul.f32 %v178, %v310
        %v319 = vmul.f32 %v179, %v311
        %v320 = vmul.f32 %v180, %v312
        %v321 = vmul.f32 %v185, %v309
        %v322 = vmul.f32 %v186, %v310
        %v323 = vmul.f32 %v187, %v311
        %v324 = vmul.f32 %v188, %v312
        %v325 = vmul.f32 %v193, %v309
        %v326 = vmul.f32 %v194, %v310
        %v327 = vmul.f32 %v195, %v311
        %v328 = vmul.f32 %v196, %v312
        %v329 = vmul.f32 %v201, %v309
        %v330 = vmul.f32 %v202, %v310
        %v331 = vmul.f32 %v203, %v311
        %v332 = vmul.f32 %v204, %v312
        %v333 = vmul.f32 %v209, %v309
        %v334 = vmul.f32 %v210, %v310
        %v335 = vmul.f32 %v211, %v311
        %v336 = vmul.f32 %v212, %v312
        %v337 = vmul.f32 %v217, %v309
        %v338 = vmul.f32 %v218, %v310
        %v339 = vmul.f32 %v219, %v311
        %v340 = vmul.f32 %v220, %v312
        %v341 = vmul.f32 %v225, %v309
        %v342 = vmul.f32 %v226, %v310
        %v343 = vmul.f32 %v227, %v311
        %v344 = vmul.f32 %v228, %v312
        %v345 = vadd.f32 %v313, 0.0
        %v346 = vadd.f32 %v314, 0.0
        %v347 = vadd.f32 %v315, 0.0
        %v348 = vadd.f32 %v316, 0.0
        %v349 = vadd.f32 %v317, 0.0
        %v350 = vadd.f32 %v318, 0.0
        %v351 = vadd.f32 %v319, 0.0
        %v352 = vadd.f32 %v320, 0.0
        %v353 = vadd.f32 %v321, 0.0
        %v354 = vadd.f32 %v322, 0.0
        %v355 = vadd.f32 %v323, 0.0
        %v356 = vadd.f32 %v324, 0.0
        %v357 = vadd.f32 %v325, 0.0
        %v358 = vadd.f32 %v326, 0.0
        %v359 = vadd.f32 %v327, 0.0
        %v360 = vadd.f32 %v328, 0.0
        %v361 = vadd.f32 %v329, 0.0
        %v362 = vadd.f32 %v330, 0.0
        %v363 = vadd.f32 %v331, 0.0
        %v364 = vadd.f32 %v332, 0.0
        %v365 = vadd.f32 %v333, 0.0
        %v366 = vadd.f32 %v334, 0.0
        %v367 = vadd.f32 %v335, 0.0
        %v368 = vadd.f32 %v336, 0.0
        %v369 = vadd.f32 %v337, 0.0
        %v370 = vadd.f32 %v338, 0.0
        %v371 = vadd.f32 %v339, 0.0
        %v372 = vadd.f32 %v340, 0.0
        %v373 = vadd.f32 %v341, 0.0
        %v374 = vadd.f32 %v342, 0.0
        %v375 = vadd.f32 %v343, 0.0
        %v376 = vadd.f32 %v344, 0.0
        %v377 = vperm.slane %v281, 1
        %v378 = vperm.slane %v282, 1
        %v379 = vperm.slane %v283, 1
        %v380 = vperm.slane %v284, 1
        %v381 = vmul.f32 %v169, %v377
        %v382 = vmul.f32 %v170, %v378
        %v383 = vmul.f32 %v171, %v379
        %v384 = vmul.f32 %v172, %v380
        %v385 = vmul.f32 %v173, %v377
        %v386 = vmul.f32 %v174, %v378
        %v387 = vmul.f32 %v175, %v379
        %v388 = vmul.f32 %v176, %v380
        %v389 = vmul.f32 %v177, %v377
        %v390 = vmul.f32 %v178, %v378
        %v391 = vmul.f32 %v179, %v379
        %v392 = vmul.f32 %v180, %v380
        %v393 = vmul.f32 %v181, %v377
        %v394 = vmul.f32 %v182, %v378
        %v395 = vmul.f32 %v183, %v379
        %v396 = vmul.f32 %v184, %v380
        %v397 = vmul.f32 %v185, %v377
        %v398 = vmul.f32 %v186, %v378
        %v399 = vmul.f32 %v187, %v379
        %v400 = vmul.f32 %v188, %v380
        %v401 = vmul.f32 %v189, %v377
        %v402 = vmul.f32 %v190, %v378
        %v403 = vmul.f32 %v191, %v379
        %v404 = vmul.f32 %v192, %v380
        %v405 = vmul.f32 %v193, %v377
        %v406 = vmul.f32 %v194, %v378
        %v407 = vmul.f32 %v195, %v379
        %v408 = vmul.f32 %v196, %v380
        %v409 = vmul.f32 %v197, %v377
        %v410 = vmul.f32 %v198, %v378
        %v411 = vmul.f32 %v199, %v379
        %v412 = vmul.f32 %v200, %v380
        %v413 = vmul.f32 %v201, %v377
        %v414 = vmul.f32 %v202, %v378
        %v415 = vmul.f32 %v203, %v379
        %v416 = vmul.f32 %v204, %v380
        %v417 = vmul.f32 %v205, %v377
        %v418 = vmul.f32 %v206, %v378
        %v419 = vmul.f32 %v207, %v379
        %v420 = vmul.f32 %v208, %v380
        %v421 = vmul.f32 %v209, %v377
        %v422 = vmul.f32 %v210, %v378
        %v423 = vmul.f32 %v211, %v379
        %v424 = vmul.f32 %v212, %v380
        %v425 = vmul.f32 %v213, %v377
        %v426 = vmul.f32 %v214, %v378
        %v427 = vmul.f32 %v215, %v379
        %v428 = vmul.f32 %v216, %v380
        %v429 = vmul.f32 %v217, %v377
        %v430 = vmul.f32 %v218, %v378
        %v431 = vmul.f32 %v219, %v379
        %v432 = vmul.f32 %v220, %v380
        %v433 = vmul.f32 %v221, %v377
        %v434 = vmul.f32 %v222, %v378
        %v435 = vmul.f32 %v223, %v379
        %v436 = vmul.f32 %v224, %v380
        %v437 = vmul.f32 %v225, %v377
        %v438 = vmul.f32 %v226, %v378
        %v439 = vmul.f32 %v227, %v379
        %v440 = vmul.f32 %v228, %v380
        %v441 = vmul.f32 %v229, %v377
        %v442 = vmul.f32 %v230, %v378
        %v443 = vmul.f32 %v231, %v379
        %v444 = vmul.f32 %v232, %v380
        %vm509 = vcmask 1046528
        %v510 = vrot.slane %v381, 1
        %v511 = vrot.slane %v385, 1
        %v512 = vsel %vm509, %v510, %v511
        %v513 = vrot.slane %v382, 1
        %v514 = vrot.slane %v386, 1
        %v515 = vsel %vm509, %v513, %v514
        %v516 = vrot.slane %v383, 1
        %v517 = vrot.slane %v387, 1
        %v518 = vsel %vm509, %v516, %v517
        %v519 = vrot.slane %v384, 1
        %v520 = vrot.slane %v388, 1
        %v521 = vsel %vm509, %v519, %v520
        %v522 = vrot.slane %v389, 1
        %v523 = vrot.slane %v393, 1
        %v524 = vsel %vm509, %v522, %v523
        %v525 = vrot.slane %v390, 1
        %v526 = vrot.slane %v394, 1
        %v527 = vsel %vm509, %v525, %v526
        %v528 = vrot.slane %v391, 1
        %v529 = vrot.slane %v395, 1
        %v530 = vsel %vm509, %v528, %v529
        %v531 = vrot.slane %v392, 1
        %v532 = vrot.slane %v396, 1
        %v533 = vsel %vm509, %v531, %v532
        %v534 = vrot.slane %v397, 1
        %v535 = vrot.slane %v401, 1
        %v536 = vsel %vm509, %v534, %v535
        %v537 = vrot.slane %v398, 1
        %v538 = vrot.slane %v402, 1
        %v539 = vsel %vm509, %v537, %v538
        %v540 = vrot.slane %v399, 1
        %v541 = vrot.slane %v403, 1
        %v542 = vsel %vm509, %v540, %v541
        %v543 = vrot.slane %v400, 1
        %v544 = vrot.slane %v404, 1
        %v545 = vsel %vm509, %v543, %v544
        %v546 = vrot.slane %v405, 1
        %v547 = vrot.slane %v409, 1
        %v548 = vsel %vm509, %v546, %v547
        %v549 = vrot.slane %v406, 1
        %v550 = vrot.slane %v410, 1
        %v551 = vsel %vm509, %v549, %v550
        %v552 = vrot.slane %v407, 1
        %v553 = vrot.slane %v411, 1
        %v554 = vsel %vm509, %v552, %v553
        %v555 = vrot.slane %v408, 1
        %v556 = vrot.slane %v412, 1
        %v557 = vsel %vm509, %v555, %v556
        %v558 = vrot.slane %v413, 1
        %v559 = vrot.slane %v417, 1
        %v560 = vsel %vm509, %v558, %v559
        %v561 = vrot.slane %v414, 1
        %v562 = vrot.slane %v418, 1
        %v563 = vsel %vm509, %v561, %v562
        %v564 = vrot.slane %v415, 1
        %v565 = vrot.slane %v419, 1
        %v566 = vsel %vm509, %v564, %v565
        %v567 = vrot.slane %v416, 1
        %v568 = vrot.slane %v420, 1
        %v569 = vsel %vm509, %v567, %v568
        %v570 = vrot.slane %v421, 1
        %v571 = vrot.slane %v425, 1
        %v572 = vsel %vm509, %v570, %v571
        %v573 = vrot.slane %v422, 1
        %v574 = vrot.slane %v426, 1
        %v575 = vsel %vm509, %v573, %v574
        %v576 = vrot.slane %v423, 1
        %v577 = vrot.slane %v427, 1
        %v578 = vsel %vm509, %v576, %v577
        %v579 = vrot.slane %v424, 1
        %v580 = vrot.slane %v428, 1
        %v581 = vsel %vm509, %v579, %v580
        %v582 = vrot.slane %v429, 1
        %v583 = vrot.slane %v433, 1
        %v584 = vsel %vm509, %v582, %v583
        %v585 = vrot.slane %v430, 1
        %v586 = vrot.slane %v434, 1
        %v587 = vsel %vm509, %v585, %v586
        %v588 = vrot.slane %v431, 1
        %v589 = vrot.slane %v435, 1
        %v590 = vsel %vm509, %v588, %v589
        %v591 = vrot.slane %v432, 1
        %v592 = vrot.slane %v436, 1
        %v593 = vsel %vm509, %v591, %v592
        %v594 = vrot.slane %v437, 1
        %v595 = vrot.slane %v441, 1
        %v596 = vsel %vm509, %v594, %v595
        %v597 = vrot.slane %v438, 1
        %v598 = vrot.slane %v442, 1
        %v599 = vsel %vm509, %v597, %v598
        %v600 = vrot.slane %v439, 1
        %v601 = vrot.slane %v443, 1
        %v602 = vsel %vm509, %v600, %v601
        %v603 = vrot.slane %v440, 1
        %v604 = vrot.slane %v444, 1
        %v605 = vsel %vm509, %v603, %v604
        %v638 = vadd.f32 %v345, %v512
        %v639 = vadd.f32 %v346, %v515
        %v640 = vadd.f32 %v347, %v518
        %v641 = vadd.f32 %v348, %v521
        %v642 = vadd.f32 %v349, %v524
        %v643 = vadd.f32 %v350, %v527
        %v644 = vadd.f32 %v351, %v530
        %v645 = vadd.f32 %v352, %v533
        %v646 = vadd.f32 %v353, %v536
        %v647 = vadd.f32 %v354, %v539
        %v648 = vadd.f32 %v355, %v542
        %v649 = vadd.f32 %v356, %v545
        %v650 = vadd.f32 %v357, %v548
        %v651 = vadd.f32 %v358, %v551
        %v652 = vadd.f32 %v359, %v554
        %v653 = vadd.f32 %v360, %v557
        %v654 = vadd.f32 %v361, %v560
        %v655 = vadd.f32 %v362, %v563
        %v656 = vadd.f32 %v363, %v566
        %v657 = vadd.f32 %v364, %v569
        %v658 = vadd.f32 %v365, %v572
        %v659 = vadd.f32 %v366, %v575
        %v660 = vadd.f32 %v367, %v578
        %v661 = vadd.f32 %v368, %v581
        %v662 = vadd.f32 %v369, %v584
        %v663 = vadd.f32 %v370, %v587
        %v664 = vadd.f32 %v371, %v590
        %v665 = vadd.f32 %v372, %v593
        %v666 = vadd.f32 %v373, %v596
        %v667 = vadd.f32 %v374, %v599
        %v668 = vadd.f32 %v375, %v602
        %v669 = vadd.f32 %v376, %v605
        %v670 = vperm.slane %v281, 2
        %v671 = vperm.slane %v282, 2
        %v672 = vperm.slane %v283, 2
        %v673 = vperm.slane %v284, 2
        %v674 = vmul.f32 %v169, %v670
        %v675 = vmul.f32 %v170, %v671
        %v676 = vmul.f32 %v171, %v672
        %v677 = vmul.f32 %v172, %v673
        %v678 = vmul.f32 %v173, %v670
        %v679 = vmul.f32 %v174, %v671
        %v680 = vmul.f32 %v175, %v672
        %v681 = vmul.f32 %v176, %v673
        %v682 = vmul.f32 %v177, %v670
        %v683 = vmul.f32 %v178, %v671
        %v684 = vmul.f32 %v179, %v672
        %v685 = vmul.f32 %v180, %v673
        %v686 = vmul.f32 %v181, %v670
        %v687 = vmul.f32 %v182, %v671
        %v688 = vmul.f32 %v183, %v672
        %v689 = vmul.f32 %v184, %v673
        %v690 = vmul.f32 %v185, %v670
        %v691 = vmul.f32 %v186, %v671
        %v692 = vmul.f32 %v187, %v672
        %v693 = vmul.f32 %v188, %v673
        %v694 = vmul.f32 %v189, %v670
        %v695 = vmul.f32 %v190, %v671
        %v696 = vmul.f32 %v191, %v672
        %v697 = vmul.f32 %v192, %v673
        %v698 = vmul.f32 %v193, %v670
        %v699 = vmul.f32 %v194, %v671
        %v700 = vmul.f32 %v195, %v672
        %v701 = vmul.f32 %v196, %v673
        %v702 = vmul.f32 %v197, %v670
        %v703 = vmul.f32 %v198, %v671
        %v704 = vmul.f32 %v199, %v672
        %v705 = vmul.f32 %v200, %v673
        %v706 = vmul.f32 %v201, %v670
        %v707 = vmul.f32 %v202, %v671
        %v708 = vmul.f32 %v203, %v672
        %v709 = vmul.f32 %v204, %v673
        %v710 = vmul.f32 %v205, %v670
        %v711 = vmul.f32 %v206, %v671
        %v712 = vmul.f32 %v207, %v672
        %v713 = vmul.f32 %v208, %v673
        %v714 = vmul.f32 %v209, %v670
        %v715 = vmul.f32 %v210, %v671
        %v716 = vmul.f32 %v211, %v672
        %v717 = vmul.f32 %v212, %v673
        %v718 = vmul.f32 %v213, %v670
        %v719 = vmul.f32 %v214, %v671
        %v720 = vmul.f32 %v215, %v672
        %v721 = vmul.f32 %v216, %v673
        %v722 = vmul.f32 %v217, %v670
        %v723 = vmul.f32 %v218, %v671
        %v724 = vmul.f32 %v219, %v672
        %v725 = vmul.f32 %v220, %v673
        %v726 = vmul.f32 %v221, %v670
        %v727 = vmul.f32 %v222, %v671
        %v728 = vmul.f32 %v223, %v672
        %v729 = vmul.f32 %v224, %v673
        %v730 = vmul.f32 %v225, %v670
        %v731 = vmul.f32 %v226, %v671
        %v732 = vmul.f32 %v227, %v672
        %v733 = vmul.f32 %v228, %v673
        %v734 = vmul.f32 %v229, %v670
        %v735 = vmul.f32 %v230, %v671
        %v736 = vmul.f32 %v231, %v672
        %v737 = vmul.f32 %v232, %v673
        %vm802 = vcmask 1045504
        %v803 = vrot.slane %v674, 2
        %v804 = vrot.slane %v678, 2
        %v805 = vsel %vm802, %v803, %v804
        %v806 = vrot.slane %v675, 2
        %v807 = vrot.slane %v679, 2
        %v808 = vsel %vm802, %v806, %v807
        %v809 = vrot.slane %v676, 2
        %v810 = vrot.slane %v680, 2
        %v811 = vsel %vm802, %v809, %v810
        %v812 = vrot.slane %v677, 2
        %v813 = vrot.slane %v681, 2
        %v814 = vsel %vm802, %v812, %v813
        %v815 = vrot.slane %v682, 2
        %v816 = vrot.slane %v686, 2
        %v817 = vsel %vm802, %v815, %v816
        %v818 = vrot.slane %v683, 2
        %v819 = vrot.slane %v687, 2
        %v820 = vsel %vm802, %v818, %v819
        %v821 = vrot.slane %v684, 2
        %v822 = vrot.slane %v688, 2
        %v823 = vsel %vm802, %v821, %v822
        %v824 = vrot.slane %v685, 2
        %v825 = vrot.slane %v689, 2
        %v826 = vsel %vm802, %v824, %v825
        %v827 = vrot.slane %v690, 2
        %v828 = vrot.slane %v694, 2
        %v829 = vsel %vm802, %v827, %v828
        %v830 = vrot.slane %v691, 2
        %v831 = vrot.slane %v695, 2
        %v832 = vsel %vm802, %v830, %v831
        %v833 = vrot.slane %v692, 2
        %v834 = vrot.slane %v696, 2
        %v835 = vsel %vm802, %v833, %v834
        %v836 = vrot.slane %v693, 2
        %v837 = vrot.slane %v697, 2
        %v838 = vsel %vm802, %v836, %v837
        %v839 = vrot.slane %v698, 2
        %v840 = vrot.slane %v702, 2
        %v841 = vsel %vm802, %v839, %v840
        %v842 = vrot.slane %v699, 2
        %v843 = vrot.slane %v703, 2
        %v844 = vsel %vm802, %v842, %v843
        %v845 = vrot.slane %v700, 2
        %v846 = vrot.slane %v704, 2
        %v847 = vsel %vm802, %v845, %v846
        %v848 = vrot.slane %v701, 2
        %v849 = vrot.slane %v705, 2
        %v850 = vsel %vm802, %v848, %v849
        %v851 = vrot.slane %v706, 2
        %v852 = vrot.slane %v710, 2
        %v853 = vsel %vm802, %v851, %v852
        %v854 = vrot.slane %v707, 2
        %v855 = vrot.slane %v711, 2
        %v856 = vsel %vm802, %v854, %v855
        %v857 = vrot.slane %v708, 2
        %v858 = vrot.slane %v712, 2
        %v859 = vsel %vm802, %v857, %v858
        %v860 = vrot.slane %v709, 2
        %v861 = vrot.slane %v713, 2
        %v862 = vsel %vm802, %v860, %v861
        %v863 = vrot.slane %v714, 2
        %v864 = vrot.slane %v718, 2
        %v865 = vsel %vm802, %v863, %v864
        %v866 = vrot.slane %v715, 2
        %v867 = vrot.slane %v719, 2
        %v868 = vsel %vm802, %v866, %v867
        %v869 = vrot.slane %v716, 2
        %v870 = vrot.slane %v720, 2
        %v871 = vsel %vm802, %v869, %v870
        %v872 = vrot.slane %v717, 2
        %v873 = vrot.slane %v721, 2
        %v874 = vsel %vm802, %v872, %v873
        %v875 = vrot.slane %v722, 2
        %v876 = vrot.slane %v726, 2
        %v877 = vsel %vm802, %v875, %v876
        %v878 = vrot.slane %v723, 2
        %v879 = vrot.slane %v727, 2
        %v880 = vsel %vm802, %v878, %v879
        %v881 = vrot.slane %v724, 2
        %v882 = vrot.slane %v728, 2
        %v883 = vsel %vm802, %v881, %v882
        %v884 = vrot.slane %v725, 2
        %v885 = vrot.slane %v729, 2
        %v886 = vsel %vm802, %v884, %v885
        %v887 = vrot.slane %v730, 2
        %v888 = vrot.slane %v734, 2
        %v889 = vsel %vm802, %v887, %v888
        %v890 = vrot.slane %v731, 2
        %v891 = vrot.slane %v735, 2
        %v892 = vsel %vm802, %v890, %v891
        %v893 = vrot.slane %v732, 2
        %v894 = vrot.slane %v736, 2
        %v895 = vsel %vm802, %v893, %v894
        %v896 = vrot.slane %v733, 2
        %v897 = vrot.slane %v737, 2
        %v898 = vsel %vm802, %v896, %v897
        %v931 = vadd.f32 %v638, %v805
        %v932 = vadd.f32 %v639, %v808
        %v933 = vadd.f32 %v640, %v811
        %v934 = vadd.f32 %v641, %v814
        %v935 = vadd.f32 %v642, %v817
        %v936 = vadd.f32 %v643, %v820
        %v937 = vadd.f32 %v644, %v823
        %v938 = vadd.f32 %v645, %v826
        %v939 = vadd.f32 %v646, %v829
        %v940 = vadd.f32 %v647, %v832
        %v941 = vadd.f32 %v648, %v835
        %v942 = vadd.f32 %v649, %v838
        %v943 = vadd.f32 %v650, %v841
        %v944 = vadd.f32 %v651, %v844
        %v945 = vadd.f32 %v652, %v847
        %v946 = vadd.f32 %v653, %v850
        %v947 = vadd.f32 %v654, %v853
        %v948 = vadd.f32 %v655, %v856
        %v949 = vadd.f32 %v656, %v859
        %v950 = vadd.f32 %v657, %v862
        %v951 = vadd.f32 %v658, %v865
        %v952 = vadd.f32 %v659, %v868
        %v953 = vadd.f32 %v660, %v871
        %v954 = vadd.f32 %v661, %v874
        %v955 = vadd.f32 %v662, %v877
        %v956 = vadd.f32 %v663, %v880
        %v957 = vadd.f32 %v664, %v883
        %v958 = vadd.f32 %v665, %v886
        %v959 = vadd.f32 %v666, %v889
        %v960 = vadd.f32 %v667, %v892
        %v961 = vadd.f32 %v668, %v895
        %v962 = vadd.f32 %v669, %v898
        %v963 = vperm.slane %v281, 3
        %v964 = vperm.slane %v282, 3
        %v965 = vperm.slane %v283, 3
        %v966 = vperm.slane %v284, 3
        %v967 = vmul.f32 %v169, %v963
        %v968 = vmul.f32 %v170, %v964
        %v969 = vmul.f32 %v171, %v965
        %v970 = vmul.f32 %v172, %v966
        %v971 = vmul.f32 %v173, %v963
        %v972 = vmul.f32 %v174, %v964
        %v973 = vmul.f32 %v175, %v965
        %v974 = vmul.f32 %v176, %v966
        %v975 = vmul.f32 %v177, %v963
        %v976 = vmul.f32 %v178, %v964
        %v977 = vmul.f32 %v179, %v965
        %v978 = vmul.f32 %v180, %v966
        %v979 = vmul.f32 %v181, %v963
        %v980 = vmul.f32 %v182, %v964
        %v981 = vmul.f32 %v183, %v965
        %v982 = vmul.f32 %v184, %v966
        %v983 = vmul.f32 %v185, %v963
        %v984 = vmul.f32 %v186, %v964
        %v985 = vmul.f32 %v187, %v965
        %v986 = vmul.f32 %v188, %v966
        %v987 = vmul.f32 %v189, %v963
        %v988 = vmul.f32 %v190, %v964
        %v989 = vmul.f32 %v191, %v965
        %v990 = vmul.f32 %v192, %v966
        %v991 = vmul.f32 %v193, %v963
        %v992 = vmul.f32 %v194, %v964
        %v993 = vmul.f32 %v195, %v965
        %v994 = vmul.f32 %v196, %v966
        %v995 = vmul.f32 %v197, %v963
        %v996 = vmul.f32 %v198, %v964
        %v997 = vmul.f32 %v199, %v965
        %v998 = vmul.f32 %v200, %v966
        %v999 = vmul.f32 %v201, %v963
        %v1000 = vmul.f32 %v202, %v964
        %v1001 = vmul.f32 %v203, %v965
        %v1002 = vmul.f32 %v204, %v966
        %v1003 = vmul.f32 %v205, %v963
        %v1004 = vmul.f32 %v206, %v964
        %v1005 = vmul.f32 %v207, %v965
        %v1006 = vmul.f32 %v208, %v966
        %v1007 = vmul.f32 %v209, %v963
        %v1008 = vmul.f32 %v210, %v964
        %v1009 = vmul.f32 %v211, %v965
        %v1010 = vmul.f32 %v212, %v966
        %v1011 = vmul.f32 %v213, %v963
        %v1012 = vmul.f32 %v214, %v964
        %v1013 = vmul.f32 %v215, %v965
        %v1014 = vmul.f32 %v216, %v966
        %v1015 = vmul.f32 %v217, %v963
        %v1016 = vmul.f32 %v218, %v964
        %v1017 = vmul.f32 %v219, %v965
        %v1018 = vmul.f32 %v220, %v966
        %v1019 = vmul.f32 %v221, %v963
        %v1020 = vmul.f32 %v222, %v964
        %v1021 = vmul.f32 %v223, %v965
        %v1022 = vmul.f32 %v224, %v966
        %v1023 = vmul.f32 %v225, %v963
        %v1024 = vmul.f32 %v226, %v964
        %v1025 = vmul.f32 %v227, %v965
        %v1026 = vmul.f32 %v228, %v966
        %v1027 = vmul.f32 %v229, %v963
        %v1028 = vmul.f32 %v230, %v964
        %v1029 = vmul.f32 %v231, %v965
        %v1030 = vmul.f32 %v232, %v966
        %vm1095 = vcmask 1044480
        %v1096 = vrot.slane %v967, 3
        %v1097 = vrot.slane %v971, 3
        %v1098 = vsel %vm1095, %v1096, %v1097
        %v1099 = vrot.slane %v968, 3
        %v1100 = vrot.slane %v972, 3
        %v1101 = vsel %vm1095, %v1099, %v1100
        %v1102 = vrot.slane %v969, 3
        %v1103 = vrot.slane %v973, 3
        %v1104 = vsel %vm1095, %v1102, %v1103
        %v1105 = vrot.slane %v970, 3
        %v1106 = vrot.slane %v974, 3
        %v1107 = vsel %vm1095, %v1105, %v1106
        %v1108 = vrot.slane %v975, 3
        %v1109 = vrot.slane %v979, 3
        %v1110 = vsel %vm1095, %v1108, %v1109
        %v1111 = vrot.slane %v976, 3
        %v1112 = vrot.slane %v980, 3
        %v1113 = vsel %vm1095, %v1111, %v1112
        %v1114 = vrot.slane %v977, 3
        %v1115 = vrot.slane %v981, 3
        %v1116 = vsel %vm1095, %v1114, %v1115
        %v1117 = vrot.slane %v978, 3
        %v1118 = vrot.slane %v982, 3
        %v1119 = vsel %vm1095, %v1117, %v1118
        %v1120 = vrot.slane %v983, 3
        %v1121 = vrot.slane %v987, 3
        %v1122 = vsel %vm1095, %v1120, %v1121
        %v1123 = vrot.slane %v984, 3
        %v1124 = vrot.slane %v988, 3
        %v1125 = vsel %vm1095, %v1123, %v1124
        %v1126 = vrot.slane %v985, 3
        %v1127 = vrot.slane %v989, 3
        %v1128 = vsel %vm1095, %v1126, %v1127
        %v1129 = vrot.slane %v986, 3
        %v1130 = vrot.slane %v990, 3
        %v1131 = vsel %vm1095, %v1129, %v1130
        %v1132 = vrot.slane %v991, 3
        %v1133 = vrot.slane %v995, 3
        %v1134 = vsel %vm1095, %v1132, %v1133
        %v1135 = vrot.slane %v992, 3
        %v1136 = vrot.slane %v996, 3
        %v1137 = vsel %vm1095, %v1135, %v1136
        %v1138 = vrot.slane %v993, 3
        %v1139 = vrot.slane %v997, 3
        %v1140 = vsel %vm1095, %v1138, %v1139
        %v1141 = vrot.slane %v994, 3
        %v1142 = vrot.slane %v998, 3
        %v1143 = vsel %vm1095, %v1141, %v1142
        %v1144 = vrot.slane %v999, 3
        %v1145 = vrot.slane %v1003, 3
        %v1146 = vsel %vm1095, %v1144, %v1145
        %v1147 = vrot.slane %v1000, 3
        %v1148 = vrot.slane %v1004, 3
        %v1149 = vsel %vm1095, %v1147, %v1148
        %v1150 = vrot.slane %v1001, 3
        %v1151 = vrot.slane %v1005, 3
        %v1152 = vsel %vm1095, %v1150, %v1151
        %v1153 = vrot.slane %v1002, 3
        %v1154 = vrot.slane %v1006, 3
        %v1155 = vsel %vm1095, %v1153, %v1154
        %v1156 = vrot.slane %v1007, 3
        %v1157 = vrot.slane %v1011, 3
        %v1158 = vsel %vm1095, %v1156, %v1157
        %v1159 = vrot.slane %v1008, 3
        %v1160 = vrot.slane %v1012, 3
        %v1161 = vsel %vm1095, %v1159, %v1160
        %v1162 = vrot.slane %v1009, 3
        %v1163 = vrot.slane %v1013, 3
        %v1164 = vsel %vm1095, %v1162, %v1163
        %v1165 = vrot.slane %v1010, 3
        %v1166 = vrot.slane %v1014, 3
        %v1167 = vsel %vm1095, %v1165, %v1166
        %v1168 = vrot.slane %v1015, 3
        %v1169 = vrot.slane %v1019, 3
        %v1170 = vsel %vm1095, %v1168, %v1169
        %v1171 = vrot.slane %v1016, 3
        %v1172 = vrot.slane %v1020, 3
        %v1173 = vsel %vm1095, %v1171, %v1172
        %v1174 = vrot.slane %v1017, 3
        %v1175 = vrot.slane %v1021, 3
        %v1176 = vsel %vm1095, %v1174, %v1175
        %v1177 = vrot.slane %v1018, 3
        %v1178 = vrot.slane %v1022, 3
        %v1179 = vsel %vm1095, %v1177, %v1178
        %v1180 = vrot.slane %v1023, 3
        %v1181 = vrot.slane %v1027, 3
        %v1182 = vsel %vm1095, %v1180, %v1181
        %v1183 = vrot.slane %v1024, 3
        %v1184 = vrot.slane %v1028, 3
        %v1185 = vsel %vm1095, %v1183, %v1184
        %v1186 = vrot.slane %v1025, 3
        %v1187 = vrot.slane %v1029, 3
        %v1188 = vsel %vm1095, %v1186, %v1187
        %v1189 = vrot.slane %v1026, 3
        %v1190 = vrot.slane %v1030, 3
        %v1191 = vsel %vm1095, %v1189, %v1190
        %v1224 = vadd.f32 %v931, %v1098
        %v1225 = vadd.f32 %v932, %v1101
        %v1226 = vadd.f32 %v933, %v1104
        %v1227 = vadd.f32 %v934, %v1107
        %v1228 = vadd.f32 %v935, %v1110
        %v1229 = vadd.f32 %v936, %v1113
        %v1230 = vadd.f32 %v937, %v1116
        %v1231 = vadd.f32 %v938, %v1119
        %v1232 = vadd.f32 %v939, %v1122
        %v1233 = vadd.f32 %v940, %v1125
        %v1234 = vadd.f32 %v941, %v1128
        %v1235 = vadd.f32 %v942, %v1131
        %v1236 = vadd.f32 %v943, %v1134
        %v1237 = vadd.f32 %v944, %v1137
        %v1238 = vadd.f32 %v945, %v1140
        %v1239 = vadd.f32 %v946, %v1143
        %v1240 = vadd.f32 %v947, %v1146
        %v1241 = vadd.f32 %v948, %v1149
        %v1242 = vadd.f32 %v949, %v1152
        %v1243 = vadd.f32 %v950, %v1155
        %v1244 = vadd.f32 %v951, %v1158
        %v1245 = vadd.f32 %v952, %v1161
        %v1246 = vadd.f32 %v953, %v1164
        %v1247 = vadd.f32 %v954, %v1167
        %v1248 = vadd.f32 %v955, %v1170
        %v1249 = vadd.f32 %v956, %v1173
        %v1250 = vadd.f32 %v957, %v1176
        %v1251 = vadd.f32 %v958, %v1179
        %v1252 = vadd.f32 %v959, %v1182
        %v1253 = vadd.f32 %v960, %v1185
        %v1254 = vadd.f32 %v961, %v1188
        %v1255 = vadd.f32 %v962, %v1191
        %v1256 = vperm.slane %v281, 4
        %v1257 = vperm.slane %v282, 4
        %v1258 = vperm.slane %v283, 4
        %v1259 = vperm.slane %v284, 4
        %v1260 = vmul.f32 %v169, %v1256
        %v1261 = vmul.f32 %v170, %v1257
        %v1262 = vmul.f32 %v171, %v1258
        %v1263 = vmul.f32 %v172, %v1259
        %v1264 = vmul.f32 %v173, %v1256
        %v1265 = vmul.f32 %v174, %v1257
        %v1266 = vmul.f32 %v175, %v1258
        %v1267 = vmul.f32 %v176, %v1259
        %v1268 = vmul.f32 %v177, %v1256
        %v1269 = vmul.f32 %v178, %v1257
        %v1270 = vmul.f32 %v179, %v1258
        %v1271 = vmul.f32 %v180, %v1259
        %v1272 = vmul.f32 %v181, %v1256
        %v1273 = vmul.f32 %v182, %v1257
        %v1274 = vmul.f32 %v183, %v1258
        %v1275 = vmul.f32 %v184, %v1259
        %v1276 = vmul.f32 %v185, %v1256
        %v1277 = vmul.f32 %v186, %v1257
        %v1278 = vmul.f32 %v187, %v1258
        %v1279 = vmul.f32 %v188, %v1259
        %v1280 = vmul.f32 %v189, %v1256
        %v1281 = vmul.f32 %v190, %v1257
        %v1282 = vmul.f32 %v191, %v1258
        %v1283 = vmul.f32 %v192, %v1259
        %v1284 = vmul.f32 %v193, %v1256
        %v1285 = vmul.f32 %v194, %v1257
        %v1286 = vmul.f32 %v195, %v1258
        %v1287 = vmul.f32 %v196, %v1259
        %v1288 = vmul.f32 %v197, %v1256
        %v1289 = vmul.f32 %v198, %v1257
        %v1290 = vmul.f32 %v199, %v1258
        %v1291 = vmul.f32 %v200, %v1259
        %v1292 = vmul.f32 %v201, %v1256
        %v1293 = vmul.f32 %v202, %v1257
        %v1294 = vmul.f32 %v203, %v1258
        %v1295 = vmul.f32 %v204, %v1259
        %v1296 = vmul.f32 %v205, %v1256
        %v1297 = vmul.f32 %v206, %v1257
        %v1298 = vmul.f32 %v207, %v1258
        %v1299 = vmul.f32 %v208, %v1259
        %v1300 = vmul.f32 %v209, %v1256
        %v1301 = vmul.f32 %v210, %v1257
        %v1302 = vmul.f32 %v211, %v1258
        %v1303 = vmul.f32 %v212, %v1259
        %v1304 = vmul.f32 %v213, %v1256
        %v1305 = vmul.f32 %v214, %v1257
        %v1306 = vmul.f32 %v215, %v1258
        %v1307 = vmul.f32 %v216, %v1259
        %v1308 = vmul.f32 %v217, %v1256
        %v1309 = vmul.f32 %v218, %v1257
        %v1310 = vmul.f32 %v219, %v1258
        %v1311 = vmul.f32 %v220, %v1259
        %v1312 = vmul.f32 %v221, %v1256
        %v1313 = vmul.f32 %v222, %v1257
        %v1314 = vmul.f32 %v223, %v1258
        %v1315 = vmul.f32 %v224, %v1259
        %v1316 = vmul.f32 %v225, %v1256
        %v1317 = vmul.f32 %v226, %v1257
        %v1318 = vmul.f32 %v227, %v1258
        %v1319 = vmul.f32 %v228, %v1259
        %v1320 = vmul.f32 %v229, %v1256
        %v1321 = vmul.f32 %v230, %v1257
        %v1322 = vmul.f32 %v231, %v1258
        %v1323 = vmul.f32 %v232, %v1259
        %vm1388 = vcmask 1043456
        %v1389 = vrot.slane %v1260, 4
        %v1390 = vrot.slane %v1264, 4
        %v1391 = vsel %vm1388, %v1389, %v1390
        %v1392 = vrot.slane %v1261, 4
        %v1393 = vrot.slane %v1265, 4
        %v1394 = vsel %vm1388, %v1392, %v1393
        %v1395 = vrot.slane %v1262, 4
        %v1396 = vrot.slane %v1266, 4
        %v1397 = vsel %vm1388, %v1395, %v1396
        %v1398 = vrot.slane %v1263, 4
        %v1399 = vrot.slane %v1267, 4
        %v1400 = vsel %vm1388, %v1398, %v1399
        %v1401 = vrot.slane %v1268, 4
        %v1402 = vrot.slane %v1272, 4
        %v1403 = vsel %vm1388, %v1401, %v1402
        %v1404 = vrot.slane %v1269, 4
        %v1405 = vrot.slane %v1273, 4
        %v1406 = vsel %vm1388, %v1404, %v1405
        %v1407 = vrot.slane %v1270, 4
        %v1408 = vrot.slane %v1274, 4
        %v1409 = vsel %vm1388, %v1407, %v1408
        %v1410 = vrot.slane %v1271, 4
        %v1411 = vrot.slane %v1275, 4
        %v1412 = vsel %vm1388, %v1410, %v1411
        %v1413 = vrot.slane %v1276, 4
        %v1414 = vrot.slane %v1280, 4
        %v1415 = vsel %vm1388, %v1413, %v1414
        %v1416 = vrot.slane %v1277, 4
        %v1417 = vrot.slane %v1281, 4
        %v1418 = vsel %vm1388, %v1416, %v1417
        %v1419 = vrot.slane %v1278, 4
        %v1420 = vrot.slane %v1282, 4
        %v1421 = vsel %vm1388, %v1419, %v1420
        %v1422 = vrot.slane %v1279, 4
        %v1423 = vrot.slane %v1283, 4
        %v1424 = vsel %vm1388, %v1422, %v1423
        %v1425 = vrot.slane %v1284, 4
        %v1426 = vrot.slane %v1288, 4
        %v1427 = vsel %vm1388, %v1425, %v1426
        %v1428 = vrot.slane %v1285, 4
        %v1429 = vrot.slane %v1289, 4
        %v1430 = vsel %vm1388, %v1428, %v1429
        %v1431 = vrot.slane %v1286, 4
        %v1432 = vrot.slane %v1290, 4
        %v1433 = vsel %vm1388, %v1431, %v1432
        %v1434 = vrot.slane %v1287, 4
        %v1435 = vrot.slane %v1291, 4
        %v1436 = vsel %vm1388, %v1434, %v1435
        %v1437 = vrot.slane %v1292, 4
        %v1438 = vrot.slane %v1296, 4
        %v1439 = vsel %vm1388, %v1437, %v1438
        %v1440 = vrot.slane %v1293, 4
        %v1441 = vrot.slane %v1297, 4
        %v1442 = vsel %vm1388, %v1440, %v1441
        %v1443 = vrot.slane %v1294, 4
        %v1444 = vrot.slane %v1298, 4
        %v1445 = vsel %vm1388, %v1443, %v1444
        %v1446 = vrot.slane %v1295, 4
        %v1447 = vrot.slane %v1299, 4
        %v1448 = vsel %vm1388, %v1446, %v1447
        %v1449 = vrot.slane %v1300, 4
        %v1450 = vrot.slane %v1304, 4
        %v1451 = vsel %vm1388, %v1449, %v1450
        %v1452 = vrot.slane %v1301, 4
        %v1453 = vrot.slane %v1305, 4
        %v1454 = vsel %vm1388, %v1452, %v1453
        %v1455 = vrot.slane %v1302, 4
        %v1456 = vrot.slane %v1306, 4
        %v1457 = vsel %vm1388, %v1455, %v1456
        %v1458 = vrot.slane %v1303, 4
        %v1459 = vrot.slane %v1307, 4
        %v1460 = vsel %vm1388, %v1458, %v1459
        %v1461 = vrot.slane %v1308, 4
        %v1462 = vrot.slane %v1312, 4
        %v1463 = vsel %vm1388, %v1461, %v1462
        %v1464 = vrot.slane %v1309, 4
        %v1465 = vrot.slane %v1313, 4
        %v1466 = vsel %vm1388, %v1464, %v1465
        %v1467 = vrot.slane %v1310, 4
        %v1468 = vrot.slane %v1314, 4
        %v1469 = vsel %vm1388, %v1467, %v1468
        %v1470 = vrot.slane %v1311, 4
        %v1471 = vrot.slane %v1315, 4
        %v1472 = vsel %vm1388, %v1470, %v1471
        %v1473 = vrot.slane %v1316, 4
        %v1474 = vrot.slane %v1320, 4
        %v1475 = vsel %vm1388, %v1473, %v1474
        %v1476 = vrot.slane %v1317, 4
        %v1477 = vrot.slane %v1321, 4
        %v1478 = vsel %vm1388, %v1476, %v1477
        %v1479 = vrot.slane %v1318, 4
        %v1480 = vrot.slane %v1322, 4
        %v1481 = vsel %vm1388, %v1479, %v1480
        %v1482 = vrot.slane %v1319, 4
        %v1483 = vrot.slane %v1323, 4
        %v1484 = vsel %vm1388, %v1482, %v1483
        %v1517 = vadd.f32 %v1224, %v1391
        %v1518 = vadd.f32 %v1225, %v1394
        %v1519 = vadd.f32 %v1226, %v1397
        %v1520 = vadd.f32 %v1227, %v1400
        %v1521 = vadd.f32 %v1228, %v1403
        %v1522 = vadd.f32 %v1229, %v1406
        %v1523 = vadd.f32 %v1230, %v1409
        %v1524 = vadd.f32 %v1231, %v1412
        %v1525 = vadd.f32 %v1232, %v1415
        %v1526 = vadd.f32 %v1233, %v1418
        %v1527 = vadd.f32 %v1234, %v1421
        %v1528 = vadd.f32 %v1235, %v1424
        %v1529 = vadd.f32 %v1236, %v1427
        %v1530 = vadd.f32 %v1237, %v1430
        %v1531 = vadd.f32 %v1238, %v1433
        %v1532 = vadd.f32 %v1239, %v1436
        %v1533 = vadd.f32 %v1240, %v1439
        %v1534 = vadd.f32 %v1241, %v1442
        %v1535 = vadd.f32 %v1242, %v1445
        %v1536 = vadd.f32 %v1243, %v1448
        %v1537 = vadd.f32 %v1244, %v1451
        %v1538 = vadd.f32 %v1245, %v1454
        %v1539 = vadd.f32 %v1246, %v1457
        %v1540 = vadd.f32 %v1247, %v1460
        %v1541 = vadd.f32 %v1248, %v1463
        %v1542 = vadd.f32 %v1249, %v1466
        %v1543 = vadd.f32 %v1250, %v1469
        %v1544 = vadd.f32 %v1251, %v1472
        %v1545 = vadd.f32 %v1252, %v1475
        %v1546 = vadd.f32 %v1253, %v1478
        %v1547 = vadd.f32 %v1254, %v1481
        %v1548 = vadd.f32 %v1255, %v1484
        %v1549 = vperm.slane %v281, 5
        %v1550 = vperm.slane %v282, 5
        %v1551 = vperm.slane %v283, 5
        %v1552 = vperm.slane %v284, 5
        %v1553 = vmul.f32 %v169, %v1549
        %v1554 = vmul.f32 %v170, %v1550
        %v1555 = vmul.f32 %v171, %v1551
        %v1556 = vmul.f32 %v172, %v1552
        %v1557 = vmul.f32 %v173, %v1549
        %v1558 = vmul.f32 %v174, %v1550
        %v1559 = vmul.f32 %v175, %v1551
        %v1560 = vmul.f32 %v176, %v1552
        %v1561 = vmul.f32 %v177, %v1549
        %v1562 = vmul.f32 %v178, %v1550
        %v1563 = vmul.f32 %v179, %v1551
        %v1564 = vmul.f32 %v180, %v1552
        %v1565 = vmul.f32 %v181, %v1549
        %v1566 = vmul.f32 %v182, %v1550
        %v1567 = vmul.f32 %v183, %v1551
        %v1568 = vmul.f32 %v184, %v1552
        %v1569 = vmul.f32 %v185, %v1549
        %v1570 = vmul.f32 %v186, %v1550
        %v1571 = vmul.f32 %v187, %v1551
        %v1572 = vmul.f32 %v188, %v1552
        %v1573 = vmul.f32 %v189, %v1549
        %v1574 = vmul.f32 %v190, %v1550
        %v1575 = vmul.f32 %v191, %v1551
        %v1576 = vmul.f32 %v192, %v1552
        %v1577 = vmul.f32 %v193, %v1549
        %v1578 = vmul.f32 %v194, %v1550
        %v1579 = vmul.f32 %v195, %v1551
        %v1580 = vmul.f32 %v196, %v1552
        %v1581 = vmul.f32 %v197, %v1549
        %v1582 = vmul.f32 %v198, %v1550
        %v1583 = vmul.f32 %v199, %v1551
        %v1584 = vmul.f32 %v200, %v1552
        %v1585 = vmul.f32 %v201, %v1549
        %v1586 = vmul.f32 %v202, %v1550
        %v1587 = vmul.f32 %v203, %v1551
        %v1588 = vmul.f32 %v204, %v1552
        %v1589 = vmul.f32 %v205, %v1549
        %v1590 = vmul.f32 %v206, %v1550
        %v1591 = vmul.f32 %v207, %v1551
        %v1592 = vmul.f32 %v208, %v1552
        %v1593 = vmul.f32 %v209, %v1549
        %v1594 = vmul.f32 %v210, %v1550
        %v1595 = vmul.f32 %v211, %v1551
        %v1596 = vmul.f32 %v212, %v1552
        %v1597 = vmul.f32 %v213, %v1549
        %v1598 = vmul.f32 %v214, %v1550
        %v1599 = vmul.f32 %v215, %v1551
        %v1600 = vmul.f32 %v216, %v1552
        %v1601 = vmul.f32 %v217, %v1549
        %v1602 = vmul.f32 %v218, %v1550
        %v1603 = vmul.f32 %v219, %v1551
        %v1604 = vmul.f32 %v220, %v1552
        %v1605 = vmul.f32 %v221, %v1549
        %v1606 = vmul.f32 %v222, %v1550
        %v1607 = vmul.f32 %v223, %v1551
        %v1608 = vmul.f32 %v224, %v1552
        %v1609 = vmul.f32 %v225, %v1549
        %v1610 = vmul.f32 %v226, %v1550
        %v1611 = vmul.f32 %v227, %v1551
        %v1612 = vmul.f32 %v228, %v1552
        %v1613 = vmul.f32 %v229, %v1549
        %v1614 = vmul.f32 %v230, %v1550
        %v1615 = vmul.f32 %v231, %v1551
        %v1616 = vmul.f32 %v232, %v1552
        %vm1681 = vcmask 1042432
        %v1682 = vrot.slane %v1553, 5
        %v1683 = vrot.slane %v1557, 5
        %v1684 = vsel %vm1681, %v1682, %v1683
        %v1685 = vrot.slane %v1554, 5
        %v1686 = vrot.slane %v1558, 5
        %v1687 = vsel %vm1681, %v1685, %v1686
        %v1688 = vrot.slane %v1555, 5
        %v1689 = vrot.slane %v1559, 5
        %v1690 = vsel %vm1681, %v1688, %v1689
        %v1691 = vrot.slane %v1556, 5
        %v1692 = vrot.slane %v1560, 5
        %v1693 = vsel %vm1681, %v1691, %v1692
        %v1694 = vrot.slane %v1561, 5
        %v1695 = vrot.slane %v1565, 5
        %v1696 = vsel %vm1681, %v1694, %v1695
        %v1697 = vrot.slane %v1562, 5
        %v1698 = vrot.slane %v1566, 5
        %v1699 = vsel %vm1681, %v1697, %v1698
        %v1700 = vrot.slane %v1563, 5
        %v1701 = vrot.slane %v1567, 5
        %v1702 = vsel %vm1681, %v1700, %v1701
        %v1703 = vrot.slane %v1564, 5
        %v1704 = vrot.slane %v1568, 5
        %v1705 = vsel %vm1681, %v1703, %v1704
        %v1706 = vrot.slane %v1569, 5
        %v1707 = vrot.slane %v1573, 5
        %v1708 = vsel %vm1681, %v1706, %v1707
        %v1709 = vrot.slane %v1570, 5
        %v1710 = vrot.slane %v1574, 5
        %v1711 = vsel %vm1681, %v1709, %v1710
        %v1712 = vrot.slane %v1571, 5
        %v1713 = vrot.slane %v1575, 5
        %v1714 = vsel %vm1681, %v1712, %v1713
        %v1715 = vrot.slane %v1572, 5
        %v1716 = vrot.slane %v1576, 5
        %v1717 = vsel %vm1681, %v1715, %v1716
        %v1718 = vrot.slane %v1577, 5
        %v1719 = vrot.slane %v1581, 5
        %v1720 = vsel %vm1681, %v1718, %v1719
        %v1721 = vrot.slane %v1578, 5
        %v1722 = vrot.slane %v1582, 5
        %v1723 = vsel %vm1681, %v1721, %v1722
        %v1724 = vrot.slane %v1579, 5
        %v1725 = vrot.slane %v1583, 5
        %v1726 = vsel %vm1681, %v1724, %v1725
        %v1727 = vrot.slane %v1580, 5
        %v1728 = vrot.slane %v1584, 5
        %v1729 = vsel %vm1681, %v1727, %v1728
        %v1730 = vrot.slane %v1585, 5
        %v1731 = vrot.slane %v1589, 5
        %v1732 = vsel %vm1681, %v1730, %v1731
        %v1733 = vrot.slane %v1586, 5
        %v1734 = vrot.slane %v1590, 5
        %v1735 = vsel %vm1681, %v1733, %v1734
        %v1736 = vrot.slane %v1587, 5
        %v1737 = vrot.slane %v1591, 5
        %v1738 = vsel %vm1681, %v1736, %v1737
        %v1739 = vrot.slane %v1588, 5
        %v1740 = vrot.slane %v1592, 5
        %v1741 = vsel %vm1681, %v1739, %v1740
        %v1742 = vrot.slane %v1593, 5
        %v1743 = vrot.slane %v1597, 5
        %v1744 = vsel %vm1681, %v1742, %v1743
        %v1745 = vrot.slane %v1594, 5
        %v1746 = vrot.slane %v1598, 5
        %v1747 = vsel %vm1681, %v1745, %v1746
        %v1748 = vrot.slane %v1595, 5
        %v1749 = vrot.slane %v1599, 5
        %v1750 = vsel %vm1681, %v1748, %v1749
        %v1751 = vrot.slane %v1596, 5
        %v1752 = vrot.slane %v1600, 5
        %v1753 = vsel %vm1681, %v1751, %v1752
        %v1754 = vrot.slane %v1601, 5
        %v1755 = vrot.slane %v1605, 5
        %v1756 = vsel %vm1681, %v1754, %v1755
        %v1757 = vrot.slane %v1602, 5
        %v1758 = vrot.slane %v1606, 5
        %v1759 = vsel %vm1681, %v1757, %v1758
        %v1760 = vrot.slane %v1603, 5
        %v1761 = vrot.slane %v1607, 5
        %v1762 = vsel %vm1681, %v1760, %v1761
        %v1763 = vrot.slane %v1604, 5
        %v1764 = vrot.slane %v1608, 5
        %v1765 = vsel %vm1681, %v1763, %v1764
        %v1766 = vrot.slane %v1609, 5
        %v1767 = vrot.slane %v1613, 5
        %v1768 = vsel %vm1681, %v1766, %v1767
        %v1769 = vrot.slane %v1610, 5
        %v1770 = vrot.slane %v1614, 5
        %v1771 = vsel %vm1681, %v1769, %v1770
        %v1772 = vrot.slane %v1611, 5
        %v1773 = vrot.slane %v1615, 5
        %v1774 = vsel %vm1681, %v1772, %v1773
        %v1775 = vrot.slane %v1612, 5
        %v1776 = vrot.slane %v1616, 5
        %v1777 = vsel %vm1681, %v1775, %v1776
        %v1810 = vadd.f32 %v1517, %v1684
        %v1811 = vadd.f32 %v1518, %v1687
        %v1812 = vadd.f32 %v1519, %v1690
        %v1813 = vadd.f32 %v1520, %v1693
        %v1814 = vadd.f32 %v1521, %v1696
        %v1815 = vadd.f32 %v1522, %v1699
        %v1816 = vadd.f32 %v1523, %v1702
        %v1817 = vadd.f32 %v1524, %v1705
        %v1818 = vadd.f32 %v1525, %v1708
        %v1819 = vadd.f32 %v1526, %v1711
        %v1820 = vadd.f32 %v1527, %v1714
        %v1821 = vadd.f32 %v1528, %v1717
        %v1822 = vadd.f32 %v1529, %v1720
        %v1823 = vadd.f32 %v1530, %v1723
        %v1824 = vadd.f32 %v1531, %v1726
        %v1825 = vadd.f32 %v1532, %v1729
        %v1826 = vadd.f32 %v1533, %v1732
        %v1827 = vadd.f32 %v1534, %v1735
        %v1828 = vadd.f32 %v1535, %v1738
        %v1829 = vadd.f32 %v1536, %v1741
        %v1830 = vadd.f32 %v1537, %v1744
        %v1831 = vadd.f32 %v1538, %v1747
        %v1832 = vadd.f32 %v1539, %v1750
        %v1833 = vadd.f32 %v1540, %v1753
        %v1834 = vadd.f32 %v1541, %v1756
        %v1835 = vadd.f32 %v1542, %v1759
        %v1836 = vadd.f32 %v1543, %v1762
        %v1837 = vadd.f32 %v1544, %v1765
        %v1838 = vadd.f32 %v1545, %v1768
        %v1839 = vadd.f32 %v1546, %v1771
        %v1840 = vadd.f32 %v1547, %v1774
        %v1841 = vadd.f32 %v1548, %v1777
        %v1842 = vperm.slane %v281, 6
        %v1843 = vperm.slane %v282, 6
        %v1844 = vperm.slane %v283, 6
        %v1845 = vperm.slane %v284, 6
        %v1846 = vmul.f32 %v169, %v1842
        %v1847 = vmul.f32 %v170, %v1843
        %v1848 = vmul.f32 %v171, %v1844
        %v1849 = vmul.f32 %v172, %v1845
        %v1850 = vmul.f32 %v173, %v1842
        %v1851 = vmul.f32 %v174, %v1843
        %v1852 = vmul.f32 %v175, %v1844
        %v1853 = vmul.f32 %v176, %v1845
        %v1854 = vmul.f32 %v177, %v1842
        %v1855 = vmul.f32 %v178, %v1843
        %v1856 = vmul.f32 %v179, %v1844
        %v1857 = vmul.f32 %v180, %v1845
        %v1858 = vmul.f32 %v181, %v1842
        %v1859 = vmul.f32 %v182, %v1843
        %v1860 = vmul.f32 %v183, %v1844
        %v1861 = vmul.f32 %v184, %v1845
        %v1862 = vmul.f32 %v185, %v1842
        %v1863 = vmul.f32 %v186, %v1843
        %v1864 = vmul.f32 %v187, %v1844
        %v1865 = vmul.f32 %v188, %v1845
        %v1866 = vmul.f32 %v189, %v1842
        %v1867 = vmul.f32 %v190, %v1843
        %v1868 = vmul.f32 %v191, %v1844
        %v1869 = vmul.f32 %v192, %v1845
        %v1870 = vmul.f32 %v193, %v1842
        %v1871 = vmul.f32 %v194, %v1843
        %v1872 = vmul.f32 %v195, %v1844
        %v1873 = vmul.f32 %v196, %v1845
        %v1874 = vmul.f32 %v197, %v1842
        %v1875 = vmul.f32 %v198, %v1843
        %v1876 = vmul.f32 %v199, %v1844
        %v1877 = vmul.f32 %v200, %v1845
        %v1878 = vmul.f32 %v201, %v1842
        %v1879 = vmul.f32 %v202, %v1843
        %v1880 = vmul.f32 %v203, %v1844
        %v1881 = vmul.f32 %v204, %v1845
        %v1882 = vmul.f32 %v205, %v1842
        %v1883 = vmul.f32 %v206, %v1843
        %v1884 = vmul.f32 %v207, %v1844
        %v1885 = vmul.f32 %v208, %v1845
        %v1886 = vmul.f32 %v209, %v1842
        %v1887 = vmul.f32 %v210, %v1843
        %v1888 = vmul.f32 %v211, %v1844
        %v1889 = vmul.f32 %v212, %v1845
        %v1890 = vmul.f32 %v213, %v1842
        %v1891 = vmul.f32 %v214, %v1843
        %v1892 = vmul.f32 %v215, %v1844
        %v1893 = vmul.f32 %v216, %v1845
        %v1894 = vmul.f32 %v217, %v1842
        %v1895 = vmul.f32 %v218, %v1843
        %v1896 = vmul.f32 %v219, %v1844
        %v1897 = vmul.f32 %v220, %v1845
        %v1898 = vmul.f32 %v221, %v1842
        %v1899 = vmul.f32 %v222, %v1843
        %v1900 = vmul.f32 %v223, %v1844
        %v1901 = vmul.f32 %v224, %v1845
        %v1902 = vmul.f32 %v225, %v1842
        %v1903 = vmul.f32 %v226, %v1843
        %v1904 = vmul.f32 %v227, %v1844
        %v1905 = vmul.f32 %v228, %v1845
        %v1906 = vmul.f32 %v229, %v1842
        %v1907 = vmul.f32 %v230, %v1843
        %v1908 = vmul.f32 %v231, %v1844
        %v1909 = vmul.f32 %v232, %v1845
        %vm1974 = vcmask 1041408
        %v1975 = vrot.slane %v1846, 6
        %v1976 = vrot.slane %v1850, 6
        %v1977 = vsel %vm1974, %v1975, %v1976
        %v1978 = vrot.slane %v1847, 6
        %v1979 = vrot.slane %v1851, 6
        %v1980 = vsel %vm1974, %v1978, %v1979
        %v1981 = vrot.slane %v1848, 6
        %v1982 = vrot.slane %v1852, 6
        %v1983 = vsel %vm1974, %v1981, %v1982
        %v1984 = vrot.slane %v1849, 6
        %v1985 = vrot.slane %v1853, 6
        %v1986 = vsel %vm1974, %v1984, %v1985
        %v1987 = vrot.slane %v1854, 6
        %v1988 = vrot.slane %v1858, 6
        %v1989 = vsel %vm1974, %v1987, %v1988
        %v1990 = vrot.slane %v1855, 6
        %v1991 = vrot.slane %v1859, 6
        %v1992 = vsel %vm1974, %v1990, %v1991
        %v1993 = vrot.slane %v1856, 6
        %v1994 = vrot.slane %v1860, 6
        %v1995 = vsel %vm1974, %v1993, %v1994
        %v1996 = vrot.slane %v1857, 6
        %v1997 = vrot.slane %v1861, 6
        %v1998 = vsel %vm1974, %v1996, %v1997
        %v1999 = vrot.slane %v1862, 6
        %v2000 = vrot.slane %v1866, 6
        %v2001 = vsel %vm1974, %v1999, %v2000
        %v2002 = vrot.slane %v1863, 6
        %v2003 = vrot.slane %v1867, 6
        %v2004 = vsel %vm1974, %v2002, %v2003
        %v2005 = vrot.slane %v1864, 6
        %v2006 = vrot.slane %v1868, 6
        %v2007 = vsel %vm1974, %v2005, %v2006
        %v2008 = vrot.slane %v1865, 6
        %v2009 = vrot.slane %v1869, 6
        %v2010 = vsel %vm1974, %v2008, %v2009
        %v2011 = vrot.slane %v1870, 6
        %v2012 = vrot.slane %v1874, 6
        %v2013 = vsel %vm1974, %v2011, %v2012
        %v2014 = vrot.slane %v1871, 6
        %v2015 = vrot.slane %v1875, 6
        %v2016 = vsel %vm1974, %v2014, %v2015
        %v2017 = vrot.slane %v1872, 6
        %v2018 = vrot.slane %v1876, 6
        %v2019 = vsel %vm1974, %v2017, %v2018
        %v2020 = vrot.slane %v1873, 6
        %v2021 = vrot.slane %v1877, 6
        %v2022 = vsel %vm1974, %v2020, %v2021
        %v2023 = vrot.slane %v1878, 6
        %v2024 = vrot.slane %v1882, 6
        %v2025 = vsel %vm1974, %v2023, %v2024
        %v2026 = vrot.slane %v1879, 6
        %v2027 = vrot.slane %v1883, 6
        %v2028 = vsel %vm1974, %v2026, %v2027
        %v2029 = vrot.slane %v1880, 6
        %v2030 = vrot.slane %v1884, 6
        %v2031 = vsel %vm1974, %v2029, %v2030
        %v2032 = vrot.slane %v1881, 6
        %v2033 = vrot.slane %v1885, 6
        %v2034 = vsel %vm1974, %v2032, %v2033
        %v2035 = vrot.slane %v1886, 6
        %v2036 = vrot.slane %v1890, 6
        %v2037 = vsel %vm1974, %v2035, %v2036
        %v2038 = vrot.slane %v1887, 6
        %v2039 = vrot.slane %v1891, 6
        %v2040 = vsel %vm1974, %v2038, %v2039
        %v2041 = vrot.slane %v1888, 6
        %v2042 = vrot.slane %v1892, 6
        %v2043 = vsel %vm1974, %v2041, %v2042
        %v2044 = vrot.slane %v1889, 6
        %v2045 = vrot.slane %v1893, 6
        %v2046 = vsel %vm1974, %v2044, %v2045
        %v2047 = vrot.slane %v1894, 6
        %v2048 = vrot.slane %v1898, 6
        %v2049 = vsel %vm1974, %v2047, %v2048
        %v2050 = vrot.slane %v1895, 6
        %v2051 = vrot.slane %v1899, 6
        %v2052 = vsel %vm1974, %v2050, %v2051
        %v2053 = vrot.slane %v1896, 6
        %v2054 = vrot.slane %v1900, 6
        %v2055 = vsel %vm1974, %v2053, %v2054
        %v2056 = vrot.slane %v1897, 6
        %v2057 = vrot.slane %v1901, 6
        %v2058 = vsel %vm1974, %v2056, %v2057
        %v2059 = vrot.slane %v1902, 6
        %v2060 = vrot.slane %v1906, 6
        %v2061 = vsel %vm1974, %v2059, %v2060
        %v2062 = vrot.slane %v1903, 6
        %v2063 = vrot.slane %v1907, 6
        %v2064 = vsel %vm1974, %v2062, %v2063
        %v2065 = vrot.slane %v1904, 6
        %v2066 = vrot.slane %v1908, 6
        %v2067 = vsel %vm1974, %v2065, %v2066
        %v2068 = vrot.slane %v1905, 6
        %v2069 = vrot.slane %v1909, 6
        %v2070 = vsel %vm1974, %v2068, %v2069
        %v2103 = vadd.f32 %v1810, %v1977
        %v2104 = vadd.f32 %v1811, %v1980
        %v2105 = vadd.f32 %v1812, %v1983
        %v2106 = vadd.f32 %v1813, %v1986
        %v2107 = vadd.f32 %v1814, %v1989
        %v2108 = vadd.f32 %v1815, %v1992
        %v2109 = vadd.f32 %v1816, %v1995
        %v2110 = vadd.f32 %v1817, %v1998
        %v2111 = vadd.f32 %v1818, %v2001
        %v2112 = vadd.f32 %v1819, %v2004
        %v2113 = vadd.f32 %v1820, %v2007
        %v2114 = vadd.f32 %v1821, %v2010
        %v2115 = vadd.f32 %v1822, %v2013
        %v2116 = vadd.f32 %v1823, %v2016
        %v2117 = vadd.f32 %v1824, %v2019
        %v2118 = vadd.f32 %v1825, %v2022
        %v2119 = vadd.f32 %v1826, %v2025
        %v2120 = vadd.f32 %v1827, %v2028
        %v2121 = vadd.f32 %v1828, %v2031
        %v2122 = vadd.f32 %v1829, %v2034
        %v2123 = vadd.f32 %v1830, %v2037
        %v2124 = vadd.f32 %v1831, %v2040
        %v2125 = vadd.f32 %v1832, %v2043
        %v2126 = vadd.f32 %v1833, %v2046
        %v2127 = vadd.f32 %v1834, %v2049
        %v2128 = vadd.f32 %v1835, %v2052
        %v2129 = vadd.f32 %v1836, %v2055
        %v2130 = vadd.f32 %v1837, %v2058
        %v2131 = vadd.f32 %v1838, %v2061
        %v2132 = vadd.f32 %v1839, %v2064
        %v2133 = vadd.f32 %v1840, %v2067
        %v2134 = vadd.f32 %v1841, %v2070
        %v2135 = vperm.slane %v285, 0
        %v2136 = vperm.slane %v286, 0
        %v2137 = vperm.slane %v287, 0
        %v2138 = vperm.slane %v288, 0
        %v2139 = vmul.f32 %v177, %v2135
        %v2140 = vmul.f32 %v178, %v2136
        %v2141 = vmul.f32 %v179, %v2137
        %v2142 = vmul.f32 %v180, %v2138
        %v2143 = vmul.f32 %v185, %v2135
        %v2144 = vmul.f32 %v186, %v2136
        %v2145 = vmul.f32 %v187, %v2137
        %v2146 = vmul.f32 %v188, %v2138
        %v2147 = vmul.f32 %v193, %v2135
        %v2148 = vmul.f32 %v194, %v2136
        %v2149 = vmul.f32 %v195, %v2137
        %v2150 = vmul.f32 %v196, %v2138
        %v2151 = vmul.f32 %v201, %v2135
        %v2152 = vmul.f32 %v202, %v2136
        %v2153 = vmul.f32 %v203, %v2137
        %v2154 = vmul.f32 %v204, %v2138
        %v2155 = vmul.f32 %v209, %v2135
        %v2156 = vmul.f32 %v210, %v2136
        %v2157 = vmul.f32 %v211, %v2137
        %v2158 = vmul.f32 %v212, %v2138
        %v2159 = vmul.f32 %v217, %v2135
        %v2160 = vmul.f32 %v218, %v2136
        %v2161 = vmul.f32 %v219, %v2137
        %v2162 = vmul.f32 %v220, %v2138
        %v2163 = vmul.f32 %v225, %v2135
        %v2164 = vmul.f32 %v226, %v2136
        %v2165 = vmul.f32 %v227, %v2137
        %v2166 = vmul.f32 %v228, %v2138
        %v2167 = vmul.f32 %v233, %v2135
        %v2168 = vmul.f32 %v234, %v2136
        %v2169 = vmul.f32 %v235, %v2137
        %v2170 = vmul.f32 %v236, %v2138
        %v2171 = vadd.f32 %v2103, %v2139
        %v2172 = vadd.f32 %v2104, %v2140
        %v2173 = vadd.f32 %v2105, %v2141
        %v2174 = vadd.f32 %v2106, %v2142
        %v2175 = vadd.f32 %v2107, %v2143
        %v2176 = vadd.f32 %v2108, %v2144
        %v2177 = vadd.f32 %v2109, %v2145
        %v2178 = vadd.f32 %v2110, %v2146
        %v2179 = vadd.f32 %v2111, %v2147
        %v2180 = vadd.f32 %v2112, %v2148
        %v2181 = vadd.f32 %v2113, %v2149
        %v2182 = vadd.f32 %v2114, %v2150
        %v2183 = vadd.f32 %v2115, %v2151
        %v2184 = vadd.f32 %v2116, %v2152
        %v2185 = vadd.f32 %v2117, %v2153
        %v2186 = vadd.f32 %v2118, %v2154
        %v2187 = vadd.f32 %v2119, %v2155
        %v2188 = vadd.f32 %v2120, %v2156
        %v2189 = vadd.f32 %v2121, %v2157
        %v2190 = vadd.f32 %v2122, %v2158
        %v2191 = vadd.f32 %v2123, %v2159
        %v2192 = vadd.f32 %v2124, %v2160
        %v2193 = vadd.f32 %v2125, %v2161
        %v2194 = vadd.f32 %v2126, %v2162
        %v2195 = vadd.f32 %v2127, %v2163
        %v2196 = vadd.f32 %v2128, %v2164
        %v2197 = vadd.f32 %v2129, %v2165
        %v2198 = vadd.f32 %v2130, %v2166
        %v2199 = vadd.f32 %v2131, %v2167
        %v2200 = vadd.f32 %v2132, %v2168
        %v2201 = vadd.f32 %v2133, %v2169
        %v2202 = vadd.f32 %v2134, %v2170
        %v2203 = vperm.slane %v285, 1
        %v2204 = vperm.slane %v286, 1
        %v2205 = vperm.slane %v287, 1
        %v2206 = vperm.slane %v288, 1
        %v2207 = vmul.f32 %v177, %v2203
        %v2208 = vmul.f32 %v178, %v2204
        %v2209 = vmul.f32 %v179, %v2205
        %v2210 = vmul.f32 %v180, %v2206
        %v2211 = vmul.f32 %v181, %v2203
        %v2212 = vmul.f32 %v182, %v2204
        %v2213 = vmul.f32 %v183, %v2205
        %v2214 = vmul.f32 %v184, %v2206
        %v2215 = vmul.f32 %v185, %v2203
        %v2216 = vmul.f32 %v186, %v2204
        %v2217 = vmul.f32 %v187, %v2205
        %v2218 = vmul.f32 %v188, %v2206
        %v2219 = vmul.f32 %v189, %v2203
        %v2220 = vmul.f32 %v190, %v2204
        %v2221 = vmul.f32 %v191, %v2205
        %v2222 = vmul.f32 %v192, %v2206
        %v2223 = vmul.f32 %v193, %v2203
        %v2224 = vmul.f32 %v194, %v2204
        %v2225 = vmul.f32 %v195, %v2205
        %v2226 = vmul.f32 %v196, %v2206
        %v2227 = vmul.f32 %v197, %v2203
        %v2228 = vmul.f32 %v198, %v2204
        %v2229 = vmul.f32 %v199, %v2205
        %v2230 = vmul.f32 %v200, %v2206
        %v2231 = vmul.f32 %v201, %v2203
        %v2232 = vmul.f32 %v202, %v2204
        %v2233 = vmul.f32 %v203, %v2205
        %v2234 = vmul.f32 %v204, %v2206
        %v2235 = vmul.f32 %v205, %v2203
        %v2236 = vmul.f32 %v206, %v2204
        %v2237 = vmul.f32 %v207, %v2205
        %v2238 = vmul.f32 %v208, %v2206
        %v2239 = vmul.f32 %v209, %v2203
        %v2240 = vmul.f32 %v210, %v2204
        %v2241 = vmul.f32 %v211, %v2205
        %v2242 = vmul.f32 %v212, %v2206
        %v2243 = vmul.f32 %v213, %v2203
        %v2244 = vmul.f32 %v214, %v2204
        %v2245 = vmul.f32 %v215, %v2205
        %v2246 = vmul.f32 %v216, %v2206
        %v2247 = vmul.f32 %v217, %v2203
        %v2248 = vmul.f32 %v218, %v2204
        %v2249 = vmul.f32 %v219, %v2205
        %v2250 = vmul.f32 %v220, %v2206
        %v2251 = vmul.f32 %v221, %v2203
        %v2252 = vmul.f32 %v222, %v2204
        %v2253 = vmul.f32 %v223, %v2205
        %v2254 = vmul.f32 %v224, %v2206
        %v2255 = vmul.f32 %v225, %v2203
        %v2256 = vmul.f32 %v226, %v2204
        %v2257 = vmul.f32 %v227, %v2205
        %v2258 = vmul.f32 %v228, %v2206
        %v2259 = vmul.f32 %v229, %v2203
        %v2260 = vmul.f32 %v230, %v2204
        %v2261 = vmul.f32 %v231, %v2205
        %v2262 = vmul.f32 %v232, %v2206
        %v2263 = vmul.f32 %v233, %v2203
        %v2264 = vmul.f32 %v234, %v2204
        %v2265 = vmul.f32 %v235, %v2205
        %v2266 = vmul.f32 %v236, %v2206
        %v2267 = vmul.f32 %v237, %v2203
        %v2268 = vmul.f32 %v238, %v2204
        %v2269 = vmul.f32 %v239, %v2205
        %v2270 = vmul.f32 %v240, %v2206
        %v2335 = vrot.slane %v2207, 1
        %v2336 = vrot.slane %v2211, 1
        %v2337 = vsel %vm509, %v2335, %v2336
        %v2338 = vrot.slane %v2208, 1
        %v2339 = vrot.slane %v2212, 1
        %v2340 = vsel %vm509, %v2338, %v2339
        %v2341 = vrot.slane %v2209, 1
        %v2342 = vrot.slane %v2213, 1
        %v2343 = vsel %vm509, %v2341, %v2342
        %v2344 = vrot.slane %v2210, 1
        %v2345 = vrot.slane %v2214, 1
        %v2346 = vsel %vm509, %v2344, %v2345
        %v2347 = vrot.slane %v2215, 1
        %v2348 = vrot.slane %v2219, 1
        %v2349 = vsel %vm509, %v2347, %v2348
        %v2350 = vrot.slane %v2216, 1
        %v2351 = vrot.slane %v2220, 1
        %v2352 = vsel %vm509, %v2350, %v2351
        %v2353 = vrot.slane %v2217, 1
        %v2354 = vrot.slane %v2221, 1
        %v2355 = vsel %vm509, %v2353, %v2354
        %v2356 = vrot.slane %v2218, 1
        %v2357 = vrot.slane %v2222, 1
        %v2358 = vsel %vm509, %v2356, %v2357
        %v2359 = vrot.slane %v2223, 1
        %v2360 = vrot.slane %v2227, 1
        %v2361 = vsel %vm509, %v2359, %v2360
        %v2362 = vrot.slane %v2224, 1
        %v2363 = vrot.slane %v2228, 1
        %v2364 = vsel %vm509, %v2362, %v2363
        %v2365 = vrot.slane %v2225, 1
        %v2366 = vrot.slane %v2229, 1
        %v2367 = vsel %vm509, %v2365, %v2366
        %v2368 = vrot.slane %v2226, 1
        %v2369 = vrot.slane %v2230, 1
        %v2370 = vsel %vm509, %v2368, %v2369
        %v2371 = vrot.slane %v2231, 1
        %v2372 = vrot.slane %v2235, 1
        %v2373 = vsel %vm509, %v2371, %v2372
        %v2374 = vrot.slane %v2232, 1
        %v2375 = vrot.slane %v2236, 1
        %v2376 = vsel %vm509, %v2374, %v2375
        %v2377 = vrot.slane %v2233, 1
        %v2378 = vrot.slane %v2237, 1
        %v2379 = vsel %vm509, %v2377, %v2378
        %v2380 = vrot.slane %v2234, 1
        %v2381 = vrot.slane %v2238, 1
        %v2382 = vsel %vm509, %v2380, %v2381
        %v2383 = vrot.slane %v2239, 1
        %v2384 = vrot.slane %v2243, 1
        %v2385 = vsel %vm509, %v2383, %v2384
        %v2386 = vrot.slane %v2240, 1
        %v2387 = vrot.slane %v2244, 1
        %v2388 = vsel %vm509, %v2386, %v2387
        %v2389 = vrot.slane %v2241, 1
        %v2390 = vrot.slane %v2245, 1
        %v2391 = vsel %vm509, %v2389, %v2390
        %v2392 = vrot.slane %v2242, 1
        %v2393 = vrot.slane %v2246, 1
        %v2394 = vsel %vm509, %v2392, %v2393
        %v2395 = vrot.slane %v2247, 1
        %v2396 = vrot.slane %v2251, 1
        %v2397 = vsel %vm509, %v2395, %v2396
        %v2398 = vrot.slane %v2248, 1
        %v2399 = vrot.slane %v2252, 1
        %v2400 = vsel %vm509, %v2398, %v2399
        %v2401 = vrot.slane %v2249, 1
        %v2402 = vrot.slane %v2253, 1
        %v2403 = vsel %vm509, %v2401, %v2402
        %v2404 = vrot.slane %v2250, 1
        %v2405 = vrot.slane %v2254, 1
        %v2406 = vsel %vm509, %v2404, %v2405
        %v2407 = vrot.slane %v2255, 1
        %v2408 = vrot.slane %v2259, 1
        %v2409 = vsel %vm509, %v2407, %v2408
        %v2410 = vrot.slane %v2256, 1
        %v2411 = vrot.slane %v2260, 1
        %v2412 = vsel %vm509, %v2410, %v2411
        %v2413 = vrot.slane %v2257, 1
        %v2414 = vrot.slane %v2261, 1
        %v2415 = vsel %vm509, %v2413, %v2414
        %v2416 = vrot.slane %v2258, 1
        %v2417 = vrot.slane %v2262, 1
        %v2418 = vsel %vm509, %v2416, %v2417
        %v2419 = vrot.slane %v2263, 1
        %v2420 = vrot.slane %v2267, 1
        %v2421 = vsel %vm509, %v2419, %v2420
        %v2422 = vrot.slane %v2264, 1
        %v2423 = vrot.slane %v2268, 1
        %v2424 = vsel %vm509, %v2422, %v2423
        %v2425 = vrot.slane %v2265, 1
        %v2426 = vrot.slane %v2269, 1
        %v2427 = vsel %vm509, %v2425, %v2426
        %v2428 = vrot.slane %v2266, 1
        %v2429 = vrot.slane %v2270, 1
        %v2430 = vsel %vm509, %v2428, %v2429
        %v2463 = vadd.f32 %v2171, %v2337
        %v2464 = vadd.f32 %v2172, %v2340
        %v2465 = vadd.f32 %v2173, %v2343
        %v2466 = vadd.f32 %v2174, %v2346
        %v2467 = vadd.f32 %v2175, %v2349
        %v2468 = vadd.f32 %v2176, %v2352
        %v2469 = vadd.f32 %v2177, %v2355
        %v2470 = vadd.f32 %v2178, %v2358
        %v2471 = vadd.f32 %v2179, %v2361
        %v2472 = vadd.f32 %v2180, %v2364
        %v2473 = vadd.f32 %v2181, %v2367
        %v2474 = vadd.f32 %v2182, %v2370
        %v2475 = vadd.f32 %v2183, %v2373
        %v2476 = vadd.f32 %v2184, %v2376
        %v2477 = vadd.f32 %v2185, %v2379
        %v2478 = vadd.f32 %v2186, %v2382
        %v2479 = vadd.f32 %v2187, %v2385
        %v2480 = vadd.f32 %v2188, %v2388
        %v2481 = vadd.f32 %v2189, %v2391
        %v2482 = vadd.f32 %v2190, %v2394
        %v2483 = vadd.f32 %v2191, %v2397
        %v2484 = vadd.f32 %v2192, %v2400
        %v2485 = vadd.f32 %v2193, %v2403
        %v2486 = vadd.f32 %v2194, %v2406
        %v2487 = vadd.f32 %v2195, %v2409
        %v2488 = vadd.f32 %v2196, %v2412
        %v2489 = vadd.f32 %v2197, %v2415
        %v2490 = vadd.f32 %v2198, %v2418
        %v2491 = vadd.f32 %v2199, %v2421
        %v2492 = vadd.f32 %v2200, %v2424
        %v2493 = vadd.f32 %v2201, %v2427
        %v2494 = vadd.f32 %v2202, %v2430
        %v2495 = vperm.slane %v285, 2
        %v2496 = vperm.slane %v286, 2
        %v2497 = vperm.slane %v287, 2
        %v2498 = vperm.slane %v288, 2
        %v2499 = vmul.f32 %v177, %v2495
        %v2500 = vmul.f32 %v178, %v2496
        %v2501 = vmul.f32 %v179, %v2497
        %v2502 = vmul.f32 %v180, %v2498
        %v2503 = vmul.f32 %v181, %v2495
        %v2504 = vmul.f32 %v182, %v2496
        %v2505 = vmul.f32 %v183, %v2497
        %v2506 = vmul.f32 %v184, %v2498
        %v2507 = vmul.f32 %v185, %v2495
        %v2508 = vmul.f32 %v186, %v2496
        %v2509 = vmul.f32 %v187, %v2497
        %v2510 = vmul.f32 %v188, %v2498
        %v2511 = vmul.f32 %v189, %v2495
        %v2512 = vmul.f32 %v190, %v2496
        %v2513 = vmul.f32 %v191, %v2497
        %v2514 = vmul.f32 %v192, %v2498
        %v2515 = vmul.f32 %v193, %v2495
        %v2516 = vmul.f32 %v194, %v2496
        %v2517 = vmul.f32 %v195, %v2497
        %v2518 = vmul.f32 %v196, %v2498
        %v2519 = vmul.f32 %v197, %v2495
        %v2520 = vmul.f32 %v198, %v2496
        %v2521 = vmul.f32 %v199, %v2497
        %v2522 = vmul.f32 %v200, %v2498
        %v2523 = vmul.f32 %v201, %v2495
        %v2524 = vmul.f32 %v202, %v2496
        %v2525 = vmul.f32 %v203, %v2497
        %v2526 = vmul.f32 %v204, %v2498
        %v2527 = vmul.f32 %v205, %v2495
        %v2528 = vmul.f32 %v206, %v2496
        %v2529 = vmul.f32 %v207, %v2497
        %v2530 = vmul.f32 %v208, %v2498
        %v2531 = vmul.f32 %v209, %v2495
        %v2532 = vmul.f32 %v210, %v2496
        %v2533 = vmul.f32 %v211, %v2497
        %v2534 = vmul.f32 %v212, %v2498
        %v2535 = vmul.f32 %v213, %v2495
        %v2536 = vmul.f32 %v214, %v2496
        %v2537 = vmul.f32 %v215, %v2497
        %v2538 = vmul.f32 %v216, %v2498
        %v2539 = vmul.f32 %v217, %v2495
        %v2540 = vmul.f32 %v218, %v2496
        %v2541 = vmul.f32 %v219, %v2497
        %v2542 = vmul.f32 %v220, %v2498
        %v2543 = vmul.f32 %v221, %v2495
        %v2544 = vmul.f32 %v222, %v2496
        %v2545 = vmul.f32 %v223, %v2497
        %v2546 = vmul.f32 %v224, %v2498
        %v2547 = vmul.f32 %v225, %v2495
        %v2548 = vmul.f32 %v226, %v2496
        %v2549 = vmul.f32 %v227, %v2497
        %v2550 = vmul.f32 %v228, %v2498
        %v2551 = vmul.f32 %v229, %v2495
        %v2552 = vmul.f32 %v230, %v2496
        %v2553 = vmul.f32 %v231, %v2497
        %v2554 = vmul.f32 %v232, %v2498
        %v2555 = vmul.f32 %v233, %v2495
        %v2556 = vmul.f32 %v234, %v2496
        %v2557 = vmul.f32 %v235, %v2497
        %v2558 = vmul.f32 %v236, %v2498
        %v2559 = vmul.f32 %v237, %v2495
        %v2560 = vmul.f32 %v238, %v2496
        %v2561 = vmul.f32 %v239, %v2497
        %v2562 = vmul.f32 %v240, %v2498
        %v2627 = vrot.slane %v2499, 2
        %v2628 = vrot.slane %v2503, 2
        %v2629 = vsel %vm802, %v2627, %v2628
        %v2630 = vrot.slane %v2500, 2
        %v2631 = vrot.slane %v2504, 2
        %v2632 = vsel %vm802, %v2630, %v2631
        %v2633 = vrot.slane %v2501, 2
        %v2634 = vrot.slane %v2505, 2
        %v2635 = vsel %vm802, %v2633, %v2634
        %v2636 = vrot.slane %v2502, 2
        %v2637 = vrot.slane %v2506, 2
        %v2638 = vsel %vm802, %v2636, %v2637
        %v2639 = vrot.slane %v2507, 2
        %v2640 = vrot.slane %v2511, 2
        %v2641 = vsel %vm802, %v2639, %v2640
        %v2642 = vrot.slane %v2508, 2
        %v2643 = vrot.slane %v2512, 2
        %v2644 = vsel %vm802, %v2642, %v2643
        %v2645 = vrot.slane %v2509, 2
        %v2646 = vrot.slane %v2513, 2
        %v2647 = vsel %vm802, %v2645, %v2646
        %v2648 = vrot.slane %v2510, 2
        %v2649 = vrot.slane %v2514, 2
        %v2650 = vsel %vm802, %v2648, %v2649
        %v2651 = vrot.slane %v2515, 2
        %v2652 = vrot.slane %v2519, 2
        %v2653 = vsel %vm802, %v2651, %v2652
        %v2654 = vrot.slane %v2516, 2
        %v2655 = vrot.slane %v2520, 2
        %v2656 = vsel %vm802, %v2654, %v2655
        %v2657 = vrot.slane %v2517, 2
        %v2658 = vrot.slane %v2521, 2
        %v2659 = vsel %vm802, %v2657, %v2658
        %v2660 = vrot.slane %v2518, 2
        %v2661 = vrot.slane %v2522, 2
        %v2662 = vsel %vm802, %v2660, %v2661
        %v2663 = vrot.slane %v2523, 2
        %v2664 = vrot.slane %v2527, 2
        %v2665 = vsel %vm802, %v2663, %v2664
        %v2666 = vrot.slane %v2524, 2
        %v2667 = vrot.slane %v2528, 2
        %v2668 = vsel %vm802, %v2666, %v2667
        %v2669 = vrot.slane %v2525, 2
        %v2670 = vrot.slane %v2529, 2
        %v2671 = vsel %vm802, %v2669, %v2670
        %v2672 = vrot.slane %v2526, 2
        %v2673 = vrot.slane %v2530, 2
        %v2674 = vsel %vm802, %v2672, %v2673
        %v2675 = vrot.slane %v2531, 2
        %v2676 = vrot.slane %v2535, 2
        %v2677 = vsel %vm802, %v2675, %v2676
        %v2678 = vrot.slane %v2532, 2
        %v2679 = vrot.slane %v2536, 2
        %v2680 = vsel %vm802, %v2678, %v2679
        %v2681 = vrot.slane %v2533, 2
        %v2682 = vrot.slane %v2537, 2
        %v2683 = vsel %vm802, %v2681, %v2682
        %v2684 = vrot.slane %v2534, 2
        %v2685 = vrot.slane %v2538, 2
        %v2686 = vsel %vm802, %v2684, %v2685
        %v2687 = vrot.slane %v2539, 2
        %v2688 = vrot.slane %v2543, 2
        %v2689 = vsel %vm802, %v2687, %v2688
        %v2690 = vrot.slane %v2540, 2
        %v2691 = vrot.slane %v2544, 2
        %v2692 = vsel %vm802, %v2690, %v2691
        %v2693 = vrot.slane %v2541, 2
        %v2694 = vrot.slane %v2545, 2
        %v2695 = vsel %vm802, %v2693, %v2694
        %v2696 = vrot.slane %v2542, 2
        %v2697 = vrot.slane %v2546, 2
        %v2698 = vsel %vm802, %v2696, %v2697
        %v2699 = vrot.slane %v2547, 2
        %v2700 = vrot.slane %v2551, 2
        %v2701 = vsel %vm802, %v2699, %v2700
        %v2702 = vrot.slane %v2548, 2
        %v2703 = vrot.slane %v2552, 2
        %v2704 = vsel %vm802, %v2702, %v2703
        %v2705 = vrot.slane %v2549, 2
        %v2706 = vrot.slane %v2553, 2
        %v2707 = vsel %vm802, %v2705, %v2706
        %v2708 = vrot.slane %v2550, 2
        %v2709 = vrot.slane %v2554, 2
        %v2710 = vsel %vm802, %v2708, %v2709
        %v2711 = vrot.slane %v2555, 2
        %v2712 = vrot.slane %v2559, 2
        %v2713 = vsel %vm802, %v2711, %v2712
        %v2714 = vrot.slane %v2556, 2
        %v2715 = vrot.slane %v2560, 2
        %v2716 = vsel %vm802, %v2714, %v2715
        %v2717 = vrot.slane %v2557, 2
        %v2718 = vrot.slane %v2561, 2
        %v2719 = vsel %vm802, %v2717, %v2718
        %v2720 = vrot.slane %v2558, 2
        %v2721 = vrot.slane %v2562, 2
        %v2722 = vsel %vm802, %v2720, %v2721
        %v2755 = vadd.f32 %v2463, %v2629
        %v2756 = vadd.f32 %v2464, %v2632
        %v2757 = vadd.f32 %v2465, %v2635
        %v2758 = vadd.f32 %v2466, %v2638
        %v2759 = vadd.f32 %v2467, %v2641
        %v2760 = vadd.f32 %v2468, %v2644
        %v2761 = vadd.f32 %v2469, %v2647
        %v2762 = vadd.f32 %v2470, %v2650
        %v2763 = vadd.f32 %v2471, %v2653
        %v2764 = vadd.f32 %v2472, %v2656
        %v2765 = vadd.f32 %v2473, %v2659
        %v2766 = vadd.f32 %v2474, %v2662
        %v2767 = vadd.f32 %v2475, %v2665
        %v2768 = vadd.f32 %v2476, %v2668
        %v2769 = vadd.f32 %v2477, %v2671
        %v2770 = vadd.f32 %v2478, %v2674
        %v2771 = vadd.f32 %v2479, %v2677
        %v2772 = vadd.f32 %v2480, %v2680
        %v2773 = vadd.f32 %v2481, %v2683
        %v2774 = vadd.f32 %v2482, %v2686
        %v2775 = vadd.f32 %v2483, %v2689
        %v2776 = vadd.f32 %v2484, %v2692
        %v2777 = vadd.f32 %v2485, %v2695
        %v2778 = vadd.f32 %v2486, %v2698
        %v2779 = vadd.f32 %v2487, %v2701
        %v2780 = vadd.f32 %v2488, %v2704
        %v2781 = vadd.f32 %v2489, %v2707
        %v2782 = vadd.f32 %v2490, %v2710
        %v2783 = vadd.f32 %v2491, %v2713
        %v2784 = vadd.f32 %v2492, %v2716
        %v2785 = vadd.f32 %v2493, %v2719
        %v2786 = vadd.f32 %v2494, %v2722
        %v2787 = vperm.slane %v285, 3
        %v2788 = vperm.slane %v286, 3
        %v2789 = vperm.slane %v287, 3
        %v2790 = vperm.slane %v288, 3
        %v2791 = vmul.f32 %v177, %v2787
        %v2792 = vmul.f32 %v178, %v2788
        %v2793 = vmul.f32 %v179, %v2789
        %v2794 = vmul.f32 %v180, %v2790
        %v2795 = vmul.f32 %v181, %v2787
        %v2796 = vmul.f32 %v182, %v2788
        %v2797 = vmul.f32 %v183, %v2789
        %v2798 = vmul.f32 %v184, %v2790
        %v2799 = vmul.f32 %v185, %v2787
        %v2800 = vmul.f32 %v186, %v2788
        %v2801 = vmul.f32 %v187, %v2789
        %v2802 = vmul.f32 %v188, %v2790
        %v2803 = vmul.f32 %v189, %v2787
        %v2804 = vmul.f32 %v190, %v2788
        %v2805 = vmul.f32 %v191, %v2789
        %v2806 = vmul.f32 %v192, %v2790
        %v2807 = vmul.f32 %v193, %v2787
        %v2808 = vmul.f32 %v194, %v2788
        %v2809 = vmul.f32 %v195, %v2789
        %v2810 = vmul.f32 %v196, %v2790
        %v2811 = vmul.f32 %v197, %v2787
        %v2812 = vmul.f32 %v198, %v2788
        %v2813 = vmul.f32 %v199, %v2789
        %v2814 = vmul.f32 %v200, %v2790
        %v2815 = vmul.f32 %v201, %v2787
        %v2816 = vmul.f32 %v202, %v2788
        %v2817 = vmul.f32 %v203, %v2789
        %v2818 = vmul.f32 %v204, %v2790
        %v2819 = vmul.f32 %v205, %v2787
        %v2820 = vmul.f32 %v206, %v2788
        %v2821 = vmul.f32 %v207, %v2789
        %v2822 = vmul.f32 %v208, %v2790
        %v2823 = vmul.f32 %v209, %v2787
        %v2824 = vmul.f32 %v210, %v2788
        %v2825 = vmul.f32 %v211, %v2789
        %v2826 = vmul.f32 %v212, %v2790
        %v2827 = vmul.f32 %v213, %v2787
        %v2828 = vmul.f32 %v214, %v2788
        %v2829 = vmul.f32 %v215, %v2789
        %v2830 = vmul.f32 %v216, %v2790
        %v2831 = vmul.f32 %v217, %v2787
        %v2832 = vmul.f32 %v218, %v2788
        %v2833 = vmul.f32 %v219, %v2789
        %v2834 = vmul.f32 %v220, %v2790
        %v2835 = vmul.f32 %v221, %v2787
        %v2836 = vmul.f32 %v222, %v2788
        %v2837 = vmul.f32 %v223, %v2789
        %v2838 = vmul.f32 %v224, %v2790
        %v2839 = vmul.f32 %v225, %v2787
        %v2840 = vmul.f32 %v226, %v2788
        %v2841 = vmul.f32 %v227, %v2789
        %v2842 = vmul.f32 %v228, %v2790
        %v2843 = vmul.f32 %v229, %v2787
        %v2844 = vmul.f32 %v230, %v2788
        %v2845 = vmul.f32 %v231, %v2789
        %v2846 = vmul.f32 %v232, %v2790
        %v2847 = vmul.f32 %v233, %v2787
        %v2848 = vmul.f32 %v234, %v2788
        %v2849 = vmul.f32 %v235, %v2789
        %v2850 = vmul.f32 %v236, %v2790
        %v2851 = vmul.f32 %v237, %v2787
        %v2852 = vmul.f32 %v238, %v2788
        %v2853 = vmul.f32 %v239, %v2789
        %v2854 = vmul.f32 %v240, %v2790
        %v2919 = vrot.slane %v2791, 3
        %v2920 = vrot.slane %v2795, 3
        %v2921 = vsel %vm1095, %v2919, %v2920
        %v2922 = vrot.slane %v2792, 3
        %v2923 = vrot.slane %v2796, 3
        %v2924 = vsel %vm1095, %v2922, %v2923
        %v2925 = vrot.slane %v2793, 3
        %v2926 = vrot.slane %v2797, 3
        %v2927 = vsel %vm1095, %v2925, %v2926
        %v2928 = vrot.slane %v2794, 3
        %v2929 = vrot.slane %v2798, 3
        %v2930 = vsel %vm1095, %v2928, %v2929
        %v2931 = vrot.slane %v2799, 3
        %v2932 = vrot.slane %v2803, 3
        %v2933 = vsel %vm1095, %v2931, %v2932
        %v2934 = vrot.slane %v2800, 3
        %v2935 = vrot.slane %v2804, 3
        %v2936 = vsel %vm1095, %v2934, %v2935
        %v2937 = vrot.slane %v2801, 3
        %v2938 = vrot.slane %v2805, 3
        %v2939 = vsel %vm1095, %v2937, %v2938
        %v2940 = vrot.slane %v2802, 3
        %v2941 = vrot.slane %v2806, 3
        %v2942 = vsel %vm1095, %v2940, %v2941
        %v2943 = vrot.slane %v2807, 3
        %v2944 = vrot.slane %v2811, 3
        %v2945 = vsel %vm1095, %v2943, %v2944
        %v2946 = vrot.slane %v2808, 3
        %v2947 = vrot.slane %v2812, 3
        %v2948 = vsel %vm1095, %v2946, %v2947
        %v2949 = vrot.slane %v2809, 3
        %v2950 = vrot.slane %v2813, 3
        %v2951 = vsel %vm1095, %v2949, %v2950
        %v2952 = vrot.slane %v2810, 3
        %v2953 = vrot.slane %v2814, 3
        %v2954 = vsel %vm1095, %v2952, %v2953
        %v2955 = vrot.slane %v2815, 3
        %v2956 = vrot.slane %v2819, 3
        %v2957 = vsel %vm1095, %v2955, %v2956
        %v2958 = vrot.slane %v2816, 3
        %v2959 = vrot.slane %v2820, 3
        %v2960 = vsel %vm1095, %v2958, %v2959
        %v2961 = vrot.slane %v2817, 3
        %v2962 = vrot.slane %v2821, 3
        %v2963 = vsel %vm1095, %v2961, %v2962
        %v2964 = vrot.slane %v2818, 3
        %v2965 = vrot.slane %v2822, 3
        %v2966 = vsel %vm1095, %v2964, %v2965
        %v2967 = vrot.slane %v2823, 3
        %v2968 = vrot.slane %v2827, 3
        %v2969 = vsel %vm1095, %v2967, %v2968
        %v2970 = vrot.slane %v2824, 3
        %v2971 = vrot.slane %v2828, 3
        %v2972 = vsel %vm1095, %v2970, %v2971
        %v2973 = vrot.slane %v2825, 3
        %v2974 = vrot.slane %v2829, 3
        %v2975 = vsel %vm1095, %v2973, %v2974
        %v2976 = vrot.slane %v2826, 3
        %v2977 = vrot.slane %v2830, 3
        %v2978 = vsel %vm1095, %v2976, %v2977
        %v2979 = vrot.slane %v2831, 3
        %v2980 = vrot.slane %v2835, 3
        %v2981 = vsel %vm1095, %v2979, %v2980
        %v2982 = vrot.slane %v2832, 3
        %v2983 = vrot.slane %v2836, 3
        %v2984 = vsel %vm1095, %v2982, %v2983
        %v2985 = vrot.slane %v2833, 3
        %v2986 = vrot.slane %v2837, 3
        %v2987 = vsel %vm1095, %v2985, %v2986
        %v2988 = vrot.slane %v2834, 3
        %v2989 = vrot.slane %v2838, 3
        %v2990 = vsel %vm1095, %v2988, %v2989
        %v2991 = vrot.slane %v2839, 3
        %v2992 = vrot.slane %v2843, 3
        %v2993 = vsel %vm1095, %v2991, %v2992
        %v2994 = vrot.slane %v2840, 3
        %v2995 = vrot.slane %v2844, 3
        %v2996 = vsel %vm1095, %v2994, %v2995
        %v2997 = vrot.slane %v2841, 3
        %v2998 = vrot.slane %v2845, 3
        %v2999 = vsel %vm1095, %v2997, %v2998
        %v3000 = vrot.slane %v2842, 3
        %v3001 = vrot.slane %v2846, 3
        %v3002 = vsel %vm1095, %v3000, %v3001
        %v3003 = vrot.slane %v2847, 3
        %v3004 = vrot.slane %v2851, 3
        %v3005 = vsel %vm1095, %v3003, %v3004
        %v3006 = vrot.slane %v2848, 3
        %v3007 = vrot.slane %v2852, 3
        %v3008 = vsel %vm1095, %v3006, %v3007
        %v3009 = vrot.slane %v2849, 3
        %v3010 = vrot.slane %v2853, 3
        %v3011 = vsel %vm1095, %v3009, %v3010
        %v3012 = vrot.slane %v2850, 3
        %v3013 = vrot.slane %v2854, 3
        %v3014 = vsel %vm1095, %v3012, %v3013
        %v3047 = vadd.f32 %v2755, %v2921
        %v3048 = vadd.f32 %v2756, %v2924
        %v3049 = vadd.f32 %v2757, %v2927
        %v3050 = vadd.f32 %v2758, %v2930
        %v3051 = vadd.f32 %v2759, %v2933
        %v3052 = vadd.f32 %v2760, %v2936
        %v3053 = vadd.f32 %v2761, %v2939
        %v3054 = vadd.f32 %v2762, %v2942
        %v3055 = vadd.f32 %v2763, %v2945
        %v3056 = vadd.f32 %v2764, %v2948
        %v3057 = vadd.f32 %v2765, %v2951
        %v3058 = vadd.f32 %v2766, %v2954
        %v3059 = vadd.f32 %v2767, %v2957
        %v3060 = vadd.f32 %v2768, %v2960
        %v3061 = vadd.f32 %v2769, %v2963
        %v3062 = vadd.f32 %v2770, %v2966
        %v3063 = vadd.f32 %v2771, %v2969
        %v3064 = vadd.f32 %v2772, %v2972
        %v3065 = vadd.f32 %v2773, %v2975
        %v3066 = vadd.f32 %v2774, %v2978
        %v3067 = vadd.f32 %v2775, %v2981
        %v3068 = vadd.f32 %v2776, %v2984
        %v3069 = vadd.f32 %v2777, %v2987
        %v3070 = vadd.f32 %v2778, %v2990
        %v3071 = vadd.f32 %v2779, %v2993
        %v3072 = vadd.f32 %v2780, %v2996
        %v3073 = vadd.f32 %v2781, %v2999
        %v3074 = vadd.f32 %v2782, %v3002
        %v3075 = vadd.f32 %v2783, %v3005
        %v3076 = vadd.f32 %v2784, %v3008
        %v3077 = vadd.f32 %v2785, %v3011
        %v3078 = vadd.f32 %v2786, %v3014
        %v3079 = vperm.slane %v285, 4
        %v3080 = vperm.slane %v286, 4
        %v3081 = vperm.slane %v287, 4
        %v3082 = vperm.slane %v288, 4
        %v3083 = vmul.f32 %v177, %v3079
        %v3084 = vmul.f32 %v178, %v3080
        %v3085 = vmul.f32 %v179, %v3081
        %v3086 = vmul.f32 %v180, %v3082
        %v3087 = vmul.f32 %v181, %v3079
        %v3088 = vmul.f32 %v182, %v3080
        %v3089 = vmul.f32 %v183, %v3081
        %v3090 = vmul.f32 %v184, %v3082
        %v3091 = vmul.f32 %v185, %v3079
        %v3092 = vmul.f32 %v186, %v3080
        %v3093 = vmul.f32 %v187, %v3081
        %v3094 = vmul.f32 %v188, %v3082
        %v3095 = vmul.f32 %v189, %v3079
        %v3096 = vmul.f32 %v190, %v3080
        %v3097 = vmul.f32 %v191, %v3081
        %v3098 = vmul.f32 %v192, %v3082
        %v3099 = vmul.f32 %v193, %v3079
        %v3100 = vmul.f32 %v194, %v3080
        %v3101 = vmul.f32 %v195, %v3081
        %v3102 = vmul.f32 %v196, %v3082
        %v3103 = vmul.f32 %v197, %v3079
        %v3104 = vmul.f32 %v198, %v3080
        %v3105 = vmul.f32 %v199, %v3081
        %v3106 = vmul.f32 %v200, %v3082
        %v3107 = vmul.f32 %v201, %v3079
        %v3108 = vmul.f32 %v202, %v3080
        %v3109 = vmul.f32 %v203, %v3081
        %v3110 = vmul.f32 %v204, %v3082
        %v3111 = vmul.f32 %v205, %v3079
        %v3112 = vmul.f32 %v206, %v3080
        %v3113 = vmul.f32 %v207, %v3081
        %v3114 = vmul.f32 %v208, %v3082
        %v3115 = vmul.f32 %v209, %v3079
        %v3116 = vmul.f32 %v210, %v3080
        %v3117 = vmul.f32 %v211, %v3081
        %v3118 = vmul.f32 %v212, %v3082
        %v3119 = vmul.f32 %v213, %v3079
        %v3120 = vmul.f32 %v214, %v3080
        %v3121 = vmul.f32 %v215, %v3081
        %v3122 = vmul.f32 %v216, %v3082
        %v3123 = vmul.f32 %v217, %v3079
        %v3124 = vmul.f32 %v218, %v3080
        %v3125 = vmul.f32 %v219, %v3081
        %v3126 = vmul.f32 %v220, %v3082
        %v3127 = vmul.f32 %v221, %v3079
        %v3128 = vmul.f32 %v222, %v3080
        %v3129 = vmul.f32 %v223, %v3081
        %v3130 = vmul.f32 %v224, %v3082
        %v3131 = vmul.f32 %v225, %v3079
        %v3132 = vmul.f32 %v226, %v3080
        %v3133 = vmul.f32 %v227, %v3081
        %v3134 = vmul.f32 %v228, %v3082
        %v3135 = vmul.f32 %v229, %v3079
        %v3136 = vmul.f32 %v230, %v3080
        %v3137 = vmul.f32 %v231, %v3081
        %v3138 = vmul.f32 %v232, %v3082
        %v3139 = vmul.f32 %v233, %v3079
        %v3140 = vmul.f32 %v234, %v3080
        %v3141 = vmul.f32 %v235, %v3081
        %v3142 = vmul.f32 %v236, %v3082
        %v3143 = vmul.f32 %v237, %v3079
        %v3144 = vmul.f32 %v238, %v3080
        %v3145 = vmul.f32 %v239, %v3081
        %v3146 = vmul.f32 %v240, %v3082
        %v3211 = vrot.slane %v3083, 4
        %v3212 = vrot.slane %v3087, 4
        %v3213 = vsel %vm1388, %v3211, %v3212
        %v3214 = vrot.slane %v3084, 4
        %v3215 = vrot.slane %v3088, 4
        %v3216 = vsel %vm1388, %v3214, %v3215
        %v3217 = vrot.slane %v3085, 4
        %v3218 = vrot.slane %v3089, 4
        %v3219 = vsel %vm1388, %v3217, %v3218
        %v3220 = vrot.slane %v3086, 4
        %v3221 = vrot.slane %v3090, 4
        %v3222 = vsel %vm1388, %v3220, %v3221
        %v3223 = vrot.slane %v3091, 4
        %v3224 = vrot.slane %v3095, 4
        %v3225 = vsel %vm1388, %v3223, %v3224
        %v3226 = vrot.slane %v3092, 4
        %v3227 = vrot.slane %v3096, 4
        %v3228 = vsel %vm1388, %v3226, %v3227
        %v3229 = vrot.slane %v3093, 4
        %v3230 = vrot.slane %v3097, 4
        %v3231 = vsel %vm1388, %v3229, %v3230
        %v3232 = vrot.slane %v3094, 4
        %v3233 = vrot.slane %v3098, 4
        %v3234 = vsel %vm1388, %v3232, %v3233
        %v3235 = vrot.slane %v3099, 4
        %v3236 = vrot.slane %v3103, 4
        %v3237 = vsel %vm1388, %v3235, %v3236
        %v3238 = vrot.slane %v3100, 4
        %v3239 = vrot.slane %v3104, 4
        %v3240 = vsel %vm1388, %v3238, %v3239
        %v3241 = vrot.slane %v3101, 4
        %v3242 = vrot.slane %v3105, 4
        %v3243 = vsel %vm1388, %v3241, %v3242
        %v3244 = vrot.slane %v3102, 4
        %v3245 = vrot.slane %v3106, 4
        %v3246 = vsel %vm1388, %v3244, %v3245
        %v3247 = vrot.slane %v3107, 4
        %v3248 = vrot.slane %v3111, 4
        %v3249 = vsel %vm1388, %v3247, %v3248
        %v3250 = vrot.slane %v3108, 4
        %v3251 = vrot.slane %v3112, 4
        %v3252 = vsel %vm1388, %v3250, %v3251
        %v3253 = vrot.slane %v3109, 4
        %v3254 = vrot.slane %v3113, 4
        %v3255 = vsel %vm1388, %v3253, %v3254
        %v3256 = vrot.slane %v3110, 4
        %v3257 = vrot.slane %v3114, 4
        %v3258 = vsel %vm1388, %v3256, %v3257
        %v3259 = vrot.slane %v3115, 4
        %v3260 = vrot.slane %v3119, 4
        %v3261 = vsel %vm1388, %v3259, %v3260
        %v3262 = vrot.slane %v3116, 4
        %v3263 = vrot.slane %v3120, 4
        %v3264 = vsel %vm1388, %v3262, %v3263
        %v3265 = vrot.slane %v3117, 4
        %v3266 = vrot.slane %v3121, 4
        %v3267 = vsel %vm1388, %v3265, %v3266
        %v3268 = vrot.slane %v3118, 4
        %v3269 = vrot.slane %v3122, 4
        %v3270 = vsel %vm1388, %v3268, %v3269
        %v3271 = vrot.slane %v3123, 4
        %v3272 = vrot.slane %v3127, 4
        %v3273 = vsel %vm1388, %v3271, %v3272
        %v3274 = vrot.slane %v3124, 4
        %v3275 = vrot.slane %v3128, 4
        %v3276 = vsel %vm1388, %v3274, %v3275
        %v3277 = vrot.slane %v3125, 4
        %v3278 = vrot.slane %v3129, 4
        %v3279 = vsel %vm1388, %v3277, %v3278
        %v3280 = vrot.slane %v3126, 4
        %v3281 = vrot.slane %v3130, 4
        %v3282 = vsel %vm1388, %v3280, %v3281
        %v3283 = vrot.slane %v3131, 4
        %v3284 = vrot.slane %v3135, 4
        %v3285 = vsel %vm1388, %v3283, %v3284
        %v3286 = vrot.slane %v3132, 4
        %v3287 = vrot.slane %v3136, 4
        %v3288 = vsel %vm1388, %v3286, %v3287
        %v3289 = vrot.slane %v3133, 4
        %v3290 = vrot.slane %v3137, 4
        %v3291 = vsel %vm1388, %v3289, %v3290
        %v3292 = vrot.slane %v3134, 4
        %v3293 = vrot.slane %v3138, 4
        %v3294 = vsel %vm1388, %v3292, %v3293
        %v3295 = vrot.slane %v3139, 4
        %v3296 = vrot.slane %v3143, 4
        %v3297 = vsel %vm1388, %v3295, %v3296
        %v3298 = vrot.slane %v3140, 4
        %v3299 = vrot.slane %v3144, 4
        %v3300 = vsel %vm1388, %v3298, %v3299
        %v3301 = vrot.slane %v3141, 4
        %v3302 = vrot.slane %v3145, 4
        %v3303 = vsel %vm1388, %v3301, %v3302
        %v3304 = vrot.slane %v3142, 4
        %v3305 = vrot.slane %v3146, 4
        %v3306 = vsel %vm1388, %v3304, %v3305
        %v3339 = vadd.f32 %v3047, %v3213
        %v3340 = vadd.f32 %v3048, %v3216
        %v3341 = vadd.f32 %v3049, %v3219
        %v3342 = vadd.f32 %v3050, %v3222
        %v3343 = vadd.f32 %v3051, %v3225
        %v3344 = vadd.f32 %v3052, %v3228
        %v3345 = vadd.f32 %v3053, %v3231
        %v3346 = vadd.f32 %v3054, %v3234
        %v3347 = vadd.f32 %v3055, %v3237
        %v3348 = vadd.f32 %v3056, %v3240
        %v3349 = vadd.f32 %v3057, %v3243
        %v3350 = vadd.f32 %v3058, %v3246
        %v3351 = vadd.f32 %v3059, %v3249
        %v3352 = vadd.f32 %v3060, %v3252
        %v3353 = vadd.f32 %v3061, %v3255
        %v3354 = vadd.f32 %v3062, %v3258
        %v3355 = vadd.f32 %v3063, %v3261
        %v3356 = vadd.f32 %v3064, %v3264
        %v3357 = vadd.f32 %v3065, %v3267
        %v3358 = vadd.f32 %v3066, %v3270
        %v3359 = vadd.f32 %v3067, %v3273
        %v3360 = vadd.f32 %v3068, %v3276
        %v3361 = vadd.f32 %v3069, %v3279
        %v3362 = vadd.f32 %v3070, %v3282
        %v3363 = vadd.f32 %v3071, %v3285
        %v3364 = vadd.f32 %v3072, %v3288
        %v3365 = vadd.f32 %v3073, %v3291
        %v3366 = vadd.f32 %v3074, %v3294
        %v3367 = vadd.f32 %v3075, %v3297
        %v3368 = vadd.f32 %v3076, %v3300
        %v3369 = vadd.f32 %v3077, %v3303
        %v3370 = vadd.f32 %v3078, %v3306
        %v3371 = vperm.slane %v285, 5
        %v3372 = vperm.slane %v286, 5
        %v3373 = vperm.slane %v287, 5
        %v3374 = vperm.slane %v288, 5
        %v3375 = vmul.f32 %v177, %v3371
        %v3376 = vmul.f32 %v178, %v3372
        %v3377 = vmul.f32 %v179, %v3373
        %v3378 = vmul.f32 %v180, %v3374
        %v3379 = vmul.f32 %v181, %v3371
        %v3380 = vmul.f32 %v182, %v3372
        %v3381 = vmul.f32 %v183, %v3373
        %v3382 = vmul.f32 %v184, %v3374
        %v3383 = vmul.f32 %v185, %v3371
        %v3384 = vmul.f32 %v186, %v3372
        %v3385 = vmul.f32 %v187, %v3373
        %v3386 = vmul.f32 %v188, %v3374
        %v3387 = vmul.f32 %v189, %v3371
        %v3388 = vmul.f32 %v190, %v3372
        %v3389 = vmul.f32 %v191, %v3373
        %v3390 = vmul.f32 %v192, %v3374
        %v3391 = vmul.f32 %v193, %v3371
        %v3392 = vmul.f32 %v194, %v3372
        %v3393 = vmul.f32 %v195, %v3373
        %v3394 = vmul.f32 %v196, %v3374
        %v3395 = vmul.f32 %v197, %v3371
        %v3396 = vmul.f32 %v198, %v3372
        %v3397 = vmul.f32 %v199, %v3373
        %v3398 = vmul.f32 %v200, %v3374
        %v3399 = vmul.f32 %v201, %v3371
        %v3400 = vmul.f32 %v202, %v3372
        %v3401 = vmul.f32 %v203, %v3373
        %v3402 = vmul.f32 %v204, %v3374
        %v3403 = vmul.f32 %v205, %v3371
        %v3404 = vmul.f32 %v206, %v3372
        %v3405 = vmul.f32 %v207, %v3373
        %v3406 = vmul.f32 %v208, %v3374
        %v3407 = vmul.f32 %v209, %v3371
        %v3408 = vmul.f32 %v210, %v3372
        %v3409 = vmul.f32 %v211, %v3373
        %v3410 = vmul.f32 %v212, %v3374
        %v3411 = vmul.f32 %v213, %v3371
        %v3412 = vmul.f32 %v214, %v3372
        %v3413 = vmul.f32 %v215, %v3373
        %v3414 = vmul.f32 %v216, %v3374
        %v3415 = vmul.f32 %v217, %v3371
        %v3416 = vmul.f32 %v218, %v3372
        %v3417 = vmul.f32 %v219, %v3373
        %v3418 = vmul.f32 %v220, %v3374
        %v3419 = vmul.f32 %v221, %v3371
        %v3420 = vmul.f32 %v222, %v3372
        %v3421 = vmul.f32 %v223, %v3373
        %v3422 = vmul.f32 %v224, %v3374
        %v3423 = vmul.f32 %v225, %v3371
        %v3424 = vmul.f32 %v226, %v3372
        %v3425 = vmul.f32 %v227, %v3373
        %v3426 = vmul.f32 %v228, %v3374
        %v3427 = vmul.f32 %v229, %v3371
        %v3428 = vmul.f32 %v230, %v3372
        %v3429 = vmul.f32 %v231, %v3373
        %v3430 = vmul.f32 %v232, %v3374
        %v3431 = vmul.f32 %v233, %v3371
        %v3432 = vmul.f32 %v234, %v3372
        %v3433 = vmul.f32 %v235, %v3373
        %v3434 = vmul.f32 %v236, %v3374
        %v3435 = vmul.f32 %v237, %v3371
        %v3436 = vmul.f32 %v238, %v3372
        %v3437 = vmul.f32 %v239, %v3373
        %v3438 = vmul.f32 %v240, %v3374
        %v3503 = vrot.slane %v3375, 5
        %v3504 = vrot.slane %v3379, 5
        %v3505 = vsel %vm1681, %v3503, %v3504
        %v3506 = vrot.slane %v3376, 5
        %v3507 = vrot.slane %v3380, 5
        %v3508 = vsel %vm1681, %v3506, %v3507
        %v3509 = vrot.slane %v3377, 5
        %v3510 = vrot.slane %v3381, 5
        %v3511 = vsel %vm1681, %v3509, %v3510
        %v3512 = vrot.slane %v3378, 5
        %v3513 = vrot.slane %v3382, 5
        %v3514 = vsel %vm1681, %v3512, %v3513
        %v3515 = vrot.slane %v3383, 5
        %v3516 = vrot.slane %v3387, 5
        %v3517 = vsel %vm1681, %v3515, %v3516
        %v3518 = vrot.slane %v3384, 5
        %v3519 = vrot.slane %v3388, 5
        %v3520 = vsel %vm1681, %v3518, %v3519
        %v3521 = vrot.slane %v3385, 5
        %v3522 = vrot.slane %v3389, 5
        %v3523 = vsel %vm1681, %v3521, %v3522
        %v3524 = vrot.slane %v3386, 5
        %v3525 = vrot.slane %v3390, 5
        %v3526 = vsel %vm1681, %v3524, %v3525
        %v3527 = vrot.slane %v3391, 5
        %v3528 = vrot.slane %v3395, 5
        %v3529 = vsel %vm1681, %v3527, %v3528
        %v3530 = vrot.slane %v3392, 5
        %v3531 = vrot.slane %v3396, 5
        %v3532 = vsel %vm1681, %v3530, %v3531
        %v3533 = vrot.slane %v3393, 5
        %v3534 = vrot.slane %v3397, 5
        %v3535 = vsel %vm1681, %v3533, %v3534
        %v3536 = vrot.slane %v3394, 5
        %v3537 = vrot.slane %v3398, 5
        %v3538 = vsel %vm1681, %v3536, %v3537
        %v3539 = vrot.slane %v3399, 5
        %v3540 = vrot.slane %v3403, 5
        %v3541 = vsel %vm1681, %v3539, %v3540
        %v3542 = vrot.slane %v3400, 5
        %v3543 = vrot.slane %v3404, 5
        %v3544 = vsel %vm1681, %v3542, %v3543
        %v3545 = vrot.slane %v3401, 5
        %v3546 = vrot.slane %v3405, 5
        %v3547 = vsel %vm1681, %v3545, %v3546
        %v3548 = vrot.slane %v3402, 5
        %v3549 = vrot.slane %v3406, 5
        %v3550 = vsel %vm1681, %v3548, %v3549
        %v3551 = vrot.slane %v3407, 5
        %v3552 = vrot.slane %v3411, 5
        %v3553 = vsel %vm1681, %v3551, %v3552
        %v3554 = vrot.slane %v3408, 5
        %v3555 = vrot.slane %v3412, 5
        %v3556 = vsel %vm1681, %v3554, %v3555
        %v3557 = vrot.slane %v3409, 5
        %v3558 = vrot.slane %v3413, 5
        %v3559 = vsel %vm1681, %v3557, %v3558
        %v3560 = vrot.slane %v3410, 5
        %v3561 = vrot.slane %v3414, 5
        %v3562 = vsel %vm1681, %v3560, %v3561
        %v3563 = vrot.slane %v3415, 5
        %v3564 = vrot.slane %v3419, 5
        %v3565 = vsel %vm1681, %v3563, %v3564
        %v3566 = vrot.slane %v3416, 5
        %v3567 = vrot.slane %v3420, 5
        %v3568 = vsel %vm1681, %v3566, %v3567
        %v3569 = vrot.slane %v3417, 5
        %v3570 = vrot.slane %v3421, 5
        %v3571 = vsel %vm1681, %v3569, %v3570
        %v3572 = vrot.slane %v3418, 5
        %v3573 = vrot.slane %v3422, 5
        %v3574 = vsel %vm1681, %v3572, %v3573
        %v3575 = vrot.slane %v3423, 5
        %v3576 = vrot.slane %v3427, 5
        %v3577 = vsel %vm1681, %v3575, %v3576
        %v3578 = vrot.slane %v3424, 5
        %v3579 = vrot.slane %v3428, 5
        %v3580 = vsel %vm1681, %v3578, %v3579
        %v3581 = vrot.slane %v3425, 5
        %v3582 = vrot.slane %v3429, 5
        %v3583 = vsel %vm1681, %v3581, %v3582
        %v3584 = vrot.slane %v3426, 5
        %v3585 = vrot.slane %v3430, 5
        %v3586 = vsel %vm1681, %v3584, %v3585
        %v3587 = vrot.slane %v3431, 5
        %v3588 = vrot.slane %v3435, 5
        %v3589 = vsel %vm1681, %v3587, %v3588
        %v3590 = vrot.slane %v3432, 5
        %v3591 = vrot.slane %v3436, 5
        %v3592 = vsel %vm1681, %v3590, %v3591
        %v3593 = vrot.slane %v3433, 5
        %v3594 = vrot.slane %v3437, 5
        %v3595 = vsel %vm1681, %v3593, %v3594
        %v3596 = vrot.slane %v3434, 5
        %v3597 = vrot.slane %v3438, 5
        %v3598 = vsel %vm1681, %v3596, %v3597
        %v3631 = vadd.f32 %v3339, %v3505
        %v3632 = vadd.f32 %v3340, %v3508
        %v3633 = vadd.f32 %v3341, %v3511
        %v3634 = vadd.f32 %v3342, %v3514
        %v3635 = vadd.f32 %v3343, %v3517
        %v3636 = vadd.f32 %v3344, %v3520
        %v3637 = vadd.f32 %v3345, %v3523
        %v3638 = vadd.f32 %v3346, %v3526
        %v3639 = vadd.f32 %v3347, %v3529
        %v3640 = vadd.f32 %v3348, %v3532
        %v3641 = vadd.f32 %v3349, %v3535
        %v3642 = vadd.f32 %v3350, %v3538
        %v3643 = vadd.f32 %v3351, %v3541
        %v3644 = vadd.f32 %v3352, %v3544
        %v3645 = vadd.f32 %v3353, %v3547
        %v3646 = vadd.f32 %v3354, %v3550
        %v3647 = vadd.f32 %v3355, %v3553
        %v3648 = vadd.f32 %v3356, %v3556
        %v3649 = vadd.f32 %v3357, %v3559
        %v3650 = vadd.f32 %v3358, %v3562
        %v3651 = vadd.f32 %v3359, %v3565
        %v3652 = vadd.f32 %v3360, %v3568
        %v3653 = vadd.f32 %v3361, %v3571
        %v3654 = vadd.f32 %v3362, %v3574
        %v3655 = vadd.f32 %v3363, %v3577
        %v3656 = vadd.f32 %v3364, %v3580
        %v3657 = vadd.f32 %v3365, %v3583
        %v3658 = vadd.f32 %v3366, %v3586
        %v3659 = vadd.f32 %v3367, %v3589
        %v3660 = vadd.f32 %v3368, %v3592
        %v3661 = vadd.f32 %v3369, %v3595
        %v3662 = vadd.f32 %v3370, %v3598
        %v3663 = vperm.slane %v285, 6
        %v3664 = vperm.slane %v286, 6
        %v3665 = vperm.slane %v287, 6
        %v3666 = vperm.slane %v288, 6
        %v3667 = vmul.f32 %v177, %v3663
        %v3668 = vmul.f32 %v178, %v3664
        %v3669 = vmul.f32 %v179, %v3665
        %v3670 = vmul.f32 %v180, %v3666
        %v3671 = vmul.f32 %v181, %v3663
        %v3672 = vmul.f32 %v182, %v3664
        %v3673 = vmul.f32 %v183, %v3665
        %v3674 = vmul.f32 %v184, %v3666
        %v3675 = vmul.f32 %v185, %v3663
        %v3676 = vmul.f32 %v186, %v3664
        %v3677 = vmul.f32 %v187, %v3665
        %v3678 = vmul.f32 %v188, %v3666
        %v3679 = vmul.f32 %v189, %v3663
        %v3680 = vmul.f32 %v190, %v3664
        %v3681 = vmul.f32 %v191, %v3665
        %v3682 = vmul.f32 %v192, %v3666
        %v3683 = vmul.f32 %v193, %v3663
        %v3684 = vmul.f32 %v194, %v3664
        %v3685 = vmul.f32 %v195, %v3665
        %v3686 = vmul.f32 %v196, %v3666
        %v3687 = vmul.f32 %v197, %v3663
        %v3688 = vmul.f32 %v198, %v3664
        %v3689 = vmul.f32 %v199, %v3665
        %v3690 = vmul.f32 %v200, %v3666
        %v3691 = vmul.f32 %v201, %v3663
        %v3692 = vmul.f32 %v202, %v3664
        %v3693 = vmul.f32 %v203, %v3665
        %v3694 = vmul.f32 %v204, %v3666
        %v3695 = vmul.f32 %v205, %v3663
        %v3696 = vmul.f32 %v206, %v3664
        %v3697 = vmul.f32 %v207, %v3665
        %v3698 = vmul.f32 %v208, %v3666
        %v3699 = vmul.f32 %v209, %v3663
        %v3700 = vmul.f32 %v210, %v3664
        %v3701 = vmul.f32 %v211, %v3665
        %v3702 = vmul.f32 %v212, %v3666
        %v3703 = vmul.f32 %v213, %v3663
        %v3704 = vmul.f32 %v214, %v3664
        %v3705 = vmul.f32 %v215, %v3665
        %v3706 = vmul.f32 %v216, %v3666
        %v3707 = vmul.f32 %v217, %v3663
        %v3708 = vmul.f32 %v218, %v3664
        %v3709 = vmul.f32 %v219, %v3665
        %v3710 = vmul.f32 %v220, %v3666
        %v3711 = vmul.f32 %v221, %v3663
        %v3712 = vmul.f32 %v222, %v3664
        %v3713 = vmul.f32 %v223, %v3665
        %v3714 = vmul.f32 %v224, %v3666
        %v3715 = vmul.f32 %v225, %v3663
        %v3716 = vmul.f32 %v226, %v3664
        %v3717 = vmul.f32 %v227, %v3665
        %v3718 = vmul.f32 %v228, %v3666
        %v3719 = vmul.f32 %v229, %v3663
        %v3720 = vmul.f32 %v230, %v3664
        %v3721 = vmul.f32 %v231, %v3665
        %v3722 = vmul.f32 %v232, %v3666
        %v3723 = vmul.f32 %v233, %v3663
        %v3724 = vmul.f32 %v234, %v3664
        %v3725 = vmul.f32 %v235, %v3665
        %v3726 = vmul.f32 %v236, %v3666
        %v3727 = vmul.f32 %v237, %v3663
        %v3728 = vmul.f32 %v238, %v3664
        %v3729 = vmul.f32 %v239, %v3665
        %v3730 = vmul.f32 %v240, %v3666
        %v3795 = vrot.slane %v3667, 6
        %v3796 = vrot.slane %v3671, 6
        %v3797 = vsel %vm1974, %v3795, %v3796
        %v3798 = vrot.slane %v3668, 6
        %v3799 = vrot.slane %v3672, 6
        %v3800 = vsel %vm1974, %v3798, %v3799
        %v3801 = vrot.slane %v3669, 6
        %v3802 = vrot.slane %v3673, 6
        %v3803 = vsel %vm1974, %v3801, %v3802
        %v3804 = vrot.slane %v3670, 6
        %v3805 = vrot.slane %v3674, 6
        %v3806 = vsel %vm1974, %v3804, %v3805
        %v3807 = vrot.slane %v3675, 6
        %v3808 = vrot.slane %v3679, 6
        %v3809 = vsel %vm1974, %v3807, %v3808
        %v3810 = vrot.slane %v3676, 6
        %v3811 = vrot.slane %v3680, 6
        %v3812 = vsel %vm1974, %v3810, %v3811
        %v3813 = vrot.slane %v3677, 6
        %v3814 = vrot.slane %v3681, 6
        %v3815 = vsel %vm1974, %v3813, %v3814
        %v3816 = vrot.slane %v3678, 6
        %v3817 = vrot.slane %v3682, 6
        %v3818 = vsel %vm1974, %v3816, %v3817
        %v3819 = vrot.slane %v3683, 6
        %v3820 = vrot.slane %v3687, 6
        %v3821 = vsel %vm1974, %v3819, %v3820
        %v3822 = vrot.slane %v3684, 6
        %v3823 = vrot.slane %v3688, 6
        %v3824 = vsel %vm1974, %v3822, %v3823
        %v3825 = vrot.slane %v3685, 6
        %v3826 = vrot.slane %v3689, 6
        %v3827 = vsel %vm1974, %v3825, %v3826
        %v3828 = vrot.slane %v3686, 6
        %v3829 = vrot.slane %v3690, 6
        %v3830 = vsel %vm1974, %v3828, %v3829
        %v3831 = vrot.slane %v3691, 6
        %v3832 = vrot.slane %v3695, 6
        %v3833 = vsel %vm1974, %v3831, %v3832
        %v3834 = vrot.slane %v3692, 6
        %v3835 = vrot.slane %v3696, 6
        %v3836 = vsel %vm1974, %v3834, %v3835
        %v3837 = vrot.slane %v3693, 6
        %v3838 = vrot.slane %v3697, 6
        %v3839 = vsel %vm1974, %v3837, %v3838
        %v3840 = vrot.slane %v3694, 6
        %v3841 = vrot.slane %v3698, 6
        %v3842 = vsel %vm1974, %v3840, %v3841
        %v3843 = vrot.slane %v3699, 6
        %v3844 = vrot.slane %v3703, 6
        %v3845 = vsel %vm1974, %v3843, %v3844
        %v3846 = vrot.slane %v3700, 6
        %v3847 = vrot.slane %v3704, 6
        %v3848 = vsel %vm1974, %v3846, %v3847
        %v3849 = vrot.slane %v3701, 6
        %v3850 = vrot.slane %v3705, 6
        %v3851 = vsel %vm1974, %v3849, %v3850
        %v3852 = vrot.slane %v3702, 6
        %v3853 = vrot.slane %v3706, 6
        %v3854 = vsel %vm1974, %v3852, %v3853
        %v3855 = vrot.slane %v3707, 6
        %v3856 = vrot.slane %v3711, 6
        %v3857 = vsel %vm1974, %v3855, %v3856
        %v3858 = vrot.slane %v3708, 6
        %v3859 = vrot.slane %v3712, 6
        %v3860 = vsel %vm1974, %v3858, %v3859
        %v3861 = vrot.slane %v3709, 6
        %v3862 = vrot.slane %v3713, 6
        %v3863 = vsel %vm1974, %v3861, %v3862
        %v3864 = vrot.slane %v3710, 6
        %v3865 = vrot.slane %v3714, 6
        %v3866 = vsel %vm1974, %v3864, %v3865
        %v3867 = vrot.slane %v3715, 6
        %v3868 = vrot.slane %v3719, 6
        %v3869 = vsel %vm1974, %v3867, %v3868
        %v3870 = vrot.slane %v3716, 6
        %v3871 = vrot.slane %v3720, 6
        %v3872 = vsel %vm1974, %v3870, %v3871
        %v3873 = vrot.slane %v3717, 6
        %v3874 = vrot.slane %v3721, 6
        %v3875 = vsel %vm1974, %v3873, %v3874
        %v3876 = vrot.slane %v3718, 6
        %v3877 = vrot.slane %v3722, 6
        %v3878 = vsel %vm1974, %v3876, %v3877
        %v3879 = vrot.slane %v3723, 6
        %v3880 = vrot.slane %v3727, 6
        %v3881 = vsel %vm1974, %v3879, %v3880
        %v3882 = vrot.slane %v3724, 6
        %v3883 = vrot.slane %v3728, 6
        %v3884 = vsel %vm1974, %v3882, %v3883
        %v3885 = vrot.slane %v3725, 6
        %v3886 = vrot.slane %v3729, 6
        %v3887 = vsel %vm1974, %v3885, %v3886
        %v3888 = vrot.slane %v3726, 6
        %v3889 = vrot.slane %v3730, 6
        %v3890 = vsel %vm1974, %v3888, %v3889
        %v3923 = vadd.f32 %v3631, %v3797
        %v3924 = vadd.f32 %v3632, %v3800
        %v3925 = vadd.f32 %v3633, %v3803
        %v3926 = vadd.f32 %v3634, %v3806
        %v3927 = vadd.f32 %v3635, %v3809
        %v3928 = vadd.f32 %v3636, %v3812
        %v3929 = vadd.f32 %v3637, %v3815
        %v3930 = vadd.f32 %v3638, %v3818
        %v3931 = vadd.f32 %v3639, %v3821
        %v3932 = vadd.f32 %v3640, %v3824
        %v3933 = vadd.f32 %v3641, %v3827
        %v3934 = vadd.f32 %v3642, %v3830
        %v3935 = vadd.f32 %v3643, %v3833
        %v3936 = vadd.f32 %v3644, %v3836
        %v3937 = vadd.f32 %v3645, %v3839
        %v3938 = vadd.f32 %v3646, %v3842
        %v3939 = vadd.f32 %v3647, %v3845
        %v3940 = vadd.f32 %v3648, %v3848
        %v3941 = vadd.f32 %v3649, %v3851
        %v3942 = vadd.f32 %v3650, %v3854
        %v3943 = vadd.f32 %v3651, %v3857
        %v3944 = vadd.f32 %v3652, %v3860
        %v3945 = vadd.f32 %v3653, %v3863
        %v3946 = vadd.f32 %v3654, %v3866
        %v3947 = vadd.f32 %v3655, %v3869
        %v3948 = vadd.f32 %v3656, %v3872
        %v3949 = vadd.f32 %v3657, %v3875
        %v3950 = vadd.f32 %v3658, %v3878
        %v3951 = vadd.f32 %v3659, %v3881
        %v3952 = vadd.f32 %v3660, %v3884
        %v3953 = vadd.f32 %v3661, %v3887
        %v3954 = vadd.f32 %v3662, %v3890
        %v3955 = vperm.slane %v289, 0
        %v3956 = vperm.slane %v290, 0
        %v3957 = vperm.slane %v291, 0
        %v3958 = vperm.slane %v292, 0
        %v3959 = vmul.f32 %v185, %v3955
        %v3960 = vmul.f32 %v186, %v3956
        %v3961 = vmul.f32 %v187, %v3957
        %v3962 = vmul.f32 %v188, %v3958
        %v3963 = vmul.f32 %v193, %v3955
        %v3964 = vmul.f32 %v194, %v3956
        %v3965 = vmul.f32 %v195, %v3957
        %v3966 = vmul.f32 %v196, %v3958
        %v3967 = vmul.f32 %v201, %v3955
        %v3968 = vmul.f32 %v202, %v3956
        %v3969 = vmul.f32 %v203, %v3957
        %v3970 = vmul.f32 %v204, %v3958
        %v3971 = vmul.f32 %v209, %v3955
        %v3972 = vmul.f32 %v210, %v3956
        %v3973 = vmul.f32 %v211, %v3957
        %v3974 = vmul.f32 %v212, %v3958
        %v3975 = vmul.f32 %v217, %v3955
        %v3976 = vmul.f32 %v218, %v3956
        %v3977 = vmul.f32 %v219, %v3957
        %v3978 = vmul.f32 %v220, %v3958
        %v3979 = vmul.f32 %v225, %v3955
        %v3980 = vmul.f32 %v226, %v3956
        %v3981 = vmul.f32 %v227, %v3957
        %v3982 = vmul.f32 %v228, %v3958
        %v3983 = vmul.f32 %v233, %v3955
        %v3984 = vmul.f32 %v234, %v3956
        %v3985 = vmul.f32 %v235, %v3957
        %v3986 = vmul.f32 %v236, %v3958
        %v3987 = vmul.f32 %v241, %v3955
        %v3988 = vmul.f32 %v242, %v3956
        %v3989 = vmul.f32 %v243, %v3957
        %v3990 = vmul.f32 %v244, %v3958
        %v3991 = vadd.f32 %v3923, %v3959
        %v3992 = vadd.f32 %v3924, %v3960
        %v3993 = vadd.f32 %v3925, %v3961
        %v3994 = vadd.f32 %v3926, %v3962
        %v3995 = vadd.f32 %v3927, %v3963
        %v3996 = vadd.f32 %v3928, %v3964
        %v3997 = vadd.f32 %v3929, %v3965
        %v3998 = vadd.f32 %v3930, %v3966
        %v3999 = vadd.f32 %v3931, %v3967
        %v4000 = vadd.f32 %v3932, %v3968
        %v4001 = vadd.f32 %v3933, %v3969
        %v4002 = vadd.f32 %v3934, %v3970
        %v4003 = vadd.f32 %v3935, %v3971
        %v4004 = vadd.f32 %v3936, %v3972
        %v4005 = vadd.f32 %v3937, %v3973
        %v4006 = vadd.f32 %v3938, %v3974
        %v4007 = vadd.f32 %v3939, %v3975
        %v4008 = vadd.f32 %v3940, %v3976
        %v4009 = vadd.f32 %v3941, %v3977
        %v4010 = vadd.f32 %v3942, %v3978
        %v4011 = vadd.f32 %v3943, %v3979
        %v4012 = vadd.f32 %v3944, %v3980
        %v4013 = vadd.f32 %v3945, %v3981
        %v4014 = vadd.f32 %v3946, %v3982
        %v4015 = vadd.f32 %v3947, %v3983
        %v4016 = vadd.f32 %v3948, %v3984
        %v4017 = vadd.f32 %v3949, %v3985
        %v4018 = vadd.f32 %v3950, %v3986
        %v4019 = vadd.f32 %v3951, %v3987
        %v4020 = vadd.f32 %v3952, %v3988
        %v4021 = vadd.f32 %v3953, %v3989
        %v4022 = vadd.f32 %v3954, %v3990
        %v4023 = vperm.slane %v289, 1
        %v4024 = vperm.slane %v290, 1
        %v4025 = vperm.slane %v291, 1
        %v4026 = vperm.slane %v292, 1
        %v4027 = vmul.f32 %v185, %v4023
        %v4028 = vmul.f32 %v186, %v4024
        %v4029 = vmul.f32 %v187, %v4025
        %v4030 = vmul.f32 %v188, %v4026
        %v4031 = vmul.f32 %v189, %v4023
        %v4032 = vmul.f32 %v190, %v4024
        %v4033 = vmul.f32 %v191, %v4025
        %v4034 = vmul.f32 %v192, %v4026
        %v4035 = vmul.f32 %v193, %v4023
        %v4036 = vmul.f32 %v194, %v4024
        %v4037 = vmul.f32 %v195, %v4025
        %v4038 = vmul.f32 %v196, %v4026
        %v4039 = vmul.f32 %v197, %v4023
        %v4040 = vmul.f32 %v198, %v4024
        %v4041 = vmul.f32 %v199, %v4025
        %v4042 = vmul.f32 %v200, %v4026
        %v4043 = vmul.f32 %v201, %v4023
        %v4044 = vmul.f32 %v202, %v4024
        %v4045 = vmul.f32 %v203, %v4025
        %v4046 = vmul.f32 %v204, %v4026
        %v4047 = vmul.f32 %v205, %v4023
        %v4048 = vmul.f32 %v206, %v4024
        %v4049 = vmul.f32 %v207, %v4025
        %v4050 = vmul.f32 %v208, %v4026
        %v4051 = vmul.f32 %v209, %v4023
        %v4052 = vmul.f32 %v210, %v4024
        %v4053 = vmul.f32 %v211, %v4025
        %v4054 = vmul.f32 %v212, %v4026
        %v4055 = vmul.f32 %v213, %v4023
        %v4056 = vmul.f32 %v214, %v4024
        %v4057 = vmul.f32 %v215, %v4025
        %v4058 = vmul.f32 %v216, %v4026
        %v4059 = vmul.f32 %v217, %v4023
        %v4060 = vmul.f32 %v218, %v4024
        %v4061 = vmul.f32 %v219, %v4025
        %v4062 = vmul.f32 %v220, %v4026
        %v4063 = vmul.f32 %v221, %v4023
        %v4064 = vmul.f32 %v222, %v4024
        %v4065 = vmul.f32 %v223, %v4025
        %v4066 = vmul.f32 %v224, %v4026
        %v4067 = vmul.f32 %v225, %v4023
        %v4068 = vmul.f32 %v226, %v4024
        %v4069 = vmul.f32 %v227, %v4025
        %v4070 = vmul.f32 %v228, %v4026
        %v4071 = vmul.f32 %v229, %v4023
        %v4072 = vmul.f32 %v230, %v4024
        %v4073 = vmul.f32 %v231, %v4025
        %v4074 = vmul.f32 %v232, %v4026
        %v4075 = vmul.f32 %v233, %v4023
        %v4076 = vmul.f32 %v234, %v4024
        %v4077 = vmul.f32 %v235, %v4025
        %v4078 = vmul.f32 %v236, %v4026
        %v4079 = vmul.f32 %v237, %v4023
        %v4080 = vmul.f32 %v238, %v4024
        %v4081 = vmul.f32 %v239, %v4025
        %v4082 = vmul.f32 %v240, %v4026
        %v4083 = vmul.f32 %v241, %v4023
        %v4084 = vmul.f32 %v242, %v4024
        %v4085 = vmul.f32 %v243, %v4025
        %v4086 = vmul.f32 %v244, %v4026
        %v4087 = vmul.f32 %v245, %v4023
        %v4088 = vmul.f32 %v246, %v4024
        %v4089 = vmul.f32 %v247, %v4025
        %v4090 = vmul.f32 %v248, %v4026
        %v4155 = vrot.slane %v4027, 1
        %v4156 = vrot.slane %v4031, 1
        %v4157 = vsel %vm509, %v4155, %v4156
        %v4158 = vrot.slane %v4028, 1
        %v4159 = vrot.slane %v4032, 1
        %v4160 = vsel %vm509, %v4158, %v4159
        %v4161 = vrot.slane %v4029, 1
        %v4162 = vrot.slane %v4033, 1
        %v4163 = vsel %vm509, %v4161, %v4162
        %v4164 = vrot.slane %v4030, 1
        %v4165 = vrot.slane %v4034, 1
        %v4166 = vsel %vm509, %v4164, %v4165
        %v4167 = vrot.slane %v4035, 1
        %v4168 = vrot.slane %v4039, 1
        %v4169 = vsel %vm509, %v4167, %v4168
        %v4170 = vrot.slane %v4036, 1
        %v4171 = vrot.slane %v4040, 1
        %v4172 = vsel %vm509, %v4170, %v4171
        %v4173 = vrot.slane %v4037, 1
        %v4174 = vrot.slane %v4041, 1
        %v4175 = vsel %vm509, %v4173, %v4174
        %v4176 = vrot.slane %v4038, 1
        %v4177 = vrot.slane %v4042, 1
        %v4178 = vsel %vm509, %v4176, %v4177
        %v4179 = vrot.slane %v4043, 1
        %v4180 = vrot.slane %v4047, 1
        %v4181 = vsel %vm509, %v4179, %v4180
        %v4182 = vrot.slane %v4044, 1
        %v4183 = vrot.slane %v4048, 1
        %v4184 = vsel %vm509, %v4182, %v4183
        %v4185 = vrot.slane %v4045, 1
        %v4186 = vrot.slane %v4049, 1
        %v4187 = vsel %vm509, %v4185, %v4186
        %v4188 = vrot.slane %v4046, 1
        %v4189 = vrot.slane %v4050, 1
        %v4190 = vsel %vm509, %v4188, %v4189
        %v4191 = vrot.slane %v4051, 1
        %v4192 = vrot.slane %v4055, 1
        %v4193 = vsel %vm509, %v4191, %v4192
        %v4194 = vrot.slane %v4052, 1
        %v4195 = vrot.slane %v4056, 1
        %v4196 = vsel %vm509, %v4194, %v4195
        %v4197 = vrot.slane %v4053, 1
        %v4198 = vrot.slane %v4057, 1
        %v4199 = vsel %vm509, %v4197, %v4198
        %v4200 = vrot.slane %v4054, 1
        %v4201 = vrot.slane %v4058, 1
        %v4202 = vsel %vm509, %v4200, %v4201
        %v4203 = vrot.slane %v4059, 1
        %v4204 = vrot.slane %v4063, 1
        %v4205 = vsel %vm509, %v4203, %v4204
        %v4206 = vrot.slane %v4060, 1
        %v4207 = vrot.slane %v4064, 1
        %v4208 = vsel %vm509, %v4206, %v4207
        %v4209 = vrot.slane %v4061, 1
        %v4210 = vrot.slane %v4065, 1
        %v4211 = vsel %vm509, %v4209, %v4210
        %v4212 = vrot.slane %v4062, 1
        %v4213 = vrot.slane %v4066, 1
        %v4214 = vsel %vm509, %v4212, %v4213
        %v4215 = vrot.slane %v4067, 1
        %v4216 = vrot.slane %v4071, 1
        %v4217 = vsel %vm509, %v4215, %v4216
        %v4218 = vrot.slane %v4068, 1
        %v4219 = vrot.slane %v4072, 1
        %v4220 = vsel %vm509, %v4218, %v4219
        %v4221 = vrot.slane %v4069, 1
        %v4222 = vrot.slane %v4073, 1
        %v4223 = vsel %vm509, %v4221, %v4222
        %v4224 = vrot.slane %v4070, 1
        %v4225 = vrot.slane %v4074, 1
        %v4226 = vsel %vm509, %v4224, %v4225
        %v4227 = vrot.slane %v4075, 1
        %v4228 = vrot.slane %v4079, 1
        %v4229 = vsel %vm509, %v4227, %v4228
        %v4230 = vrot.slane %v4076, 1
        %v4231 = vrot.slane %v4080, 1
        %v4232 = vsel %vm509, %v4230, %v4231
        %v4233 = vrot.slane %v4077, 1
        %v4234 = vrot.slane %v4081, 1
        %v4235 = vsel %vm509, %v4233, %v4234
        %v4236 = vrot.slane %v4078, 1
        %v4237 = vrot.slane %v4082, 1
        %v4238 = vsel %vm509, %v4236, %v4237
        %v4239 = vrot.slane %v4083, 1
        %v4240 = vrot.slane %v4087, 1
        %v4241 = vsel %vm509, %v4239, %v4240
        %v4242 = vrot.slane %v4084, 1
        %v4243 = vrot.slane %v4088, 1
        %v4244 = vsel %vm509, %v4242, %v4243
        %v4245 = vrot.slane %v4085, 1
        %v4246 = vrot.slane %v4089, 1
        %v4247 = vsel %vm509, %v4245, %v4246
        %v4248 = vrot.slane %v4086, 1
        %v4249 = vrot.slane %v4090, 1
        %v4250 = vsel %vm509, %v4248, %v4249
        %v4283 = vadd.f32 %v3991, %v4157
        %v4284 = vadd.f32 %v3992, %v4160
        %v4285 = vadd.f32 %v3993, %v4163
        %v4286 = vadd.f32 %v3994, %v4166
        %v4287 = vadd.f32 %v3995, %v4169
        %v4288 = vadd.f32 %v3996, %v4172
        %v4289 = vadd.f32 %v3997, %v4175
        %v4290 = vadd.f32 %v3998, %v4178
        %v4291 = vadd.f32 %v3999, %v4181
        %v4292 = vadd.f32 %v4000, %v4184
        %v4293 = vadd.f32 %v4001, %v4187
        %v4294 = vadd.f32 %v4002, %v4190
        %v4295 = vadd.f32 %v4003, %v4193
        %v4296 = vadd.f32 %v4004, %v4196
        %v4297 = vadd.f32 %v4005, %v4199
        %v4298 = vadd.f32 %v4006, %v4202
        %v4299 = vadd.f32 %v4007, %v4205
        %v4300 = vadd.f32 %v4008, %v4208
        %v4301 = vadd.f32 %v4009, %v4211
        %v4302 = vadd.f32 %v4010, %v4214
        %v4303 = vadd.f32 %v4011, %v4217
        %v4304 = vadd.f32 %v4012, %v4220
        %v4305 = vadd.f32 %v4013, %v4223
        %v4306 = vadd.f32 %v4014, %v4226
        %v4307 = vadd.f32 %v4015, %v4229
        %v4308 = vadd.f32 %v4016, %v4232
        %v4309 = vadd.f32 %v4017, %v4235
        %v4310 = vadd.f32 %v4018, %v4238
        %v4311 = vadd.f32 %v4019, %v4241
        %v4312 = vadd.f32 %v4020, %v4244
        %v4313 = vadd.f32 %v4021, %v4247
        %v4314 = vadd.f32 %v4022, %v4250
        %v4315 = vperm.slane %v289, 2
        %v4316 = vperm.slane %v290, 2
        %v4317 = vperm.slane %v291, 2
        %v4318 = vperm.slane %v292, 2
        %v4319 = vmul.f32 %v185, %v4315
        %v4320 = vmul.f32 %v186, %v4316
        %v4321 = vmul.f32 %v187, %v4317
        %v4322 = vmul.f32 %v188, %v4318
        %v4323 = vmul.f32 %v189, %v4315
        %v4324 = vmul.f32 %v190, %v4316
        %v4325 = vmul.f32 %v191, %v4317
        %v4326 = vmul.f32 %v192, %v4318
        %v4327 = vmul.f32 %v193, %v4315
        %v4328 = vmul.f32 %v194, %v4316
        %v4329 = vmul.f32 %v195, %v4317
        %v4330 = vmul.f32 %v196, %v4318
        %v4331 = vmul.f32 %v197, %v4315
        %v4332 = vmul.f32 %v198, %v4316
        %v4333 = vmul.f32 %v199, %v4317
        %v4334 = vmul.f32 %v200, %v4318
        %v4335 = vmul.f32 %v201, %v4315
        %v4336 = vmul.f32 %v202, %v4316
        %v4337 = vmul.f32 %v203, %v4317
        %v4338 = vmul.f32 %v204, %v4318
        %v4339 = vmul.f32 %v205, %v4315
        %v4340 = vmul.f32 %v206, %v4316
        %v4341 = vmul.f32 %v207, %v4317
        %v4342 = vmul.f32 %v208, %v4318
        %v4343 = vmul.f32 %v209, %v4315
        %v4344 = vmul.f32 %v210, %v4316
        %v4345 = vmul.f32 %v211, %v4317
        %v4346 = vmul.f32 %v212, %v4318
        %v4347 = vmul.f32 %v213, %v4315
        %v4348 = vmul.f32 %v214, %v4316
        %v4349 = vmul.f32 %v215, %v4317
        %v4350 = vmul.f32 %v216, %v4318
        %v4351 = vmul.f32 %v217, %v4315
        %v4352 = vmul.f32 %v218, %v4316
        %v4353 = vmul.f32 %v219, %v4317
        %v4354 = vmul.f32 %v220, %v4318
        %v4355 = vmul.f32 %v221, %v4315
        %v4356 = vmul.f32 %v222, %v4316
        %v4357 = vmul.f32 %v223, %v4317
        %v4358 = vmul.f32 %v224, %v4318
        %v4359 = vmul.f32 %v225, %v4315
        %v4360 = vmul.f32 %v226, %v4316
        %v4361 = vmul.f32 %v227, %v4317
        %v4362 = vmul.f32 %v228, %v4318
        %v4363 = vmul.f32 %v229, %v4315
        %v4364 = vmul.f32 %v230, %v4316
        %v4365 = vmul.f32 %v231, %v4317
        %v4366 = vmul.f32 %v232, %v4318
        %v4367 = vmul.f32 %v233, %v4315
        %v4368 = vmul.f32 %v234, %v4316
        %v4369 = vmul.f32 %v235, %v4317
        %v4370 = vmul.f32 %v236, %v4318
        %v4371 = vmul.f32 %v237, %v4315
        %v4372 = vmul.f32 %v238, %v4316
        %v4373 = vmul.f32 %v239, %v4317
        %v4374 = vmul.f32 %v240, %v4318
        %v4375 = vmul.f32 %v241, %v4315
        %v4376 = vmul.f32 %v242, %v4316
        %v4377 = vmul.f32 %v243, %v4317
        %v4378 = vmul.f32 %v244, %v4318
        %v4379 = vmul.f32 %v245, %v4315
        %v4380 = vmul.f32 %v246, %v4316
        %v4381 = vmul.f32 %v247, %v4317
        %v4382 = vmul.f32 %v248, %v4318
        %v4447 = vrot.slane %v4319, 2
        %v4448 = vrot.slane %v4323, 2
        %v4449 = vsel %vm802, %v4447, %v4448
        %v4450 = vrot.slane %v4320, 2
        %v4451 = vrot.slane %v4324, 2
        %v4452 = vsel %vm802, %v4450, %v4451
        %v4453 = vrot.slane %v4321, 2
        %v4454 = vrot.slane %v4325, 2
        %v4455 = vsel %vm802, %v4453, %v4454
        %v4456 = vrot.slane %v4322, 2
        %v4457 = vrot.slane %v4326, 2
        %v4458 = vsel %vm802, %v4456, %v4457
        %v4459 = vrot.slane %v4327, 2
        %v4460 = vrot.slane %v4331, 2
        %v4461 = vsel %vm802, %v4459, %v4460
        %v4462 = vrot.slane %v4328, 2
        %v4463 = vrot.slane %v4332, 2
        %v4464 = vsel %vm802, %v4462, %v4463
        %v4465 = vrot.slane %v4329, 2
        %v4466 = vrot.slane %v4333, 2
        %v4467 = vsel %vm802, %v4465, %v4466
        %v4468 = vrot.slane %v4330, 2
        %v4469 = vrot.slane %v4334, 2
        %v4470 = vsel %vm802, %v4468, %v4469
        %v4471 = vrot.slane %v4335, 2
        %v4472 = vrot.slane %v4339, 2
        %v4473 = vsel %vm802, %v4471, %v4472
        %v4474 = vrot.slane %v4336, 2
        %v4475 = vrot.slane %v4340, 2
        %v4476 = vsel %vm802, %v4474, %v4475
        %v4477 = vrot.slane %v4337, 2
        %v4478 = vrot.slane %v4341, 2
        %v4479 = vsel %vm802, %v4477, %v4478
        %v4480 = vrot.slane %v4338, 2
        %v4481 = vrot.slane %v4342, 2
        %v4482 = vsel %vm802, %v4480, %v4481
        %v4483 = vrot.slane %v4343, 2
        %v4484 = vrot.slane %v4347, 2
        %v4485 = vsel %vm802, %v4483, %v4484
        %v4486 = vrot.slane %v4344, 2
        %v4487 = vrot.slane %v4348, 2
        %v4488 = vsel %vm802, %v4486, %v4487
        %v4489 = vrot.slane %v4345, 2
        %v4490 = vrot.slane %v4349, 2
        %v4491 = vsel %vm802, %v4489, %v4490
        %v4492 = vrot.slane %v4346, 2
        %v4493 = vrot.slane %v4350, 2
        %v4494 = vsel %vm802, %v4492, %v4493
        %v4495 = vrot.slane %v4351, 2
        %v4496 = vrot.slane %v4355, 2
        %v4497 = vsel %vm802, %v4495, %v4496
        %v4498 = vrot.slane %v4352, 2
        %v4499 = vrot.slane %v4356, 2
        %v4500 = vsel %vm802, %v4498, %v4499
        %v4501 = vrot.slane %v4353, 2
        %v4502 = vrot.slane %v4357, 2
        %v4503 = vsel %vm802, %v4501, %v4502
        %v4504 = vrot.slane %v4354, 2
        %v4505 = vrot.slane %v4358, 2
        %v4506 = vsel %vm802, %v4504, %v4505
        %v4507 = vrot.slane %v4359, 2
        %v4508 = vrot.slane %v4363, 2
        %v4509 = vsel %vm802, %v4507, %v4508
        %v4510 = vrot.slane %v4360, 2
        %v4511 = vrot.slane %v4364, 2
        %v4512 = vsel %vm802, %v4510, %v4511
        %v4513 = vrot.slane %v4361, 2
        %v4514 = vrot.slane %v4365, 2
        %v4515 = vsel %vm802, %v4513, %v4514
        %v4516 = vrot.slane %v4362, 2
        %v4517 = vrot.slane %v4366, 2
        %v4518 = vsel %vm802, %v4516, %v4517
        %v4519 = vrot.slane %v4367, 2
        %v4520 = vrot.slane %v4371, 2
        %v4521 = vsel %vm802, %v4519, %v4520
        %v4522 = vrot.slane %v4368, 2
        %v4523 = vrot.slane %v4372, 2
        %v4524 = vsel %vm802, %v4522, %v4523
        %v4525 = vrot.slane %v4369, 2
        %v4526 = vrot.slane %v4373, 2
        %v4527 = vsel %vm802, %v4525, %v4526
        %v4528 = vrot.slane %v4370, 2
        %v4529 = vrot.slane %v4374, 2
        %v4530 = vsel %vm802, %v4528, %v4529
        %v4531 = vrot.slane %v4375, 2
        %v4532 = vrot.slane %v4379, 2
        %v4533 = vsel %vm802, %v4531, %v4532
        %v4534 = vrot.slane %v4376, 2
        %v4535 = vrot.slane %v4380, 2
        %v4536 = vsel %vm802, %v4534, %v4535
        %v4537 = vrot.slane %v4377, 2
        %v4538 = vrot.slane %v4381, 2
        %v4539 = vsel %vm802, %v4537, %v4538
        %v4540 = vrot.slane %v4378, 2
        %v4541 = vrot.slane %v4382, 2
        %v4542 = vsel %vm802, %v4540, %v4541
        %v4575 = vadd.f32 %v4283, %v4449
        %v4576 = vadd.f32 %v4284, %v4452
        %v4577 = vadd.f32 %v4285, %v4455
        %v4578 = vadd.f32 %v4286, %v4458
        %v4579 = vadd.f32 %v4287, %v4461
        %v4580 = vadd.f32 %v4288, %v4464
        %v4581 = vadd.f32 %v4289, %v4467
        %v4582 = vadd.f32 %v4290, %v4470
        %v4583 = vadd.f32 %v4291, %v4473
        %v4584 = vadd.f32 %v4292, %v4476
        %v4585 = vadd.f32 %v4293, %v4479
        %v4586 = vadd.f32 %v4294, %v4482
        %v4587 = vadd.f32 %v4295, %v4485
        %v4588 = vadd.f32 %v4296, %v4488
        %v4589 = vadd.f32 %v4297, %v4491
        %v4590 = vadd.f32 %v4298, %v4494
        %v4591 = vadd.f32 %v4299, %v4497
        %v4592 = vadd.f32 %v4300, %v4500
        %v4593 = vadd.f32 %v4301, %v4503
        %v4594 = vadd.f32 %v4302, %v4506
        %v4595 = vadd.f32 %v4303, %v4509
        %v4596 = vadd.f32 %v4304, %v4512
        %v4597 = vadd.f32 %v4305, %v4515
        %v4598 = vadd.f32 %v4306, %v4518
        %v4599 = vadd.f32 %v4307, %v4521
        %v4600 = vadd.f32 %v4308, %v4524
        %v4601 = vadd.f32 %v4309, %v4527
        %v4602 = vadd.f32 %v4310, %v4530
        %v4603 = vadd.f32 %v4311, %v4533
        %v4604 = vadd.f32 %v4312, %v4536
        %v4605 = vadd.f32 %v4313, %v4539
        %v4606 = vadd.f32 %v4314, %v4542
        %v4607 = vperm.slane %v289, 3
        %v4608 = vperm.slane %v290, 3
        %v4609 = vperm.slane %v291, 3
        %v4610 = vperm.slane %v292, 3
        %v4611 = vmul.f32 %v185, %v4607
        %v4612 = vmul.f32 %v186, %v4608
        %v4613 = vmul.f32 %v187, %v4609
        %v4614 = vmul.f32 %v188, %v4610
        %v4615 = vmul.f32 %v189, %v4607
        %v4616 = vmul.f32 %v190, %v4608
        %v4617 = vmul.f32 %v191, %v4609
        %v4618 = vmul.f32 %v192, %v4610
        %v4619 = vmul.f32 %v193, %v4607
        %v4620 = vmul.f32 %v194, %v4608
        %v4621 = vmul.f32 %v195, %v4609
        %v4622 = vmul.f32 %v196, %v4610
        %v4623 = vmul.f32 %v197, %v4607
        %v4624 = vmul.f32 %v198, %v4608
        %v4625 = vmul.f32 %v199, %v4609
        %v4626 = vmul.f32 %v200, %v4610
        %v4627 = vmul.f32 %v201, %v4607
        %v4628 = vmul.f32 %v202, %v4608
        %v4629 = vmul.f32 %v203, %v4609
        %v4630 = vmul.f32 %v204, %v4610
        %v4631 = vmul.f32 %v205, %v4607
        %v4632 = vmul.f32 %v206, %v4608
        %v4633 = vmul.f32 %v207, %v4609
        %v4634 = vmul.f32 %v208, %v4610
        %v4635 = vmul.f32 %v209, %v4607
        %v4636 = vmul.f32 %v210, %v4608
        %v4637 = vmul.f32 %v211, %v4609
        %v4638 = vmul.f32 %v212, %v4610
        %v4639 = vmul.f32 %v213, %v4607
        %v4640 = vmul.f32 %v214, %v4608
        %v4641 = vmul.f32 %v215, %v4609
        %v4642 = vmul.f32 %v216, %v4610
        %v4643 = vmul.f32 %v217, %v4607
        %v4644 = vmul.f32 %v218, %v4608
        %v4645 = vmul.f32 %v219, %v4609
        %v4646 = vmul.f32 %v220, %v4610
        %v4647 = vmul.f32 %v221, %v4607
        %v4648 = vmul.f32 %v222, %v4608
        %v4649 = vmul.f32 %v223, %v4609
        %v4650 = vmul.f32 %v224, %v4610
        %v4651 = vmul.f32 %v225, %v4607
        %v4652 = vmul.f32 %v226, %v4608
        %v4653 = vmul.f32 %v227, %v4609
        %v4654 = vmul.f32 %v228, %v4610
        %v4655 = vmul.f32 %v229, %v4607
        %v4656 = vmul.f32 %v230, %v4608
        %v4657 = vmul.f32 %v231, %v4609
        %v4658 = vmul.f32 %v232, %v4610
        %v4659 = vmul.f32 %v233, %v4607
        %v4660 = vmul.f32 %v234, %v4608
        %v4661 = vmul.f32 %v235, %v4609
        %v4662 = vmul.f32 %v236, %v4610
        %v4663 = vmul.f32 %v237, %v4607
        %v4664 = vmul.f32 %v238, %v4608
        %v4665 = vmul.f32 %v239, %v4609
        %v4666 = vmul.f32 %v240, %v4610
        %v4667 = vmul.f32 %v241, %v4607
        %v4668 = vmul.f32 %v242, %v4608
        %v4669 = vmul.f32 %v243, %v4609
        %v4670 = vmul.f32 %v244, %v4610
        %v4671 = vmul.f32 %v245, %v4607
        %v4672 = vmul.f32 %v246, %v4608
        %v4673 = vmul.f32 %v247, %v4609
        %v4674 = vmul.f32 %v248, %v4610
        %v4739 = vrot.slane %v4611, 3
        %v4740 = vrot.slane %v4615, 3
        %v4741 = vsel %vm1095, %v4739, %v4740
        %v4742 = vrot.slane %v4612, 3
        %v4743 = vrot.slane %v4616, 3
        %v4744 = vsel %vm1095, %v4742, %v4743
        %v4745 = vrot.slane %v4613, 3
        %v4746 = vrot.slane %v4617, 3
        %v4747 = vsel %vm1095, %v4745, %v4746
        %v4748 = vrot.slane %v4614, 3
        %v4749 = vrot.slane %v4618, 3
        %v4750 = vsel %vm1095, %v4748, %v4749
        %v4751 = vrot.slane %v4619, 3
        %v4752 = vrot.slane %v4623, 3
        %v4753 = vsel %vm1095, %v4751, %v4752
        %v4754 = vrot.slane %v4620, 3
        %v4755 = vrot.slane %v4624, 3
        %v4756 = vsel %vm1095, %v4754, %v4755
        %v4757 = vrot.slane %v4621, 3
        %v4758 = vrot.slane %v4625, 3
        %v4759 = vsel %vm1095, %v4757, %v4758
        %v4760 = vrot.slane %v4622, 3
        %v4761 = vrot.slane %v4626, 3
        %v4762 = vsel %vm1095, %v4760, %v4761
        %v4763 = vrot.slane %v4627, 3
        %v4764 = vrot.slane %v4631, 3
        %v4765 = vsel %vm1095, %v4763, %v4764
        %v4766 = vrot.slane %v4628, 3
        %v4767 = vrot.slane %v4632, 3
        %v4768 = vsel %vm1095, %v4766, %v4767
        %v4769 = vrot.slane %v4629, 3
        %v4770 = vrot.slane %v4633, 3
        %v4771 = vsel %vm1095, %v4769, %v4770
        %v4772 = vrot.slane %v4630, 3
        %v4773 = vrot.slane %v4634, 3
        %v4774 = vsel %vm1095, %v4772, %v4773
        %v4775 = vrot.slane %v4635, 3
        %v4776 = vrot.slane %v4639, 3
        %v4777 = vsel %vm1095, %v4775, %v4776
        %v4778 = vrot.slane %v4636, 3
        %v4779 = vrot.slane %v4640, 3
        %v4780 = vsel %vm1095, %v4778, %v4779
        %v4781 = vrot.slane %v4637, 3
        %v4782 = vrot.slane %v4641, 3
        %v4783 = vsel %vm1095, %v4781, %v4782
        %v4784 = vrot.slane %v4638, 3
        %v4785 = vrot.slane %v4642, 3
        %v4786 = vsel %vm1095, %v4784, %v4785
        %v4787 = vrot.slane %v4643, 3
        %v4788 = vrot.slane %v4647, 3
        %v4789 = vsel %vm1095, %v4787, %v4788
        %v4790 = vrot.slane %v4644, 3
        %v4791 = vrot.slane %v4648, 3
        %v4792 = vsel %vm1095, %v4790, %v4791
        %v4793 = vrot.slane %v4645, 3
        %v4794 = vrot.slane %v4649, 3
        %v4795 = vsel %vm1095, %v4793, %v4794
        %v4796 = vrot.slane %v4646, 3
        %v4797 = vrot.slane %v4650, 3
        %v4798 = vsel %vm1095, %v4796, %v4797
        %v4799 = vrot.slane %v4651, 3
        %v4800 = vrot.slane %v4655, 3
        %v4801 = vsel %vm1095, %v4799, %v4800
        %v4802 = vrot.slane %v4652, 3
        %v4803 = vrot.slane %v4656, 3
        %v4804 = vsel %vm1095, %v4802, %v4803
        %v4805 = vrot.slane %v4653, 3
        %v4806 = vrot.slane %v4657, 3
        %v4807 = vsel %vm1095, %v4805, %v4806
        %v4808 = vrot.slane %v4654, 3
        %v4809 = vrot.slane %v4658, 3
        %v4810 = vsel %vm1095, %v4808, %v4809
        %v4811 = vrot.slane %v4659, 3
        %v4812 = vrot.slane %v4663, 3
        %v4813 = vsel %vm1095, %v4811, %v4812
        %v4814 = vrot.slane %v4660, 3
        %v4815 = vrot.slane %v4664, 3
        %v4816 = vsel %vm1095, %v4814, %v4815
        %v4817 = vrot.slane %v4661, 3
        %v4818 = vrot.slane %v4665, 3
        %v4819 = vsel %vm1095, %v4817, %v4818
        %v4820 = vrot.slane %v4662, 3
        %v4821 = vrot.slane %v4666, 3
        %v4822 = vsel %vm1095, %v4820, %v4821
        %v4823 = vrot.slane %v4667, 3
        %v4824 = vrot.slane %v4671, 3
        %v4825 = vsel %vm1095, %v4823, %v4824
        %v4826 = vrot.slane %v4668, 3
        %v4827 = vrot.slane %v4672, 3
        %v4828 = vsel %vm1095, %v4826, %v4827
        %v4829 = vrot.slane %v4669, 3
        %v4830 = vrot.slane %v4673, 3
        %v4831 = vsel %vm1095, %v4829, %v4830
        %v4832 = vrot.slane %v4670, 3
        %v4833 = vrot.slane %v4674, 3
        %v4834 = vsel %vm1095, %v4832, %v4833
        %v4867 = vadd.f32 %v4575, %v4741
        %v4868 = vadd.f32 %v4576, %v4744
        %v4869 = vadd.f32 %v4577, %v4747
        %v4870 = vadd.f32 %v4578, %v4750
        %v4871 = vadd.f32 %v4579, %v4753
        %v4872 = vadd.f32 %v4580, %v4756
        %v4873 = vadd.f32 %v4581, %v4759
        %v4874 = vadd.f32 %v4582, %v4762
        %v4875 = vadd.f32 %v4583, %v4765
        %v4876 = vadd.f32 %v4584, %v4768
        %v4877 = vadd.f32 %v4585, %v4771
        %v4878 = vadd.f32 %v4586, %v4774
        %v4879 = vadd.f32 %v4587, %v4777
        %v4880 = vadd.f32 %v4588, %v4780
        %v4881 = vadd.f32 %v4589, %v4783
        %v4882 = vadd.f32 %v4590, %v4786
        %v4883 = vadd.f32 %v4591, %v4789
        %v4884 = vadd.f32 %v4592, %v4792
        %v4885 = vadd.f32 %v4593, %v4795
        %v4886 = vadd.f32 %v4594, %v4798
        %v4887 = vadd.f32 %v4595, %v4801
        %v4888 = vadd.f32 %v4596, %v4804
        %v4889 = vadd.f32 %v4597, %v4807
        %v4890 = vadd.f32 %v4598, %v4810
        %v4891 = vadd.f32 %v4599, %v4813
        %v4892 = vadd.f32 %v4600, %v4816
        %v4893 = vadd.f32 %v4601, %v4819
        %v4894 = vadd.f32 %v4602, %v4822
        %v4895 = vadd.f32 %v4603, %v4825
        %v4896 = vadd.f32 %v4604, %v4828
        %v4897 = vadd.f32 %v4605, %v4831
        %v4898 = vadd.f32 %v4606, %v4834
        %v4899 = vperm.slane %v289, 4
        %v4900 = vperm.slane %v290, 4
        %v4901 = vperm.slane %v291, 4
        %v4902 = vperm.slane %v292, 4
        %v4903 = vmul.f32 %v185, %v4899
        %v4904 = vmul.f32 %v186, %v4900
        %v4905 = vmul.f32 %v187, %v4901
        %v4906 = vmul.f32 %v188, %v4902
        %v4907 = vmul.f32 %v189, %v4899
        %v4908 = vmul.f32 %v190, %v4900
        %v4909 = vmul.f32 %v191, %v4901
        %v4910 = vmul.f32 %v192, %v4902
        %v4911 = vmul.f32 %v193, %v4899
        %v4912 = vmul.f32 %v194, %v4900
        %v4913 = vmul.f32 %v195, %v4901
        %v4914 = vmul.f32 %v196, %v4902
        %v4915 = vmul.f32 %v197, %v4899
        %v4916 = vmul.f32 %v198, %v4900
        %v4917 = vmul.f32 %v199, %v4901
        %v4918 = vmul.f32 %v200, %v4902
        %v4919 = vmul.f32 %v201, %v4899
        %v4920 = vmul.f32 %v202, %v4900
        %v4921 = vmul.f32 %v203, %v4901
        %v4922 = vmul.f32 %v204, %v4902
        %v4923 = vmul.f32 %v205, %v4899
        %v4924 = vmul.f32 %v206, %v4900
        %v4925 = vmul.f32 %v207, %v4901
        %v4926 = vmul.f32 %v208, %v4902
        %v4927 = vmul.f32 %v209, %v4899
        %v4928 = vmul.f32 %v210, %v4900
        %v4929 = vmul.f32 %v211, %v4901
        %v4930 = vmul.f32 %v212, %v4902
        %v4931 = vmul.f32 %v213, %v4899
        %v4932 = vmul.f32 %v214, %v4900
        %v4933 = vmul.f32 %v215, %v4901
        %v4934 = vmul.f32 %v216, %v4902
        %v4935 = vmul.f32 %v217, %v4899
        %v4936 = vmul.f32 %v218, %v4900
        %v4937 = vmul.f32 %v219, %v4901
        %v4938 = vmul.f32 %v220, %v4902
        %v4939 = vmul.f32 %v221, %v4899
        %v4940 = vmul.f32 %v222, %v4900
        %v4941 = vmul.f32 %v223, %v4901
        %v4942 = vmul.f32 %v224, %v4902
        %v4943 = vmul.f32 %v225, %v4899
        %v4944 = vmul.f32 %v226, %v4900
        %v4945 = vmul.f32 %v227, %v4901
        %v4946 = vmul.f32 %v228, %v4902
        %v4947 = vmul.f32 %v229, %v4899
        %v4948 = vmul.f32 %v230, %v4900
        %v4949 = vmul.f32 %v231, %v4901
        %v4950 = vmul.f32 %v232, %v4902
        %v4951 = vmul.f32 %v233, %v4899
        %v4952 = vmul.f32 %v234, %v4900
        %v4953 = vmul.f32 %v235, %v4901
        %v4954 = vmul.f32 %v236, %v4902
        %v4955 = vmul.f32 %v237, %v4899
        %v4956 = vmul.f32 %v238, %v4900
        %v4957 = vmul.f32 %v239, %v4901
        %v4958 = vmul.f32 %v240, %v4902
        %v4959 = vmul.f32 %v241, %v4899
        %v4960 = vmul.f32 %v242, %v4900
        %v4961 = vmul.f32 %v243, %v4901
        %v4962 = vmul.f32 %v244, %v4902
        %v4963 = vmul.f32 %v245, %v4899
        %v4964 = vmul.f32 %v246, %v4900
        %v4965 = vmul.f32 %v247, %v4901
        %v4966 = vmul.f32 %v248, %v4902
        %v5031 = vrot.slane %v4903, 4
        %v5032 = vrot.slane %v4907, 4
        %v5033 = vsel %vm1388, %v5031, %v5032
        %v5034 = vrot.slane %v4904, 4
        %v5035 = vrot.slane %v4908, 4
        %v5036 = vsel %vm1388, %v5034, %v5035
        %v5037 = vrot.slane %v4905, 4
        %v5038 = vrot.slane %v4909, 4
        %v5039 = vsel %vm1388, %v5037, %v5038
        %v5040 = vrot.slane %v4906, 4
        %v5041 = vrot.slane %v4910, 4
        %v5042 = vsel %vm1388, %v5040, %v5041
        %v5043 = vrot.slane %v4911, 4
        %v5044 = vrot.slane %v4915, 4
        %v5045 = vsel %vm1388, %v5043, %v5044
        %v5046 = vrot.slane %v4912, 4
        %v5047 = vrot.slane %v4916, 4
        %v5048 = vsel %vm1388, %v5046, %v5047
        %v5049 = vrot.slane %v4913, 4
        %v5050 = vrot.slane %v4917, 4
        %v5051 = vsel %vm1388, %v5049, %v5050
        %v5052 = vrot.slane %v4914, 4
        %v5053 = vrot.slane %v4918, 4
        %v5054 = vsel %vm1388, %v5052, %v5053
        %v5055 = vrot.slane %v4919, 4
        %v5056 = vrot.slane %v4923, 4
        %v5057 = vsel %vm1388, %v5055, %v5056
        %v5058 = vrot.slane %v4920, 4
        %v5059 = vrot.slane %v4924, 4
        %v5060 = vsel %vm1388, %v5058, %v5059
        %v5061 = vrot.slane %v4921, 4
        %v5062 = vrot.slane %v4925, 4
        %v5063 = vsel %vm1388, %v5061, %v5062
        %v5064 = vrot.slane %v4922, 4
        %v5065 = vrot.slane %v4926, 4
        %v5066 = vsel %vm1388, %v5064, %v5065
        %v5067 = vrot.slane %v4927, 4
        %v5068 = vrot.slane %v4931, 4
        %v5069 = vsel %vm1388, %v5067, %v5068
        %v5070 = vrot.slane %v4928, 4
        %v5071 = vrot.slane %v4932, 4
        %v5072 = vsel %vm1388, %v5070, %v5071
        %v5073 = vrot.slane %v4929, 4
        %v5074 = vrot.slane %v4933, 4
        %v5075 = vsel %vm1388, %v5073, %v5074
        %v5076 = vrot.slane %v4930, 4
        %v5077 = vrot.slane %v4934, 4
        %v5078 = vsel %vm1388, %v5076, %v5077
        %v5079 = vrot.slane %v4935, 4
        %v5080 = vrot.slane %v4939, 4
        %v5081 = vsel %vm1388, %v5079, %v5080
        %v5082 = vrot.slane %v4936, 4
        %v5083 = vrot.slane %v4940, 4
        %v5084 = vsel %vm1388, %v5082, %v5083
        %v5085 = vrot.slane %v4937, 4
        %v5086 = vrot.slane %v4941, 4
        %v5087 = vsel %vm1388, %v5085, %v5086
        %v5088 = vrot.slane %v4938, 4
        %v5089 = vrot.slane %v4942, 4
        %v5090 = vsel %vm1388, %v5088, %v5089
        %v5091 = vrot.slane %v4943, 4
        %v5092 = vrot.slane %v4947, 4
        %v5093 = vsel %vm1388, %v5091, %v5092
        %v5094 = vrot.slane %v4944, 4
        %v5095 = vrot.slane %v4948, 4
        %v5096 = vsel %vm1388, %v5094, %v5095
        %v5097 = vrot.slane %v4945, 4
        %v5098 = vrot.slane %v4949, 4
        %v5099 = vsel %vm1388, %v5097, %v5098
        %v5100 = vrot.slane %v4946, 4
        %v5101 = vrot.slane %v4950, 4
        %v5102 = vsel %vm1388, %v5100, %v5101
        %v5103 = vrot.slane %v4951, 4
        %v5104 = vrot.slane %v4955, 4
        %v5105 = vsel %vm1388, %v5103, %v5104
        %v5106 = vrot.slane %v4952, 4
        %v5107 = vrot.slane %v4956, 4
        %v5108 = vsel %vm1388, %v5106, %v5107
        %v5109 = vrot.slane %v4953, 4
        %v5110 = vrot.slane %v4957, 4
        %v5111 = vsel %vm1388, %v5109, %v5110
        %v5112 = vrot.slane %v4954, 4
        %v5113 = vrot.slane %v4958, 4
        %v5114 = vsel %vm1388, %v5112, %v5113
        %v5115 = vrot.slane %v4959, 4
        %v5116 = vrot.slane %v4963, 4
        %v5117 = vsel %vm1388, %v5115, %v5116
        %v5118 = vrot.slane %v4960, 4
        %v5119 = vrot.slane %v4964, 4
        %v5120 = vsel %vm1388, %v5118, %v5119
        %v5121 = vrot.slane %v4961, 4
        %v5122 = vrot.slane %v4965, 4
        %v5123 = vsel %vm1388, %v5121, %v5122
        %v5124 = vrot.slane %v4962, 4
        %v5125 = vrot.slane %v4966, 4
        %v5126 = vsel %vm1388, %v5124, %v5125
        %v5159 = vadd.f32 %v4867, %v5033
        %v5160 = vadd.f32 %v4868, %v5036
        %v5161 = vadd.f32 %v4869, %v5039
        %v5162 = vadd.f32 %v4870, %v5042
        %v5163 = vadd.f32 %v4871, %v5045
        %v5164 = vadd.f32 %v4872, %v5048
        %v5165 = vadd.f32 %v4873, %v5051
        %v5166 = vadd.f32 %v4874, %v5054
        %v5167 = vadd.f32 %v4875, %v5057
        %v5168 = vadd.f32 %v4876, %v5060
        %v5169 = vadd.f32 %v4877, %v5063
        %v5170 = vadd.f32 %v4878, %v5066
        %v5171 = vadd.f32 %v4879, %v5069
        %v5172 = vadd.f32 %v4880, %v5072
        %v5173 = vadd.f32 %v4881, %v5075
        %v5174 = vadd.f32 %v4882, %v5078
        %v5175 = vadd.f32 %v4883, %v5081
        %v5176 = vadd.f32 %v4884, %v5084
        %v5177 = vadd.f32 %v4885, %v5087
        %v5178 = vadd.f32 %v4886, %v5090
        %v5179 = vadd.f32 %v4887, %v5093
        %v5180 = vadd.f32 %v4888, %v5096
        %v5181 = vadd.f32 %v4889, %v5099
        %v5182 = vadd.f32 %v4890, %v5102
        %v5183 = vadd.f32 %v4891, %v5105
        %v5184 = vadd.f32 %v4892, %v5108
        %v5185 = vadd.f32 %v4893, %v5111
        %v5186 = vadd.f32 %v4894, %v5114
        %v5187 = vadd.f32 %v4895, %v5117
        %v5188 = vadd.f32 %v4896, %v5120
        %v5189 = vadd.f32 %v4897, %v5123
        %v5190 = vadd.f32 %v4898, %v5126
        %v5191 = vperm.slane %v289, 5
        %v5192 = vperm.slane %v290, 5
        %v5193 = vperm.slane %v291, 5
        %v5194 = vperm.slane %v292, 5
        %v5195 = vmul.f32 %v185, %v5191
        %v5196 = vmul.f32 %v186, %v5192
        %v5197 = vmul.f32 %v187, %v5193
        %v5198 = vmul.f32 %v188, %v5194
        %v5199 = vmul.f32 %v189, %v5191
        %v5200 = vmul.f32 %v190, %v5192
        %v5201 = vmul.f32 %v191, %v5193
        %v5202 = vmul.f32 %v192, %v5194
        %v5203 = vmul.f32 %v193, %v5191
        %v5204 = vmul.f32 %v194, %v5192
        %v5205 = vmul.f32 %v195, %v5193
        %v5206 = vmul.f32 %v196, %v5194
        %v5207 = vmul.f32 %v197, %v5191
        %v5208 = vmul.f32 %v198, %v5192
        %v5209 = vmul.f32 %v199, %v5193
        %v5210 = vmul.f32 %v200, %v5194
        %v5211 = vmul.f32 %v201, %v5191
        %v5212 = vmul.f32 %v202, %v5192
        %v5213 = vmul.f32 %v203, %v5193
        %v5214 = vmul.f32 %v204, %v5194
        %v5215 = vmul.f32 %v205, %v5191
        %v5216 = vmul.f32 %v206, %v5192
        %v5217 = vmul.f32 %v207, %v5193
        %v5218 = vmul.f32 %v208, %v5194
        %v5219 = vmul.f32 %v209, %v5191
        %v5220 = vmul.f32 %v210, %v5192
        %v5221 = vmul.f32 %v211, %v5193
        %v5222 = vmul.f32 %v212, %v5194
        %v5223 = vmul.f32 %v213, %v5191
        %v5224 = vmul.f32 %v214, %v5192
        %v5225 = vmul.f32 %v215, %v5193
        %v5226 = vmul.f32 %v216, %v5194
        %v5227 = vmul.f32 %v217, %v5191
        %v5228 = vmul.f32 %v218, %v5192
        %v5229 = vmul.f32 %v219, %v5193
        %v5230 = vmul.f32 %v220, %v5194
        %v5231 = vmul.f32 %v221, %v5191
        %v5232 = vmul.f32 %v222, %v5192
        %v5233 = vmul.f32 %v223, %v5193
        %v5234 = vmul.f32 %v224, %v5194
        %v5235 = vmul.f32 %v225, %v5191
        %v5236 = vmul.f32 %v226, %v5192
        %v5237 = vmul.f32 %v227, %v5193
        %v5238 = vmul.f32 %v228, %v5194
        %v5239 = vmul.f32 %v229, %v5191
        %v5240 = vmul.f32 %v230, %v5192
        %v5241 = vmul.f32 %v231, %v5193
        %v5242 = vmul.f32 %v232, %v5194
        %v5243 = vmul.f32 %v233, %v5191
        %v5244 = vmul.f32 %v234, %v5192
        %v5245 = vmul.f32 %v235, %v5193
        %v5246 = vmul.f32 %v236, %v5194
        %v5247 = vmul.f32 %v237, %v5191
        %v5248 = vmul.f32 %v238, %v5192
        %v5249 = vmul.f32 %v239, %v5193
        %v5250 = vmul.f32 %v240, %v5194
        %v5251 = vmul.f32 %v241, %v5191
        %v5252 = vmul.f32 %v242, %v5192
        %v5253 = vmul.f32 %v243, %v5193
        %v5254 = vmul.f32 %v244, %v5194
        %v5255 = vmul.f32 %v245, %v5191
        %v5256 = vmul.f32 %v246, %v5192
        %v5257 = vmul.f32 %v247, %v5193
        %v5258 = vmul.f32 %v248, %v5194
        %v5323 = vrot.slane %v5195, 5
        %v5324 = vrot.slane %v5199, 5
        %v5325 = vsel %vm1681, %v5323, %v5324
        %v5326 = vrot.slane %v5196, 5
        %v5327 = vrot.slane %v5200, 5
        %v5328 = vsel %vm1681, %v5326, %v5327
        %v5329 = vrot.slane %v5197, 5
        %v5330 = vrot.slane %v5201, 5
        %v5331 = vsel %vm1681, %v5329, %v5330
        %v5332 = vrot.slane %v5198, 5
        %v5333 = vrot.slane %v5202, 5
        %v5334 = vsel %vm1681, %v5332, %v5333
        %v5335 = vrot.slane %v5203, 5
        %v5336 = vrot.slane %v5207, 5
        %v5337 = vsel %vm1681, %v5335, %v5336
        %v5338 = vrot.slane %v5204, 5
        %v5339 = vrot.slane %v5208, 5
        %v5340 = vsel %vm1681, %v5338, %v5339
        %v5341 = vrot.slane %v5205, 5
        %v5342 = vrot.slane %v5209, 5
        %v5343 = vsel %vm1681, %v5341, %v5342
        %v5344 = vrot.slane %v5206, 5
        %v5345 = vrot.slane %v5210, 5
        %v5346 = vsel %vm1681, %v5344, %v5345
        %v5347 = vrot.slane %v5211, 5
        %v5348 = vrot.slane %v5215, 5
        %v5349 = vsel %vm1681, %v5347, %v5348
        %v5350 = vrot.slane %v5212, 5
        %v5351 = vrot.slane %v5216, 5
        %v5352 = vsel %vm1681, %v5350, %v5351
        %v5353 = vrot.slane %v5213, 5
        %v5354 = vrot.slane %v5217, 5
        %v5355 = vsel %vm1681, %v5353, %v5354
        %v5356 = vrot.slane %v5214, 5
        %v5357 = vrot.slane %v5218, 5
        %v5358 = vsel %vm1681, %v5356, %v5357
        %v5359 = vrot.slane %v5219, 5
        %v5360 = vrot.slane %v5223, 5
        %v5361 = vsel %vm1681, %v5359, %v5360
        %v5362 = vrot.slane %v5220, 5
        %v5363 = vrot.slane %v5224, 5
        %v5364 = vsel %vm1681, %v5362, %v5363
        %v5365 = vrot.slane %v5221, 5
        %v5366 = vrot.slane %v5225, 5
        %v5367 = vsel %vm1681, %v5365, %v5366
        %v5368 = vrot.slane %v5222, 5
        %v5369 = vrot.slane %v5226, 5
        %v5370 = vsel %vm1681, %v5368, %v5369
        %v5371 = vrot.slane %v5227, 5
        %v5372 = vrot.slane %v5231, 5
        %v5373 = vsel %vm1681, %v5371, %v5372
        %v5374 = vrot.slane %v5228, 5
        %v5375 = vrot.slane %v5232, 5
        %v5376 = vsel %vm1681, %v5374, %v5375
        %v5377 = vrot.slane %v5229, 5
        %v5378 = vrot.slane %v5233, 5
        %v5379 = vsel %vm1681, %v5377, %v5378
        %v5380 = vrot.slane %v5230, 5
        %v5381 = vrot.slane %v5234, 5
        %v5382 = vsel %vm1681, %v5380, %v5381
        %v5383 = vrot.slane %v5235, 5
        %v5384 = vrot.slane %v5239, 5
        %v5385 = vsel %vm1681, %v5383, %v5384
        %v5386 = vrot.slane %v5236, 5
        %v5387 = vrot.slane %v5240, 5
        %v5388 = vsel %vm1681, %v5386, %v5387
        %v5389 = vrot.slane %v5237, 5
        %v5390 = vrot.slane %v5241, 5
        %v5391 = vsel %vm1681, %v5389, %v5390
        %v5392 = vrot.slane %v5238, 5
        %v5393 = vrot.slane %v5242, 5
        %v5394 = vsel %vm1681, %v5392, %v5393
        %v5395 = vrot.slane %v5243, 5
        %v5396 = vrot.slane %v5247, 5
        %v5397 = vsel %vm1681, %v5395, %v5396
        %v5398 = vrot.slane %v5244, 5
        %v5399 = vrot.slane %v5248, 5
        %v5400 = vsel %vm1681, %v5398, %v5399
        %v5401 = vrot.slane %v5245, 5
        %v5402 = vrot.slane %v5249, 5
        %v5403 = vsel %vm1681, %v5401, %v5402
        %v5404 = vrot.slane %v5246, 5
        %v5405 = vrot.slane %v5250, 5
        %v5406 = vsel %vm1681, %v5404, %v5405
        %v5407 = vrot.slane %v5251, 5
        %v5408 = vrot.slane %v5255, 5
        %v5409 = vsel %vm1681, %v5407, %v5408
        %v5410 = vrot.slane %v5252, 5
        %v5411 = vrot.slane %v5256, 5
        %v5412 = vsel %vm1681, %v5410, %v5411
        %v5413 = vrot.slane %v5253, 5
        %v5414 = vrot.slane %v5257, 5
        %v5415 = vsel %vm1681, %v5413, %v5414
        %v5416 = vrot.slane %v5254, 5
        %v5417 = vrot.slane %v5258, 5
        %v5418 = vsel %vm1681, %v5416, %v5417
        %v5451 = vadd.f32 %v5159, %v5325
        %v5452 = vadd.f32 %v5160, %v5328
        %v5453 = vadd.f32 %v5161, %v5331
        %v5454 = vadd.f32 %v5162, %v5334
        %v5455 = vadd.f32 %v5163, %v5337
        %v5456 = vadd.f32 %v5164, %v5340
        %v5457 = vadd.f32 %v5165, %v5343
        %v5458 = vadd.f32 %v5166, %v5346
        %v5459 = vadd.f32 %v5167, %v5349
        %v5460 = vadd.f32 %v5168, %v5352
        %v5461 = vadd.f32 %v5169, %v5355
        %v5462 = vadd.f32 %v5170, %v5358
        %v5463 = vadd.f32 %v5171, %v5361
        %v5464 = vadd.f32 %v5172, %v5364
        %v5465 = vadd.f32 %v5173, %v5367
        %v5466 = vadd.f32 %v5174, %v5370
        %v5467 = vadd.f32 %v5175, %v5373
        %v5468 = vadd.f32 %v5176, %v5376
        %v5469 = vadd.f32 %v5177, %v5379
        %v5470 = vadd.f32 %v5178, %v5382
        %v5471 = vadd.f32 %v5179, %v5385
        %v5472 = vadd.f32 %v5180, %v5388
        %v5473 = vadd.f32 %v5181, %v5391
        %v5474 = vadd.f32 %v5182, %v5394
        %v5475 = vadd.f32 %v5183, %v5397
        %v5476 = vadd.f32 %v5184, %v5400
        %v5477 = vadd.f32 %v5185, %v5403
        %v5478 = vadd.f32 %v5186, %v5406
        %v5479 = vadd.f32 %v5187, %v5409
        %v5480 = vadd.f32 %v5188, %v5412
        %v5481 = vadd.f32 %v5189, %v5415
        %v5482 = vadd.f32 %v5190, %v5418
        %v5483 = vperm.slane %v289, 6
        %v5484 = vperm.slane %v290, 6
        %v5485 = vperm.slane %v291, 6
        %v5486 = vperm.slane %v292, 6
        %v5487 = vmul.f32 %v185, %v5483
        %v5488 = vmul.f32 %v186, %v5484
        %v5489 = vmul.f32 %v187, %v5485
        %v5490 = vmul.f32 %v188, %v5486
        %v5491 = vmul.f32 %v189, %v5483
        %v5492 = vmul.f32 %v190, %v5484
        %v5493 = vmul.f32 %v191, %v5485
        %v5494 = vmul.f32 %v192, %v5486
        %v5495 = vmul.f32 %v193, %v5483
        %v5496 = vmul.f32 %v194, %v5484
        %v5497 = vmul.f32 %v195, %v5485
        %v5498 = vmul.f32 %v196, %v5486
        %v5499 = vmul.f32 %v197, %v5483
        %v5500 = vmul.f32 %v198, %v5484
        %v5501 = vmul.f32 %v199, %v5485
        %v5502 = vmul.f32 %v200, %v5486
        %v5503 = vmul.f32 %v201, %v5483
        %v5504 = vmul.f32 %v202, %v5484
        %v5505 = vmul.f32 %v203, %v5485
        %v5506 = vmul.f32 %v204, %v5486
        %v5507 = vmul.f32 %v205, %v5483
        %v5508 = vmul.f32 %v206, %v5484
        %v5509 = vmul.f32 %v207, %v5485
        %v5510 = vmul.f32 %v208, %v5486
        %v5511 = vmul.f32 %v209, %v5483
        %v5512 = vmul.f32 %v210, %v5484
        %v5513 = vmul.f32 %v211, %v5485
        %v5514 = vmul.f32 %v212, %v5486
        %v5515 = vmul.f32 %v213, %v5483
        %v5516 = vmul.f32 %v214, %v5484
        %v5517 = vmul.f32 %v215, %v5485
        %v5518 = vmul.f32 %v216, %v5486
        %v5519 = vmul.f32 %v217, %v5483
        %v5520 = vmul.f32 %v218, %v5484
        %v5521 = vmul.f32 %v219, %v5485
        %v5522 = vmul.f32 %v220, %v5486
        %v5523 = vmul.f32 %v221, %v5483
        %v5524 = vmul.f32 %v222, %v5484
        %v5525 = vmul.f32 %v223, %v5485
        %v5526 = vmul.f32 %v224, %v5486
        %v5527 = vmul.f32 %v225, %v5483
        %v5528 = vmul.f32 %v226, %v5484
        %v5529 = vmul.f32 %v227, %v5485
        %v5530 = vmul.f32 %v228, %v5486
        %v5531 = vmul.f32 %v229, %v5483
        %v5532 = vmul.f32 %v230, %v5484
        %v5533 = vmul.f32 %v231, %v5485
        %v5534 = vmul.f32 %v232, %v5486
        %v5535 = vmul.f32 %v233, %v5483
        %v5536 = vmul.f32 %v234, %v5484
        %v5537 = vmul.f32 %v235, %v5485
        %v5538 = vmul.f32 %v236, %v5486
        %v5539 = vmul.f32 %v237, %v5483
        %v5540 = vmul.f32 %v238, %v5484
        %v5541 = vmul.f32 %v239, %v5485
        %v5542 = vmul.f32 %v240, %v5486
        %v5543 = vmul.f32 %v241, %v5483
        %v5544 = vmul.f32 %v242, %v5484
        %v5545 = vmul.f32 %v243, %v5485
        %v5546 = vmul.f32 %v244, %v5486
        %v5547 = vmul.f32 %v245, %v5483
        %v5548 = vmul.f32 %v246, %v5484
        %v5549 = vmul.f32 %v247, %v5485
        %v5550 = vmul.f32 %v248, %v5486
        %v5615 = vrot.slane %v5487, 6
        %v5616 = vrot.slane %v5491, 6
        %v5617 = vsel %vm1974, %v5615, %v5616
        %v5618 = vrot.slane %v5488, 6
        %v5619 = vrot.slane %v5492, 6
        %v5620 = vsel %vm1974, %v5618, %v5619
        %v5621 = vrot.slane %v5489, 6
        %v5622 = vrot.slane %v5493, 6
        %v5623 = vsel %vm1974, %v5621, %v5622
        %v5624 = vrot.slane %v5490, 6
        %v5625 = vrot.slane %v5494, 6
        %v5626 = vsel %vm1974, %v5624, %v5625
        %v5627 = vrot.slane %v5495, 6
        %v5628 = vrot.slane %v5499, 6
        %v5629 = vsel %vm1974, %v5627, %v5628
        %v5630 = vrot.slane %v5496, 6
        %v5631 = vrot.slane %v5500, 6
        %v5632 = vsel %vm1974, %v5630, %v5631
        %v5633 = vrot.slane %v5497, 6
        %v5634 = vrot.slane %v5501, 6
        %v5635 = vsel %vm1974, %v5633, %v5634
        %v5636 = vrot.slane %v5498, 6
        %v5637 = vrot.slane %v5502, 6
        %v5638 = vsel %vm1974, %v5636, %v5637
        %v5639 = vrot.slane %v5503, 6
        %v5640 = vrot.slane %v5507, 6
        %v5641 = vsel %vm1974, %v5639, %v5640
        %v5642 = vrot.slane %v5504, 6
        %v5643 = vrot.slane %v5508, 6
        %v5644 = vsel %vm1974, %v5642, %v5643
        %v5645 = vrot.slane %v5505, 6
        %v5646 = vrot.slane %v5509, 6
        %v5647 = vsel %vm1974, %v5645, %v5646
        %v5648 = vrot.slane %v5506, 6
        %v5649 = vrot.slane %v5510, 6
        %v5650 = vsel %vm1974, %v5648, %v5649
        %v5651 = vrot.slane %v5511, 6
        %v5652 = vrot.slane %v5515, 6
        %v5653 = vsel %vm1974, %v5651, %v5652
        %v5654 = vrot.slane %v5512, 6
        %v5655 = vrot.slane %v5516, 6
        %v5656 = vsel %vm1974, %v5654, %v5655
        %v5657 = vrot.slane %v5513, 6
        %v5658 = vrot.slane %v5517, 6
        %v5659 = vsel %vm1974, %v5657, %v5658
        %v5660 = vrot.slane %v5514, 6
        %v5661 = vrot.slane %v5518, 6
        %v5662 = vsel %vm1974, %v5660, %v5661
        %v5663 = vrot.slane %v5519, 6
        %v5664 = vrot.slane %v5523, 6
        %v5665 = vsel %vm1974, %v5663, %v5664
        %v5666 = vrot.slane %v5520, 6
        %v5667 = vrot.slane %v5524, 6
        %v5668 = vsel %vm1974, %v5666, %v5667
        %v5669 = vrot.slane %v5521, 6
        %v5670 = vrot.slane %v5525, 6
        %v5671 = vsel %vm1974, %v5669, %v5670
        %v5672 = vrot.slane %v5522, 6
        %v5673 = vrot.slane %v5526, 6
        %v5674 = vsel %vm1974, %v5672, %v5673
        %v5675 = vrot.slane %v5527, 6
        %v5676 = vrot.slane %v5531, 6
        %v5677 = vsel %vm1974, %v5675, %v5676
        %v5678 = vrot.slane %v5528, 6
        %v5679 = vrot.slane %v5532, 6
        %v5680 = vsel %vm1974, %v5678, %v5679
        %v5681 = vrot.slane %v5529, 6
        %v5682 = vrot.slane %v5533, 6
        %v5683 = vsel %vm1974, %v5681, %v5682
        %v5684 = vrot.slane %v5530, 6
        %v5685 = vrot.slane %v5534, 6
        %v5686 = vsel %vm1974, %v5684, %v5685
        %v5687 = vrot.slane %v5535, 6
        %v5688 = vrot.slane %v5539, 6
        %v5689 = vsel %vm1974, %v5687, %v5688
        %v5690 = vrot.slane %v5536, 6
        %v5691 = vrot.slane %v5540, 6
        %v5692 = vsel %vm1974, %v5690, %v5691
        %v5693 = vrot.slane %v5537, 6
        %v5694 = vrot.slane %v5541, 6
        %v5695 = vsel %vm1974, %v5693, %v5694
        %v5696 = vrot.slane %v5538, 6
        %v5697 = vrot.slane %v5542, 6
        %v5698 = vsel %vm1974, %v5696, %v5697
        %v5699 = vrot.slane %v5543, 6
        %v5700 = vrot.slane %v5547, 6
        %v5701 = vsel %vm1974, %v5699, %v5700
        %v5702 = vrot.slane %v5544, 6
        %v5703 = vrot.slane %v5548, 6
        %v5704 = vsel %vm1974, %v5702, %v5703
        %v5705 = vrot.slane %v5545, 6
        %v5706 = vrot.slane %v5549, 6
        %v5707 = vsel %vm1974, %v5705, %v5706
        %v5708 = vrot.slane %v5546, 6
        %v5709 = vrot.slane %v5550, 6
        %v5710 = vsel %vm1974, %v5708, %v5709
        %v5743 = vadd.f32 %v5451, %v5617
        %v5744 = vadd.f32 %v5452, %v5620
        %v5745 = vadd.f32 %v5453, %v5623
        %v5746 = vadd.f32 %v5454, %v5626
        %v5747 = vadd.f32 %v5455, %v5629
        %v5748 = vadd.f32 %v5456, %v5632
        %v5749 = vadd.f32 %v5457, %v5635
        %v5750 = vadd.f32 %v5458, %v5638
        %v5751 = vadd.f32 %v5459, %v5641
        %v5752 = vadd.f32 %v5460, %v5644
        %v5753 = vadd.f32 %v5461, %v5647
        %v5754 = vadd.f32 %v5462, %v5650
        %v5755 = vadd.f32 %v5463, %v5653
        %v5756 = vadd.f32 %v5464, %v5656
        %v5757 = vadd.f32 %v5465, %v5659
        %v5758 = vadd.f32 %v5466, %v5662
        %v5759 = vadd.f32 %v5467, %v5665
        %v5760 = vadd.f32 %v5468, %v5668
        %v5761 = vadd.f32 %v5469, %v5671
        %v5762 = vadd.f32 %v5470, %v5674
        %v5763 = vadd.f32 %v5471, %v5677
        %v5764 = vadd.f32 %v5472, %v5680
        %v5765 = vadd.f32 %v5473, %v5683
        %v5766 = vadd.f32 %v5474, %v5686
        %v5767 = vadd.f32 %v5475, %v5689
        %v5768 = vadd.f32 %v5476, %v5692
        %v5769 = vadd.f32 %v5477, %v5695
        %v5770 = vadd.f32 %v5478, %v5698
        %v5771 = vadd.f32 %v5479, %v5701
        %v5772 = vadd.f32 %v5480, %v5704
        %v5773 = vadd.f32 %v5481, %v5707
        %v5774 = vadd.f32 %v5482, %v5710
        %v5775 = vperm.slane %v293, 0
        %v5776 = vperm.slane %v294, 0
        %v5777 = vperm.slane %v295, 0
        %v5778 = vperm.slane %v296, 0
        %v5779 = vmul.f32 %v193, %v5775
        %v5780 = vmul.f32 %v194, %v5776
        %v5781 = vmul.f32 %v195, %v5777
        %v5782 = vmul.f32 %v196, %v5778
        %v5783 = vmul.f32 %v201, %v5775
        %v5784 = vmul.f32 %v202, %v5776
        %v5785 = vmul.f32 %v203, %v5777
        %v5786 = vmul.f32 %v204, %v5778
        %v5787 = vmul.f32 %v209, %v5775
        %v5788 = vmul.f32 %v210, %v5776
        %v5789 = vmul.f32 %v211, %v5777
        %v5790 = vmul.f32 %v212, %v5778
        %v5791 = vmul.f32 %v217, %v5775
        %v5792 = vmul.f32 %v218, %v5776
        %v5793 = vmul.f32 %v219, %v5777
        %v5794 = vmul.f32 %v220, %v5778
        %v5795 = vmul.f32 %v225, %v5775
        %v5796 = vmul.f32 %v226, %v5776
        %v5797 = vmul.f32 %v227, %v5777
        %v5798 = vmul.f32 %v228, %v5778
        %v5799 = vmul.f32 %v233, %v5775
        %v5800 = vmul.f32 %v234, %v5776
        %v5801 = vmul.f32 %v235, %v5777
        %v5802 = vmul.f32 %v236, %v5778
        %v5803 = vmul.f32 %v241, %v5775
        %v5804 = vmul.f32 %v242, %v5776
        %v5805 = vmul.f32 %v243, %v5777
        %v5806 = vmul.f32 %v244, %v5778
        %v5807 = vmul.f32 %v249, %v5775
        %v5808 = vmul.f32 %v250, %v5776
        %v5809 = vmul.f32 %v251, %v5777
        %v5810 = vmul.f32 %v252, %v5778
        %v5811 = vadd.f32 %v5743, %v5779
        %v5812 = vadd.f32 %v5744, %v5780
        %v5813 = vadd.f32 %v5745, %v5781
        %v5814 = vadd.f32 %v5746, %v5782
        %v5815 = vadd.f32 %v5747, %v5783
        %v5816 = vadd.f32 %v5748, %v5784
        %v5817 = vadd.f32 %v5749, %v5785
        %v5818 = vadd.f32 %v5750, %v5786
        %v5819 = vadd.f32 %v5751, %v5787
        %v5820 = vadd.f32 %v5752, %v5788
        %v5821 = vadd.f32 %v5753, %v5789
        %v5822 = vadd.f32 %v5754, %v5790
        %v5823 = vadd.f32 %v5755, %v5791
        %v5824 = vadd.f32 %v5756, %v5792
        %v5825 = vadd.f32 %v5757, %v5793
        %v5826 = vadd.f32 %v5758, %v5794
        %v5827 = vadd.f32 %v5759, %v5795
        %v5828 = vadd.f32 %v5760, %v5796
        %v5829 = vadd.f32 %v5761, %v5797
        %v5830 = vadd.f32 %v5762, %v5798
        %v5831 = vadd.f32 %v5763, %v5799
        %v5832 = vadd.f32 %v5764, %v5800
        %v5833 = vadd.f32 %v5765, %v5801
        %v5834 = vadd.f32 %v5766, %v5802
        %v5835 = vadd.f32 %v5767, %v5803
        %v5836 = vadd.f32 %v5768, %v5804
        %v5837 = vadd.f32 %v5769, %v5805
        %v5838 = vadd.f32 %v5770, %v5806
        %v5839 = vadd.f32 %v5771, %v5807
        %v5840 = vadd.f32 %v5772, %v5808
        %v5841 = vadd.f32 %v5773, %v5809
        %v5842 = vadd.f32 %v5774, %v5810
        %v5843 = vperm.slane %v293, 1
        %v5844 = vperm.slane %v294, 1
        %v5845 = vperm.slane %v295, 1
        %v5846 = vperm.slane %v296, 1
        %v5847 = vmul.f32 %v193, %v5843
        %v5848 = vmul.f32 %v194, %v5844
        %v5849 = vmul.f32 %v195, %v5845
        %v5850 = vmul.f32 %v196, %v5846
        %v5851 = vmul.f32 %v197, %v5843
        %v5852 = vmul.f32 %v198, %v5844
        %v5853 = vmul.f32 %v199, %v5845
        %v5854 = vmul.f32 %v200, %v5846
        %v5855 = vmul.f32 %v201, %v5843
        %v5856 = vmul.f32 %v202, %v5844
        %v5857 = vmul.f32 %v203, %v5845
        %v5858 = vmul.f32 %v204, %v5846
        %v5859 = vmul.f32 %v205, %v5843
        %v5860 = vmul.f32 %v206, %v5844
        %v5861 = vmul.f32 %v207, %v5845
        %v5862 = vmul.f32 %v208, %v5846
        %v5863 = vmul.f32 %v209, %v5843
        %v5864 = vmul.f32 %v210, %v5844
        %v5865 = vmul.f32 %v211, %v5845
        %v5866 = vmul.f32 %v212, %v5846
        %v5867 = vmul.f32 %v213, %v5843
        %v5868 = vmul.f32 %v214, %v5844
        %v5869 = vmul.f32 %v215, %v5845
        %v5870 = vmul.f32 %v216, %v5846
        %v5871 = vmul.f32 %v217, %v5843
        %v5872 = vmul.f32 %v218, %v5844
        %v5873 = vmul.f32 %v219, %v5845
        %v5874 = vmul.f32 %v220, %v5846
        %v5875 = vmul.f32 %v221, %v5843
        %v5876 = vmul.f32 %v222, %v5844
        %v5877 = vmul.f32 %v223, %v5845
        %v5878 = vmul.f32 %v224, %v5846
        %v5879 = vmul.f32 %v225, %v5843
        %v5880 = vmul.f32 %v226, %v5844
        %v5881 = vmul.f32 %v227, %v5845
        %v5882 = vmul.f32 %v228, %v5846
        %v5883 = vmul.f32 %v229, %v5843
        %v5884 = vmul.f32 %v230, %v5844
        %v5885 = vmul.f32 %v231, %v5845
        %v5886 = vmul.f32 %v232, %v5846
        %v5887 = vmul.f32 %v233, %v5843
        %v5888 = vmul.f32 %v234, %v5844
        %v5889 = vmul.f32 %v235, %v5845
        %v5890 = vmul.f32 %v236, %v5846
        %v5891 = vmul.f32 %v237, %v5843
        %v5892 = vmul.f32 %v238, %v5844
        %v5893 = vmul.f32 %v239, %v5845
        %v5894 = vmul.f32 %v240, %v5846
        %v5895 = vmul.f32 %v241, %v5843
        %v5896 = vmul.f32 %v242, %v5844
        %v5897 = vmul.f32 %v243, %v5845
        %v5898 = vmul.f32 %v244, %v5846
        %v5899 = vmul.f32 %v245, %v5843
        %v5900 = vmul.f32 %v246, %v5844
        %v5901 = vmul.f32 %v247, %v5845
        %v5902 = vmul.f32 %v248, %v5846
        %v5903 = vmul.f32 %v249, %v5843
        %v5904 = vmul.f32 %v250, %v5844
        %v5905 = vmul.f32 %v251, %v5845
        %v5906 = vmul.f32 %v252, %v5846
        %v5907 = vmul.f32 %v253, %v5843
        %v5908 = vmul.f32 %v254, %v5844
        %v5909 = vmul.f32 %v255, %v5845
        %v5910 = vmul.f32 %v256, %v5846
        %v5975 = vrot.slane %v5847, 1
        %v5976 = vrot.slane %v5851, 1
        %v5977 = vsel %vm509, %v5975, %v5976
        %v5978 = vrot.slane %v5848, 1
        %v5979 = vrot.slane %v5852, 1
        %v5980 = vsel %vm509, %v5978, %v5979
        %v5981 = vrot.slane %v5849, 1
        %v5982 = vrot.slane %v5853, 1
        %v5983 = vsel %vm509, %v5981, %v5982
        %v5984 = vrot.slane %v5850, 1
        %v5985 = vrot.slane %v5854, 1
        %v5986 = vsel %vm509, %v5984, %v5985
        %v5987 = vrot.slane %v5855, 1
        %v5988 = vrot.slane %v5859, 1
        %v5989 = vsel %vm509, %v5987, %v5988
        %v5990 = vrot.slane %v5856, 1
        %v5991 = vrot.slane %v5860, 1
        %v5992 = vsel %vm509, %v5990, %v5991
        %v5993 = vrot.slane %v5857, 1
        %v5994 = vrot.slane %v5861, 1
        %v5995 = vsel %vm509, %v5993, %v5994
        %v5996 = vrot.slane %v5858, 1
        %v5997 = vrot.slane %v5862, 1
        %v5998 = vsel %vm509, %v5996, %v5997
        %v5999 = vrot.slane %v5863, 1
        %v6000 = vrot.slane %v5867, 1
        %v6001 = vsel %vm509, %v5999, %v6000
        %v6002 = vrot.slane %v5864, 1
        %v6003 = vrot.slane %v5868, 1
        %v6004 = vsel %vm509, %v6002, %v6003
        %v6005 = vrot.slane %v5865, 1
        %v6006 = vrot.slane %v5869, 1
        %v6007 = vsel %vm509, %v6005, %v6006
        %v6008 = vrot.slane %v5866, 1
        %v6009 = vrot.slane %v5870, 1
        %v6010 = vsel %vm509, %v6008, %v6009
        %v6011 = vrot.slane %v5871, 1
        %v6012 = vrot.slane %v5875, 1
        %v6013 = vsel %vm509, %v6011, %v6012
        %v6014 = vrot.slane %v5872, 1
        %v6015 = vrot.slane %v5876, 1
        %v6016 = vsel %vm509, %v6014, %v6015
        %v6017 = vrot.slane %v5873, 1
        %v6018 = vrot.slane %v5877, 1
        %v6019 = vsel %vm509, %v6017, %v6018
        %v6020 = vrot.slane %v5874, 1
        %v6021 = vrot.slane %v5878, 1
        %v6022 = vsel %vm509, %v6020, %v6021
        %v6023 = vrot.slane %v5879, 1
        %v6024 = vrot.slane %v5883, 1
        %v6025 = vsel %vm509, %v6023, %v6024
        %v6026 = vrot.slane %v5880, 1
        %v6027 = vrot.slane %v5884, 1
        %v6028 = vsel %vm509, %v6026, %v6027
        %v6029 = vrot.slane %v5881, 1
        %v6030 = vrot.slane %v5885, 1
        %v6031 = vsel %vm509, %v6029, %v6030
        %v6032 = vrot.slane %v5882, 1
        %v6033 = vrot.slane %v5886, 1
        %v6034 = vsel %vm509, %v6032, %v6033
        %v6035 = vrot.slane %v5887, 1
        %v6036 = vrot.slane %v5891, 1
        %v6037 = vsel %vm509, %v6035, %v6036
        %v6038 = vrot.slane %v5888, 1
        %v6039 = vrot.slane %v5892, 1
        %v6040 = vsel %vm509, %v6038, %v6039
        %v6041 = vrot.slane %v5889, 1
        %v6042 = vrot.slane %v5893, 1
        %v6043 = vsel %vm509, %v6041, %v6042
        %v6044 = vrot.slane %v5890, 1
        %v6045 = vrot.slane %v5894, 1
        %v6046 = vsel %vm509, %v6044, %v6045
        %v6047 = vrot.slane %v5895, 1
        %v6048 = vrot.slane %v5899, 1
        %v6049 = vsel %vm509, %v6047, %v6048
        %v6050 = vrot.slane %v5896, 1
        %v6051 = vrot.slane %v5900, 1
        %v6052 = vsel %vm509, %v6050, %v6051
        %v6053 = vrot.slane %v5897, 1
        %v6054 = vrot.slane %v5901, 1
        %v6055 = vsel %vm509, %v6053, %v6054
        %v6056 = vrot.slane %v5898, 1
        %v6057 = vrot.slane %v5902, 1
        %v6058 = vsel %vm509, %v6056, %v6057
        %v6059 = vrot.slane %v5903, 1
        %v6060 = vrot.slane %v5907, 1
        %v6061 = vsel %vm509, %v6059, %v6060
        %v6062 = vrot.slane %v5904, 1
        %v6063 = vrot.slane %v5908, 1
        %v6064 = vsel %vm509, %v6062, %v6063
        %v6065 = vrot.slane %v5905, 1
        %v6066 = vrot.slane %v5909, 1
        %v6067 = vsel %vm509, %v6065, %v6066
        %v6068 = vrot.slane %v5906, 1
        %v6069 = vrot.slane %v5910, 1
        %v6070 = vsel %vm509, %v6068, %v6069
        %v6103 = vadd.f32 %v5811, %v5977
        %v6104 = vadd.f32 %v5812, %v5980
        %v6105 = vadd.f32 %v5813, %v5983
        %v6106 = vadd.f32 %v5814, %v5986
        %v6107 = vadd.f32 %v5815, %v5989
        %v6108 = vadd.f32 %v5816, %v5992
        %v6109 = vadd.f32 %v5817, %v5995
        %v6110 = vadd.f32 %v5818, %v5998
        %v6111 = vadd.f32 %v5819, %v6001
        %v6112 = vadd.f32 %v5820, %v6004
        %v6113 = vadd.f32 %v5821, %v6007
        %v6114 = vadd.f32 %v5822, %v6010
        %v6115 = vadd.f32 %v5823, %v6013
        %v6116 = vadd.f32 %v5824, %v6016
        %v6117 = vadd.f32 %v5825, %v6019
        %v6118 = vadd.f32 %v5826, %v6022
        %v6119 = vadd.f32 %v5827, %v6025
        %v6120 = vadd.f32 %v5828, %v6028
        %v6121 = vadd.f32 %v5829, %v6031
        %v6122 = vadd.f32 %v5830, %v6034
        %v6123 = vadd.f32 %v5831, %v6037
        %v6124 = vadd.f32 %v5832, %v6040
        %v6125 = vadd.f32 %v5833, %v6043
        %v6126 = vadd.f32 %v5834, %v6046
        %v6127 = vadd.f32 %v5835, %v6049
        %v6128 = vadd.f32 %v5836, %v6052
        %v6129 = vadd.f32 %v5837, %v6055
        %v6130 = vadd.f32 %v5838, %v6058
        %v6131 = vadd.f32 %v5839, %v6061
        %v6132 = vadd.f32 %v5840, %v6064
        %v6133 = vadd.f32 %v5841, %v6067
        %v6134 = vadd.f32 %v5842, %v6070
        %v6135 = vperm.slane %v293, 2
        %v6136 = vperm.slane %v294, 2
        %v6137 = vperm.slane %v295, 2
        %v6138 = vperm.slane %v296, 2
        %v6139 = vmul.f32 %v193, %v6135
        %v6140 = vmul.f32 %v194, %v6136
        %v6141 = vmul.f32 %v195, %v6137
        %v6142 = vmul.f32 %v196, %v6138
        %v6143 = vmul.f32 %v197, %v6135
        %v6144 = vmul.f32 %v198, %v6136
        %v6145 = vmul.f32 %v199, %v6137
        %v6146 = vmul.f32 %v200, %v6138
        %v6147 = vmul.f32 %v201, %v6135
        %v6148 = vmul.f32 %v202, %v6136
        %v6149 = vmul.f32 %v203, %v6137
        %v6150 = vmul.f32 %v204, %v6138
        %v6151 = vmul.f32 %v205, %v6135
        %v6152 = vmul.f32 %v206, %v6136
        %v6153 = vmul.f32 %v207, %v6137
        %v6154 = vmul.f32 %v208, %v6138
        %v6155 = vmul.f32 %v209, %v6135
        %v6156 = vmul.f32 %v210, %v6136
        %v6157 = vmul.f32 %v211, %v6137
        %v6158 = vmul.f32 %v212, %v6138
        %v6159 = vmul.f32 %v213, %v6135
        %v6160 = vmul.f32 %v214, %v6136
        %v6161 = vmul.f32 %v215, %v6137
        %v6162 = vmul.f32 %v216, %v6138
        %v6163 = vmul.f32 %v217, %v6135
        %v6164 = vmul.f32 %v218, %v6136
        %v6165 = vmul.f32 %v219, %v6137
        %v6166 = vmul.f32 %v220, %v6138
        %v6167 = vmul.f32 %v221, %v6135
        %v6168 = vmul.f32 %v222, %v6136
        %v6169 = vmul.f32 %v223, %v6137
        %v6170 = vmul.f32 %v224, %v6138
        %v6171 = vmul.f32 %v225, %v6135
        %v6172 = vmul.f32 %v226, %v6136
        %v6173 = vmul.f32 %v227, %v6137
        %v6174 = vmul.f32 %v228, %v6138
        %v6175 = vmul.f32 %v229, %v6135
        %v6176 = vmul.f32 %v230, %v6136
        %v6177 = vmul.f32 %v231, %v6137
        %v6178 = vmul.f32 %v232, %v6138
        %v6179 = vmul.f32 %v233, %v6135
        %v6180 = vmul.f32 %v234, %v6136
        %v6181 = vmul.f32 %v235, %v6137
        %v6182 = vmul.f32 %v236, %v6138
        %v6183 = vmul.f32 %v237, %v6135
        %v6184 = vmul.f32 %v238, %v6136
        %v6185 = vmul.f32 %v239, %v6137
        %v6186 = vmul.f32 %v240, %v6138
        %v6187 = vmul.f32 %v241, %v6135
        %v6188 = vmul.f32 %v242, %v6136
        %v6189 = vmul.f32 %v243, %v6137
        %v6190 = vmul.f32 %v244, %v6138
        %v6191 = vmul.f32 %v245, %v6135
        %v6192 = vmul.f32 %v246, %v6136
        %v6193 = vmul.f32 %v247, %v6137
        %v6194 = vmul.f32 %v248, %v6138
        %v6195 = vmul.f32 %v249, %v6135
        %v6196 = vmul.f32 %v250, %v6136
        %v6197 = vmul.f32 %v251, %v6137
        %v6198 = vmul.f32 %v252, %v6138
        %v6199 = vmul.f32 %v253, %v6135
        %v6200 = vmul.f32 %v254, %v6136
        %v6201 = vmul.f32 %v255, %v6137
        %v6202 = vmul.f32 %v256, %v6138
        %v6267 = vrot.slane %v6139, 2
        %v6268 = vrot.slane %v6143, 2
        %v6269 = vsel %vm802, %v6267, %v6268
        %v6270 = vrot.slane %v6140, 2
        %v6271 = vrot.slane %v6144, 2
        %v6272 = vsel %vm802, %v6270, %v6271
        %v6273 = vrot.slane %v6141, 2
        %v6274 = vrot.slane %v6145, 2
        %v6275 = vsel %vm802, %v6273, %v6274
        %v6276 = vrot.slane %v6142, 2
        %v6277 = vrot.slane %v6146, 2
        %v6278 = vsel %vm802, %v6276, %v6277
        %v6279 = vrot.slane %v6147, 2
        %v6280 = vrot.slane %v6151, 2
        %v6281 = vsel %vm802, %v6279, %v6280
        %v6282 = vrot.slane %v6148, 2
        %v6283 = vrot.slane %v6152, 2
        %v6284 = vsel %vm802, %v6282, %v6283
        %v6285 = vrot.slane %v6149, 2
        %v6286 = vrot.slane %v6153, 2
        %v6287 = vsel %vm802, %v6285, %v6286
        %v6288 = vrot.slane %v6150, 2
        %v6289 = vrot.slane %v6154, 2
        %v6290 = vsel %vm802, %v6288, %v6289
        %v6291 = vrot.slane %v6155, 2
        %v6292 = vrot.slane %v6159, 2
        %v6293 = vsel %vm802, %v6291, %v6292
        %v6294 = vrot.slane %v6156, 2
        %v6295 = vrot.slane %v6160, 2
        %v6296 = vsel %vm802, %v6294, %v6295
        %v6297 = vrot.slane %v6157, 2
        %v6298 = vrot.slane %v6161, 2
        %v6299 = vsel %vm802, %v6297, %v6298
        %v6300 = vrot.slane %v6158, 2
        %v6301 = vrot.slane %v6162, 2
        %v6302 = vsel %vm802, %v6300, %v6301
        %v6303 = vrot.slane %v6163, 2
        %v6304 = vrot.slane %v6167, 2
        %v6305 = vsel %vm802, %v6303, %v6304
        %v6306 = vrot.slane %v6164, 2
        %v6307 = vrot.slane %v6168, 2
        %v6308 = vsel %vm802, %v6306, %v6307
        %v6309 = vrot.slane %v6165, 2
        %v6310 = vrot.slane %v6169, 2
        %v6311 = vsel %vm802, %v6309, %v6310
        %v6312 = vrot.slane %v6166, 2
        %v6313 = vrot.slane %v6170, 2
        %v6314 = vsel %vm802, %v6312, %v6313
        %v6315 = vrot.slane %v6171, 2
        %v6316 = vrot.slane %v6175, 2
        %v6317 = vsel %vm802, %v6315, %v6316
        %v6318 = vrot.slane %v6172, 2
        %v6319 = vrot.slane %v6176, 2
        %v6320 = vsel %vm802, %v6318, %v6319
        %v6321 = vrot.slane %v6173, 2
        %v6322 = vrot.slane %v6177, 2
        %v6323 = vsel %vm802, %v6321, %v6322
        %v6324 = vrot.slane %v6174, 2
        %v6325 = vrot.slane %v6178, 2
        %v6326 = vsel %vm802, %v6324, %v6325
        %v6327 = vrot.slane %v6179, 2
        %v6328 = vrot.slane %v6183, 2
        %v6329 = vsel %vm802, %v6327, %v6328
        %v6330 = vrot.slane %v6180, 2
        %v6331 = vrot.slane %v6184, 2
        %v6332 = vsel %vm802, %v6330, %v6331
        %v6333 = vrot.slane %v6181, 2
        %v6334 = vrot.slane %v6185, 2
        %v6335 = vsel %vm802, %v6333, %v6334
        %v6336 = vrot.slane %v6182, 2
        %v6337 = vrot.slane %v6186, 2
        %v6338 = vsel %vm802, %v6336, %v6337
        %v6339 = vrot.slane %v6187, 2
        %v6340 = vrot.slane %v6191, 2
        %v6341 = vsel %vm802, %v6339, %v6340
        %v6342 = vrot.slane %v6188, 2
        %v6343 = vrot.slane %v6192, 2
        %v6344 = vsel %vm802, %v6342, %v6343
        %v6345 = vrot.slane %v6189, 2
        %v6346 = vrot.slane %v6193, 2
        %v6347 = vsel %vm802, %v6345, %v6346
        %v6348 = vrot.slane %v6190, 2
        %v6349 = vrot.slane %v6194, 2
        %v6350 = vsel %vm802, %v6348, %v6349
        %v6351 = vrot.slane %v6195, 2
        %v6352 = vrot.slane %v6199, 2
        %v6353 = vsel %vm802, %v6351, %v6352
        %v6354 = vrot.slane %v6196, 2
        %v6355 = vrot.slane %v6200, 2
        %v6356 = vsel %vm802, %v6354, %v6355
        %v6357 = vrot.slane %v6197, 2
        %v6358 = vrot.slane %v6201, 2
        %v6359 = vsel %vm802, %v6357, %v6358
        %v6360 = vrot.slane %v6198, 2
        %v6361 = vrot.slane %v6202, 2
        %v6362 = vsel %vm802, %v6360, %v6361
        %v6395 = vadd.f32 %v6103, %v6269
        %v6396 = vadd.f32 %v6104, %v6272
        %v6397 = vadd.f32 %v6105, %v6275
        %v6398 = vadd.f32 %v6106, %v6278
        %v6399 = vadd.f32 %v6107, %v6281
        %v6400 = vadd.f32 %v6108, %v6284
        %v6401 = vadd.f32 %v6109, %v6287
        %v6402 = vadd.f32 %v6110, %v6290
        %v6403 = vadd.f32 %v6111, %v6293
        %v6404 = vadd.f32 %v6112, %v6296
        %v6405 = vadd.f32 %v6113, %v6299
        %v6406 = vadd.f32 %v6114, %v6302
        %v6407 = vadd.f32 %v6115, %v6305
        %v6408 = vadd.f32 %v6116, %v6308
        %v6409 = vadd.f32 %v6117, %v6311
        %v6410 = vadd.f32 %v6118, %v6314
        %v6411 = vadd.f32 %v6119, %v6317
        %v6412 = vadd.f32 %v6120, %v6320
        %v6413 = vadd.f32 %v6121, %v6323
        %v6414 = vadd.f32 %v6122, %v6326
        %v6415 = vadd.f32 %v6123, %v6329
        %v6416 = vadd.f32 %v6124, %v6332
        %v6417 = vadd.f32 %v6125, %v6335
        %v6418 = vadd.f32 %v6126, %v6338
        %v6419 = vadd.f32 %v6127, %v6341
        %v6420 = vadd.f32 %v6128, %v6344
        %v6421 = vadd.f32 %v6129, %v6347
        %v6422 = vadd.f32 %v6130, %v6350
        %v6423 = vadd.f32 %v6131, %v6353
        %v6424 = vadd.f32 %v6132, %v6356
        %v6425 = vadd.f32 %v6133, %v6359
        %v6426 = vadd.f32 %v6134, %v6362
        %v6427 = vperm.slane %v293, 3
        %v6428 = vperm.slane %v294, 3
        %v6429 = vperm.slane %v295, 3
        %v6430 = vperm.slane %v296, 3
        %v6431 = vmul.f32 %v193, %v6427
        %v6432 = vmul.f32 %v194, %v6428
        %v6433 = vmul.f32 %v195, %v6429
        %v6434 = vmul.f32 %v196, %v6430
        %v6435 = vmul.f32 %v197, %v6427
        %v6436 = vmul.f32 %v198, %v6428
        %v6437 = vmul.f32 %v199, %v6429
        %v6438 = vmul.f32 %v200, %v6430
        %v6439 = vmul.f32 %v201, %v6427
        %v6440 = vmul.f32 %v202, %v6428
        %v6441 = vmul.f32 %v203, %v6429
        %v6442 = vmul.f32 %v204, %v6430
        %v6443 = vmul.f32 %v205, %v6427
        %v6444 = vmul.f32 %v206, %v6428
        %v6445 = vmul.f32 %v207, %v6429
        %v6446 = vmul.f32 %v208, %v6430
        %v6447 = vmul.f32 %v209, %v6427
        %v6448 = vmul.f32 %v210, %v6428
        %v6449 = vmul.f32 %v211, %v6429
        %v6450 = vmul.f32 %v212, %v6430
        %v6451 = vmul.f32 %v213, %v6427
        %v6452 = vmul.f32 %v214, %v6428
        %v6453 = vmul.f32 %v215, %v6429
        %v6454 = vmul.f32 %v216, %v6430
        %v6455 = vmul.f32 %v217, %v6427
        %v6456 = vmul.f32 %v218, %v6428
        %v6457 = vmul.f32 %v219, %v6429
        %v6458 = vmul.f32 %v220, %v6430
        %v6459 = vmul.f32 %v221, %v6427
        %v6460 = vmul.f32 %v222, %v6428
        %v6461 = vmul.f32 %v223, %v6429
        %v6462 = vmul.f32 %v224, %v6430
        %v6463 = vmul.f32 %v225, %v6427
        %v6464 = vmul.f32 %v226, %v6428
        %v6465 = vmul.f32 %v227, %v6429
        %v6466 = vmul.f32 %v228, %v6430
        %v6467 = vmul.f32 %v229, %v6427
        %v6468 = vmul.f32 %v230, %v6428
        %v6469 = vmul.f32 %v231, %v6429
        %v6470 = vmul.f32 %v232, %v6430
        %v6471 = vmul.f32 %v233, %v6427
        %v6472 = vmul.f32 %v234, %v6428
        %v6473 = vmul.f32 %v235, %v6429
        %v6474 = vmul.f32 %v236, %v6430
        %v6475 = vmul.f32 %v237, %v6427
        %v6476 = vmul.f32 %v238, %v6428
        %v6477 = vmul.f32 %v239, %v6429
        %v6478 = vmul.f32 %v240, %v6430
        %v6479 = vmul.f32 %v241, %v6427
        %v6480 = vmul.f32 %v242, %v6428
        %v6481 = vmul.f32 %v243, %v6429
        %v6482 = vmul.f32 %v244, %v6430
        %v6483 = vmul.f32 %v245, %v6427
        %v6484 = vmul.f32 %v246, %v6428
        %v6485 = vmul.f32 %v247, %v6429
        %v6486 = vmul.f32 %v248, %v6430
        %v6487 = vmul.f32 %v249, %v6427
        %v6488 = vmul.f32 %v250, %v6428
        %v6489 = vmul.f32 %v251, %v6429
        %v6490 = vmul.f32 %v252, %v6430
        %v6491 = vmul.f32 %v253, %v6427
        %v6492 = vmul.f32 %v254, %v6428
        %v6493 = vmul.f32 %v255, %v6429
        %v6494 = vmul.f32 %v256, %v6430
        %v6559 = vrot.slane %v6431, 3
        %v6560 = vrot.slane %v6435, 3
        %v6561 = vsel %vm1095, %v6559, %v6560
        %v6562 = vrot.slane %v6432, 3
        %v6563 = vrot.slane %v6436, 3
        %v6564 = vsel %vm1095, %v6562, %v6563
        %v6565 = vrot.slane %v6433, 3
        %v6566 = vrot.slane %v6437, 3
        %v6567 = vsel %vm1095, %v6565, %v6566
        %v6568 = vrot.slane %v6434, 3
        %v6569 = vrot.slane %v6438, 3
        %v6570 = vsel %vm1095, %v6568, %v6569
        %v6571 = vrot.slane %v6439, 3
        %v6572 = vrot.slane %v6443, 3
        %v6573 = vsel %vm1095, %v6571, %v6572
        %v6574 = vrot.slane %v6440, 3
        %v6575 = vrot.slane %v6444, 3
        %v6576 = vsel %vm1095, %v6574, %v6575
        %v6577 = vrot.slane %v6441, 3
        %v6578 = vrot.slane %v6445, 3
        %v6579 = vsel %vm1095, %v6577, %v6578
        %v6580 = vrot.slane %v6442, 3
        %v6581 = vrot.slane %v6446, 3
        %v6582 = vsel %vm1095, %v6580, %v6581
        %v6583 = vrot.slane %v6447, 3
        %v6584 = vrot.slane %v6451, 3
        %v6585 = vsel %vm1095, %v6583, %v6584
        %v6586 = vrot.slane %v6448, 3
        %v6587 = vrot.slane %v6452, 3
        %v6588 = vsel %vm1095, %v6586, %v6587
        %v6589 = vrot.slane %v6449, 3
        %v6590 = vrot.slane %v6453, 3
        %v6591 = vsel %vm1095, %v6589, %v6590
        %v6592 = vrot.slane %v6450, 3
        %v6593 = vrot.slane %v6454, 3
        %v6594 = vsel %vm1095, %v6592, %v6593
        %v6595 = vrot.slane %v6455, 3
        %v6596 = vrot.slane %v6459, 3
        %v6597 = vsel %vm1095, %v6595, %v6596
        %v6598 = vrot.slane %v6456, 3
        %v6599 = vrot.slane %v6460, 3
        %v6600 = vsel %vm1095, %v6598, %v6599
        %v6601 = vrot.slane %v6457, 3
        %v6602 = vrot.slane %v6461, 3
        %v6603 = vsel %vm1095, %v6601, %v6602
        %v6604 = vrot.slane %v6458, 3
        %v6605 = vrot.slane %v6462, 3
        %v6606 = vsel %vm1095, %v6604, %v6605
        %v6607 = vrot.slane %v6463, 3
        %v6608 = vrot.slane %v6467, 3
        %v6609 = vsel %vm1095, %v6607, %v6608
        %v6610 = vrot.slane %v6464, 3
        %v6611 = vrot.slane %v6468, 3
        %v6612 = vsel %vm1095, %v6610, %v6611
        %v6613 = vrot.slane %v6465, 3
        %v6614 = vrot.slane %v6469, 3
        %v6615 = vsel %vm1095, %v6613, %v6614
        %v6616 = vrot.slane %v6466, 3
        %v6617 = vrot.slane %v6470, 3
        %v6618 = vsel %vm1095, %v6616, %v6617
        %v6619 = vrot.slane %v6471, 3
        %v6620 = vrot.slane %v6475, 3
        %v6621 = vsel %vm1095, %v6619, %v6620
        %v6622 = vrot.slane %v6472, 3
        %v6623 = vrot.slane %v6476, 3
        %v6624 = vsel %vm1095, %v6622, %v6623
        %v6625 = vrot.slane %v6473, 3
        %v6626 = vrot.slane %v6477, 3
        %v6627 = vsel %vm1095, %v6625, %v6626
        %v6628 = vrot.slane %v6474, 3
        %v6629 = vrot.slane %v6478, 3
        %v6630 = vsel %vm1095, %v6628, %v6629
        %v6631 = vrot.slane %v6479, 3
        %v6632 = vrot.slane %v6483, 3
        %v6633 = vsel %vm1095, %v6631, %v6632
        %v6634 = vrot.slane %v6480, 3
        %v6635 = vrot.slane %v6484, 3
        %v6636 = vsel %vm1095, %v6634, %v6635
        %v6637 = vrot.slane %v6481, 3
        %v6638 = vrot.slane %v6485, 3
        %v6639 = vsel %vm1095, %v6637, %v6638
        %v6640 = vrot.slane %v6482, 3
        %v6641 = vrot.slane %v6486, 3
        %v6642 = vsel %vm1095, %v6640, %v6641
        %v6643 = vrot.slane %v6487, 3
        %v6644 = vrot.slane %v6491, 3
        %v6645 = vsel %vm1095, %v6643, %v6644
        %v6646 = vrot.slane %v6488, 3
        %v6647 = vrot.slane %v6492, 3
        %v6648 = vsel %vm1095, %v6646, %v6647
        %v6649 = vrot.slane %v6489, 3
        %v6650 = vrot.slane %v6493, 3
        %v6651 = vsel %vm1095, %v6649, %v6650
        %v6652 = vrot.slane %v6490, 3
        %v6653 = vrot.slane %v6494, 3
        %v6654 = vsel %vm1095, %v6652, %v6653
        %v6687 = vadd.f32 %v6395, %v6561
        %v6688 = vadd.f32 %v6396, %v6564
        %v6689 = vadd.f32 %v6397, %v6567
        %v6690 = vadd.f32 %v6398, %v6570
        %v6691 = vadd.f32 %v6399, %v6573
        %v6692 = vadd.f32 %v6400, %v6576
        %v6693 = vadd.f32 %v6401, %v6579
        %v6694 = vadd.f32 %v6402, %v6582
        %v6695 = vadd.f32 %v6403, %v6585
        %v6696 = vadd.f32 %v6404, %v6588
        %v6697 = vadd.f32 %v6405, %v6591
        %v6698 = vadd.f32 %v6406, %v6594
        %v6699 = vadd.f32 %v6407, %v6597
        %v6700 = vadd.f32 %v6408, %v6600
        %v6701 = vadd.f32 %v6409, %v6603
        %v6702 = vadd.f32 %v6410, %v6606
        %v6703 = vadd.f32 %v6411, %v6609
        %v6704 = vadd.f32 %v6412, %v6612
        %v6705 = vadd.f32 %v6413, %v6615
        %v6706 = vadd.f32 %v6414, %v6618
        %v6707 = vadd.f32 %v6415, %v6621
        %v6708 = vadd.f32 %v6416, %v6624
        %v6709 = vadd.f32 %v6417, %v6627
        %v6710 = vadd.f32 %v6418, %v6630
        %v6711 = vadd.f32 %v6419, %v6633
        %v6712 = vadd.f32 %v6420, %v6636
        %v6713 = vadd.f32 %v6421, %v6639
        %v6714 = vadd.f32 %v6422, %v6642
        %v6715 = vadd.f32 %v6423, %v6645
        %v6716 = vadd.f32 %v6424, %v6648
        %v6717 = vadd.f32 %v6425, %v6651
        %v6718 = vadd.f32 %v6426, %v6654
        %v6719 = vperm.slane %v293, 4
        %v6720 = vperm.slane %v294, 4
        %v6721 = vperm.slane %v295, 4
        %v6722 = vperm.slane %v296, 4
        %v6723 = vmul.f32 %v193, %v6719
        %v6724 = vmul.f32 %v194, %v6720
        %v6725 = vmul.f32 %v195, %v6721
        %v6726 = vmul.f32 %v196, %v6722
        %v6727 = vmul.f32 %v197, %v6719
        %v6728 = vmul.f32 %v198, %v6720
        %v6729 = vmul.f32 %v199, %v6721
        %v6730 = vmul.f32 %v200, %v6722
        %v6731 = vmul.f32 %v201, %v6719
        %v6732 = vmul.f32 %v202, %v6720
        %v6733 = vmul.f32 %v203, %v6721
        %v6734 = vmul.f32 %v204, %v6722
        %v6735 = vmul.f32 %v205, %v6719
        %v6736 = vmul.f32 %v206, %v6720
        %v6737 = vmul.f32 %v207, %v6721
        %v6738 = vmul.f32 %v208, %v6722
        %v6739 = vmul.f32 %v209, %v6719
        %v6740 = vmul.f32 %v210, %v6720
        %v6741 = vmul.f32 %v211, %v6721
        %v6742 = vmul.f32 %v212, %v6722
        %v6743 = vmul.f32 %v213, %v6719
        %v6744 = vmul.f32 %v214, %v6720
        %v6745 = vmul.f32 %v215, %v6721
        %v6746 = vmul.f32 %v216, %v6722
        %v6747 = vmul.f32 %v217, %v6719
        %v6748 = vmul.f32 %v218, %v6720
        %v6749 = vmul.f32 %v219, %v6721
        %v6750 = vmul.f32 %v220, %v6722
        %v6751 = vmul.f32 %v221, %v6719
        %v6752 = vmul.f32 %v222, %v6720
        %v6753 = vmul.f32 %v223, %v6721
        %v6754 = vmul.f32 %v224, %v6722
        %v6755 = vmul.f32 %v225, %v6719
        %v6756 = vmul.f32 %v226, %v6720
        %v6757 = vmul.f32 %v227, %v6721
        %v6758 = vmul.f32 %v228, %v6722
        %v6759 = vmul.f32 %v229, %v6719
        %v6760 = vmul.f32 %v230, %v6720
        %v6761 = vmul.f32 %v231, %v6721
        %v6762 = vmul.f32 %v232, %v6722
        %v6763 = vmul.f32 %v233, %v6719
        %v6764 = vmul.f32 %v234, %v6720
        %v6765 = vmul.f32 %v235, %v6721
        %v6766 = vmul.f32 %v236, %v6722
        %v6767 = vmul.f32 %v237, %v6719
        %v6768 = vmul.f32 %v238, %v6720
        %v6769 = vmul.f32 %v239, %v6721
        %v6770 = vmul.f32 %v240, %v6722
        %v6771 = vmul.f32 %v241, %v6719
        %v6772 = vmul.f32 %v242, %v6720
        %v6773 = vmul.f32 %v243, %v6721
        %v6774 = vmul.f32 %v244, %v6722
        %v6775 = vmul.f32 %v245, %v6719
        %v6776 = vmul.f32 %v246, %v6720
        %v6777 = vmul.f32 %v247, %v6721
        %v6778 = vmul.f32 %v248, %v6722
        %v6779 = vmul.f32 %v249, %v6719
        %v6780 = vmul.f32 %v250, %v6720
        %v6781 = vmul.f32 %v251, %v6721
        %v6782 = vmul.f32 %v252, %v6722
        %v6783 = vmul.f32 %v253, %v6719
        %v6784 = vmul.f32 %v254, %v6720
        %v6785 = vmul.f32 %v255, %v6721
        %v6786 = vmul.f32 %v256, %v6722
        %v6851 = vrot.slane %v6723, 4
        %v6852 = vrot.slane %v6727, 4
        %v6853 = vsel %vm1388, %v6851, %v6852
        %v6854 = vrot.slane %v6724, 4
        %v6855 = vrot.slane %v6728, 4
        %v6856 = vsel %vm1388, %v6854, %v6855
        %v6857 = vrot.slane %v6725, 4
        %v6858 = vrot.slane %v6729, 4
        %v6859 = vsel %vm1388, %v6857, %v6858
        %v6860 = vrot.slane %v6726, 4
        %v6861 = vrot.slane %v6730, 4
        %v6862 = vsel %vm1388, %v6860, %v6861
        %v6863 = vrot.slane %v6731, 4
        %v6864 = vrot.slane %v6735, 4
        %v6865 = vsel %vm1388, %v6863, %v6864
        %v6866 = vrot.slane %v6732, 4
        %v6867 = vrot.slane %v6736, 4
        %v6868 = vsel %vm1388, %v6866, %v6867
        %v6869 = vrot.slane %v6733, 4
        %v6870 = vrot.slane %v6737, 4
        %v6871 = vsel %vm1388, %v6869, %v6870
        %v6872 = vrot.slane %v6734, 4
        %v6873 = vrot.slane %v6738, 4
        %v6874 = vsel %vm1388, %v6872, %v6873
        %v6875 = vrot.slane %v6739, 4
        %v6876 = vrot.slane %v6743, 4
        %v6877 = vsel %vm1388, %v6875, %v6876
        %v6878 = vrot.slane %v6740, 4
        %v6879 = vrot.slane %v6744, 4
        %v6880 = vsel %vm1388, %v6878, %v6879
        %v6881 = vrot.slane %v6741, 4
        %v6882 = vrot.slane %v6745, 4
        %v6883 = vsel %vm1388, %v6881, %v6882
        %v6884 = vrot.slane %v6742, 4
        %v6885 = vrot.slane %v6746, 4
        %v6886 = vsel %vm1388, %v6884, %v6885
        %v6887 = vrot.slane %v6747, 4
        %v6888 = vrot.slane %v6751, 4
        %v6889 = vsel %vm1388, %v6887, %v6888
        %v6890 = vrot.slane %v6748, 4
        %v6891 = vrot.slane %v6752, 4
        %v6892 = vsel %vm1388, %v6890, %v6891
        %v6893 = vrot.slane %v6749, 4
        %v6894 = vrot.slane %v6753, 4
        %v6895 = vsel %vm1388, %v6893, %v6894
        %v6896 = vrot.slane %v6750, 4
        %v6897 = vrot.slane %v6754, 4
        %v6898 = vsel %vm1388, %v6896, %v6897
        %v6899 = vrot.slane %v6755, 4
        %v6900 = vrot.slane %v6759, 4
        %v6901 = vsel %vm1388, %v6899, %v6900
        %v6902 = vrot.slane %v6756, 4
        %v6903 = vrot.slane %v6760, 4
        %v6904 = vsel %vm1388, %v6902, %v6903
        %v6905 = vrot.slane %v6757, 4
        %v6906 = vrot.slane %v6761, 4
        %v6907 = vsel %vm1388, %v6905, %v6906
        %v6908 = vrot.slane %v6758, 4
        %v6909 = vrot.slane %v6762, 4
        %v6910 = vsel %vm1388, %v6908, %v6909
        %v6911 = vrot.slane %v6763, 4
        %v6912 = vrot.slane %v6767, 4
        %v6913 = vsel %vm1388, %v6911, %v6912
        %v6914 = vrot.slane %v6764, 4
        %v6915 = vrot.slane %v6768, 4
        %v6916 = vsel %vm1388, %v6914, %v6915
        %v6917 = vrot.slane %v6765, 4
        %v6918 = vrot.slane %v6769, 4
        %v6919 = vsel %vm1388, %v6917, %v6918
        %v6920 = vrot.slane %v6766, 4
        %v6921 = vrot.slane %v6770, 4
        %v6922 = vsel %vm1388, %v6920, %v6921
        %v6923 = vrot.slane %v6771, 4
        %v6924 = vrot.slane %v6775, 4
        %v6925 = vsel %vm1388, %v6923, %v6924
        %v6926 = vrot.slane %v6772, 4
        %v6927 = vrot.slane %v6776, 4
        %v6928 = vsel %vm1388, %v6926, %v6927
        %v6929 = vrot.slane %v6773, 4
        %v6930 = vrot.slane %v6777, 4
        %v6931 = vsel %vm1388, %v6929, %v6930
        %v6932 = vrot.slane %v6774, 4
        %v6933 = vrot.slane %v6778, 4
        %v6934 = vsel %vm1388, %v6932, %v6933
        %v6935 = vrot.slane %v6779, 4
        %v6936 = vrot.slane %v6783, 4
        %v6937 = vsel %vm1388, %v6935, %v6936
        %v6938 = vrot.slane %v6780, 4
        %v6939 = vrot.slane %v6784, 4
        %v6940 = vsel %vm1388, %v6938, %v6939
        %v6941 = vrot.slane %v6781, 4
        %v6942 = vrot.slane %v6785, 4
        %v6943 = vsel %vm1388, %v6941, %v6942
        %v6944 = vrot.slane %v6782, 4
        %v6945 = vrot.slane %v6786, 4
        %v6946 = vsel %vm1388, %v6944, %v6945
        %v6979 = vadd.f32 %v6687, %v6853
        %v6980 = vadd.f32 %v6688, %v6856
        %v6981 = vadd.f32 %v6689, %v6859
        %v6982 = vadd.f32 %v6690, %v6862
        %v6983 = vadd.f32 %v6691, %v6865
        %v6984 = vadd.f32 %v6692, %v6868
        %v6985 = vadd.f32 %v6693, %v6871
        %v6986 = vadd.f32 %v6694, %v6874
        %v6987 = vadd.f32 %v6695, %v6877
        %v6988 = vadd.f32 %v6696, %v6880
        %v6989 = vadd.f32 %v6697, %v6883
        %v6990 = vadd.f32 %v6698, %v6886
        %v6991 = vadd.f32 %v6699, %v6889
        %v6992 = vadd.f32 %v6700, %v6892
        %v6993 = vadd.f32 %v6701, %v6895
        %v6994 = vadd.f32 %v6702, %v6898
        %v6995 = vadd.f32 %v6703, %v6901
        %v6996 = vadd.f32 %v6704, %v6904
        %v6997 = vadd.f32 %v6705, %v6907
        %v6998 = vadd.f32 %v6706, %v6910
        %v6999 = vadd.f32 %v6707, %v6913
        %v7000 = vadd.f32 %v6708, %v6916
        %v7001 = vadd.f32 %v6709, %v6919
        %v7002 = vadd.f32 %v6710, %v6922
        %v7003 = vadd.f32 %v6711, %v6925
        %v7004 = vadd.f32 %v6712, %v6928
        %v7005 = vadd.f32 %v6713, %v6931
        %v7006 = vadd.f32 %v6714, %v6934
        %v7007 = vadd.f32 %v6715, %v6937
        %v7008 = vadd.f32 %v6716, %v6940
        %v7009 = vadd.f32 %v6717, %v6943
        %v7010 = vadd.f32 %v6718, %v6946
        %v7011 = vperm.slane %v293, 5
        %v7012 = vperm.slane %v294, 5
        %v7013 = vperm.slane %v295, 5
        %v7014 = vperm.slane %v296, 5
        %v7015 = vmul.f32 %v193, %v7011
        %v7016 = vmul.f32 %v194, %v7012
        %v7017 = vmul.f32 %v195, %v7013
        %v7018 = vmul.f32 %v196, %v7014
        %v7019 = vmul.f32 %v197, %v7011
        %v7020 = vmul.f32 %v198, %v7012
        %v7021 = vmul.f32 %v199, %v7013
        %v7022 = vmul.f32 %v200, %v7014
        %v7023 = vmul.f32 %v201, %v7011
        %v7024 = vmul.f32 %v202, %v7012
        %v7025 = vmul.f32 %v203, %v7013
        %v7026 = vmul.f32 %v204, %v7014
        %v7027 = vmul.f32 %v205, %v7011
        %v7028 = vmul.f32 %v206, %v7012
        %v7029 = vmul.f32 %v207, %v7013
        %v7030 = vmul.f32 %v208, %v7014
        %v7031 = vmul.f32 %v209, %v7011
        %v7032 = vmul.f32 %v210, %v7012
        %v7033 = vmul.f32 %v211, %v7013
        %v7034 = vmul.f32 %v212, %v7014
        %v7035 = vmul.f32 %v213, %v7011
        %v7036 = vmul.f32 %v214, %v7012
        %v7037 = vmul.f32 %v215, %v7013
        %v7038 = vmul.f32 %v216, %v7014
        %v7039 = vmul.f32 %v217, %v7011
        %v7040 = vmul.f32 %v218, %v7012
        %v7041 = vmul.f32 %v219, %v7013
        %v7042 = vmul.f32 %v220, %v7014
        %v7043 = vmul.f32 %v221, %v7011
        %v7044 = vmul.f32 %v222, %v7012
        %v7045 = vmul.f32 %v223, %v7013
        %v7046 = vmul.f32 %v224, %v7014
        %v7047 = vmul.f32 %v225, %v7011
        %v7048 = vmul.f32 %v226, %v7012
        %v7049 = vmul.f32 %v227, %v7013
        %v7050 = vmul.f32 %v228, %v7014
        %v7051 = vmul.f32 %v229, %v7011
        %v7052 = vmul.f32 %v230, %v7012
        %v7053 = vmul.f32 %v231, %v7013
        %v7054 = vmul.f32 %v232, %v7014
        %v7055 = vmul.f32 %v233, %v7011
        %v7056 = vmul.f32 %v234, %v7012
        %v7057 = vmul.f32 %v235, %v7013
        %v7058 = vmul.f32 %v236, %v7014
        %v7059 = vmul.f32 %v237, %v7011
        %v7060 = vmul.f32 %v238, %v7012
        %v7061 = vmul.f32 %v239, %v7013
        %v7062 = vmul.f32 %v240, %v7014
        %v7063 = vmul.f32 %v241, %v7011
        %v7064 = vmul.f32 %v242, %v7012
        %v7065 = vmul.f32 %v243, %v7013
        %v7066 = vmul.f32 %v244, %v7014
        %v7067 = vmul.f32 %v245, %v7011
        %v7068 = vmul.f32 %v246, %v7012
        %v7069 = vmul.f32 %v247, %v7013
        %v7070 = vmul.f32 %v248, %v7014
        %v7071 = vmul.f32 %v249, %v7011
        %v7072 = vmul.f32 %v250, %v7012
        %v7073 = vmul.f32 %v251, %v7013
        %v7074 = vmul.f32 %v252, %v7014
        %v7075 = vmul.f32 %v253, %v7011
        %v7076 = vmul.f32 %v254, %v7012
        %v7077 = vmul.f32 %v255, %v7013
        %v7078 = vmul.f32 %v256, %v7014
        %v7143 = vrot.slane %v7015, 5
        %v7144 = vrot.slane %v7019, 5
        %v7145 = vsel %vm1681, %v7143, %v7144
        %v7146 = vrot.slane %v7016, 5
        %v7147 = vrot.slane %v7020, 5
        %v7148 = vsel %vm1681, %v7146, %v7147
        %v7149 = vrot.slane %v7017, 5
        %v7150 = vrot.slane %v7021, 5
        %v7151 = vsel %vm1681, %v7149, %v7150
        %v7152 = vrot.slane %v7018, 5
        %v7153 = vrot.slane %v7022, 5
        %v7154 = vsel %vm1681, %v7152, %v7153
        %v7155 = vrot.slane %v7023, 5
        %v7156 = vrot.slane %v7027, 5
        %v7157 = vsel %vm1681, %v7155, %v7156
        %v7158 = vrot.slane %v7024, 5
        %v7159 = vrot.slane %v7028, 5
        %v7160 = vsel %vm1681, %v7158, %v7159
        %v7161 = vrot.slane %v7025, 5
        %v7162 = vrot.slane %v7029, 5
        %v7163 = vsel %vm1681, %v7161, %v7162
        %v7164 = vrot.slane %v7026, 5
        %v7165 = vrot.slane %v7030, 5
        %v7166 = vsel %vm1681, %v7164, %v7165
        %v7167 = vrot.slane %v7031, 5
        %v7168 = vrot.slane %v7035, 5
        %v7169 = vsel %vm1681, %v7167, %v7168
        %v7170 = vrot.slane %v7032, 5
        %v7171 = vrot.slane %v7036, 5
        %v7172 = vsel %vm1681, %v7170, %v7171
        %v7173 = vrot.slane %v7033, 5
        %v7174 = vrot.slane %v7037, 5
        %v7175 = vsel %vm1681, %v7173, %v7174
        %v7176 = vrot.slane %v7034, 5
        %v7177 = vrot.slane %v7038, 5
        %v7178 = vsel %vm1681, %v7176, %v7177
        %v7179 = vrot.slane %v7039, 5
        %v7180 = vrot.slane %v7043, 5
        %v7181 = vsel %vm1681, %v7179, %v7180
        %v7182 = vrot.slane %v7040, 5
        %v7183 = vrot.slane %v7044, 5
        %v7184 = vsel %vm1681, %v7182, %v7183
        %v7185 = vrot.slane %v7041, 5
        %v7186 = vrot.slane %v7045, 5
        %v7187 = vsel %vm1681, %v7185, %v7186
        %v7188 = vrot.slane %v7042, 5
        %v7189 = vrot.slane %v7046, 5
        %v7190 = vsel %vm1681, %v7188, %v7189
        %v7191 = vrot.slane %v7047, 5
        %v7192 = vrot.slane %v7051, 5
        %v7193 = vsel %vm1681, %v7191, %v7192
        %v7194 = vrot.slane %v7048, 5
        %v7195 = vrot.slane %v7052, 5
        %v7196 = vsel %vm1681, %v7194, %v7195
        %v7197 = vrot.slane %v7049, 5
        %v7198 = vrot.slane %v7053, 5
        %v7199 = vsel %vm1681, %v7197, %v7198
        %v7200 = vrot.slane %v7050, 5
        %v7201 = vrot.slane %v7054, 5
        %v7202 = vsel %vm1681, %v7200, %v7201
        %v7203 = vrot.slane %v7055, 5
        %v7204 = vrot.slane %v7059, 5
        %v7205 = vsel %vm1681, %v7203, %v7204
        %v7206 = vrot.slane %v7056, 5
        %v7207 = vrot.slane %v7060, 5
        %v7208 = vsel %vm1681, %v7206, %v7207
        %v7209 = vrot.slane %v7057, 5
        %v7210 = vrot.slane %v7061, 5
        %v7211 = vsel %vm1681, %v7209, %v7210
        %v7212 = vrot.slane %v7058, 5
        %v7213 = vrot.slane %v7062, 5
        %v7214 = vsel %vm1681, %v7212, %v7213
        %v7215 = vrot.slane %v7063, 5
        %v7216 = vrot.slane %v7067, 5
        %v7217 = vsel %vm1681, %v7215, %v7216
        %v7218 = vrot.slane %v7064, 5
        %v7219 = vrot.slane %v7068, 5
        %v7220 = vsel %vm1681, %v7218, %v7219
        %v7221 = vrot.slane %v7065, 5
        %v7222 = vrot.slane %v7069, 5
        %v7223 = vsel %vm1681, %v7221, %v7222
        %v7224 = vrot.slane %v7066, 5
        %v7225 = vrot.slane %v7070, 5
        %v7226 = vsel %vm1681, %v7224, %v7225
        %v7227 = vrot.slane %v7071, 5
        %v7228 = vrot.slane %v7075, 5
        %v7229 = vsel %vm1681, %v7227, %v7228
        %v7230 = vrot.slane %v7072, 5
        %v7231 = vrot.slane %v7076, 5
        %v7232 = vsel %vm1681, %v7230, %v7231
        %v7233 = vrot.slane %v7073, 5
        %v7234 = vrot.slane %v7077, 5
        %v7235 = vsel %vm1681, %v7233, %v7234
        %v7236 = vrot.slane %v7074, 5
        %v7237 = vrot.slane %v7078, 5
        %v7238 = vsel %vm1681, %v7236, %v7237
        %v7271 = vadd.f32 %v6979, %v7145
        %v7272 = vadd.f32 %v6980, %v7148
        %v7273 = vadd.f32 %v6981, %v7151
        %v7274 = vadd.f32 %v6982, %v7154
        %v7275 = vadd.f32 %v6983, %v7157
        %v7276 = vadd.f32 %v6984, %v7160
        %v7277 = vadd.f32 %v6985, %v7163
        %v7278 = vadd.f32 %v6986, %v7166
        %v7279 = vadd.f32 %v6987, %v7169
        %v7280 = vadd.f32 %v6988, %v7172
        %v7281 = vadd.f32 %v6989, %v7175
        %v7282 = vadd.f32 %v6990, %v7178
        %v7283 = vadd.f32 %v6991, %v7181
        %v7284 = vadd.f32 %v6992, %v7184
        %v7285 = vadd.f32 %v6993, %v7187
        %v7286 = vadd.f32 %v6994, %v7190
        %v7287 = vadd.f32 %v6995, %v7193
        %v7288 = vadd.f32 %v6996, %v7196
        %v7289 = vadd.f32 %v6997, %v7199
        %v7290 = vadd.f32 %v6998, %v7202
        %v7291 = vadd.f32 %v6999, %v7205
        %v7292 = vadd.f32 %v7000, %v7208
        %v7293 = vadd.f32 %v7001, %v7211
        %v7294 = vadd.f32 %v7002, %v7214
        %v7295 = vadd.f32 %v7003, %v7217
        %v7296 = vadd.f32 %v7004, %v7220
        %v7297 = vadd.f32 %v7005, %v7223
        %v7298 = vadd.f32 %v7006, %v7226
        %v7299 = vadd.f32 %v7007, %v7229
        %v7300 = vadd.f32 %v7008, %v7232
        %v7301 = vadd.f32 %v7009, %v7235
        %v7302 = vadd.f32 %v7010, %v7238
        %v7303 = vperm.slane %v293, 6
        %v7304 = vperm.slane %v294, 6
        %v7305 = vperm.slane %v295, 6
        %v7306 = vperm.slane %v296, 6
        %v7307 = vmul.f32 %v193, %v7303
        %v7308 = vmul.f32 %v194, %v7304
        %v7309 = vmul.f32 %v195, %v7305
        %v7310 = vmul.f32 %v196, %v7306
        %v7311 = vmul.f32 %v197, %v7303
        %v7312 = vmul.f32 %v198, %v7304
        %v7313 = vmul.f32 %v199, %v7305
        %v7314 = vmul.f32 %v200, %v7306
        %v7315 = vmul.f32 %v201, %v7303
        %v7316 = vmul.f32 %v202, %v7304
        %v7317 = vmul.f32 %v203, %v7305
        %v7318 = vmul.f32 %v204, %v7306
        %v7319 = vmul.f32 %v205, %v7303
        %v7320 = vmul.f32 %v206, %v7304
        %v7321 = vmul.f32 %v207, %v7305
        %v7322 = vmul.f32 %v208, %v7306
        %v7323 = vmul.f32 %v209, %v7303
        %v7324 = vmul.f32 %v210, %v7304
        %v7325 = vmul.f32 %v211, %v7305
        %v7326 = vmul.f32 %v212, %v7306
        %v7327 = vmul.f32 %v213, %v7303
        %v7328 = vmul.f32 %v214, %v7304
        %v7329 = vmul.f32 %v215, %v7305
        %v7330 = vmul.f32 %v216, %v7306
        %v7331 = vmul.f32 %v217, %v7303
        %v7332 = vmul.f32 %v218, %v7304
        %v7333 = vmul.f32 %v219, %v7305
        %v7334 = vmul.f32 %v220, %v7306
        %v7335 = vmul.f32 %v221, %v7303
        %v7336 = vmul.f32 %v222, %v7304
        %v7337 = vmul.f32 %v223, %v7305
        %v7338 = vmul.f32 %v224, %v7306
        %v7339 = vmul.f32 %v225, %v7303
        %v7340 = vmul.f32 %v226, %v7304
        %v7341 = vmul.f32 %v227, %v7305
        %v7342 = vmul.f32 %v228, %v7306
        %v7343 = vmul.f32 %v229, %v7303
        %v7344 = vmul.f32 %v230, %v7304
        %v7345 = vmul.f32 %v231, %v7305
        %v7346 = vmul.f32 %v232, %v7306
        %v7347 = vmul.f32 %v233, %v7303
        %v7348 = vmul.f32 %v234, %v7304
        %v7349 = vmul.f32 %v235, %v7305
        %v7350 = vmul.f32 %v236, %v7306
        %v7351 = vmul.f32 %v237, %v7303
        %v7352 = vmul.f32 %v238, %v7304
        %v7353 = vmul.f32 %v239, %v7305
        %v7354 = vmul.f32 %v240, %v7306
        %v7355 = vmul.f32 %v241, %v7303
        %v7356 = vmul.f32 %v242, %v7304
        %v7357 = vmul.f32 %v243, %v7305
        %v7358 = vmul.f32 %v244, %v7306
        %v7359 = vmul.f32 %v245, %v7303
        %v7360 = vmul.f32 %v246, %v7304
        %v7361 = vmul.f32 %v247, %v7305
        %v7362 = vmul.f32 %v248, %v7306
        %v7363 = vmul.f32 %v249, %v7303
        %v7364 = vmul.f32 %v250, %v7304
        %v7365 = vmul.f32 %v251, %v7305
        %v7366 = vmul.f32 %v252, %v7306
        %v7367 = vmul.f32 %v253, %v7303
        %v7368 = vmul.f32 %v254, %v7304
        %v7369 = vmul.f32 %v255, %v7305
        %v7370 = vmul.f32 %v256, %v7306
        %v7435 = vrot.slane %v7307, 6
        %v7436 = vrot.slane %v7311, 6
        %v7437 = vsel %vm1974, %v7435, %v7436
        %v7438 = vrot.slane %v7308, 6
        %v7439 = vrot.slane %v7312, 6
        %v7440 = vsel %vm1974, %v7438, %v7439
        %v7441 = vrot.slane %v7309, 6
        %v7442 = vrot.slane %v7313, 6
        %v7443 = vsel %vm1974, %v7441, %v7442
        %v7444 = vrot.slane %v7310, 6
        %v7445 = vrot.slane %v7314, 6
        %v7446 = vsel %vm1974, %v7444, %v7445
        %v7447 = vrot.slane %v7315, 6
        %v7448 = vrot.slane %v7319, 6
        %v7449 = vsel %vm1974, %v7447, %v7448
        %v7450 = vrot.slane %v7316, 6
        %v7451 = vrot.slane %v7320, 6
        %v7452 = vsel %vm1974, %v7450, %v7451
        %v7453 = vrot.slane %v7317, 6
        %v7454 = vrot.slane %v7321, 6
        %v7455 = vsel %vm1974, %v7453, %v7454
        %v7456 = vrot.slane %v7318, 6
        %v7457 = vrot.slane %v7322, 6
        %v7458 = vsel %vm1974, %v7456, %v7457
        %v7459 = vrot.slane %v7323, 6
        %v7460 = vrot.slane %v7327, 6
        %v7461 = vsel %vm1974, %v7459, %v7460
        %v7462 = vrot.slane %v7324, 6
        %v7463 = vrot.slane %v7328, 6
        %v7464 = vsel %vm1974, %v7462, %v7463
        %v7465 = vrot.slane %v7325, 6
        %v7466 = vrot.slane %v7329, 6
        %v7467 = vsel %vm1974, %v7465, %v7466
        %v7468 = vrot.slane %v7326, 6
        %v7469 = vrot.slane %v7330, 6
        %v7470 = vsel %vm1974, %v7468, %v7469
        %v7471 = vrot.slane %v7331, 6
        %v7472 = vrot.slane %v7335, 6
        %v7473 = vsel %vm1974, %v7471, %v7472
        %v7474 = vrot.slane %v7332, 6
        %v7475 = vrot.slane %v7336, 6
        %v7476 = vsel %vm1974, %v7474, %v7475
        %v7477 = vrot.slane %v7333, 6
        %v7478 = vrot.slane %v7337, 6
        %v7479 = vsel %vm1974, %v7477, %v7478
        %v7480 = vrot.slane %v7334, 6
        %v7481 = vrot.slane %v7338, 6
        %v7482 = vsel %vm1974, %v7480, %v7481
        %v7483 = vrot.slane %v7339, 6
        %v7484 = vrot.slane %v7343, 6
        %v7485 = vsel %vm1974, %v7483, %v7484
        %v7486 = vrot.slane %v7340, 6
        %v7487 = vrot.slane %v7344, 6
        %v7488 = vsel %vm1974, %v7486, %v7487
        %v7489 = vrot.slane %v7341, 6
        %v7490 = vrot.slane %v7345, 6
        %v7491 = vsel %vm1974, %v7489, %v7490
        %v7492 = vrot.slane %v7342, 6
        %v7493 = vrot.slane %v7346, 6
        %v7494 = vsel %vm1974, %v7492, %v7493
        %v7495 = vrot.slane %v7347, 6
        %v7496 = vrot.slane %v7351, 6
        %v7497 = vsel %vm1974, %v7495, %v7496
        %v7498 = vrot.slane %v7348, 6
        %v7499 = vrot.slane %v7352, 6
        %v7500 = vsel %vm1974, %v7498, %v7499
        %v7501 = vrot.slane %v7349, 6
        %v7502 = vrot.slane %v7353, 6
        %v7503 = vsel %vm1974, %v7501, %v7502
        %v7504 = vrot.slane %v7350, 6
        %v7505 = vrot.slane %v7354, 6
        %v7506 = vsel %vm1974, %v7504, %v7505
        %v7507 = vrot.slane %v7355, 6
        %v7508 = vrot.slane %v7359, 6
        %v7509 = vsel %vm1974, %v7507, %v7508
        %v7510 = vrot.slane %v7356, 6
        %v7511 = vrot.slane %v7360, 6
        %v7512 = vsel %vm1974, %v7510, %v7511
        %v7513 = vrot.slane %v7357, 6
        %v7514 = vrot.slane %v7361, 6
        %v7515 = vsel %vm1974, %v7513, %v7514
        %v7516 = vrot.slane %v7358, 6
        %v7517 = vrot.slane %v7362, 6
        %v7518 = vsel %vm1974, %v7516, %v7517
        %v7519 = vrot.slane %v7363, 6
        %v7520 = vrot.slane %v7367, 6
        %v7521 = vsel %vm1974, %v7519, %v7520
        %v7522 = vrot.slane %v7364, 6
        %v7523 = vrot.slane %v7368, 6
        %v7524 = vsel %vm1974, %v7522, %v7523
        %v7525 = vrot.slane %v7365, 6
        %v7526 = vrot.slane %v7369, 6
        %v7527 = vsel %vm1974, %v7525, %v7526
        %v7528 = vrot.slane %v7366, 6
        %v7529 = vrot.slane %v7370, 6
        %v7530 = vsel %vm1974, %v7528, %v7529
        %v7563 = vadd.f32 %v7271, %v7437
        %v7564 = vadd.f32 %v7272, %v7440
        %v7565 = vadd.f32 %v7273, %v7443
        %v7566 = vadd.f32 %v7274, %v7446
        %v7567 = vadd.f32 %v7275, %v7449
        %v7568 = vadd.f32 %v7276, %v7452
        %v7569 = vadd.f32 %v7277, %v7455
        %v7570 = vadd.f32 %v7278, %v7458
        %v7571 = vadd.f32 %v7279, %v7461
        %v7572 = vadd.f32 %v7280, %v7464
        %v7573 = vadd.f32 %v7281, %v7467
        %v7574 = vadd.f32 %v7282, %v7470
        %v7575 = vadd.f32 %v7283, %v7473
        %v7576 = vadd.f32 %v7284, %v7476
        %v7577 = vadd.f32 %v7285, %v7479
        %v7578 = vadd.f32 %v7286, %v7482
        %v7579 = vadd.f32 %v7287, %v7485
        %v7580 = vadd.f32 %v7288, %v7488
        %v7581 = vadd.f32 %v7289, %v7491
        %v7582 = vadd.f32 %v7290, %v7494
        %v7583 = vadd.f32 %v7291, %v7497
        %v7584 = vadd.f32 %v7292, %v7500
        %v7585 = vadd.f32 %v7293, %v7503
        %v7586 = vadd.f32 %v7294, %v7506
        %v7587 = vadd.f32 %v7295, %v7509
        %v7588 = vadd.f32 %v7296, %v7512
        %v7589 = vadd.f32 %v7297, %v7515
        %v7590 = vadd.f32 %v7298, %v7518
        %v7591 = vadd.f32 %v7299, %v7521
        %v7592 = vadd.f32 %v7300, %v7524
        %v7593 = vadd.f32 %v7301, %v7527
        %v7594 = vadd.f32 %v7302, %v7530
        %v7595 = vperm.slane %v297, 0
        %v7596 = vperm.slane %v298, 0
        %v7597 = vperm.slane %v299, 0
        %v7598 = vperm.slane %v300, 0
        %v7599 = vmul.f32 %v201, %v7595
        %v7600 = vmul.f32 %v202, %v7596
        %v7601 = vmul.f32 %v203, %v7597
        %v7602 = vmul.f32 %v204, %v7598
        %v7603 = vmul.f32 %v209, %v7595
        %v7604 = vmul.f32 %v210, %v7596
        %v7605 = vmul.f32 %v211, %v7597
        %v7606 = vmul.f32 %v212, %v7598
        %v7607 = vmul.f32 %v217, %v7595
        %v7608 = vmul.f32 %v218, %v7596
        %v7609 = vmul.f32 %v219, %v7597
        %v7610 = vmul.f32 %v220, %v7598
        %v7611 = vmul.f32 %v225, %v7595
        %v7612 = vmul.f32 %v226, %v7596
        %v7613 = vmul.f32 %v227, %v7597
        %v7614 = vmul.f32 %v228, %v7598
        %v7615 = vmul.f32 %v233, %v7595
        %v7616 = vmul.f32 %v234, %v7596
        %v7617 = vmul.f32 %v235, %v7597
        %v7618 = vmul.f32 %v236, %v7598
        %v7619 = vmul.f32 %v241, %v7595
        %v7620 = vmul.f32 %v242, %v7596
        %v7621 = vmul.f32 %v243, %v7597
        %v7622 = vmul.f32 %v244, %v7598
        %v7623 = vmul.f32 %v249, %v7595
        %v7624 = vmul.f32 %v250, %v7596
        %v7625 = vmul.f32 %v251, %v7597
        %v7626 = vmul.f32 %v252, %v7598
        %v7627 = vmul.f32 %v257, %v7595
        %v7628 = vmul.f32 %v258, %v7596
        %v7629 = vmul.f32 %v259, %v7597
        %v7630 = vmul.f32 %v260, %v7598
        %v7631 = vadd.f32 %v7563, %v7599
        %v7632 = vadd.f32 %v7564, %v7600
        %v7633 = vadd.f32 %v7565, %v7601
        %v7634 = vadd.f32 %v7566, %v7602
        %v7635 = vadd.f32 %v7567, %v7603
        %v7636 = vadd.f32 %v7568, %v7604
        %v7637 = vadd.f32 %v7569, %v7605
        %v7638 = vadd.f32 %v7570, %v7606
        %v7639 = vadd.f32 %v7571, %v7607
        %v7640 = vadd.f32 %v7572, %v7608
        %v7641 = vadd.f32 %v7573, %v7609
        %v7642 = vadd.f32 %v7574, %v7610
        %v7643 = vadd.f32 %v7575, %v7611
        %v7644 = vadd.f32 %v7576, %v7612
        %v7645 = vadd.f32 %v7577, %v7613
        %v7646 = vadd.f32 %v7578, %v7614
        %v7647 = vadd.f32 %v7579, %v7615
        %v7648 = vadd.f32 %v7580, %v7616
        %v7649 = vadd.f32 %v7581, %v7617
        %v7650 = vadd.f32 %v7582, %v7618
        %v7651 = vadd.f32 %v7583, %v7619
        %v7652 = vadd.f32 %v7584, %v7620
        %v7653 = vadd.f32 %v7585, %v7621
        %v7654 = vadd.f32 %v7586, %v7622
        %v7655 = vadd.f32 %v7587, %v7623
        %v7656 = vadd.f32 %v7588, %v7624
        %v7657 = vadd.f32 %v7589, %v7625
        %v7658 = vadd.f32 %v7590, %v7626
        %v7659 = vadd.f32 %v7591, %v7627
        %v7660 = vadd.f32 %v7592, %v7628
        %v7661 = vadd.f32 %v7593, %v7629
        %v7662 = vadd.f32 %v7594, %v7630
        %v7663 = vperm.slane %v297, 1
        %v7664 = vperm.slane %v298, 1
        %v7665 = vperm.slane %v299, 1
        %v7666 = vperm.slane %v300, 1
        %v7667 = vmul.f32 %v201, %v7663
        %v7668 = vmul.f32 %v202, %v7664
        %v7669 = vmul.f32 %v203, %v7665
        %v7670 = vmul.f32 %v204, %v7666
        %v7671 = vmul.f32 %v205, %v7663
        %v7672 = vmul.f32 %v206, %v7664
        %v7673 = vmul.f32 %v207, %v7665
        %v7674 = vmul.f32 %v208, %v7666
        %v7675 = vmul.f32 %v209, %v7663
        %v7676 = vmul.f32 %v210, %v7664
        %v7677 = vmul.f32 %v211, %v7665
        %v7678 = vmul.f32 %v212, %v7666
        %v7679 = vmul.f32 %v213, %v7663
        %v7680 = vmul.f32 %v214, %v7664
        %v7681 = vmul.f32 %v215, %v7665
        %v7682 = vmul.f32 %v216, %v7666
        %v7683 = vmul.f32 %v217, %v7663
        %v7684 = vmul.f32 %v218, %v7664
        %v7685 = vmul.f32 %v219, %v7665
        %v7686 = vmul.f32 %v220, %v7666
        %v7687 = vmul.f32 %v221, %v7663
        %v7688 = vmul.f32 %v222, %v7664
        %v7689 = vmul.f32 %v223, %v7665
        %v7690 = vmul.f32 %v224, %v7666
        %v7691 = vmul.f32 %v225, %v7663
        %v7692 = vmul.f32 %v226, %v7664
        %v7693 = vmul.f32 %v227, %v7665
        %v7694 = vmul.f32 %v228, %v7666
        %v7695 = vmul.f32 %v229, %v7663
        %v7696 = vmul.f32 %v230, %v7664
        %v7697 = vmul.f32 %v231, %v7665
        %v7698 = vmul.f32 %v232, %v7666
        %v7699 = vmul.f32 %v233, %v7663
        %v7700 = vmul.f32 %v234, %v7664
        %v7701 = vmul.f32 %v235, %v7665
        %v7702 = vmul.f32 %v236, %v7666
        %v7703 = vmul.f32 %v237, %v7663
        %v7704 = vmul.f32 %v238, %v7664
        %v7705 = vmul.f32 %v239, %v7665
        %v7706 = vmul.f32 %v240, %v7666
        %v7707 = vmul.f32 %v241, %v7663
        %v7708 = vmul.f32 %v242, %v7664
        %v7709 = vmul.f32 %v243, %v7665
        %v7710 = vmul.f32 %v244, %v7666
        %v7711 = vmul.f32 %v245, %v7663
        %v7712 = vmul.f32 %v246, %v7664
        %v7713 = vmul.f32 %v247, %v7665
        %v7714 = vmul.f32 %v248, %v7666
        %v7715 = vmul.f32 %v249, %v7663
        %v7716 = vmul.f32 %v250, %v7664
        %v7717 = vmul.f32 %v251, %v7665
        %v7718 = vmul.f32 %v252, %v7666
        %v7719 = vmul.f32 %v253, %v7663
        %v7720 = vmul.f32 %v254, %v7664
        %v7721 = vmul.f32 %v255, %v7665
        %v7722 = vmul.f32 %v256, %v7666
        %v7723 = vmul.f32 %v257, %v7663
        %v7724 = vmul.f32 %v258, %v7664
        %v7725 = vmul.f32 %v259, %v7665
        %v7726 = vmul.f32 %v260, %v7666
        %v7727 = vmul.f32 %v261, %v7663
        %v7728 = vmul.f32 %v262, %v7664
        %v7729 = vmul.f32 %v263, %v7665
        %v7730 = vmul.f32 %v264, %v7666
        %v7795 = vrot.slane %v7667, 1
        %v7796 = vrot.slane %v7671, 1
        %v7797 = vsel %vm509, %v7795, %v7796
        %v7798 = vrot.slane %v7668, 1
        %v7799 = vrot.slane %v7672, 1
        %v7800 = vsel %vm509, %v7798, %v7799
        %v7801 = vrot.slane %v7669, 1
        %v7802 = vrot.slane %v7673, 1
        %v7803 = vsel %vm509, %v7801, %v7802
        %v7804 = vrot.slane %v7670, 1
        %v7805 = vrot.slane %v7674, 1
        %v7806 = vsel %vm509, %v7804, %v7805
        %v7807 = vrot.slane %v7675, 1
        %v7808 = vrot.slane %v7679, 1
        %v7809 = vsel %vm509, %v7807, %v7808
        %v7810 = vrot.slane %v7676, 1
        %v7811 = vrot.slane %v7680, 1
        %v7812 = vsel %vm509, %v7810, %v7811
        %v7813 = vrot.slane %v7677, 1
        %v7814 = vrot.slane %v7681, 1
        %v7815 = vsel %vm509, %v7813, %v7814
        %v7816 = vrot.slane %v7678, 1
        %v7817 = vrot.slane %v7682, 1
        %v7818 = vsel %vm509, %v7816, %v7817
        %v7819 = vrot.slane %v7683, 1
        %v7820 = vrot.slane %v7687, 1
        %v7821 = vsel %vm509, %v7819, %v7820
        %v7822 = vrot.slane %v7684, 1
        %v7823 = vrot.slane %v7688, 1
        %v7824 = vsel %vm509, %v7822, %v7823
        %v7825 = vrot.slane %v7685, 1
        %v7826 = vrot.slane %v7689, 1
        %v7827 = vsel %vm509, %v7825, %v7826
        %v7828 = vrot.slane %v7686, 1
        %v7829 = vrot.slane %v7690, 1
        %v7830 = vsel %vm509, %v7828, %v7829
        %v7831 = vrot.slane %v7691, 1
        %v7832 = vrot.slane %v7695, 1
        %v7833 = vsel %vm509, %v7831, %v7832
        %v7834 = vrot.slane %v7692, 1
        %v7835 = vrot.slane %v7696, 1
        %v7836 = vsel %vm509, %v7834, %v7835
        %v7837 = vrot.slane %v7693, 1
        %v7838 = vrot.slane %v7697, 1
        %v7839 = vsel %vm509, %v7837, %v7838
        %v7840 = vrot.slane %v7694, 1
        %v7841 = vrot.slane %v7698, 1
        %v7842 = vsel %vm509, %v7840, %v7841
        %v7843 = vrot.slane %v7699, 1
        %v7844 = vrot.slane %v7703, 1
        %v7845 = vsel %vm509, %v7843, %v7844
        %v7846 = vrot.slane %v7700, 1
        %v7847 = vrot.slane %v7704, 1
        %v7848 = vsel %vm509, %v7846, %v7847
        %v7849 = vrot.slane %v7701, 1
        %v7850 = vrot.slane %v7705, 1
        %v7851 = vsel %vm509, %v7849, %v7850
        %v7852 = vrot.slane %v7702, 1
        %v7853 = vrot.slane %v7706, 1
        %v7854 = vsel %vm509, %v7852, %v7853
        %v7855 = vrot.slane %v7707, 1
        %v7856 = vrot.slane %v7711, 1
        %v7857 = vsel %vm509, %v7855, %v7856
        %v7858 = vrot.slane %v7708, 1
        %v7859 = vrot.slane %v7712, 1
        %v7860 = vsel %vm509, %v7858, %v7859
        %v7861 = vrot.slane %v7709, 1
        %v7862 = vrot.slane %v7713, 1
        %v7863 = vsel %vm509, %v7861, %v7862
        %v7864 = vrot.slane %v7710, 1
        %v7865 = vrot.slane %v7714, 1
        %v7866 = vsel %vm509, %v7864, %v7865
        %v7867 = vrot.slane %v7715, 1
        %v7868 = vrot.slane %v7719, 1
        %v7869 = vsel %vm509, %v7867, %v7868
        %v7870 = vrot.slane %v7716, 1
        %v7871 = vrot.slane %v7720, 1
        %v7872 = vsel %vm509, %v7870, %v7871
        %v7873 = vrot.slane %v7717, 1
        %v7874 = vrot.slane %v7721, 1
        %v7875 = vsel %vm509, %v7873, %v7874
        %v7876 = vrot.slane %v7718, 1
        %v7877 = vrot.slane %v7722, 1
        %v7878 = vsel %vm509, %v7876, %v7877
        %v7879 = vrot.slane %v7723, 1
        %v7880 = vrot.slane %v7727, 1
        %v7881 = vsel %vm509, %v7879, %v7880
        %v7882 = vrot.slane %v7724, 1
        %v7883 = vrot.slane %v7728, 1
        %v7884 = vsel %vm509, %v7882, %v7883
        %v7885 = vrot.slane %v7725, 1
        %v7886 = vrot.slane %v7729, 1
        %v7887 = vsel %vm509, %v7885, %v7886
        %v7888 = vrot.slane %v7726, 1
        %v7889 = vrot.slane %v7730, 1
        %v7890 = vsel %vm509, %v7888, %v7889
        %v7923 = vadd.f32 %v7631, %v7797
        %v7924 = vadd.f32 %v7632, %v7800
        %v7925 = vadd.f32 %v7633, %v7803
        %v7926 = vadd.f32 %v7634, %v7806
        %v7927 = vadd.f32 %v7635, %v7809
        %v7928 = vadd.f32 %v7636, %v7812
        %v7929 = vadd.f32 %v7637, %v7815
        %v7930 = vadd.f32 %v7638, %v7818
        %v7931 = vadd.f32 %v7639, %v7821
        %v7932 = vadd.f32 %v7640, %v7824
        %v7933 = vadd.f32 %v7641, %v7827
        %v7934 = vadd.f32 %v7642, %v7830
        %v7935 = vadd.f32 %v7643, %v7833
        %v7936 = vadd.f32 %v7644, %v7836
        %v7937 = vadd.f32 %v7645, %v7839
        %v7938 = vadd.f32 %v7646, %v7842
        %v7939 = vadd.f32 %v7647, %v7845
        %v7940 = vadd.f32 %v7648, %v7848
        %v7941 = vadd.f32 %v7649, %v7851
        %v7942 = vadd.f32 %v7650, %v7854
        %v7943 = vadd.f32 %v7651, %v7857
        %v7944 = vadd.f32 %v7652, %v7860
        %v7945 = vadd.f32 %v7653, %v7863
        %v7946 = vadd.f32 %v7654, %v7866
        %v7947 = vadd.f32 %v7655, %v7869
        %v7948 = vadd.f32 %v7656, %v7872
        %v7949 = vadd.f32 %v7657, %v7875
        %v7950 = vadd.f32 %v7658, %v7878
        %v7951 = vadd.f32 %v7659, %v7881
        %v7952 = vadd.f32 %v7660, %v7884
        %v7953 = vadd.f32 %v7661, %v7887
        %v7954 = vadd.f32 %v7662, %v7890
        %v7955 = vperm.slane %v297, 2
        %v7956 = vperm.slane %v298, 2
        %v7957 = vperm.slane %v299, 2
        %v7958 = vperm.slane %v300, 2
        %v7959 = vmul.f32 %v201, %v7955
        %v7960 = vmul.f32 %v202, %v7956
        %v7961 = vmul.f32 %v203, %v7957
        %v7962 = vmul.f32 %v204, %v7958
        %v7963 = vmul.f32 %v205, %v7955
        %v7964 = vmul.f32 %v206, %v7956
        %v7965 = vmul.f32 %v207, %v7957
        %v7966 = vmul.f32 %v208, %v7958
        %v7967 = vmul.f32 %v209, %v7955
        %v7968 = vmul.f32 %v210, %v7956
        %v7969 = vmul.f32 %v211, %v7957
        %v7970 = vmul.f32 %v212, %v7958
        %v7971 = vmul.f32 %v213, %v7955
        %v7972 = vmul.f32 %v214, %v7956
        %v7973 = vmul.f32 %v215, %v7957
        %v7974 = vmul.f32 %v216, %v7958
        %v7975 = vmul.f32 %v217, %v7955
        %v7976 = vmul.f32 %v218, %v7956
        %v7977 = vmul.f32 %v219, %v7957
        %v7978 = vmul.f32 %v220, %v7958
        %v7979 = vmul.f32 %v221, %v7955
        %v7980 = vmul.f32 %v222, %v7956
        %v7981 = vmul.f32 %v223, %v7957
        %v7982 = vmul.f32 %v224, %v7958
        %v7983 = vmul.f32 %v225, %v7955
        %v7984 = vmul.f32 %v226, %v7956
        %v7985 = vmul.f32 %v227, %v7957
        %v7986 = vmul.f32 %v228, %v7958
        %v7987 = vmul.f32 %v229, %v7955
        %v7988 = vmul.f32 %v230, %v7956
        %v7989 = vmul.f32 %v231, %v7957
        %v7990 = vmul.f32 %v232, %v7958
        %v7991 = vmul.f32 %v233, %v7955
        %v7992 = vmul.f32 %v234, %v7956
        %v7993 = vmul.f32 %v235, %v7957
        %v7994 = vmul.f32 %v236, %v7958
        %v7995 = vmul.f32 %v237, %v7955
        %v7996 = vmul.f32 %v238, %v7956
        %v7997 = vmul.f32 %v239, %v7957
        %v7998 = vmul.f32 %v240, %v7958
        %v7999 = vmul.f32 %v241, %v7955
        %v8000 = vmul.f32 %v242, %v7956
        %v8001 = vmul.f32 %v243, %v7957
        %v8002 = vmul.f32 %v244, %v7958
        %v8003 = vmul.f32 %v245, %v7955
        %v8004 = vmul.f32 %v246, %v7956
        %v8005 = vmul.f32 %v247, %v7957
        %v8006 = vmul.f32 %v248, %v7958
        %v8007 = vmul.f32 %v249, %v7955
        %v8008 = vmul.f32 %v250, %v7956
        %v8009 = vmul.f32 %v251, %v7957
        %v8010 = vmul.f32 %v252, %v7958
        %v8011 = vmul.f32 %v253, %v7955
        %v8012 = vmul.f32 %v254, %v7956
        %v8013 = vmul.f32 %v255, %v7957
        %v8014 = vmul.f32 %v256, %v7958
        %v8015 = vmul.f32 %v257, %v7955
        %v8016 = vmul.f32 %v258, %v7956
        %v8017 = vmul.f32 %v259, %v7957
        %v8018 = vmul.f32 %v260, %v7958
        %v8019 = vmul.f32 %v261, %v7955
        %v8020 = vmul.f32 %v262, %v7956
        %v8021 = vmul.f32 %v263, %v7957
        %v8022 = vmul.f32 %v264, %v7958
        %v8087 = vrot.slane %v7959, 2
        %v8088 = vrot.slane %v7963, 2
        %v8089 = vsel %vm802, %v8087, %v8088
        %v8090 = vrot.slane %v7960, 2
        %v8091 = vrot.slane %v7964, 2
        %v8092 = vsel %vm802, %v8090, %v8091
        %v8093 = vrot.slane %v7961, 2
        %v8094 = vrot.slane %v7965, 2
        %v8095 = vsel %vm802, %v8093, %v8094
        %v8096 = vrot.slane %v7962, 2
        %v8097 = vrot.slane %v7966, 2
        %v8098 = vsel %vm802, %v8096, %v8097
        %v8099 = vrot.slane %v7967, 2
        %v8100 = vrot.slane %v7971, 2
        %v8101 = vsel %vm802, %v8099, %v8100
        %v8102 = vrot.slane %v7968, 2
        %v8103 = vrot.slane %v7972, 2
        %v8104 = vsel %vm802, %v8102, %v8103
        %v8105 = vrot.slane %v7969, 2
        %v8106 = vrot.slane %v7973, 2
        %v8107 = vsel %vm802, %v8105, %v8106
        %v8108 = vrot.slane %v7970, 2
        %v8109 = vrot.slane %v7974, 2
        %v8110 = vsel %vm802, %v8108, %v8109
        %v8111 = vrot.slane %v7975, 2
        %v8112 = vrot.slane %v7979, 2
        %v8113 = vsel %vm802, %v8111, %v8112
        %v8114 = vrot.slane %v7976, 2
        %v8115 = vrot.slane %v7980, 2
        %v8116 = vsel %vm802, %v8114, %v8115
        %v8117 = vrot.slane %v7977, 2
        %v8118 = vrot.slane %v7981, 2
        %v8119 = vsel %vm802, %v8117, %v8118
        %v8120 = vrot.slane %v7978, 2
        %v8121 = vrot.slane %v7982, 2
        %v8122 = vsel %vm802, %v8120, %v8121
        %v8123 = vrot.slane %v7983, 2
        %v8124 = vrot.slane %v7987, 2
        %v8125 = vsel %vm802, %v8123, %v8124
        %v8126 = vrot.slane %v7984, 2
        %v8127 = vrot.slane %v7988, 2
        %v8128 = vsel %vm802, %v8126, %v8127
        %v8129 = vrot.slane %v7985, 2
        %v8130 = vrot.slane %v7989, 2
        %v8131 = vsel %vm802, %v8129, %v8130
        %v8132 = vrot.slane %v7986, 2
        %v8133 = vrot.slane %v7990, 2
        %v8134 = vsel %vm802, %v8132, %v8133
        %v8135 = vrot.slane %v7991, 2
        %v8136 = vrot.slane %v7995, 2
        %v8137 = vsel %vm802, %v8135, %v8136
        %v8138 = vrot.slane %v7992, 2
        %v8139 = vrot.slane %v7996, 2
        %v8140 = vsel %vm802, %v8138, %v8139
        %v8141 = vrot.slane %v7993, 2
        %v8142 = vrot.slane %v7997, 2
        %v8143 = vsel %vm802, %v8141, %v8142
        %v8144 = vrot.slane %v7994, 2
        %v8145 = vrot.slane %v7998, 2
        %v8146 = vsel %vm802, %v8144, %v8145
        %v8147 = vrot.slane %v7999, 2
        %v8148 = vrot.slane %v8003, 2
        %v8149 = vsel %vm802, %v8147, %v8148
        %v8150 = vrot.slane %v8000, 2
        %v8151 = vrot.slane %v8004, 2
        %v8152 = vsel %vm802, %v8150, %v8151
        %v8153 = vrot.slane %v8001, 2
        %v8154 = vrot.slane %v8005, 2
        %v8155 = vsel %vm802, %v8153, %v8154
        %v8156 = vrot.slane %v8002, 2
        %v8157 = vrot.slane %v8006, 2
        %v8158 = vsel %vm802, %v8156, %v8157
        %v8159 = vrot.slane %v8007, 2
        %v8160 = vrot.slane %v8011, 2
        %v8161 = vsel %vm802, %v8159, %v8160
        %v8162 = vrot.slane %v8008, 2
        %v8163 = vrot.slane %v8012, 2
        %v8164 = vsel %vm802, %v8162, %v8163
        %v8165 = vrot.slane %v8009, 2
        %v8166 = vrot.slane %v8013, 2
        %v8167 = vsel %vm802, %v8165, %v8166
        %v8168 = vrot.slane %v8010, 2
        %v8169 = vrot.slane %v8014, 2
        %v8170 = vsel %vm802, %v8168, %v8169
        %v8171 = vrot.slane %v8015, 2
        %v8172 = vrot.slane %v8019, 2
        %v8173 = vsel %vm802, %v8171, %v8172
        %v8174 = vrot.slane %v8016, 2
        %v8175 = vrot.slane %v8020, 2
        %v8176 = vsel %vm802, %v8174, %v8175
        %v8177 = vrot.slane %v8017, 2
        %v8178 = vrot.slane %v8021, 2
        %v8179 = vsel %vm802, %v8177, %v8178
        %v8180 = vrot.slane %v8018, 2
        %v8181 = vrot.slane %v8022, 2
        %v8182 = vsel %vm802, %v8180, %v8181
        %v8215 = vadd.f32 %v7923, %v8089
        %v8216 = vadd.f32 %v7924, %v8092
        %v8217 = vadd.f32 %v7925, %v8095
        %v8218 = vadd.f32 %v7926, %v8098
        %v8219 = vadd.f32 %v7927, %v8101
        %v8220 = vadd.f32 %v7928, %v8104
        %v8221 = vadd.f32 %v7929, %v8107
        %v8222 = vadd.f32 %v7930, %v8110
        %v8223 = vadd.f32 %v7931, %v8113
        %v8224 = vadd.f32 %v7932, %v8116
        %v8225 = vadd.f32 %v7933, %v8119
        %v8226 = vadd.f32 %v7934, %v8122
        %v8227 = vadd.f32 %v7935, %v8125
        %v8228 = vadd.f32 %v7936, %v8128
        %v8229 = vadd.f32 %v7937, %v8131
        %v8230 = vadd.f32 %v7938, %v8134
        %v8231 = vadd.f32 %v7939, %v8137
        %v8232 = vadd.f32 %v7940, %v8140
        %v8233 = vadd.f32 %v7941, %v8143
        %v8234 = vadd.f32 %v7942, %v8146
        %v8235 = vadd.f32 %v7943, %v8149
        %v8236 = vadd.f32 %v7944, %v8152
        %v8237 = vadd.f32 %v7945, %v8155
        %v8238 = vadd.f32 %v7946, %v8158
        %v8239 = vadd.f32 %v7947, %v8161
        %v8240 = vadd.f32 %v7948, %v8164
        %v8241 = vadd.f32 %v7949, %v8167
        %v8242 = vadd.f32 %v7950, %v8170
        %v8243 = vadd.f32 %v7951, %v8173
        %v8244 = vadd.f32 %v7952, %v8176
        %v8245 = vadd.f32 %v7953, %v8179
        %v8246 = vadd.f32 %v7954, %v8182
        %v8247 = vperm.slane %v297, 3
        %v8248 = vperm.slane %v298, 3
        %v8249 = vperm.slane %v299, 3
        %v8250 = vperm.slane %v300, 3
        %v8251 = vmul.f32 %v201, %v8247
        %v8252 = vmul.f32 %v202, %v8248
        %v8253 = vmul.f32 %v203, %v8249
        %v8254 = vmul.f32 %v204, %v8250
        %v8255 = vmul.f32 %v205, %v8247
        %v8256 = vmul.f32 %v206, %v8248
        %v8257 = vmul.f32 %v207, %v8249
        %v8258 = vmul.f32 %v208, %v8250
        %v8259 = vmul.f32 %v209, %v8247
        %v8260 = vmul.f32 %v210, %v8248
        %v8261 = vmul.f32 %v211, %v8249
        %v8262 = vmul.f32 %v212, %v8250
        %v8263 = vmul.f32 %v213, %v8247
        %v8264 = vmul.f32 %v214, %v8248
        %v8265 = vmul.f32 %v215, %v8249
        %v8266 = vmul.f32 %v216, %v8250
        %v8267 = vmul.f32 %v217, %v8247
        %v8268 = vmul.f32 %v218, %v8248
        %v8269 = vmul.f32 %v219, %v8249
        %v8270 = vmul.f32 %v220, %v8250
        %v8271 = vmul.f32 %v221, %v8247
        %v8272 = vmul.f32 %v222, %v8248
        %v8273 = vmul.f32 %v223, %v8249
        %v8274 = vmul.f32 %v224, %v8250
        %v8275 = vmul.f32 %v225, %v8247
        %v8276 = vmul.f32 %v226, %v8248
        %v8277 = vmul.f32 %v227, %v8249
        %v8278 = vmul.f32 %v228, %v8250
        %v8279 = vmul.f32 %v229, %v8247
        %v8280 = vmul.f32 %v230, %v8248
        %v8281 = vmul.f32 %v231, %v8249
        %v8282 = vmul.f32 %v232, %v8250
        %v8283 = vmul.f32 %v233, %v8247
        %v8284 = vmul.f32 %v234, %v8248
        %v8285 = vmul.f32 %v235, %v8249
        %v8286 = vmul.f32 %v236, %v8250
        %v8287 = vmul.f32 %v237, %v8247
        %v8288 = vmul.f32 %v238, %v8248
        %v8289 = vmul.f32 %v239, %v8249
        %v8290 = vmul.f32 %v240, %v8250
        %v8291 = vmul.f32 %v241, %v8247
        %v8292 = vmul.f32 %v242, %v8248
        %v8293 = vmul.f32 %v243, %v8249
        %v8294 = vmul.f32 %v244, %v8250
        %v8295 = vmul.f32 %v245, %v8247
        %v8296 = vmul.f32 %v246, %v8248
        %v8297 = vmul.f32 %v247, %v8249
        %v8298 = vmul.f32 %v248, %v8250
        %v8299 = vmul.f32 %v249, %v8247
        %v8300 = vmul.f32 %v250, %v8248
        %v8301 = vmul.f32 %v251, %v8249
        %v8302 = vmul.f32 %v252, %v8250
        %v8303 = vmul.f32 %v253, %v8247
        %v8304 = vmul.f32 %v254, %v8248
        %v8305 = vmul.f32 %v255, %v8249
        %v8306 = vmul.f32 %v256, %v8250
        %v8307 = vmul.f32 %v257, %v8247
        %v8308 = vmul.f32 %v258, %v8248
        %v8309 = vmul.f32 %v259, %v8249
        %v8310 = vmul.f32 %v260, %v8250
        %v8311 = vmul.f32 %v261, %v8247
        %v8312 = vmul.f32 %v262, %v8248
        %v8313 = vmul.f32 %v263, %v8249
        %v8314 = vmul.f32 %v264, %v8250
        %v8379 = vrot.slane %v8251, 3
        %v8380 = vrot.slane %v8255, 3
        %v8381 = vsel %vm1095, %v8379, %v8380
        %v8382 = vrot.slane %v8252, 3
        %v8383 = vrot.slane %v8256, 3
        %v8384 = vsel %vm1095, %v8382, %v8383
        %v8385 = vrot.slane %v8253, 3
        %v8386 = vrot.slane %v8257, 3
        %v8387 = vsel %vm1095, %v8385, %v8386
        %v8388 = vrot.slane %v8254, 3
        %v8389 = vrot.slane %v8258, 3
        %v8390 = vsel %vm1095, %v8388, %v8389
        %v8391 = vrot.slane %v8259, 3
        %v8392 = vrot.slane %v8263, 3
        %v8393 = vsel %vm1095, %v8391, %v8392
        %v8394 = vrot.slane %v8260, 3
        %v8395 = vrot.slane %v8264, 3
        %v8396 = vsel %vm1095, %v8394, %v8395
        %v8397 = vrot.slane %v8261, 3
        %v8398 = vrot.slane %v8265, 3
        %v8399 = vsel %vm1095, %v8397, %v8398
        %v8400 = vrot.slane %v8262, 3
        %v8401 = vrot.slane %v8266, 3
        %v8402 = vsel %vm1095, %v8400, %v8401
        %v8403 = vrot.slane %v8267, 3
        %v8404 = vrot.slane %v8271, 3
        %v8405 = vsel %vm1095, %v8403, %v8404
        %v8406 = vrot.slane %v8268, 3
        %v8407 = vrot.slane %v8272, 3
        %v8408 = vsel %vm1095, %v8406, %v8407
        %v8409 = vrot.slane %v8269, 3
        %v8410 = vrot.slane %v8273, 3
        %v8411 = vsel %vm1095, %v8409, %v8410
        %v8412 = vrot.slane %v8270, 3
        %v8413 = vrot.slane %v8274, 3
        %v8414 = vsel %vm1095, %v8412, %v8413
        %v8415 = vrot.slane %v8275, 3
        %v8416 = vrot.slane %v8279, 3
        %v8417 = vsel %vm1095, %v8415, %v8416
        %v8418 = vrot.slane %v8276, 3
        %v8419 = vrot.slane %v8280, 3
        %v8420 = vsel %vm1095, %v8418, %v8419
        %v8421 = vrot.slane %v8277, 3
        %v8422 = vrot.slane %v8281, 3
        %v8423 = vsel %vm1095, %v8421, %v8422
        %v8424 = vrot.slane %v8278, 3
        %v8425 = vrot.slane %v8282, 3
        %v8426 = vsel %vm1095, %v8424, %v8425
        %v8427 = vrot.slane %v8283, 3
        %v8428 = vrot.slane %v8287, 3
        %v8429 = vsel %vm1095, %v8427, %v8428
        %v8430 = vrot.slane %v8284, 3
        %v8431 = vrot.slane %v8288, 3
        %v8432 = vsel %vm1095, %v8430, %v8431
        %v8433 = vrot.slane %v8285, 3
        %v8434 = vrot.slane %v8289, 3
        %v8435 = vsel %vm1095, %v8433, %v8434
        %v8436 = vrot.slane %v8286, 3
        %v8437 = vrot.slane %v8290, 3
        %v8438 = vsel %vm1095, %v8436, %v8437
        %v8439 = vrot.slane %v8291, 3
        %v8440 = vrot.slane %v8295, 3
        %v8441 = vsel %vm1095, %v8439, %v8440
        %v8442 = vrot.slane %v8292, 3
        %v8443 = vrot.slane %v8296, 3
        %v8444 = vsel %vm1095, %v8442, %v8443
        %v8445 = vrot.slane %v8293, 3
        %v8446 = vrot.slane %v8297, 3
        %v8447 = vsel %vm1095, %v8445, %v8446
        %v8448 = vrot.slane %v8294, 3
        %v8449 = vrot.slane %v8298, 3
        %v8450 = vsel %vm1095, %v8448, %v8449
        %v8451 = vrot.slane %v8299, 3
        %v8452 = vrot.slane %v8303, 3
        %v8453 = vsel %vm1095, %v8451, %v8452
        %v8454 = vrot.slane %v8300, 3
        %v8455 = vrot.slane %v8304, 3
        %v8456 = vsel %vm1095, %v8454, %v8455
        %v8457 = vrot.slane %v8301, 3
        %v8458 = vrot.slane %v8305, 3
        %v8459 = vsel %vm1095, %v8457, %v8458
        %v8460 = vrot.slane %v8302, 3
        %v8461 = vrot.slane %v8306, 3
        %v8462 = vsel %vm1095, %v8460, %v8461
        %v8463 = vrot.slane %v8307, 3
        %v8464 = vrot.slane %v8311, 3
        %v8465 = vsel %vm1095, %v8463, %v8464
        %v8466 = vrot.slane %v8308, 3
        %v8467 = vrot.slane %v8312, 3
        %v8468 = vsel %vm1095, %v8466, %v8467
        %v8469 = vrot.slane %v8309, 3
        %v8470 = vrot.slane %v8313, 3
        %v8471 = vsel %vm1095, %v8469, %v8470
        %v8472 = vrot.slane %v8310, 3
        %v8473 = vrot.slane %v8314, 3
        %v8474 = vsel %vm1095, %v8472, %v8473
        %v8507 = vadd.f32 %v8215, %v8381
        %v8508 = vadd.f32 %v8216, %v8384
        %v8509 = vadd.f32 %v8217, %v8387
        %v8510 = vadd.f32 %v8218, %v8390
        %v8511 = vadd.f32 %v8219, %v8393
        %v8512 = vadd.f32 %v8220, %v8396
        %v8513 = vadd.f32 %v8221, %v8399
        %v8514 = vadd.f32 %v8222, %v8402
        %v8515 = vadd.f32 %v8223, %v8405
        %v8516 = vadd.f32 %v8224, %v8408
        %v8517 = vadd.f32 %v8225, %v8411
        %v8518 = vadd.f32 %v8226, %v8414
        %v8519 = vadd.f32 %v8227, %v8417
        %v8520 = vadd.f32 %v8228, %v8420
        %v8521 = vadd.f32 %v8229, %v8423
        %v8522 = vadd.f32 %v8230, %v8426
        %v8523 = vadd.f32 %v8231, %v8429
        %v8524 = vadd.f32 %v8232, %v8432
        %v8525 = vadd.f32 %v8233, %v8435
        %v8526 = vadd.f32 %v8234, %v8438
        %v8527 = vadd.f32 %v8235, %v8441
        %v8528 = vadd.f32 %v8236, %v8444
        %v8529 = vadd.f32 %v8237, %v8447
        %v8530 = vadd.f32 %v8238, %v8450
        %v8531 = vadd.f32 %v8239, %v8453
        %v8532 = vadd.f32 %v8240, %v8456
        %v8533 = vadd.f32 %v8241, %v8459
        %v8534 = vadd.f32 %v8242, %v8462
        %v8535 = vadd.f32 %v8243, %v8465
        %v8536 = vadd.f32 %v8244, %v8468
        %v8537 = vadd.f32 %v8245, %v8471
        %v8538 = vadd.f32 %v8246, %v8474
        %v8539 = vperm.slane %v297, 4
        %v8540 = vperm.slane %v298, 4
        %v8541 = vperm.slane %v299, 4
        %v8542 = vperm.slane %v300, 4
        %v8543 = vmul.f32 %v201, %v8539
        %v8544 = vmul.f32 %v202, %v8540
        %v8545 = vmul.f32 %v203, %v8541
        %v8546 = vmul.f32 %v204, %v8542
        %v8547 = vmul.f32 %v205, %v8539
        %v8548 = vmul.f32 %v206, %v8540
        %v8549 = vmul.f32 %v207, %v8541
        %v8550 = vmul.f32 %v208, %v8542
        %v8551 = vmul.f32 %v209, %v8539
        %v8552 = vmul.f32 %v210, %v8540
        %v8553 = vmul.f32 %v211, %v8541
        %v8554 = vmul.f32 %v212, %v8542
        %v8555 = vmul.f32 %v213, %v8539
        %v8556 = vmul.f32 %v214, %v8540
        %v8557 = vmul.f32 %v215, %v8541
        %v8558 = vmul.f32 %v216, %v8542
        %v8559 = vmul.f32 %v217, %v8539
        %v8560 = vmul.f32 %v218, %v8540
        %v8561 = vmul.f32 %v219, %v8541
        %v8562 = vmul.f32 %v220, %v8542
        %v8563 = vmul.f32 %v221, %v8539
        %v8564 = vmul.f32 %v222, %v8540
        %v8565 = vmul.f32 %v223, %v8541
        %v8566 = vmul.f32 %v224, %v8542
        %v8567 = vmul.f32 %v225, %v8539
        %v8568 = vmul.f32 %v226, %v8540
        %v8569 = vmul.f32 %v227, %v8541
        %v8570 = vmul.f32 %v228, %v8542
        %v8571 = vmul.f32 %v229, %v8539
        %v8572 = vmul.f32 %v230, %v8540
        %v8573 = vmul.f32 %v231, %v8541
        %v8574 = vmul.f32 %v232, %v8542
        %v8575 = vmul.f32 %v233, %v8539
        %v8576 = vmul.f32 %v234, %v8540
        %v8577 = vmul.f32 %v235, %v8541
        %v8578 = vmul.f32 %v236, %v8542
        %v8579 = vmul.f32 %v237, %v8539
        %v8580 = vmul.f32 %v238, %v8540
        %v8581 = vmul.f32 %v239, %v8541
        %v8582 = vmul.f32 %v240, %v8542
        %v8583 = vmul.f32 %v241, %v8539
        %v8584 = vmul.f32 %v242, %v8540
        %v8585 = vmul.f32 %v243, %v8541
        %v8586 = vmul.f32 %v244, %v8542
        %v8587 = vmul.f32 %v245, %v8539
        %v8588 = vmul.f32 %v246, %v8540
        %v8589 = vmul.f32 %v247, %v8541
        %v8590 = vmul.f32 %v248, %v8542
        %v8591 = vmul.f32 %v249, %v8539
        %v8592 = vmul.f32 %v250, %v8540
        %v8593 = vmul.f32 %v251, %v8541
        %v8594 = vmul.f32 %v252, %v8542
        %v8595 = vmul.f32 %v253, %v8539
        %v8596 = vmul.f32 %v254, %v8540
        %v8597 = vmul.f32 %v255, %v8541
        %v8598 = vmul.f32 %v256, %v8542
        %v8599 = vmul.f32 %v257, %v8539
        %v8600 = vmul.f32 %v258, %v8540
        %v8601 = vmul.f32 %v259, %v8541
        %v8602 = vmul.f32 %v260, %v8542
        %v8603 = vmul.f32 %v261, %v8539
        %v8604 = vmul.f32 %v262, %v8540
        %v8605 = vmul.f32 %v263, %v8541
        %v8606 = vmul.f32 %v264, %v8542
        %v8671 = vrot.slane %v8543, 4
        %v8672 = vrot.slane %v8547, 4
        %v8673 = vsel %vm1388, %v8671, %v8672
        %v8674 = vrot.slane %v8544, 4
        %v8675 = vrot.slane %v8548, 4
        %v8676 = vsel %vm1388, %v8674, %v8675
        %v8677 = vrot.slane %v8545, 4
        %v8678 = vrot.slane %v8549, 4
        %v8679 = vsel %vm1388, %v8677, %v8678
        %v8680 = vrot.slane %v8546, 4
        %v8681 = vrot.slane %v8550, 4
        %v8682 = vsel %vm1388, %v8680, %v8681
        %v8683 = vrot.slane %v8551, 4
        %v8684 = vrot.slane %v8555, 4
        %v8685 = vsel %vm1388, %v8683, %v8684
        %v8686 = vrot.slane %v8552, 4
        %v8687 = vrot.slane %v8556, 4
        %v8688 = vsel %vm1388, %v8686, %v8687
        %v8689 = vrot.slane %v8553, 4
        %v8690 = vrot.slane %v8557, 4
        %v8691 = vsel %vm1388, %v8689, %v8690
        %v8692 = vrot.slane %v8554, 4
        %v8693 = vrot.slane %v8558, 4
        %v8694 = vsel %vm1388, %v8692, %v8693
        %v8695 = vrot.slane %v8559, 4
        %v8696 = vrot.slane %v8563, 4
        %v8697 = vsel %vm1388, %v8695, %v8696
        %v8698 = vrot.slane %v8560, 4
        %v8699 = vrot.slane %v8564, 4
        %v8700 = vsel %vm1388, %v8698, %v8699
        %v8701 = vrot.slane %v8561, 4
        %v8702 = vrot.slane %v8565, 4
        %v8703 = vsel %vm1388, %v8701, %v8702
        %v8704 = vrot.slane %v8562, 4
        %v8705 = vrot.slane %v8566, 4
        %v8706 = vsel %vm1388, %v8704, %v8705
        %v8707 = vrot.slane %v8567, 4
        %v8708 = vrot.slane %v8571, 4
        %v8709 = vsel %vm1388, %v8707, %v8708
        %v8710 = vrot.slane %v8568, 4
        %v8711 = vrot.slane %v8572, 4
        %v8712 = vsel %vm1388, %v8710, %v8711
        %v8713 = vrot.slane %v8569, 4
        %v8714 = vrot.slane %v8573, 4
        %v8715 = vsel %vm1388, %v8713, %v8714
        %v8716 = vrot.slane %v8570, 4
        %v8717 = vrot.slane %v8574, 4
        %v8718 = vsel %vm1388, %v8716, %v8717
        %v8719 = vrot.slane %v8575, 4
        %v8720 = vrot.slane %v8579, 4
        %v8721 = vsel %vm1388, %v8719, %v8720
        %v8722 = vrot.slane %v8576, 4
        %v8723 = vrot.slane %v8580, 4
        %v8724 = vsel %vm1388, %v8722, %v8723
        %v8725 = vrot.slane %v8577, 4
        %v8726 = vrot.slane %v8581, 4
        %v8727 = vsel %vm1388, %v8725, %v8726
        %v8728 = vrot.slane %v8578, 4
        %v8729 = vrot.slane %v8582, 4
        %v8730 = vsel %vm1388, %v8728, %v8729
        %v8731 = vrot.slane %v8583, 4
        %v8732 = vrot.slane %v8587, 4
        %v8733 = vsel %vm1388, %v8731, %v8732
        %v8734 = vrot.slane %v8584, 4
        %v8735 = vrot.slane %v8588, 4
        %v8736 = vsel %vm1388, %v8734, %v8735
        %v8737 = vrot.slane %v8585, 4
        %v8738 = vrot.slane %v8589, 4
        %v8739 = vsel %vm1388, %v8737, %v8738
        %v8740 = vrot.slane %v8586, 4
        %v8741 = vrot.slane %v8590, 4
        %v8742 = vsel %vm1388, %v8740, %v8741
        %v8743 = vrot.slane %v8591, 4
        %v8744 = vrot.slane %v8595, 4
        %v8745 = vsel %vm1388, %v8743, %v8744
        %v8746 = vrot.slane %v8592, 4
        %v8747 = vrot.slane %v8596, 4
        %v8748 = vsel %vm1388, %v8746, %v8747
        %v8749 = vrot.slane %v8593, 4
        %v8750 = vrot.slane %v8597, 4
        %v8751 = vsel %vm1388, %v8749, %v8750
        %v8752 = vrot.slane %v8594, 4
        %v8753 = vrot.slane %v8598, 4
        %v8754 = vsel %vm1388, %v8752, %v8753
        %v8755 = vrot.slane %v8599, 4
        %v8756 = vrot.slane %v8603, 4
        %v8757 = vsel %vm1388, %v8755, %v8756
        %v8758 = vrot.slane %v8600, 4
        %v8759 = vrot.slane %v8604, 4
        %v8760 = vsel %vm1388, %v8758, %v8759
        %v8761 = vrot.slane %v8601, 4
        %v8762 = vrot.slane %v8605, 4
        %v8763 = vsel %vm1388, %v8761, %v8762
        %v8764 = vrot.slane %v8602, 4
        %v8765 = vrot.slane %v8606, 4
        %v8766 = vsel %vm1388, %v8764, %v8765
        %v8799 = vadd.f32 %v8507, %v8673
        %v8800 = vadd.f32 %v8508, %v8676
        %v8801 = vadd.f32 %v8509, %v8679
        %v8802 = vadd.f32 %v8510, %v8682
        %v8803 = vadd.f32 %v8511, %v8685
        %v8804 = vadd.f32 %v8512, %v8688
        %v8805 = vadd.f32 %v8513, %v8691
        %v8806 = vadd.f32 %v8514, %v8694
        %v8807 = vadd.f32 %v8515, %v8697
        %v8808 = vadd.f32 %v8516, %v8700
        %v8809 = vadd.f32 %v8517, %v8703
        %v8810 = vadd.f32 %v8518, %v8706
        %v8811 = vadd.f32 %v8519, %v8709
        %v8812 = vadd.f32 %v8520, %v8712
        %v8813 = vadd.f32 %v8521, %v8715
        %v8814 = vadd.f32 %v8522, %v8718
        %v8815 = vadd.f32 %v8523, %v8721
        %v8816 = vadd.f32 %v8524, %v8724
        %v8817 = vadd.f32 %v8525, %v8727
        %v8818 = vadd.f32 %v8526, %v8730
        %v8819 = vadd.f32 %v8527, %v8733
        %v8820 = vadd.f32 %v8528, %v8736
        %v8821 = vadd.f32 %v8529, %v8739
        %v8822 = vadd.f32 %v8530, %v8742
        %v8823 = vadd.f32 %v8531, %v8745
        %v8824 = vadd.f32 %v8532, %v8748
        %v8825 = vadd.f32 %v8533, %v8751
        %v8826 = vadd.f32 %v8534, %v8754
        %v8827 = vadd.f32 %v8535, %v8757
        %v8828 = vadd.f32 %v8536, %v8760
        %v8829 = vadd.f32 %v8537, %v8763
        %v8830 = vadd.f32 %v8538, %v8766
        %v8831 = vperm.slane %v297, 5
        %v8832 = vperm.slane %v298, 5
        %v8833 = vperm.slane %v299, 5
        %v8834 = vperm.slane %v300, 5
        %v8835 = vmul.f32 %v201, %v8831
        %v8836 = vmul.f32 %v202, %v8832
        %v8837 = vmul.f32 %v203, %v8833
        %v8838 = vmul.f32 %v204, %v8834
        %v8839 = vmul.f32 %v205, %v8831
        %v8840 = vmul.f32 %v206, %v8832
        %v8841 = vmul.f32 %v207, %v8833
        %v8842 = vmul.f32 %v208, %v8834
        %v8843 = vmul.f32 %v209, %v8831
        %v8844 = vmul.f32 %v210, %v8832
        %v8845 = vmul.f32 %v211, %v8833
        %v8846 = vmul.f32 %v212, %v8834
        %v8847 = vmul.f32 %v213, %v8831
        %v8848 = vmul.f32 %v214, %v8832
        %v8849 = vmul.f32 %v215, %v8833
        %v8850 = vmul.f32 %v216, %v8834
        %v8851 = vmul.f32 %v217, %v8831
        %v8852 = vmul.f32 %v218, %v8832
        %v8853 = vmul.f32 %v219, %v8833
        %v8854 = vmul.f32 %v220, %v8834
        %v8855 = vmul.f32 %v221, %v8831
        %v8856 = vmul.f32 %v222, %v8832
        %v8857 = vmul.f32 %v223, %v8833
        %v8858 = vmul.f32 %v224, %v8834
        %v8859 = vmul.f32 %v225, %v8831
        %v8860 = vmul.f32 %v226, %v8832
        %v8861 = vmul.f32 %v227, %v8833
        %v8862 = vmul.f32 %v228, %v8834
        %v8863 = vmul.f32 %v229, %v8831
        %v8864 = vmul.f32 %v230, %v8832
        %v8865 = vmul.f32 %v231, %v8833
        %v8866 = vmul.f32 %v232, %v8834
        %v8867 = vmul.f32 %v233, %v8831
        %v8868 = vmul.f32 %v234, %v8832
        %v8869 = vmul.f32 %v235, %v8833
        %v8870 = vmul.f32 %v236, %v8834
        %v8871 = vmul.f32 %v237, %v8831
        %v8872 = vmul.f32 %v238, %v8832
        %v8873 = vmul.f32 %v239, %v8833
        %v8874 = vmul.f32 %v240, %v8834
        %v8875 = vmul.f32 %v241, %v8831
        %v8876 = vmul.f32 %v242, %v8832
        %v8877 = vmul.f32 %v243, %v8833
        %v8878 = vmul.f32 %v244, %v8834
        %v8879 = vmul.f32 %v245, %v8831
        %v8880 = vmul.f32 %v246, %v8832
        %v8881 = vmul.f32 %v247, %v8833
        %v8882 = vmul.f32 %v248, %v8834
        %v8883 = vmul.f32 %v249, %v8831
        %v8884 = vmul.f32 %v250, %v8832
        %v8885 = vmul.f32 %v251, %v8833
        %v8886 = vmul.f32 %v252, %v8834
        %v8887 = vmul.f32 %v253, %v8831
        %v8888 = vmul.f32 %v254, %v8832
        %v8889 = vmul.f32 %v255, %v8833
        %v8890 = vmul.f32 %v256, %v8834
        %v8891 = vmul.f32 %v257, %v8831
        %v8892 = vmul.f32 %v258, %v8832
        %v8893 = vmul.f32 %v259, %v8833
        %v8894 = vmul.f32 %v260, %v8834
        %v8895 = vmul.f32 %v261, %v8831
        %v8896 = vmul.f32 %v262, %v8832
        %v8897 = vmul.f32 %v263, %v8833
        %v8898 = vmul.f32 %v264, %v8834
        %v8963 = vrot.slane %v8835, 5
        %v8964 = vrot.slane %v8839, 5
        %v8965 = vsel %vm1681, %v8963, %v8964
        %v8966 = vrot.slane %v8836, 5
        %v8967 = vrot.slane %v8840, 5
        %v8968 = vsel %vm1681, %v8966, %v8967
        %v8969 = vrot.slane %v8837, 5
        %v8970 = vrot.slane %v8841, 5
        %v8971 = vsel %vm1681, %v8969, %v8970
        %v8972 = vrot.slane %v8838, 5
        %v8973 = vrot.slane %v8842, 5
        %v8974 = vsel %vm1681, %v8972, %v8973
        %v8975 = vrot.slane %v8843, 5
        %v8976 = vrot.slane %v8847, 5
        %v8977 = vsel %vm1681, %v8975, %v8976
        %v8978 = vrot.slane %v8844, 5
        %v8979 = vrot.slane %v8848, 5
        %v8980 = vsel %vm1681, %v8978, %v8979
        %v8981 = vrot.slane %v8845, 5
        %v8982 = vrot.slane %v8849, 5
        %v8983 = vsel %vm1681, %v8981, %v8982
        %v8984 = vrot.slane %v8846, 5
        %v8985 = vrot.slane %v8850, 5
        %v8986 = vsel %vm1681, %v8984, %v8985
        %v8987 = vrot.slane %v8851, 5
        %v8988 = vrot.slane %v8855, 5
        %v8989 = vsel %vm1681, %v8987, %v8988
        %v8990 = vrot.slane %v8852, 5
        %v8991 = vrot.slane %v8856, 5
        %v8992 = vsel %vm1681, %v8990, %v8991
        %v8993 = vrot.slane %v8853, 5
        %v8994 = vrot.slane %v8857, 5
        %v8995 = vsel %vm1681, %v8993, %v8994
        %v8996 = vrot.slane %v8854, 5
        %v8997 = vrot.slane %v8858, 5
        %v8998 = vsel %vm1681, %v8996, %v8997
        %v8999 = vrot.slane %v8859, 5
        %v9000 = vrot.slane %v8863, 5
        %v9001 = vsel %vm1681, %v8999, %v9000
        %v9002 = vrot.slane %v8860, 5
        %v9003 = vrot.slane %v8864, 5
        %v9004 = vsel %vm1681, %v9002, %v9003
        %v9005 = vrot.slane %v8861, 5
        %v9006 = vrot.slane %v8865, 5
        %v9007 = vsel %vm1681, %v9005, %v9006
        %v9008 = vrot.slane %v8862, 5
        %v9009 = vrot.slane %v8866, 5
        %v9010 = vsel %vm1681, %v9008, %v9009
        %v9011 = vrot.slane %v8867, 5
        %v9012 = vrot.slane %v8871, 5
        %v9013 = vsel %vm1681, %v9011, %v9012
        %v9014 = vrot.slane %v8868, 5
        %v9015 = vrot.slane %v8872, 5
        %v9016 = vsel %vm1681, %v9014, %v9015
        %v9017 = vrot.slane %v8869, 5
        %v9018 = vrot.slane %v8873, 5
        %v9019 = vsel %vm1681, %v9017, %v9018
        %v9020 = vrot.slane %v8870, 5
        %v9021 = vrot.slane %v8874, 5
        %v9022 = vsel %vm1681, %v9020, %v9021
        %v9023 = vrot.slane %v8875, 5
        %v9024 = vrot.slane %v8879, 5
        %v9025 = vsel %vm1681, %v9023, %v9024
        %v9026 = vrot.slane %v8876, 5
        %v9027 = vrot.slane %v8880, 5
        %v9028 = vsel %vm1681, %v9026, %v9027
        %v9029 = vrot.slane %v8877, 5
        %v9030 = vrot.slane %v8881, 5
        %v9031 = vsel %vm1681, %v9029, %v9030
        %v9032 = vrot.slane %v8878, 5
        %v9033 = vrot.slane %v8882, 5
        %v9034 = vsel %vm1681, %v9032, %v9033
        %v9035 = vrot.slane %v8883, 5
        %v9036 = vrot.slane %v8887, 5
        %v9037 = vsel %vm1681, %v9035, %v9036
        %v9038 = vrot.slane %v8884, 5
        %v9039 = vrot.slane %v8888, 5
        %v9040 = vsel %vm1681, %v9038, %v9039
        %v9041 = vrot.slane %v8885, 5
        %v9042 = vrot.slane %v8889, 5
        %v9043 = vsel %vm1681, %v9041, %v9042
        %v9044 = vrot.slane %v8886, 5
        %v9045 = vrot.slane %v8890, 5
        %v9046 = vsel %vm1681, %v9044, %v9045
        %v9047 = vrot.slane %v8891, 5
        %v9048 = vrot.slane %v8895, 5
        %v9049 = vsel %vm1681, %v9047, %v9048
        %v9050 = vrot.slane %v8892, 5
        %v9051 = vrot.slane %v8896, 5
        %v9052 = vsel %vm1681, %v9050, %v9051
        %v9053 = vrot.slane %v8893, 5
        %v9054 = vrot.slane %v8897, 5
        %v9055 = vsel %vm1681, %v9053, %v9054
        %v9056 = vrot.slane %v8894, 5
        %v9057 = vrot.slane %v8898, 5
        %v9058 = vsel %vm1681, %v9056, %v9057
        %v9091 = vadd.f32 %v8799, %v8965
        %v9092 = vadd.f32 %v8800, %v8968
        %v9093 = vadd.f32 %v8801, %v8971
        %v9094 = vadd.f32 %v8802, %v8974
        %v9095 = vadd.f32 %v8803, %v8977
        %v9096 = vadd.f32 %v8804, %v8980
        %v9097 = vadd.f32 %v8805, %v8983
        %v9098 = vadd.f32 %v8806, %v8986
        %v9099 = vadd.f32 %v8807, %v8989
        %v9100 = vadd.f32 %v8808, %v8992
        %v9101 = vadd.f32 %v8809, %v8995
        %v9102 = vadd.f32 %v8810, %v8998
        %v9103 = vadd.f32 %v8811, %v9001
        %v9104 = vadd.f32 %v8812, %v9004
        %v9105 = vadd.f32 %v8813, %v9007
        %v9106 = vadd.f32 %v8814, %v9010
        %v9107 = vadd.f32 %v8815, %v9013
        %v9108 = vadd.f32 %v8816, %v9016
        %v9109 = vadd.f32 %v8817, %v9019
        %v9110 = vadd.f32 %v8818, %v9022
        %v9111 = vadd.f32 %v8819, %v9025
        %v9112 = vadd.f32 %v8820, %v9028
        %v9113 = vadd.f32 %v8821, %v9031
        %v9114 = vadd.f32 %v8822, %v9034
        %v9115 = vadd.f32 %v8823, %v9037
        %v9116 = vadd.f32 %v8824, %v9040
        %v9117 = vadd.f32 %v8825, %v9043
        %v9118 = vadd.f32 %v8826, %v9046
        %v9119 = vadd.f32 %v8827, %v9049
        %v9120 = vadd.f32 %v8828, %v9052
        %v9121 = vadd.f32 %v8829, %v9055
        %v9122 = vadd.f32 %v8830, %v9058
        %v9123 = vperm.slane %v297, 6
        %v9124 = vperm.slane %v298, 6
        %v9125 = vperm.slane %v299, 6
        %v9126 = vperm.slane %v300, 6
        %v9127 = vmul.f32 %v201, %v9123
        %v9128 = vmul.f32 %v202, %v9124
        %v9129 = vmul.f32 %v203, %v9125
        %v9130 = vmul.f32 %v204, %v9126
        %v9131 = vmul.f32 %v205, %v9123
        %v9132 = vmul.f32 %v206, %v9124
        %v9133 = vmul.f32 %v207, %v9125
        %v9134 = vmul.f32 %v208, %v9126
        %v9135 = vmul.f32 %v209, %v9123
        %v9136 = vmul.f32 %v210, %v9124
        %v9137 = vmul.f32 %v211, %v9125
        %v9138 = vmul.f32 %v212, %v9126
        %v9139 = vmul.f32 %v213, %v9123
        %v9140 = vmul.f32 %v214, %v9124
        %v9141 = vmul.f32 %v215, %v9125
        %v9142 = vmul.f32 %v216, %v9126
        %v9143 = vmul.f32 %v217, %v9123
        %v9144 = vmul.f32 %v218, %v9124
        %v9145 = vmul.f32 %v219, %v9125
        %v9146 = vmul.f32 %v220, %v9126
        %v9147 = vmul.f32 %v221, %v9123
        %v9148 = vmul.f32 %v222, %v9124
        %v9149 = vmul.f32 %v223, %v9125
        %v9150 = vmul.f32 %v224, %v9126
        %v9151 = vmul.f32 %v225, %v9123
        %v9152 = vmul.f32 %v226, %v9124
        %v9153 = vmul.f32 %v227, %v9125
        %v9154 = vmul.f32 %v228, %v9126
        %v9155 = vmul.f32 %v229, %v9123
        %v9156 = vmul.f32 %v230, %v9124
        %v9157 = vmul.f32 %v231, %v9125
        %v9158 = vmul.f32 %v232, %v9126
        %v9159 = vmul.f32 %v233, %v9123
        %v9160 = vmul.f32 %v234, %v9124
        %v9161 = vmul.f32 %v235, %v9125
        %v9162 = vmul.f32 %v236, %v9126
        %v9163 = vmul.f32 %v237, %v9123
        %v9164 = vmul.f32 %v238, %v9124
        %v9165 = vmul.f32 %v239, %v9125
        %v9166 = vmul.f32 %v240, %v9126
        %v9167 = vmul.f32 %v241, %v9123
        %v9168 = vmul.f32 %v242, %v9124
        %v9169 = vmul.f32 %v243, %v9125
        %v9170 = vmul.f32 %v244, %v9126
        %v9171 = vmul.f32 %v245, %v9123
        %v9172 = vmul.f32 %v246, %v9124
        %v9173 = vmul.f32 %v247, %v9125
        %v9174 = vmul.f32 %v248, %v9126
        %v9175 = vmul.f32 %v249, %v9123
        %v9176 = vmul.f32 %v250, %v9124
        %v9177 = vmul.f32 %v251, %v9125
        %v9178 = vmul.f32 %v252, %v9126
        %v9179 = vmul.f32 %v253, %v9123
        %v9180 = vmul.f32 %v254, %v9124
        %v9181 = vmul.f32 %v255, %v9125
        %v9182 = vmul.f32 %v256, %v9126
        %v9183 = vmul.f32 %v257, %v9123
        %v9184 = vmul.f32 %v258, %v9124
        %v9185 = vmul.f32 %v259, %v9125
        %v9186 = vmul.f32 %v260, %v9126
        %v9187 = vmul.f32 %v261, %v9123
        %v9188 = vmul.f32 %v262, %v9124
        %v9189 = vmul.f32 %v263, %v9125
        %v9190 = vmul.f32 %v264, %v9126
        %v9255 = vrot.slane %v9127, 6
        %v9256 = vrot.slane %v9131, 6
        %v9257 = vsel %vm1974, %v9255, %v9256
        %v9258 = vrot.slane %v9128, 6
        %v9259 = vrot.slane %v9132, 6
        %v9260 = vsel %vm1974, %v9258, %v9259
        %v9261 = vrot.slane %v9129, 6
        %v9262 = vrot.slane %v9133, 6
        %v9263 = vsel %vm1974, %v9261, %v9262
        %v9264 = vrot.slane %v9130, 6
        %v9265 = vrot.slane %v9134, 6
        %v9266 = vsel %vm1974, %v9264, %v9265
        %v9267 = vrot.slane %v9135, 6
        %v9268 = vrot.slane %v9139, 6
        %v9269 = vsel %vm1974, %v9267, %v9268
        %v9270 = vrot.slane %v9136, 6
        %v9271 = vrot.slane %v9140, 6
        %v9272 = vsel %vm1974, %v9270, %v9271
        %v9273 = vrot.slane %v9137, 6
        %v9274 = vrot.slane %v9141, 6
        %v9275 = vsel %vm1974, %v9273, %v9274
        %v9276 = vrot.slane %v9138, 6
        %v9277 = vrot.slane %v9142, 6
        %v9278 = vsel %vm1974, %v9276, %v9277
        %v9279 = vrot.slane %v9143, 6
        %v9280 = vrot.slane %v9147, 6
        %v9281 = vsel %vm1974, %v9279, %v9280
        %v9282 = vrot.slane %v9144, 6
        %v9283 = vrot.slane %v9148, 6
        %v9284 = vsel %vm1974, %v9282, %v9283
        %v9285 = vrot.slane %v9145, 6
        %v9286 = vrot.slane %v9149, 6
        %v9287 = vsel %vm1974, %v9285, %v9286
        %v9288 = vrot.slane %v9146, 6
        %v9289 = vrot.slane %v9150, 6
        %v9290 = vsel %vm1974, %v9288, %v9289
        %v9291 = vrot.slane %v9151, 6
        %v9292 = vrot.slane %v9155, 6
        %v9293 = vsel %vm1974, %v9291, %v9292
        %v9294 = vrot.slane %v9152, 6
        %v9295 = vrot.slane %v9156, 6
        %v9296 = vsel %vm1974, %v9294, %v9295
        %v9297 = vrot.slane %v9153, 6
        %v9298 = vrot.slane %v9157, 6
        %v9299 = vsel %vm1974, %v9297, %v9298
        %v9300 = vrot.slane %v9154, 6
        %v9301 = vrot.slane %v9158, 6
        %v9302 = vsel %vm1974, %v9300, %v9301
        %v9303 = vrot.slane %v9159, 6
        %v9304 = vrot.slane %v9163, 6
        %v9305 = vsel %vm1974, %v9303, %v9304
        %v9306 = vrot.slane %v9160, 6
        %v9307 = vrot.slane %v9164, 6
        %v9308 = vsel %vm1974, %v9306, %v9307
        %v9309 = vrot.slane %v9161, 6
        %v9310 = vrot.slane %v9165, 6
        %v9311 = vsel %vm1974, %v9309, %v9310
        %v9312 = vrot.slane %v9162, 6
        %v9313 = vrot.slane %v9166, 6
        %v9314 = vsel %vm1974, %v9312, %v9313
        %v9315 = vrot.slane %v9167, 6
        %v9316 = vrot.slane %v9171, 6
        %v9317 = vsel %vm1974, %v9315, %v9316
        %v9318 = vrot.slane %v9168, 6
        %v9319 = vrot.slane %v9172, 6
        %v9320 = vsel %vm1974, %v9318, %v9319
        %v9321 = vrot.slane %v9169, 6
        %v9322 = vrot.slane %v9173, 6
        %v9323 = vsel %vm1974, %v9321, %v9322
        %v9324 = vrot.slane %v9170, 6
        %v9325 = vrot.slane %v9174, 6
        %v9326 = vsel %vm1974, %v9324, %v9325
        %v9327 = vrot.slane %v9175, 6
        %v9328 = vrot.slane %v9179, 6
        %v9329 = vsel %vm1974, %v9327, %v9328
        %v9330 = vrot.slane %v9176, 6
        %v9331 = vrot.slane %v9180, 6
        %v9332 = vsel %vm1974, %v9330, %v9331
        %v9333 = vrot.slane %v9177, 6
        %v9334 = vrot.slane %v9181, 6
        %v9335 = vsel %vm1974, %v9333, %v9334
        %v9336 = vrot.slane %v9178, 6
        %v9337 = vrot.slane %v9182, 6
        %v9338 = vsel %vm1974, %v9336, %v9337
        %v9339 = vrot.slane %v9183, 6
        %v9340 = vrot.slane %v9187, 6
        %v9341 = vsel %vm1974, %v9339, %v9340
        %v9342 = vrot.slane %v9184, 6
        %v9343 = vrot.slane %v9188, 6
        %v9344 = vsel %vm1974, %v9342, %v9343
        %v9345 = vrot.slane %v9185, 6
        %v9346 = vrot.slane %v9189, 6
        %v9347 = vsel %vm1974, %v9345, %v9346
        %v9348 = vrot.slane %v9186, 6
        %v9349 = vrot.slane %v9190, 6
        %v9350 = vsel %vm1974, %v9348, %v9349
        %v9383 = vadd.f32 %v9091, %v9257
        %v9384 = vadd.f32 %v9092, %v9260
        %v9385 = vadd.f32 %v9093, %v9263
        %v9386 = vadd.f32 %v9094, %v9266
        %v9387 = vadd.f32 %v9095, %v9269
        %v9388 = vadd.f32 %v9096, %v9272
        %v9389 = vadd.f32 %v9097, %v9275
        %v9390 = vadd.f32 %v9098, %v9278
        %v9391 = vadd.f32 %v9099, %v9281
        %v9392 = vadd.f32 %v9100, %v9284
        %v9393 = vadd.f32 %v9101, %v9287
        %v9394 = vadd.f32 %v9102, %v9290
        %v9395 = vadd.f32 %v9103, %v9293
        %v9396 = vadd.f32 %v9104, %v9296
        %v9397 = vadd.f32 %v9105, %v9299
        %v9398 = vadd.f32 %v9106, %v9302
        %v9399 = vadd.f32 %v9107, %v9305
        %v9400 = vadd.f32 %v9108, %v9308
        %v9401 = vadd.f32 %v9109, %v9311
        %v9402 = vadd.f32 %v9110, %v9314
        %v9403 = vadd.f32 %v9111, %v9317
        %v9404 = vadd.f32 %v9112, %v9320
        %v9405 = vadd.f32 %v9113, %v9323
        %v9406 = vadd.f32 %v9114, %v9326
        %v9407 = vadd.f32 %v9115, %v9329
        %v9408 = vadd.f32 %v9116, %v9332
        %v9409 = vadd.f32 %v9117, %v9335
        %v9410 = vadd.f32 %v9118, %v9338
        %v9411 = vadd.f32 %v9119, %v9341
        %v9412 = vadd.f32 %v9120, %v9344
        %v9413 = vadd.f32 %v9121, %v9347
        %v9414 = vadd.f32 %v9122, %v9350
        %v9415 = vperm.slane %v301, 0
        %v9416 = vperm.slane %v302, 0
        %v9417 = vperm.slane %v303, 0
        %v9418 = vperm.slane %v304, 0
        %v9419 = vmul.f32 %v209, %v9415
        %v9420 = vmul.f32 %v210, %v9416
        %v9421 = vmul.f32 %v211, %v9417
        %v9422 = vmul.f32 %v212, %v9418
        %v9423 = vmul.f32 %v217, %v9415
        %v9424 = vmul.f32 %v218, %v9416
        %v9425 = vmul.f32 %v219, %v9417
        %v9426 = vmul.f32 %v220, %v9418
        %v9427 = vmul.f32 %v225, %v9415
        %v9428 = vmul.f32 %v226, %v9416
        %v9429 = vmul.f32 %v227, %v9417
        %v9430 = vmul.f32 %v228, %v9418
        %v9431 = vmul.f32 %v233, %v9415
        %v9432 = vmul.f32 %v234, %v9416
        %v9433 = vmul.f32 %v235, %v9417
        %v9434 = vmul.f32 %v236, %v9418
        %v9435 = vmul.f32 %v241, %v9415
        %v9436 = vmul.f32 %v242, %v9416
        %v9437 = vmul.f32 %v243, %v9417
        %v9438 = vmul.f32 %v244, %v9418
        %v9439 = vmul.f32 %v249, %v9415
        %v9440 = vmul.f32 %v250, %v9416
        %v9441 = vmul.f32 %v251, %v9417
        %v9442 = vmul.f32 %v252, %v9418
        %v9443 = vmul.f32 %v257, %v9415
        %v9444 = vmul.f32 %v258, %v9416
        %v9445 = vmul.f32 %v259, %v9417
        %v9446 = vmul.f32 %v260, %v9418
        %v9447 = vmul.f32 %v265, %v9415
        %v9448 = vmul.f32 %v266, %v9416
        %v9449 = vmul.f32 %v267, %v9417
        %v9450 = vmul.f32 %v268, %v9418
        %v9451 = vadd.f32 %v9383, %v9419
        %v9452 = vadd.f32 %v9384, %v9420
        %v9453 = vadd.f32 %v9385, %v9421
        %v9454 = vadd.f32 %v9386, %v9422
        %v9455 = vadd.f32 %v9387, %v9423
        %v9456 = vadd.f32 %v9388, %v9424
        %v9457 = vadd.f32 %v9389, %v9425
        %v9458 = vadd.f32 %v9390, %v9426
        %v9459 = vadd.f32 %v9391, %v9427
        %v9460 = vadd.f32 %v9392, %v9428
        %v9461 = vadd.f32 %v9393, %v9429
        %v9462 = vadd.f32 %v9394, %v9430
        %v9463 = vadd.f32 %v9395, %v9431
        %v9464 = vadd.f32 %v9396, %v9432
        %v9465 = vadd.f32 %v9397, %v9433
        %v9466 = vadd.f32 %v9398, %v9434
        %v9467 = vadd.f32 %v9399, %v9435
        %v9468 = vadd.f32 %v9400, %v9436
        %v9469 = vadd.f32 %v9401, %v9437
        %v9470 = vadd.f32 %v9402, %v9438
        %v9471 = vadd.f32 %v9403, %v9439
        %v9472 = vadd.f32 %v9404, %v9440
        %v9473 = vadd.f32 %v9405, %v9441
        %v9474 = vadd.f32 %v9406, %v9442
        %v9475 = vadd.f32 %v9407, %v9443
        %v9476 = vadd.f32 %v9408, %v9444
        %v9477 = vadd.f32 %v9409, %v9445
        %v9478 = vadd.f32 %v9410, %v9446
        %v9479 = vadd.f32 %v9411, %v9447
        %v9480 = vadd.f32 %v9412, %v9448
        %v9481 = vadd.f32 %v9413, %v9449
        %v9482 = vadd.f32 %v9414, %v9450
        %v9483 = vperm.slane %v301, 1
        %v9484 = vperm.slane %v302, 1
        %v9485 = vperm.slane %v303, 1
        %v9486 = vperm.slane %v304, 1
        %v9487 = vmul.f32 %v209, %v9483
        %v9488 = vmul.f32 %v210, %v9484
        %v9489 = vmul.f32 %v211, %v9485
        %v9490 = vmul.f32 %v212, %v9486
        %v9491 = vmul.f32 %v213, %v9483
        %v9492 = vmul.f32 %v214, %v9484
        %v9493 = vmul.f32 %v215, %v9485
        %v9494 = vmul.f32 %v216, %v9486
        %v9495 = vmul.f32 %v217, %v9483
        %v9496 = vmul.f32 %v218, %v9484
        %v9497 = vmul.f32 %v219, %v9485
        %v9498 = vmul.f32 %v220, %v9486
        %v9499 = vmul.f32 %v221, %v9483
        %v9500 = vmul.f32 %v222, %v9484
        %v9501 = vmul.f32 %v223, %v9485
        %v9502 = vmul.f32 %v224, %v9486
        %v9503 = vmul.f32 %v225, %v9483
        %v9504 = vmul.f32 %v226, %v9484
        %v9505 = vmul.f32 %v227, %v9485
        %v9506 = vmul.f32 %v228, %v9486
        %v9507 = vmul.f32 %v229, %v9483
        %v9508 = vmul.f32 %v230, %v9484
        %v9509 = vmul.f32 %v231, %v9485
        %v9510 = vmul.f32 %v232, %v9486
        %v9511 = vmul.f32 %v233, %v9483
        %v9512 = vmul.f32 %v234, %v9484
        %v9513 = vmul.f32 %v235, %v9485
        %v9514 = vmul.f32 %v236, %v9486
        %v9515 = vmul.f32 %v237, %v9483
        %v9516 = vmul.f32 %v238, %v9484
        %v9517 = vmul.f32 %v239, %v9485
        %v9518 = vmul.f32 %v240, %v9486
        %v9519 = vmul.f32 %v241, %v9483
        %v9520 = vmul.f32 %v242, %v9484
        %v9521 = vmul.f32 %v243, %v9485
        %v9522 = vmul.f32 %v244, %v9486
        %v9523 = vmul.f32 %v245, %v9483
        %v9524 = vmul.f32 %v246, %v9484
        %v9525 = vmul.f32 %v247, %v9485
        %v9526 = vmul.f32 %v248, %v9486
        %v9527 = vmul.f32 %v249, %v9483
        %v9528 = vmul.f32 %v250, %v9484
        %v9529 = vmul.f32 %v251, %v9485
        %v9530 = vmul.f32 %v252, %v9486
        %v9531 = vmul.f32 %v253, %v9483
        %v9532 = vmul.f32 %v254, %v9484
        %v9533 = vmul.f32 %v255, %v9485
        %v9534 = vmul.f32 %v256, %v9486
        %v9535 = vmul.f32 %v257, %v9483
        %v9536 = vmul.f32 %v258, %v9484
        %v9537 = vmul.f32 %v259, %v9485
        %v9538 = vmul.f32 %v260, %v9486
        %v9539 = vmul.f32 %v261, %v9483
        %v9540 = vmul.f32 %v262, %v9484
        %v9541 = vmul.f32 %v263, %v9485
        %v9542 = vmul.f32 %v264, %v9486
        %v9543 = vmul.f32 %v265, %v9483
        %v9544 = vmul.f32 %v266, %v9484
        %v9545 = vmul.f32 %v267, %v9485
        %v9546 = vmul.f32 %v268, %v9486
        %v9547 = vmul.f32 %v269, %v9483
        %v9548 = vmul.f32 %v270, %v9484
        %v9549 = vmul.f32 %v271, %v9485
        %v9550 = vmul.f32 %v272, %v9486
        %v9615 = vrot.slane %v9487, 1
        %v9616 = vrot.slane %v9491, 1
        %v9617 = vsel %vm509, %v9615, %v9616
        %v9618 = vrot.slane %v9488, 1
        %v9619 = vrot.slane %v9492, 1
        %v9620 = vsel %vm509, %v9618, %v9619
        %v9621 = vrot.slane %v9489, 1
        %v9622 = vrot.slane %v9493, 1
        %v9623 = vsel %vm509, %v9621, %v9622
        %v9624 = vrot.slane %v9490, 1
        %v9625 = vrot.slane %v9494, 1
        %v9626 = vsel %vm509, %v9624, %v9625
        %v9627 = vrot.slane %v9495, 1
        %v9628 = vrot.slane %v9499, 1
        %v9629 = vsel %vm509, %v9627, %v9628
        %v9630 = vrot.slane %v9496, 1
        %v9631 = vrot.slane %v9500, 1
        %v9632 = vsel %vm509, %v9630, %v9631
        %v9633 = vrot.slane %v9497, 1
        %v9634 = vrot.slane %v9501, 1
        %v9635 = vsel %vm509, %v9633, %v9634
        %v9636 = vrot.slane %v9498, 1
        %v9637 = vrot.slane %v9502, 1
        %v9638 = vsel %vm509, %v9636, %v9637
        %v9639 = vrot.slane %v9503, 1
        %v9640 = vrot.slane %v9507, 1
        %v9641 = vsel %vm509, %v9639, %v9640
        %v9642 = vrot.slane %v9504, 1
        %v9643 = vrot.slane %v9508, 1
        %v9644 = vsel %vm509, %v9642, %v9643
        %v9645 = vrot.slane %v9505, 1
        %v9646 = vrot.slane %v9509, 1
        %v9647 = vsel %vm509, %v9645, %v9646
        %v9648 = vrot.slane %v9506, 1
        %v9649 = vrot.slane %v9510, 1
        %v9650 = vsel %vm509, %v9648, %v9649
        %v9651 = vrot.slane %v9511, 1
        %v9652 = vrot.slane %v9515, 1
        %v9653 = vsel %vm509, %v9651, %v9652
        %v9654 = vrot.slane %v9512, 1
        %v9655 = vrot.slane %v9516, 1
        %v9656 = vsel %vm509, %v9654, %v9655
        %v9657 = vrot.slane %v9513, 1
        %v9658 = vrot.slane %v9517, 1
        %v9659 = vsel %vm509, %v9657, %v9658
        %v9660 = vrot.slane %v9514, 1
        %v9661 = vrot.slane %v9518, 1
        %v9662 = vsel %vm509, %v9660, %v9661
        %v9663 = vrot.slane %v9519, 1
        %v9664 = vrot.slane %v9523, 1
        %v9665 = vsel %vm509, %v9663, %v9664
        %v9666 = vrot.slane %v9520, 1
        %v9667 = vrot.slane %v9524, 1
        %v9668 = vsel %vm509, %v9666, %v9667
        %v9669 = vrot.slane %v9521, 1
        %v9670 = vrot.slane %v9525, 1
        %v9671 = vsel %vm509, %v9669, %v9670
        %v9672 = vrot.slane %v9522, 1
        %v9673 = vrot.slane %v9526, 1
        %v9674 = vsel %vm509, %v9672, %v9673
        %v9675 = vrot.slane %v9527, 1
        %v9676 = vrot.slane %v9531, 1
        %v9677 = vsel %vm509, %v9675, %v9676
        %v9678 = vrot.slane %v9528, 1
        %v9679 = vrot.slane %v9532, 1
        %v9680 = vsel %vm509, %v9678, %v9679
        %v9681 = vrot.slane %v9529, 1
        %v9682 = vrot.slane %v9533, 1
        %v9683 = vsel %vm509, %v9681, %v9682
        %v9684 = vrot.slane %v9530, 1
        %v9685 = vrot.slane %v9534, 1
        %v9686 = vsel %vm509, %v9684, %v9685
        %v9687 = vrot.slane %v9535, 1
        %v9688 = vrot.slane %v9539, 1
        %v9689 = vsel %vm509, %v9687, %v9688
        %v9690 = vrot.slane %v9536, 1
        %v9691 = vrot.slane %v9540, 1
        %v9692 = vsel %vm509, %v9690, %v9691
        %v9693 = vrot.slane %v9537, 1
        %v9694 = vrot.slane %v9541, 1
        %v9695 = vsel %vm509, %v9693, %v9694
        %v9696 = vrot.slane %v9538, 1
        %v9697 = vrot.slane %v9542, 1
        %v9698 = vsel %vm509, %v9696, %v9697
        %v9699 = vrot.slane %v9543, 1
        %v9700 = vrot.slane %v9547, 1
        %v9701 = vsel %vm509, %v9699, %v9700
        %v9702 = vrot.slane %v9544, 1
        %v9703 = vrot.slane %v9548, 1
        %v9704 = vsel %vm509, %v9702, %v9703
        %v9705 = vrot.slane %v9545, 1
        %v9706 = vrot.slane %v9549, 1
        %v9707 = vsel %vm509, %v9705, %v9706
        %v9708 = vrot.slane %v9546, 1
        %v9709 = vrot.slane %v9550, 1
        %v9710 = vsel %vm509, %v9708, %v9709
        %v9743 = vadd.f32 %v9451, %v9617
        %v9744 = vadd.f32 %v9452, %v9620
        %v9745 = vadd.f32 %v9453, %v9623
        %v9746 = vadd.f32 %v9454, %v9626
        %v9747 = vadd.f32 %v9455, %v9629
        %v9748 = vadd.f32 %v9456, %v9632
        %v9749 = vadd.f32 %v9457, %v9635
        %v9750 = vadd.f32 %v9458, %v9638
        %v9751 = vadd.f32 %v9459, %v9641
        %v9752 = vadd.f32 %v9460, %v9644
        %v9753 = vadd.f32 %v9461, %v9647
        %v9754 = vadd.f32 %v9462, %v9650
        %v9755 = vadd.f32 %v9463, %v9653
        %v9756 = vadd.f32 %v9464, %v9656
        %v9757 = vadd.f32 %v9465, %v9659
        %v9758 = vadd.f32 %v9466, %v9662
        %v9759 = vadd.f32 %v9467, %v9665
        %v9760 = vadd.f32 %v9468, %v9668
        %v9761 = vadd.f32 %v9469, %v9671
        %v9762 = vadd.f32 %v9470, %v9674
        %v9763 = vadd.f32 %v9471, %v9677
        %v9764 = vadd.f32 %v9472, %v9680
        %v9765 = vadd.f32 %v9473, %v9683
        %v9766 = vadd.f32 %v9474, %v9686
        %v9767 = vadd.f32 %v9475, %v9689
        %v9768 = vadd.f32 %v9476, %v9692
        %v9769 = vadd.f32 %v9477, %v9695
        %v9770 = vadd.f32 %v9478, %v9698
        %v9771 = vadd.f32 %v9479, %v9701
        %v9772 = vadd.f32 %v9480, %v9704
        %v9773 = vadd.f32 %v9481, %v9707
        %v9774 = vadd.f32 %v9482, %v9710
        %v9775 = vperm.slane %v301, 2
        %v9776 = vperm.slane %v302, 2
        %v9777 = vperm.slane %v303, 2
        %v9778 = vperm.slane %v304, 2
        %v9779 = vmul.f32 %v209, %v9775
        %v9780 = vmul.f32 %v210, %v9776
        %v9781 = vmul.f32 %v211, %v9777
        %v9782 = vmul.f32 %v212, %v9778
        %v9783 = vmul.f32 %v213, %v9775
        %v9784 = vmul.f32 %v214, %v9776
        %v9785 = vmul.f32 %v215, %v9777
        %v9786 = vmul.f32 %v216, %v9778
        %v9787 = vmul.f32 %v217, %v9775
        %v9788 = vmul.f32 %v218, %v9776
        %v9789 = vmul.f32 %v219, %v9777
        %v9790 = vmul.f32 %v220, %v9778
        %v9791 = vmul.f32 %v221, %v9775
        %v9792 = vmul.f32 %v222, %v9776
        %v9793 = vmul.f32 %v223, %v9777
        %v9794 = vmul.f32 %v224, %v9778
        %v9795 = vmul.f32 %v225, %v9775
        %v9796 = vmul.f32 %v226, %v9776
        %v9797 = vmul.f32 %v227, %v9777
        %v9798 = vmul.f32 %v228, %v9778
        %v9799 = vmul.f32 %v229, %v9775
        %v9800 = vmul.f32 %v230, %v9776
        %v9801 = vmul.f32 %v231, %v9777
        %v9802 = vmul.f32 %v232, %v9778
        %v9803 = vmul.f32 %v233, %v9775
        %v9804 = vmul.f32 %v234, %v9776
        %v9805 = vmul.f32 %v235, %v9777
        %v9806 = vmul.f32 %v236, %v9778
        %v9807 = vmul.f32 %v237, %v9775
        %v9808 = vmul.f32 %v238, %v9776
        %v9809 = vmul.f32 %v239, %v9777
        %v9810 = vmul.f32 %v240, %v9778
        %v9811 = vmul.f32 %v241, %v9775
        %v9812 = vmul.f32 %v242, %v9776
        %v9813 = vmul.f32 %v243, %v9777
        %v9814 = vmul.f32 %v244, %v9778
        %v9815 = vmul.f32 %v245, %v9775
        %v9816 = vmul.f32 %v246, %v9776
        %v9817 = vmul.f32 %v247, %v9777
        %v9818 = vmul.f32 %v248, %v9778
        %v9819 = vmul.f32 %v249, %v9775
        %v9820 = vmul.f32 %v250, %v9776
        %v9821 = vmul.f32 %v251, %v9777
        %v9822 = vmul.f32 %v252, %v9778
        %v9823 = vmul.f32 %v253, %v9775
        %v9824 = vmul.f32 %v254, %v9776
        %v9825 = vmul.f32 %v255, %v9777
        %v9826 = vmul.f32 %v256, %v9778
        %v9827 = vmul.f32 %v257, %v9775
        %v9828 = vmul.f32 %v258, %v9776
        %v9829 = vmul.f32 %v259, %v9777
        %v9830 = vmul.f32 %v260, %v9778
        %v9831 = vmul.f32 %v261, %v9775
        %v9832 = vmul.f32 %v262, %v9776
        %v9833 = vmul.f32 %v263, %v9777
        %v9834 = vmul.f32 %v264, %v9778
        %v9835 = vmul.f32 %v265, %v9775
        %v9836 = vmul.f32 %v266, %v9776
        %v9837 = vmul.f32 %v267, %v9777
        %v9838 = vmul.f32 %v268, %v9778
        %v9839 = vmul.f32 %v269, %v9775
        %v9840 = vmul.f32 %v270, %v9776
        %v9841 = vmul.f32 %v271, %v9777
        %v9842 = vmul.f32 %v272, %v9778
        %v9907 = vrot.slane %v9779, 2
        %v9908 = vrot.slane %v9783, 2
        %v9909 = vsel %vm802, %v9907, %v9908
        %v9910 = vrot.slane %v9780, 2
        %v9911 = vrot.slane %v9784, 2
        %v9912 = vsel %vm802, %v9910, %v9911
        %v9913 = vrot.slane %v9781, 2
        %v9914 = vrot.slane %v9785, 2
        %v9915 = vsel %vm802, %v9913, %v9914
        %v9916 = vrot.slane %v9782, 2
        %v9917 = vrot.slane %v9786, 2
        %v9918 = vsel %vm802, %v9916, %v9917
        %v9919 = vrot.slane %v9787, 2
        %v9920 = vrot.slane %v9791, 2
        %v9921 = vsel %vm802, %v9919, %v9920
        %v9922 = vrot.slane %v9788, 2
        %v9923 = vrot.slane %v9792, 2
        %v9924 = vsel %vm802, %v9922, %v9923
        %v9925 = vrot.slane %v9789, 2
        %v9926 = vrot.slane %v9793, 2
        %v9927 = vsel %vm802, %v9925, %v9926
        %v9928 = vrot.slane %v9790, 2
        %v9929 = vrot.slane %v9794, 2
        %v9930 = vsel %vm802, %v9928, %v9929
        %v9931 = vrot.slane %v9795, 2
        %v9932 = vrot.slane %v9799, 2
        %v9933 = vsel %vm802, %v9931, %v9932
        %v9934 = vrot.slane %v9796, 2
        %v9935 = vrot.slane %v9800, 2
        %v9936 = vsel %vm802, %v9934, %v9935
        %v9937 = vrot.slane %v9797, 2
        %v9938 = vrot.slane %v9801, 2
        %v9939 = vsel %vm802, %v9937, %v9938
        %v9940 = vrot.slane %v9798, 2
        %v9941 = vrot.slane %v9802, 2
        %v9942 = vsel %vm802, %v9940, %v9941
        %v9943 = vrot.slane %v9803, 2
        %v9944 = vrot.slane %v9807, 2
        %v9945 = vsel %vm802, %v9943, %v9944
        %v9946 = vrot.slane %v9804, 2
        %v9947 = vrot.slane %v9808, 2
        %v9948 = vsel %vm802, %v9946, %v9947
        %v9949 = vrot.slane %v9805, 2
        %v9950 = vrot.slane %v9809, 2
        %v9951 = vsel %vm802, %v9949, %v9950
        %v9952 = vrot.slane %v9806, 2
        %v9953 = vrot.slane %v9810, 2
        %v9954 = vsel %vm802, %v9952, %v9953
        %v9955 = vrot.slane %v9811, 2
        %v9956 = vrot.slane %v9815, 2
        %v9957 = vsel %vm802, %v9955, %v9956
        %v9958 = vrot.slane %v9812, 2
        %v9959 = vrot.slane %v9816, 2
        %v9960 = vsel %vm802, %v9958, %v9959
        %v9961 = vrot.slane %v9813, 2
        %v9962 = vrot.slane %v9817, 2
        %v9963 = vsel %vm802, %v9961, %v9962
        %v9964 = vrot.slane %v9814, 2
        %v9965 = vrot.slane %v9818, 2
        %v9966 = vsel %vm802, %v9964, %v9965
        %v9967 = vrot.slane %v9819, 2
        %v9968 = vrot.slane %v9823, 2
        %v9969 = vsel %vm802, %v9967, %v9968
        %v9970 = vrot.slane %v9820, 2
        %v9971 = vrot.slane %v9824, 2
        %v9972 = vsel %vm802, %v9970, %v9971
        %v9973 = vrot.slane %v9821, 2
        %v9974 = vrot.slane %v9825, 2
        %v9975 = vsel %vm802, %v9973, %v9974
        %v9976 = vrot.slane %v9822, 2
        %v9977 = vrot.slane %v9826, 2
        %v9978 = vsel %vm802, %v9976, %v9977
        %v9979 = vrot.slane %v9827, 2
        %v9980 = vrot.slane %v9831, 2
        %v9981 = vsel %vm802, %v9979, %v9980
        %v9982 = vrot.slane %v9828, 2
        %v9983 = vrot.slane %v9832, 2
        %v9984 = vsel %vm802, %v9982, %v9983
        %v9985 = vrot.slane %v9829, 2
        %v9986 = vrot.slane %v9833, 2
        %v9987 = vsel %vm802, %v9985, %v9986
        %v9988 = vrot.slane %v9830, 2
        %v9989 = vrot.slane %v9834, 2
        %v9990 = vsel %vm802, %v9988, %v9989
        %v9991 = vrot.slane %v9835, 2
        %v9992 = vrot.slane %v9839, 2
        %v9993 = vsel %vm802, %v9991, %v9992
        %v9994 = vrot.slane %v9836, 2
        %v9995 = vrot.slane %v9840, 2
        %v9996 = vsel %vm802, %v9994, %v9995
        %v9997 = vrot.slane %v9837, 2
        %v9998 = vrot.slane %v9841, 2
        %v9999 = vsel %vm802, %v9997, %v9998
        %v10000 = vrot.slane %v9838, 2
        %v10001 = vrot.slane %v9842, 2
        %v10002 = vsel %vm802, %v10000, %v10001
        %v10035 = vadd.f32 %v9743, %v9909
        %v10036 = vadd.f32 %v9744, %v9912
        %v10037 = vadd.f32 %v9745, %v9915
        %v10038 = vadd.f32 %v9746, %v9918
        %v10039 = vadd.f32 %v9747, %v9921
        %v10040 = vadd.f32 %v9748, %v9924
        %v10041 = vadd.f32 %v9749, %v9927
        %v10042 = vadd.f32 %v9750, %v9930
        %v10043 = vadd.f32 %v9751, %v9933
        %v10044 = vadd.f32 %v9752, %v9936
        %v10045 = vadd.f32 %v9753, %v9939
        %v10046 = vadd.f32 %v9754, %v9942
        %v10047 = vadd.f32 %v9755, %v9945
        %v10048 = vadd.f32 %v9756, %v9948
        %v10049 = vadd.f32 %v9757, %v9951
        %v10050 = vadd.f32 %v9758, %v9954
        %v10051 = vadd.f32 %v9759, %v9957
        %v10052 = vadd.f32 %v9760, %v9960
        %v10053 = vadd.f32 %v9761, %v9963
        %v10054 = vadd.f32 %v9762, %v9966
        %v10055 = vadd.f32 %v9763, %v9969
        %v10056 = vadd.f32 %v9764, %v9972
        %v10057 = vadd.f32 %v9765, %v9975
        %v10058 = vadd.f32 %v9766, %v9978
        %v10059 = vadd.f32 %v9767, %v9981
        %v10060 = vadd.f32 %v9768, %v9984
        %v10061 = vadd.f32 %v9769, %v9987
        %v10062 = vadd.f32 %v9770, %v9990
        %v10063 = vadd.f32 %v9771, %v9993
        %v10064 = vadd.f32 %v9772, %v9996
        %v10065 = vadd.f32 %v9773, %v9999
        %v10066 = vadd.f32 %v9774, %v10002
        %v10067 = vperm.slane %v301, 3
        %v10068 = vperm.slane %v302, 3
        %v10069 = vperm.slane %v303, 3
        %v10070 = vperm.slane %v304, 3
        %v10071 = vmul.f32 %v209, %v10067
        %v10072 = vmul.f32 %v210, %v10068
        %v10073 = vmul.f32 %v211, %v10069
        %v10074 = vmul.f32 %v212, %v10070
        %v10075 = vmul.f32 %v213, %v10067
        %v10076 = vmul.f32 %v214, %v10068
        %v10077 = vmul.f32 %v215, %v10069
        %v10078 = vmul.f32 %v216, %v10070
        %v10079 = vmul.f32 %v217, %v10067
        %v10080 = vmul.f32 %v218, %v10068
        %v10081 = vmul.f32 %v219, %v10069
        %v10082 = vmul.f32 %v220, %v10070
        %v10083 = vmul.f32 %v221, %v10067
        %v10084 = vmul.f32 %v222, %v10068
        %v10085 = vmul.f32 %v223, %v10069
        %v10086 = vmul.f32 %v224, %v10070
        %v10087 = vmul.f32 %v225, %v10067
        %v10088 = vmul.f32 %v226, %v10068
        %v10089 = vmul.f32 %v227, %v10069
        %v10090 = vmul.f32 %v228, %v10070
        %v10091 = vmul.f32 %v229, %v10067
        %v10092 = vmul.f32 %v230, %v10068
        %v10093 = vmul.f32 %v231, %v10069
        %v10094 = vmul.f32 %v232, %v10070
        %v10095 = vmul.f32 %v233, %v10067
        %v10096 = vmul.f32 %v234, %v10068
        %v10097 = vmul.f32 %v235, %v10069
        %v10098 = vmul.f32 %v236, %v10070
        %v10099 = vmul.f32 %v237, %v10067
        %v10100 = vmul.f32 %v238, %v10068
        %v10101 = vmul.f32 %v239, %v10069
        %v10102 = vmul.f32 %v240, %v10070
        %v10103 = vmul.f32 %v241, %v10067
        %v10104 = vmul.f32 %v242, %v10068
        %v10105 = vmul.f32 %v243, %v10069
        %v10106 = vmul.f32 %v244, %v10070
        %v10107 = vmul.f32 %v245, %v10067
        %v10108 = vmul.f32 %v246, %v10068
        %v10109 = vmul.f32 %v247, %v10069
        %v10110 = vmul.f32 %v248, %v10070
        %v10111 = vmul.f32 %v249, %v10067
        %v10112 = vmul.f32 %v250, %v10068
        %v10113 = vmul.f32 %v251, %v10069
        %v10114 = vmul.f32 %v252, %v10070
        %v10115 = vmul.f32 %v253, %v10067
        %v10116 = vmul.f32 %v254, %v10068
        %v10117 = vmul.f32 %v255, %v10069
        %v10118 = vmul.f32 %v256, %v10070
        %v10119 = vmul.f32 %v257, %v10067
        %v10120 = vmul.f32 %v258, %v10068
        %v10121 = vmul.f32 %v259, %v10069
        %v10122 = vmul.f32 %v260, %v10070
        %v10123 = vmul.f32 %v261, %v10067
        %v10124 = vmul.f32 %v262, %v10068
        %v10125 = vmul.f32 %v263, %v10069
        %v10126 = vmul.f32 %v264, %v10070
        %v10127 = vmul.f32 %v265, %v10067
        %v10128 = vmul.f32 %v266, %v10068
        %v10129 = vmul.f32 %v267, %v10069
        %v10130 = vmul.f32 %v268, %v10070
        %v10131 = vmul.f32 %v269, %v10067
        %v10132 = vmul.f32 %v270, %v10068
        %v10133 = vmul.f32 %v271, %v10069
        %v10134 = vmul.f32 %v272, %v10070
        %v10199 = vrot.slane %v10071, 3
        %v10200 = vrot.slane %v10075, 3
        %v10201 = vsel %vm1095, %v10199, %v10200
        %v10202 = vrot.slane %v10072, 3
        %v10203 = vrot.slane %v10076, 3
        %v10204 = vsel %vm1095, %v10202, %v10203
        %v10205 = vrot.slane %v10073, 3
        %v10206 = vrot.slane %v10077, 3
        %v10207 = vsel %vm1095, %v10205, %v10206
        %v10208 = vrot.slane %v10074, 3
        %v10209 = vrot.slane %v10078, 3
        %v10210 = vsel %vm1095, %v10208, %v10209
        %v10211 = vrot.slane %v10079, 3
        %v10212 = vrot.slane %v10083, 3
        %v10213 = vsel %vm1095, %v10211, %v10212
        %v10214 = vrot.slane %v10080, 3
        %v10215 = vrot.slane %v10084, 3
        %v10216 = vsel %vm1095, %v10214, %v10215
        %v10217 = vrot.slane %v10081, 3
        %v10218 = vrot.slane %v10085, 3
        %v10219 = vsel %vm1095, %v10217, %v10218
        %v10220 = vrot.slane %v10082, 3
        %v10221 = vrot.slane %v10086, 3
        %v10222 = vsel %vm1095, %v10220, %v10221
        %v10223 = vrot.slane %v10087, 3
        %v10224 = vrot.slane %v10091, 3
        %v10225 = vsel %vm1095, %v10223, %v10224
        %v10226 = vrot.slane %v10088, 3
        %v10227 = vrot.slane %v10092, 3
        %v10228 = vsel %vm1095, %v10226, %v10227
        %v10229 = vrot.slane %v10089, 3
        %v10230 = vrot.slane %v10093, 3
        %v10231 = vsel %vm1095, %v10229, %v10230
        %v10232 = vrot.slane %v10090, 3
        %v10233 = vrot.slane %v10094, 3
        %v10234 = vsel %vm1095, %v10232, %v10233
        %v10235 = vrot.slane %v10095, 3
        %v10236 = vrot.slane %v10099, 3
        %v10237 = vsel %vm1095, %v10235, %v10236
        %v10238 = vrot.slane %v10096, 3
        %v10239 = vrot.slane %v10100, 3
        %v10240 = vsel %vm1095, %v10238, %v10239
        %v10241 = vrot.slane %v10097, 3
        %v10242 = vrot.slane %v10101, 3
        %v10243 = vsel %vm1095, %v10241, %v10242
        %v10244 = vrot.slane %v10098, 3
        %v10245 = vrot.slane %v10102, 3
        %v10246 = vsel %vm1095, %v10244, %v10245
        %v10247 = vrot.slane %v10103, 3
        %v10248 = vrot.slane %v10107, 3
        %v10249 = vsel %vm1095, %v10247, %v10248
        %v10250 = vrot.slane %v10104, 3
        %v10251 = vrot.slane %v10108, 3
        %v10252 = vsel %vm1095, %v10250, %v10251
        %v10253 = vrot.slane %v10105, 3
        %v10254 = vrot.slane %v10109, 3
        %v10255 = vsel %vm1095, %v10253, %v10254
        %v10256 = vrot.slane %v10106, 3
        %v10257 = vrot.slane %v10110, 3
        %v10258 = vsel %vm1095, %v10256, %v10257
        %v10259 = vrot.slane %v10111, 3
        %v10260 = vrot.slane %v10115, 3
        %v10261 = vsel %vm1095, %v10259, %v10260
        %v10262 = vrot.slane %v10112, 3
        %v10263 = vrot.slane %v10116, 3
        %v10264 = vsel %vm1095, %v10262, %v10263
        %v10265 = vrot.slane %v10113, 3
        %v10266 = vrot.slane %v10117, 3
        %v10267 = vsel %vm1095, %v10265, %v10266
        %v10268 = vrot.slane %v10114, 3
        %v10269 = vrot.slane %v10118, 3
        %v10270 = vsel %vm1095, %v10268, %v10269
        %v10271 = vrot.slane %v10119, 3
        %v10272 = vrot.slane %v10123, 3
        %v10273 = vsel %vm1095, %v10271, %v10272
        %v10274 = vrot.slane %v10120, 3
        %v10275 = vrot.slane %v10124, 3
        %v10276 = vsel %vm1095, %v10274, %v10275
        %v10277 = vrot.slane %v10121, 3
        %v10278 = vrot.slane %v10125, 3
        %v10279 = vsel %vm1095, %v10277, %v10278
        %v10280 = vrot.slane %v10122, 3
        %v10281 = vrot.slane %v10126, 3
        %v10282 = vsel %vm1095, %v10280, %v10281
        %v10283 = vrot.slane %v10127, 3
        %v10284 = vrot.slane %v10131, 3
        %v10285 = vsel %vm1095, %v10283, %v10284
        %v10286 = vrot.slane %v10128, 3
        %v10287 = vrot.slane %v10132, 3
        %v10288 = vsel %vm1095, %v10286, %v10287
        %v10289 = vrot.slane %v10129, 3
        %v10290 = vrot.slane %v10133, 3
        %v10291 = vsel %vm1095, %v10289, %v10290
        %v10292 = vrot.slane %v10130, 3
        %v10293 = vrot.slane %v10134, 3
        %v10294 = vsel %vm1095, %v10292, %v10293
        %v10327 = vadd.f32 %v10035, %v10201
        %v10328 = vadd.f32 %v10036, %v10204
        %v10329 = vadd.f32 %v10037, %v10207
        %v10330 = vadd.f32 %v10038, %v10210
        %v10331 = vadd.f32 %v10039, %v10213
        %v10332 = vadd.f32 %v10040, %v10216
        %v10333 = vadd.f32 %v10041, %v10219
        %v10334 = vadd.f32 %v10042, %v10222
        %v10335 = vadd.f32 %v10043, %v10225
        %v10336 = vadd.f32 %v10044, %v10228
        %v10337 = vadd.f32 %v10045, %v10231
        %v10338 = vadd.f32 %v10046, %v10234
        %v10339 = vadd.f32 %v10047, %v10237
        %v10340 = vadd.f32 %v10048, %v10240
        %v10341 = vadd.f32 %v10049, %v10243
        %v10342 = vadd.f32 %v10050, %v10246
        %v10343 = vadd.f32 %v10051, %v10249
        %v10344 = vadd.f32 %v10052, %v10252
        %v10345 = vadd.f32 %v10053, %v10255
        %v10346 = vadd.f32 %v10054, %v10258
        %v10347 = vadd.f32 %v10055, %v10261
        %v10348 = vadd.f32 %v10056, %v10264
        %v10349 = vadd.f32 %v10057, %v10267
        %v10350 = vadd.f32 %v10058, %v10270
        %v10351 = vadd.f32 %v10059, %v10273
        %v10352 = vadd.f32 %v10060, %v10276
        %v10353 = vadd.f32 %v10061, %v10279
        %v10354 = vadd.f32 %v10062, %v10282
        %v10355 = vadd.f32 %v10063, %v10285
        %v10356 = vadd.f32 %v10064, %v10288
        %v10357 = vadd.f32 %v10065, %v10291
        %v10358 = vadd.f32 %v10066, %v10294
        %v10359 = vperm.slane %v301, 4
        %v10360 = vperm.slane %v302, 4
        %v10361 = vperm.slane %v303, 4
        %v10362 = vperm.slane %v304, 4
        %v10363 = vmul.f32 %v209, %v10359
        %v10364 = vmul.f32 %v210, %v10360
        %v10365 = vmul.f32 %v211, %v10361
        %v10366 = vmul.f32 %v212, %v10362
        %v10367 = vmul.f32 %v213, %v10359
        %v10368 = vmul.f32 %v214, %v10360
        %v10369 = vmul.f32 %v215, %v10361
        %v10370 = vmul.f32 %v216, %v10362
        %v10371 = vmul.f32 %v217, %v10359
        %v10372 = vmul.f32 %v218, %v10360
        %v10373 = vmul.f32 %v219, %v10361
        %v10374 = vmul.f32 %v220, %v10362
        %v10375 = vmul.f32 %v221, %v10359
        %v10376 = vmul.f32 %v222, %v10360
        %v10377 = vmul.f32 %v223, %v10361
        %v10378 = vmul.f32 %v224, %v10362
        %v10379 = vmul.f32 %v225, %v10359
        %v10380 = vmul.f32 %v226, %v10360
        %v10381 = vmul.f32 %v227, %v10361
        %v10382 = vmul.f32 %v228, %v10362
        %v10383 = vmul.f32 %v229, %v10359
        %v10384 = vmul.f32 %v230, %v10360
        %v10385 = vmul.f32 %v231, %v10361
        %v10386 = vmul.f32 %v232, %v10362
        %v10387 = vmul.f32 %v233, %v10359
        %v10388 = vmul.f32 %v234, %v10360
        %v10389 = vmul.f32 %v235, %v10361
        %v10390 = vmul.f32 %v236, %v10362
        %v10391 = vmul.f32 %v237, %v10359
        %v10392 = vmul.f32 %v238, %v10360
        %v10393 = vmul.f32 %v239, %v10361
        %v10394 = vmul.f32 %v240, %v10362
        %v10395 = vmul.f32 %v241, %v10359
        %v10396 = vmul.f32 %v242, %v10360
        %v10397 = vmul.f32 %v243, %v10361
        %v10398 = vmul.f32 %v244, %v10362
        %v10399 = vmul.f32 %v245, %v10359
        %v10400 = vmul.f32 %v246, %v10360
        %v10401 = vmul.f32 %v247, %v10361
        %v10402 = vmul.f32 %v248, %v10362
        %v10403 = vmul.f32 %v249, %v10359
        %v10404 = vmul.f32 %v250, %v10360
        %v10405 = vmul.f32 %v251, %v10361
        %v10406 = vmul.f32 %v252, %v10362
        %v10407 = vmul.f32 %v253, %v10359
        %v10408 = vmul.f32 %v254, %v10360
        %v10409 = vmul.f32 %v255, %v10361
        %v10410 = vmul.f32 %v256, %v10362
        %v10411 = vmul.f32 %v257, %v10359
        %v10412 = vmul.f32 %v258, %v10360
        %v10413 = vmul.f32 %v259, %v10361
        %v10414 = vmul.f32 %v260, %v10362
        %v10415 = vmul.f32 %v261, %v10359
        %v10416 = vmul.f32 %v262, %v10360
        %v10417 = vmul.f32 %v263, %v10361
        %v10418 = vmul.f32 %v264, %v10362
        %v10419 = vmul.f32 %v265, %v10359
        %v10420 = vmul.f32 %v266, %v10360
        %v10421 = vmul.f32 %v267, %v10361
        %v10422 = vmul.f32 %v268, %v10362
        %v10423 = vmul.f32 %v269, %v10359
        %v10424 = vmul.f32 %v270, %v10360
        %v10425 = vmul.f32 %v271, %v10361
        %v10426 = vmul.f32 %v272, %v10362
        %v10491 = vrot.slane %v10363, 4
        %v10492 = vrot.slane %v10367, 4
        %v10493 = vsel %vm1388, %v10491, %v10492
        %v10494 = vrot.slane %v10364, 4
        %v10495 = vrot.slane %v10368, 4
        %v10496 = vsel %vm1388, %v10494, %v10495
        %v10497 = vrot.slane %v10365, 4
        %v10498 = vrot.slane %v10369, 4
        %v10499 = vsel %vm1388, %v10497, %v10498
        %v10500 = vrot.slane %v10366, 4
        %v10501 = vrot.slane %v10370, 4
        %v10502 = vsel %vm1388, %v10500, %v10501
        %v10503 = vrot.slane %v10371, 4
        %v10504 = vrot.slane %v10375, 4
        %v10505 = vsel %vm1388, %v10503, %v10504
        %v10506 = vrot.slane %v10372, 4
        %v10507 = vrot.slane %v10376, 4
        %v10508 = vsel %vm1388, %v10506, %v10507
        %v10509 = vrot.slane %v10373, 4
        %v10510 = vrot.slane %v10377, 4
        %v10511 = vsel %vm1388, %v10509, %v10510
        %v10512 = vrot.slane %v10374, 4
        %v10513 = vrot.slane %v10378, 4
        %v10514 = vsel %vm1388, %v10512, %v10513
        %v10515 = vrot.slane %v10379, 4
        %v10516 = vrot.slane %v10383, 4
        %v10517 = vsel %vm1388, %v10515, %v10516
        %v10518 = vrot.slane %v10380, 4
        %v10519 = vrot.slane %v10384, 4
        %v10520 = vsel %vm1388, %v10518, %v10519
        %v10521 = vrot.slane %v10381, 4
        %v10522 = vrot.slane %v10385, 4
        %v10523 = vsel %vm1388, %v10521, %v10522
        %v10524 = vrot.slane %v10382, 4
        %v10525 = vrot.slane %v10386, 4
        %v10526 = vsel %vm1388, %v10524, %v10525
        %v10527 = vrot.slane %v10387, 4
        %v10528 = vrot.slane %v10391, 4
        %v10529 = vsel %vm1388, %v10527, %v10528
        %v10530 = vrot.slane %v10388, 4
        %v10531 = vrot.slane %v10392, 4
        %v10532 = vsel %vm1388, %v10530, %v10531
        %v10533 = vrot.slane %v10389, 4
        %v10534 = vrot.slane %v10393, 4
        %v10535 = vsel %vm1388, %v10533, %v10534
        %v10536 = vrot.slane %v10390, 4
        %v10537 = vrot.slane %v10394, 4
        %v10538 = vsel %vm1388, %v10536, %v10537
        %v10539 = vrot.slane %v10395, 4
        %v10540 = vrot.slane %v10399, 4
        %v10541 = vsel %vm1388, %v10539, %v10540
        %v10542 = vrot.slane %v10396, 4
        %v10543 = vrot.slane %v10400, 4
        %v10544 = vsel %vm1388, %v10542, %v10543
        %v10545 = vrot.slane %v10397, 4
        %v10546 = vrot.slane %v10401, 4
        %v10547 = vsel %vm1388, %v10545, %v10546
        %v10548 = vrot.slane %v10398, 4
        %v10549 = vrot.slane %v10402, 4
        %v10550 = vsel %vm1388, %v10548, %v10549
        %v10551 = vrot.slane %v10403, 4
        %v10552 = vrot.slane %v10407, 4
        %v10553 = vsel %vm1388, %v10551, %v10552
        %v10554 = vrot.slane %v10404, 4
        %v10555 = vrot.slane %v10408, 4
        %v10556 = vsel %vm1388, %v10554, %v10555
        %v10557 = vrot.slane %v10405, 4
        %v10558 = vrot.slane %v10409, 4
        %v10559 = vsel %vm1388, %v10557, %v10558
        %v10560 = vrot.slane %v10406, 4
        %v10561 = vrot.slane %v10410, 4
        %v10562 = vsel %vm1388, %v10560, %v10561
        %v10563 = vrot.slane %v10411, 4
        %v10564 = vrot.slane %v10415, 4
        %v10565 = vsel %vm1388, %v10563, %v10564
        %v10566 = vrot.slane %v10412, 4
        %v10567 = vrot.slane %v10416, 4
        %v10568 = vsel %vm1388, %v10566, %v10567
        %v10569 = vrot.slane %v10413, 4
        %v10570 = vrot.slane %v10417, 4
        %v10571 = vsel %vm1388, %v10569, %v10570
        %v10572 = vrot.slane %v10414, 4
        %v10573 = vrot.slane %v10418, 4
        %v10574 = vsel %vm1388, %v10572, %v10573
        %v10575 = vrot.slane %v10419, 4
        %v10576 = vrot.slane %v10423, 4
        %v10577 = vsel %vm1388, %v10575, %v10576
        %v10578 = vrot.slane %v10420, 4
        %v10579 = vrot.slane %v10424, 4
        %v10580 = vsel %vm1388, %v10578, %v10579
        %v10581 = vrot.slane %v10421, 4
        %v10582 = vrot.slane %v10425, 4
        %v10583 = vsel %vm1388, %v10581, %v10582
        %v10584 = vrot.slane %v10422, 4
        %v10585 = vrot.slane %v10426, 4
        %v10586 = vsel %vm1388, %v10584, %v10585
        %v10619 = vadd.f32 %v10327, %v10493
        %v10620 = vadd.f32 %v10328, %v10496
        %v10621 = vadd.f32 %v10329, %v10499
        %v10622 = vadd.f32 %v10330, %v10502
        %v10623 = vadd.f32 %v10331, %v10505
        %v10624 = vadd.f32 %v10332, %v10508
        %v10625 = vadd.f32 %v10333, %v10511
        %v10626 = vadd.f32 %v10334, %v10514
        %v10627 = vadd.f32 %v10335, %v10517
        %v10628 = vadd.f32 %v10336, %v10520
        %v10629 = vadd.f32 %v10337, %v10523
        %v10630 = vadd.f32 %v10338, %v10526
        %v10631 = vadd.f32 %v10339, %v10529
        %v10632 = vadd.f32 %v10340, %v10532
        %v10633 = vadd.f32 %v10341, %v10535
        %v10634 = vadd.f32 %v10342, %v10538
        %v10635 = vadd.f32 %v10343, %v10541
        %v10636 = vadd.f32 %v10344, %v10544
        %v10637 = vadd.f32 %v10345, %v10547
        %v10638 = vadd.f32 %v10346, %v10550
        %v10639 = vadd.f32 %v10347, %v10553
        %v10640 = vadd.f32 %v10348, %v10556
        %v10641 = vadd.f32 %v10349, %v10559
        %v10642 = vadd.f32 %v10350, %v10562
        %v10643 = vadd.f32 %v10351, %v10565
        %v10644 = vadd.f32 %v10352, %v10568
        %v10645 = vadd.f32 %v10353, %v10571
        %v10646 = vadd.f32 %v10354, %v10574
        %v10647 = vadd.f32 %v10355, %v10577
        %v10648 = vadd.f32 %v10356, %v10580
        %v10649 = vadd.f32 %v10357, %v10583
        %v10650 = vadd.f32 %v10358, %v10586
        %v10651 = vperm.slane %v301, 5
        %v10652 = vperm.slane %v302, 5
        %v10653 = vperm.slane %v303, 5
        %v10654 = vperm.slane %v304, 5
        %v10655 = vmul.f32 %v209, %v10651
        %v10656 = vmul.f32 %v210, %v10652
        %v10657 = vmul.f32 %v211, %v10653
        %v10658 = vmul.f32 %v212, %v10654
        %v10659 = vmul.f32 %v213, %v10651
        %v10660 = vmul.f32 %v214, %v10652
        %v10661 = vmul.f32 %v215, %v10653
        %v10662 = vmul.f32 %v216, %v10654
        %v10663 = vmul.f32 %v217, %v10651
        %v10664 = vmul.f32 %v218, %v10652
        %v10665 = vmul.f32 %v219, %v10653
        %v10666 = vmul.f32 %v220, %v10654
        %v10667 = vmul.f32 %v221, %v10651
        %v10668 = vmul.f32 %v222, %v10652
        %v10669 = vmul.f32 %v223, %v10653
        %v10670 = vmul.f32 %v224, %v10654
        %v10671 = vmul.f32 %v225, %v10651
        %v10672 = vmul.f32 %v226, %v10652
        %v10673 = vmul.f32 %v227, %v10653
        %v10674 = vmul.f32 %v228, %v10654
        %v10675 = vmul.f32 %v229, %v10651
        %v10676 = vmul.f32 %v230, %v10652
        %v10677 = vmul.f32 %v231, %v10653
        %v10678 = vmul.f32 %v232, %v10654
        %v10679 = vmul.f32 %v233, %v10651
        %v10680 = vmul.f32 %v234, %v10652
        %v10681 = vmul.f32 %v235, %v10653
        %v10682 = vmul.f32 %v236, %v10654
        %v10683 = vmul.f32 %v237, %v10651
        %v10684 = vmul.f32 %v238, %v10652
        %v10685 = vmul.f32 %v239, %v10653
        %v10686 = vmul.f32 %v240, %v10654
        %v10687 = vmul.f32 %v241, %v10651
        %v10688 = vmul.f32 %v242, %v10652
        %v10689 = vmul.f32 %v243, %v10653
        %v10690 = vmul.f32 %v244, %v10654
        %v10691 = vmul.f32 %v245, %v10651
        %v10692 = vmul.f32 %v246, %v10652
        %v10693 = vmul.f32 %v247, %v10653
        %v10694 = vmul.f32 %v248, %v10654
        %v10695 = vmul.f32 %v249, %v10651
        %v10696 = vmul.f32 %v250, %v10652
        %v10697 = vmul.f32 %v251, %v10653
        %v10698 = vmul.f32 %v252, %v10654
        %v10699 = vmul.f32 %v253, %v10651
        %v10700 = vmul.f32 %v254, %v10652
        %v10701 = vmul.f32 %v255, %v10653
        %v10702 = vmul.f32 %v256, %v10654
        %v10703 = vmul.f32 %v257, %v10651
        %v10704 = vmul.f32 %v258, %v10652
        %v10705 = vmul.f32 %v259, %v10653
        %v10706 = vmul.f32 %v260, %v10654
        %v10707 = vmul.f32 %v261, %v10651
        %v10708 = vmul.f32 %v262, %v10652
        %v10709 = vmul.f32 %v263, %v10653
        %v10710 = vmul.f32 %v264, %v10654
        %v10711 = vmul.f32 %v265, %v10651
        %v10712 = vmul.f32 %v266, %v10652
        %v10713 = vmul.f32 %v267, %v10653
        %v10714 = vmul.f32 %v268, %v10654
        %v10715 = vmul.f32 %v269, %v10651
        %v10716 = vmul.f32 %v270, %v10652
        %v10717 = vmul.f32 %v271, %v10653
        %v10718 = vmul.f32 %v272, %v10654
        %v10783 = vrot.slane %v10655, 5
        %v10784 = vrot.slane %v10659, 5
        %v10785 = vsel %vm1681, %v10783, %v10784
        %v10786 = vrot.slane %v10656, 5
        %v10787 = vrot.slane %v10660, 5
        %v10788 = vsel %vm1681, %v10786, %v10787
        %v10789 = vrot.slane %v10657, 5
        %v10790 = vrot.slane %v10661, 5
        %v10791 = vsel %vm1681, %v10789, %v10790
        %v10792 = vrot.slane %v10658, 5
        %v10793 = vrot.slane %v10662, 5
        %v10794 = vsel %vm1681, %v10792, %v10793
        %v10795 = vrot.slane %v10663, 5
        %v10796 = vrot.slane %v10667, 5
        %v10797 = vsel %vm1681, %v10795, %v10796
        %v10798 = vrot.slane %v10664, 5
        %v10799 = vrot.slane %v10668, 5
        %v10800 = vsel %vm1681, %v10798, %v10799
        %v10801 = vrot.slane %v10665, 5
        %v10802 = vrot.slane %v10669, 5
        %v10803 = vsel %vm1681, %v10801, %v10802
        %v10804 = vrot.slane %v10666, 5
        %v10805 = vrot.slane %v10670, 5
        %v10806 = vsel %vm1681, %v10804, %v10805
        %v10807 = vrot.slane %v10671, 5
        %v10808 = vrot.slane %v10675, 5
        %v10809 = vsel %vm1681, %v10807, %v10808
        %v10810 = vrot.slane %v10672, 5
        %v10811 = vrot.slane %v10676, 5
        %v10812 = vsel %vm1681, %v10810, %v10811
        %v10813 = vrot.slane %v10673, 5
        %v10814 = vrot.slane %v10677, 5
        %v10815 = vsel %vm1681, %v10813, %v10814
        %v10816 = vrot.slane %v10674, 5
        %v10817 = vrot.slane %v10678, 5
        %v10818 = vsel %vm1681, %v10816, %v10817
        %v10819 = vrot.slane %v10679, 5
        %v10820 = vrot.slane %v10683, 5
        %v10821 = vsel %vm1681, %v10819, %v10820
        %v10822 = vrot.slane %v10680, 5
        %v10823 = vrot.slane %v10684, 5
        %v10824 = vsel %vm1681, %v10822, %v10823
        %v10825 = vrot.slane %v10681, 5
        %v10826 = vrot.slane %v10685, 5
        %v10827 = vsel %vm1681, %v10825, %v10826
        %v10828 = vrot.slane %v10682, 5
        %v10829 = vrot.slane %v10686, 5
        %v10830 = vsel %vm1681, %v10828, %v10829
        %v10831 = vrot.slane %v10687, 5
        %v10832 = vrot.slane %v10691, 5
        %v10833 = vsel %vm1681, %v10831, %v10832
        %v10834 = vrot.slane %v10688, 5
        %v10835 = vrot.slane %v10692, 5
        %v10836 = vsel %vm1681, %v10834, %v10835
        %v10837 = vrot.slane %v10689, 5
        %v10838 = vrot.slane %v10693, 5
        %v10839 = vsel %vm1681, %v10837, %v10838
        %v10840 = vrot.slane %v10690, 5
        %v10841 = vrot.slane %v10694, 5
        %v10842 = vsel %vm1681, %v10840, %v10841
        %v10843 = vrot.slane %v10695, 5
        %v10844 = vrot.slane %v10699, 5
        %v10845 = vsel %vm1681, %v10843, %v10844
        %v10846 = vrot.slane %v10696, 5
        %v10847 = vrot.slane %v10700, 5
        %v10848 = vsel %vm1681, %v10846, %v10847
        %v10849 = vrot.slane %v10697, 5
        %v10850 = vrot.slane %v10701, 5
        %v10851 = vsel %vm1681, %v10849, %v10850
        %v10852 = vrot.slane %v10698, 5
        %v10853 = vrot.slane %v10702, 5
        %v10854 = vsel %vm1681, %v10852, %v10853
        %v10855 = vrot.slane %v10703, 5
        %v10856 = vrot.slane %v10707, 5
        %v10857 = vsel %vm1681, %v10855, %v10856
        %v10858 = vrot.slane %v10704, 5
        %v10859 = vrot.slane %v10708, 5
        %v10860 = vsel %vm1681, %v10858, %v10859
        %v10861 = vrot.slane %v10705, 5
        %v10862 = vrot.slane %v10709, 5
        %v10863 = vsel %vm1681, %v10861, %v10862
        %v10864 = vrot.slane %v10706, 5
        %v10865 = vrot.slane %v10710, 5
        %v10866 = vsel %vm1681, %v10864, %v10865
        %v10867 = vrot.slane %v10711, 5
        %v10868 = vrot.slane %v10715, 5
        %v10869 = vsel %vm1681, %v10867, %v10868
        %v10870 = vrot.slane %v10712, 5
        %v10871 = vrot.slane %v10716, 5
        %v10872 = vsel %vm1681, %v10870, %v10871
        %v10873 = vrot.slane %v10713, 5
        %v10874 = vrot.slane %v10717, 5
        %v10875 = vsel %vm1681, %v10873, %v10874
        %v10876 = vrot.slane %v10714, 5
        %v10877 = vrot.slane %v10718, 5
        %v10878 = vsel %vm1681, %v10876, %v10877
        %v10911 = vadd.f32 %v10619, %v10785
        %v10912 = vadd.f32 %v10620, %v10788
        %v10913 = vadd.f32 %v10621, %v10791
        %v10914 = vadd.f32 %v10622, %v10794
        %v10915 = vadd.f32 %v10623, %v10797
        %v10916 = vadd.f32 %v10624, %v10800
        %v10917 = vadd.f32 %v10625, %v10803
        %v10918 = vadd.f32 %v10626, %v10806
        %v10919 = vadd.f32 %v10627, %v10809
        %v10920 = vadd.f32 %v10628, %v10812
        %v10921 = vadd.f32 %v10629, %v10815
        %v10922 = vadd.f32 %v10630, %v10818
        %v10923 = vadd.f32 %v10631, %v10821
        %v10924 = vadd.f32 %v10632, %v10824
        %v10925 = vadd.f32 %v10633, %v10827
        %v10926 = vadd.f32 %v10634, %v10830
        %v10927 = vadd.f32 %v10635, %v10833
        %v10928 = vadd.f32 %v10636, %v10836
        %v10929 = vadd.f32 %v10637, %v10839
        %v10930 = vadd.f32 %v10638, %v10842
        %v10931 = vadd.f32 %v10639, %v10845
        %v10932 = vadd.f32 %v10640, %v10848
        %v10933 = vadd.f32 %v10641, %v10851
        %v10934 = vadd.f32 %v10642, %v10854
        %v10935 = vadd.f32 %v10643, %v10857
        %v10936 = vadd.f32 %v10644, %v10860
        %v10937 = vadd.f32 %v10645, %v10863
        %v10938 = vadd.f32 %v10646, %v10866
        %v10939 = vadd.f32 %v10647, %v10869
        %v10940 = vadd.f32 %v10648, %v10872
        %v10941 = vadd.f32 %v10649, %v10875
        %v10942 = vadd.f32 %v10650, %v10878
        %v10943 = vperm.slane %v301, 6
        %v10944 = vperm.slane %v302, 6
        %v10945 = vperm.slane %v303, 6
        %v10946 = vperm.slane %v304, 6
        %v10947 = vmul.f32 %v209, %v10943
        %v10948 = vmul.f32 %v210, %v10944
        %v10949 = vmul.f32 %v211, %v10945
        %v10950 = vmul.f32 %v212, %v10946
        %v10951 = vmul.f32 %v213, %v10943
        %v10952 = vmul.f32 %v214, %v10944
        %v10953 = vmul.f32 %v215, %v10945
        %v10954 = vmul.f32 %v216, %v10946
        %v10955 = vmul.f32 %v217, %v10943
        %v10956 = vmul.f32 %v218, %v10944
        %v10957 = vmul.f32 %v219, %v10945
        %v10958 = vmul.f32 %v220, %v10946
        %v10959 = vmul.f32 %v221, %v10943
        %v10960 = vmul.f32 %v222, %v10944
        %v10961 = vmul.f32 %v223, %v10945
        %v10962 = vmul.f32 %v224, %v10946
        %v10963 = vmul.f32 %v225, %v10943
        %v10964 = vmul.f32 %v226, %v10944
        %v10965 = vmul.f32 %v227, %v10945
        %v10966 = vmul.f32 %v228, %v10946
        %v10967 = vmul.f32 %v229, %v10943
        %v10968 = vmul.f32 %v230, %v10944
        %v10969 = vmul.f32 %v231, %v10945
        %v10970 = vmul.f32 %v232, %v10946
        %v10971 = vmul.f32 %v233, %v10943
        %v10972 = vmul.f32 %v234, %v10944
        %v10973 = vmul.f32 %v235, %v10945
        %v10974 = vmul.f32 %v236, %v10946
        %v10975 = vmul.f32 %v237, %v10943
        %v10976 = vmul.f32 %v238, %v10944
        %v10977 = vmul.f32 %v239, %v10945
        %v10978 = vmul.f32 %v240, %v10946
        %v10979 = vmul.f32 %v241, %v10943
        %v10980 = vmul.f32 %v242, %v10944
        %v10981 = vmul.f32 %v243, %v10945
        %v10982 = vmul.f32 %v244, %v10946
        %v10983 = vmul.f32 %v245, %v10943
        %v10984 = vmul.f32 %v246, %v10944
        %v10985 = vmul.f32 %v247, %v10945
        %v10986 = vmul.f32 %v248, %v10946
        %v10987 = vmul.f32 %v249, %v10943
        %v10988 = vmul.f32 %v250, %v10944
        %v10989 = vmul.f32 %v251, %v10945
        %v10990 = vmul.f32 %v252, %v10946
        %v10991 = vmul.f32 %v253, %v10943
        %v10992 = vmul.f32 %v254, %v10944
        %v10993 = vmul.f32 %v255, %v10945
        %v10994 = vmul.f32 %v256, %v10946
        %v10995 = vmul.f32 %v257, %v10943
        %v10996 = vmul.f32 %v258, %v10944
        %v10997 = vmul.f32 %v259, %v10945
        %v10998 = vmul.f32 %v260, %v10946
        %v10999 = vmul.f32 %v261, %v10943
        %v11000 = vmul.f32 %v262, %v10944
        %v11001 = vmul.f32 %v263, %v10945
        %v11002 = vmul.f32 %v264, %v10946
        %v11003 = vmul.f32 %v265, %v10943
        %v11004 = vmul.f32 %v266, %v10944
        %v11005 = vmul.f32 %v267, %v10945
        %v11006 = vmul.f32 %v268, %v10946
        %v11007 = vmul.f32 %v269, %v10943
        %v11008 = vmul.f32 %v270, %v10944
        %v11009 = vmul.f32 %v271, %v10945
        %v11010 = vmul.f32 %v272, %v10946
        %v11075 = vrot.slane %v10947, 6
        %v11076 = vrot.slane %v10951, 6
        %v11077 = vsel %vm1974, %v11075, %v11076
        %v11078 = vrot.slane %v10948, 6
        %v11079 = vrot.slane %v10952, 6
        %v11080 = vsel %vm1974, %v11078, %v11079
        %v11081 = vrot.slane %v10949, 6
        %v11082 = vrot.slane %v10953, 6
        %v11083 = vsel %vm1974, %v11081, %v11082
        %v11084 = vrot.slane %v10950, 6
        %v11085 = vrot.slane %v10954, 6
        %v11086 = vsel %vm1974, %v11084, %v11085
        %v11087 = vrot.slane %v10955, 6
        %v11088 = vrot.slane %v10959, 6
        %v11089 = vsel %vm1974, %v11087, %v11088
        %v11090 = vrot.slane %v10956, 6
        %v11091 = vrot.slane %v10960, 6
        %v11092 = vsel %vm1974, %v11090, %v11091
        %v11093 = vrot.slane %v10957, 6
        %v11094 = vrot.slane %v10961, 6
        %v11095 = vsel %vm1974, %v11093, %v11094
        %v11096 = vrot.slane %v10958, 6
        %v11097 = vrot.slane %v10962, 6
        %v11098 = vsel %vm1974, %v11096, %v11097
        %v11099 = vrot.slane %v10963, 6
        %v11100 = vrot.slane %v10967, 6
        %v11101 = vsel %vm1974, %v11099, %v11100
        %v11102 = vrot.slane %v10964, 6
        %v11103 = vrot.slane %v10968, 6
        %v11104 = vsel %vm1974, %v11102, %v11103
        %v11105 = vrot.slane %v10965, 6
        %v11106 = vrot.slane %v10969, 6
        %v11107 = vsel %vm1974, %v11105, %v11106
        %v11108 = vrot.slane %v10966, 6
        %v11109 = vrot.slane %v10970, 6
        %v11110 = vsel %vm1974, %v11108, %v11109
        %v11111 = vrot.slane %v10971, 6
        %v11112 = vrot.slane %v10975, 6
        %v11113 = vsel %vm1974, %v11111, %v11112
        %v11114 = vrot.slane %v10972, 6
        %v11115 = vrot.slane %v10976, 6
        %v11116 = vsel %vm1974, %v11114, %v11115
        %v11117 = vrot.slane %v10973, 6
        %v11118 = vrot.slane %v10977, 6
        %v11119 = vsel %vm1974, %v11117, %v11118
        %v11120 = vrot.slane %v10974, 6
        %v11121 = vrot.slane %v10978, 6
        %v11122 = vsel %vm1974, %v11120, %v11121
        %v11123 = vrot.slane %v10979, 6
        %v11124 = vrot.slane %v10983, 6
        %v11125 = vsel %vm1974, %v11123, %v11124
        %v11126 = vrot.slane %v10980, 6
        %v11127 = vrot.slane %v10984, 6
        %v11128 = vsel %vm1974, %v11126, %v11127
        %v11129 = vrot.slane %v10981, 6
        %v11130 = vrot.slane %v10985, 6
        %v11131 = vsel %vm1974, %v11129, %v11130
        %v11132 = vrot.slane %v10982, 6
        %v11133 = vrot.slane %v10986, 6
        %v11134 = vsel %vm1974, %v11132, %v11133
        %v11135 = vrot.slane %v10987, 6
        %v11136 = vrot.slane %v10991, 6
        %v11137 = vsel %vm1974, %v11135, %v11136
        %v11138 = vrot.slane %v10988, 6
        %v11139 = vrot.slane %v10992, 6
        %v11140 = vsel %vm1974, %v11138, %v11139
        %v11141 = vrot.slane %v10989, 6
        %v11142 = vrot.slane %v10993, 6
        %v11143 = vsel %vm1974, %v11141, %v11142
        %v11144 = vrot.slane %v10990, 6
        %v11145 = vrot.slane %v10994, 6
        %v11146 = vsel %vm1974, %v11144, %v11145
        %v11147 = vrot.slane %v10995, 6
        %v11148 = vrot.slane %v10999, 6
        %v11149 = vsel %vm1974, %v11147, %v11148
        %v11150 = vrot.slane %v10996, 6
        %v11151 = vrot.slane %v11000, 6
        %v11152 = vsel %vm1974, %v11150, %v11151
        %v11153 = vrot.slane %v10997, 6
        %v11154 = vrot.slane %v11001, 6
        %v11155 = vsel %vm1974, %v11153, %v11154
        %v11156 = vrot.slane %v10998, 6
        %v11157 = vrot.slane %v11002, 6
        %v11158 = vsel %vm1974, %v11156, %v11157
        %v11159 = vrot.slane %v11003, 6
        %v11160 = vrot.slane %v11007, 6
        %v11161 = vsel %vm1974, %v11159, %v11160
        %v11162 = vrot.slane %v11004, 6
        %v11163 = vrot.slane %v11008, 6
        %v11164 = vsel %vm1974, %v11162, %v11163
        %v11165 = vrot.slane %v11005, 6
        %v11166 = vrot.slane %v11009, 6
        %v11167 = vsel %vm1974, %v11165, %v11166
        %v11168 = vrot.slane %v11006, 6
        %v11169 = vrot.slane %v11010, 6
        %v11170 = vsel %vm1974, %v11168, %v11169
        %v11203 = vadd.f32 %v10911, %v11077
        %v11204 = vadd.f32 %v10912, %v11080
        %v11205 = vadd.f32 %v10913, %v11083
        %v11206 = vadd.f32 %v10914, %v11086
        %v11207 = vadd.f32 %v10915, %v11089
        %v11208 = vadd.f32 %v10916, %v11092
        %v11209 = vadd.f32 %v10917, %v11095
        %v11210 = vadd.f32 %v10918, %v11098
        %v11211 = vadd.f32 %v10919, %v11101
        %v11212 = vadd.f32 %v10920, %v11104
        %v11213 = vadd.f32 %v10921, %v11107
        %v11214 = vadd.f32 %v10922, %v11110
        %v11215 = vadd.f32 %v10923, %v11113
        %v11216 = vadd.f32 %v10924, %v11116
        %v11217 = vadd.f32 %v10925, %v11119
        %v11218 = vadd.f32 %v10926, %v11122
        %v11219 = vadd.f32 %v10927, %v11125
        %v11220 = vadd.f32 %v10928, %v11128
        %v11221 = vadd.f32 %v10929, %v11131
        %v11222 = vadd.f32 %v10930, %v11134
        %v11223 = vadd.f32 %v10931, %v11137
        %v11224 = vadd.f32 %v10932, %v11140
        %v11225 = vadd.f32 %v10933, %v11143
        %v11226 = vadd.f32 %v10934, %v11146
        %v11227 = vadd.f32 %v10935, %v11149
        %v11228 = vadd.f32 %v10936, %v11152
        %v11229 = vadd.f32 %v10937, %v11155
        %v11230 = vadd.f32 %v10938, %v11158
        %v11231 = vadd.f32 %v10939, %v11161
        %v11232 = vadd.f32 %v10940, %v11164
        %v11233 = vadd.f32 %v10941, %v11167
        %v11234 = vadd.f32 %v10942, %v11170
        %v11235 = vperm.slane %v305, 0
        %v11236 = vperm.slane %v306, 0
        %v11237 = vperm.slane %v307, 0
        %v11238 = vperm.slane %v308, 0
        %v11239 = vmul.f32 %v217, %v11235
        %v11240 = vmul.f32 %v218, %v11236
        %v11241 = vmul.f32 %v219, %v11237
        %v11242 = vmul.f32 %v220, %v11238
        %v11243 = vmul.f32 %v225, %v11235
        %v11244 = vmul.f32 %v226, %v11236
        %v11245 = vmul.f32 %v227, %v11237
        %v11246 = vmul.f32 %v228, %v11238
        %v11247 = vmul.f32 %v233, %v11235
        %v11248 = vmul.f32 %v234, %v11236
        %v11249 = vmul.f32 %v235, %v11237
        %v11250 = vmul.f32 %v236, %v11238
        %v11251 = vmul.f32 %v241, %v11235
        %v11252 = vmul.f32 %v242, %v11236
        %v11253 = vmul.f32 %v243, %v11237
        %v11254 = vmul.f32 %v244, %v11238
        %v11255 = vmul.f32 %v249, %v11235
        %v11256 = vmul.f32 %v250, %v11236
        %v11257 = vmul.f32 %v251, %v11237
        %v11258 = vmul.f32 %v252, %v11238
        %v11259 = vmul.f32 %v257, %v11235
        %v11260 = vmul.f32 %v258, %v11236
        %v11261 = vmul.f32 %v259, %v11237
        %v11262 = vmul.f32 %v260, %v11238
        %v11263 = vmul.f32 %v265, %v11235
        %v11264 = vmul.f32 %v266, %v11236
        %v11265 = vmul.f32 %v267, %v11237
        %v11266 = vmul.f32 %v268, %v11238
        %v11267 = vmul.f32 %v273, %v11235
        %v11268 = vmul.f32 %v274, %v11236
        %v11269 = vmul.f32 %v275, %v11237
        %v11270 = vmul.f32 %v276, %v11238
        %v11271 = vadd.f32 %v11203, %v11239
        %v11272 = vadd.f32 %v11204, %v11240
        %v11273 = vadd.f32 %v11205, %v11241
        %v11274 = vadd.f32 %v11206, %v11242
        %v11275 = vadd.f32 %v11207, %v11243
        %v11276 = vadd.f32 %v11208, %v11244
        %v11277 = vadd.f32 %v11209, %v11245
        %v11278 = vadd.f32 %v11210, %v11246
        %v11279 = vadd.f32 %v11211, %v11247
        %v11280 = vadd.f32 %v11212, %v11248
        %v11281 = vadd.f32 %v11213, %v11249
        %v11282 = vadd.f32 %v11214, %v11250
        %v11283 = vadd.f32 %v11215, %v11251
        %v11284 = vadd.f32 %v11216, %v11252
        %v11285 = vadd.f32 %v11217, %v11253
        %v11286 = vadd.f32 %v11218, %v11254
        %v11287 = vadd.f32 %v11219, %v11255
        %v11288 = vadd.f32 %v11220, %v11256
        %v11289 = vadd.f32 %v11221, %v11257
        %v11290 = vadd.f32 %v11222, %v11258
        %v11291 = vadd.f32 %v11223, %v11259
        %v11292 = vadd.f32 %v11224, %v11260
        %v11293 = vadd.f32 %v11225, %v11261
        %v11294 = vadd.f32 %v11226, %v11262
        %v11295 = vadd.f32 %v11227, %v11263
        %v11296 = vadd.f32 %v11228, %v11264
        %v11297 = vadd.f32 %v11229, %v11265
        %v11298 = vadd.f32 %v11230, %v11266
        %v11299 = vadd.f32 %v11231, %v11267
        %v11300 = vadd.f32 %v11232, %v11268
        %v11301 = vadd.f32 %v11233, %v11269
        %v11302 = vadd.f32 %v11234, %v11270
        %v11303 = vperm.slane %v305, 1
        %v11304 = vperm.slane %v306, 1
        %v11305 = vperm.slane %v307, 1
        %v11306 = vperm.slane %v308, 1
        %v11307 = vmul.f32 %v217, %v11303
        %v11308 = vmul.f32 %v218, %v11304
        %v11309 = vmul.f32 %v219, %v11305
        %v11310 = vmul.f32 %v220, %v11306
        %v11311 = vmul.f32 %v221, %v11303
        %v11312 = vmul.f32 %v222, %v11304
        %v11313 = vmul.f32 %v223, %v11305
        %v11314 = vmul.f32 %v224, %v11306
        %v11315 = vmul.f32 %v225, %v11303
        %v11316 = vmul.f32 %v226, %v11304
        %v11317 = vmul.f32 %v227, %v11305
        %v11318 = vmul.f32 %v228, %v11306
        %v11319 = vmul.f32 %v229, %v11303
        %v11320 = vmul.f32 %v230, %v11304
        %v11321 = vmul.f32 %v231, %v11305
        %v11322 = vmul.f32 %v232, %v11306
        %v11323 = vmul.f32 %v233, %v11303
        %v11324 = vmul.f32 %v234, %v11304
        %v11325 = vmul.f32 %v235, %v11305
        %v11326 = vmul.f32 %v236, %v11306
        %v11327 = vmul.f32 %v237, %v11303
        %v11328 = vmul.f32 %v238, %v11304
        %v11329 = vmul.f32 %v239, %v11305
        %v11330 = vmul.f32 %v240, %v11306
        %v11331 = vmul.f32 %v241, %v11303
        %v11332 = vmul.f32 %v242, %v11304
        %v11333 = vmul.f32 %v243, %v11305
        %v11334 = vmul.f32 %v244, %v11306
        %v11335 = vmul.f32 %v245, %v11303
        %v11336 = vmul.f32 %v246, %v11304
        %v11337 = vmul.f32 %v247, %v11305
        %v11338 = vmul.f32 %v248, %v11306
        %v11339 = vmul.f32 %v249, %v11303
        %v11340 = vmul.f32 %v250, %v11304
        %v11341 = vmul.f32 %v251, %v11305
        %v11342 = vmul.f32 %v252, %v11306
        %v11343 = vmul.f32 %v253, %v11303
        %v11344 = vmul.f32 %v254, %v11304
        %v11345 = vmul.f32 %v255, %v11305
        %v11346 = vmul.f32 %v256, %v11306
        %v11347 = vmul.f32 %v257, %v11303
        %v11348 = vmul.f32 %v258, %v11304
        %v11349 = vmul.f32 %v259, %v11305
        %v11350 = vmul.f32 %v260, %v11306
        %v11351 = vmul.f32 %v261, %v11303
        %v11352 = vmul.f32 %v262, %v11304
        %v11353 = vmul.f32 %v263, %v11305
        %v11354 = vmul.f32 %v264, %v11306
        %v11355 = vmul.f32 %v265, %v11303
        %v11356 = vmul.f32 %v266, %v11304
        %v11357 = vmul.f32 %v267, %v11305
        %v11358 = vmul.f32 %v268, %v11306
        %v11359 = vmul.f32 %v269, %v11303
        %v11360 = vmul.f32 %v270, %v11304
        %v11361 = vmul.f32 %v271, %v11305
        %v11362 = vmul.f32 %v272, %v11306
        %v11363 = vmul.f32 %v273, %v11303
        %v11364 = vmul.f32 %v274, %v11304
        %v11365 = vmul.f32 %v275, %v11305
        %v11366 = vmul.f32 %v276, %v11306
        %v11367 = vmul.f32 %v277, %v11303
        %v11368 = vmul.f32 %v278, %v11304
        %v11369 = vmul.f32 %v279, %v11305
        %v11370 = vmul.f32 %v280, %v11306
        %v11435 = vrot.slane %v11307, 1
        %v11436 = vrot.slane %v11311, 1
        %v11437 = vsel %vm509, %v11435, %v11436
        %v11438 = vrot.slane %v11308, 1
        %v11439 = vrot.slane %v11312, 1
        %v11440 = vsel %vm509, %v11438, %v11439
        %v11441 = vrot.slane %v11309, 1
        %v11442 = vrot.slane %v11313, 1
        %v11443 = vsel %vm509, %v11441, %v11442
        %v11444 = vrot.slane %v11310, 1
        %v11445 = vrot.slane %v11314, 1
        %v11446 = vsel %vm509, %v11444, %v11445
        %v11447 = vrot.slane %v11315, 1
        %v11448 = vrot.slane %v11319, 1
        %v11449 = vsel %vm509, %v11447, %v11448
        %v11450 = vrot.slane %v11316, 1
        %v11451 = vrot.slane %v11320, 1
        %v11452 = vsel %vm509, %v11450, %v11451
        %v11453 = vrot.slane %v11317, 1
        %v11454 = vrot.slane %v11321, 1
        %v11455 = vsel %vm509, %v11453, %v11454
        %v11456 = vrot.slane %v11318, 1
        %v11457 = vrot.slane %v11322, 1
        %v11458 = vsel %vm509, %v11456, %v11457
        %v11459 = vrot.slane %v11323, 1
        %v11460 = vrot.slane %v11327, 1
        %v11461 = vsel %vm509, %v11459, %v11460
        %v11462 = vrot.slane %v11324, 1
        %v11463 = vrot.slane %v11328, 1
        %v11464 = vsel %vm509, %v11462, %v11463
        %v11465 = vrot.slane %v11325, 1
        %v11466 = vrot.slane %v11329, 1
        %v11467 = vsel %vm509, %v11465, %v11466
        %v11468 = vrot.slane %v11326, 1
        %v11469 = vrot.slane %v11330, 1
        %v11470 = vsel %vm509, %v11468, %v11469
        %v11471 = vrot.slane %v11331, 1
        %v11472 = vrot.slane %v11335, 1
        %v11473 = vsel %vm509, %v11471, %v11472
        %v11474 = vrot.slane %v11332, 1
        %v11475 = vrot.slane %v11336, 1
        %v11476 = vsel %vm509, %v11474, %v11475
        %v11477 = vrot.slane %v11333, 1
        %v11478 = vrot.slane %v11337, 1
        %v11479 = vsel %vm509, %v11477, %v11478
        %v11480 = vrot.slane %v11334, 1
        %v11481 = vrot.slane %v11338, 1
        %v11482 = vsel %vm509, %v11480, %v11481
        %v11483 = vrot.slane %v11339, 1
        %v11484 = vrot.slane %v11343, 1
        %v11485 = vsel %vm509, %v11483, %v11484
        %v11486 = vrot.slane %v11340, 1
        %v11487 = vrot.slane %v11344, 1
        %v11488 = vsel %vm509, %v11486, %v11487
        %v11489 = vrot.slane %v11341, 1
        %v11490 = vrot.slane %v11345, 1
        %v11491 = vsel %vm509, %v11489, %v11490
        %v11492 = vrot.slane %v11342, 1
        %v11493 = vrot.slane %v11346, 1
        %v11494 = vsel %vm509, %v11492, %v11493
        %v11495 = vrot.slane %v11347, 1
        %v11496 = vrot.slane %v11351, 1
        %v11497 = vsel %vm509, %v11495, %v11496
        %v11498 = vrot.slane %v11348, 1
        %v11499 = vrot.slane %v11352, 1
        %v11500 = vsel %vm509, %v11498, %v11499
        %v11501 = vrot.slane %v11349, 1
        %v11502 = vrot.slane %v11353, 1
        %v11503 = vsel %vm509, %v11501, %v11502
        %v11504 = vrot.slane %v11350, 1
        %v11505 = vrot.slane %v11354, 1
        %v11506 = vsel %vm509, %v11504, %v11505
        %v11507 = vrot.slane %v11355, 1
        %v11508 = vrot.slane %v11359, 1
        %v11509 = vsel %vm509, %v11507, %v11508
        %v11510 = vrot.slane %v11356, 1
        %v11511 = vrot.slane %v11360, 1
        %v11512 = vsel %vm509, %v11510, %v11511
        %v11513 = vrot.slane %v11357, 1
        %v11514 = vrot.slane %v11361, 1
        %v11515 = vsel %vm509, %v11513, %v11514
        %v11516 = vrot.slane %v11358, 1
        %v11517 = vrot.slane %v11362, 1
        %v11518 = vsel %vm509, %v11516, %v11517
        %v11519 = vrot.slane %v11363, 1
        %v11520 = vrot.slane %v11367, 1
        %v11521 = vsel %vm509, %v11519, %v11520
        %v11522 = vrot.slane %v11364, 1
        %v11523 = vrot.slane %v11368, 1
        %v11524 = vsel %vm509, %v11522, %v11523
        %v11525 = vrot.slane %v11365, 1
        %v11526 = vrot.slane %v11369, 1
        %v11527 = vsel %vm509, %v11525, %v11526
        %v11528 = vrot.slane %v11366, 1
        %v11529 = vrot.slane %v11370, 1
        %v11530 = vsel %vm509, %v11528, %v11529
        %v11563 = vadd.f32 %v11271, %v11437
        %v11564 = vadd.f32 %v11272, %v11440
        %v11565 = vadd.f32 %v11273, %v11443
        %v11566 = vadd.f32 %v11274, %v11446
        %v11567 = vadd.f32 %v11275, %v11449
        %v11568 = vadd.f32 %v11276, %v11452
        %v11569 = vadd.f32 %v11277, %v11455
        %v11570 = vadd.f32 %v11278, %v11458
        %v11571 = vadd.f32 %v11279, %v11461
        %v11572 = vadd.f32 %v11280, %v11464
        %v11573 = vadd.f32 %v11281, %v11467
        %v11574 = vadd.f32 %v11282, %v11470
        %v11575 = vadd.f32 %v11283, %v11473
        %v11576 = vadd.f32 %v11284, %v11476
        %v11577 = vadd.f32 %v11285, %v11479
        %v11578 = vadd.f32 %v11286, %v11482
        %v11579 = vadd.f32 %v11287, %v11485
        %v11580 = vadd.f32 %v11288, %v11488
        %v11581 = vadd.f32 %v11289, %v11491
        %v11582 = vadd.f32 %v11290, %v11494
        %v11583 = vadd.f32 %v11291, %v11497
        %v11584 = vadd.f32 %v11292, %v11500
        %v11585 = vadd.f32 %v11293, %v11503
        %v11586 = vadd.f32 %v11294, %v11506
        %v11587 = vadd.f32 %v11295, %v11509
        %v11588 = vadd.f32 %v11296, %v11512
        %v11589 = vadd.f32 %v11297, %v11515
        %v11590 = vadd.f32 %v11298, %v11518
        %v11591 = vadd.f32 %v11299, %v11521
        %v11592 = vadd.f32 %v11300, %v11524
        %v11593 = vadd.f32 %v11301, %v11527
        %v11594 = vadd.f32 %v11302, %v11530
        %v11595 = vperm.slane %v305, 2
        %v11596 = vperm.slane %v306, 2
        %v11597 = vperm.slane %v307, 2
        %v11598 = vperm.slane %v308, 2
        %v11599 = vmul.f32 %v217, %v11595
        %v11600 = vmul.f32 %v218, %v11596
        %v11601 = vmul.f32 %v219, %v11597
        %v11602 = vmul.f32 %v220, %v11598
        %v11603 = vmul.f32 %v221, %v11595
        %v11604 = vmul.f32 %v222, %v11596
        %v11605 = vmul.f32 %v223, %v11597
        %v11606 = vmul.f32 %v224, %v11598
        %v11607 = vmul.f32 %v225, %v11595
        %v11608 = vmul.f32 %v226, %v11596
        %v11609 = vmul.f32 %v227, %v11597
        %v11610 = vmul.f32 %v228, %v11598
        %v11611 = vmul.f32 %v229, %v11595
        %v11612 = vmul.f32 %v230, %v11596
        %v11613 = vmul.f32 %v231, %v11597
        %v11614 = vmul.f32 %v232, %v11598
        %v11615 = vmul.f32 %v233, %v11595
        %v11616 = vmul.f32 %v234, %v11596
        %v11617 = vmul.f32 %v235, %v11597
        %v11618 = vmul.f32 %v236, %v11598
        %v11619 = vmul.f32 %v237, %v11595
        %v11620 = vmul.f32 %v238, %v11596
        %v11621 = vmul.f32 %v239, %v11597
        %v11622 = vmul.f32 %v240, %v11598
        %v11623 = vmul.f32 %v241, %v11595
        %v11624 = vmul.f32 %v242, %v11596
        %v11625 = vmul.f32 %v243, %v11597
        %v11626 = vmul.f32 %v244, %v11598
        %v11627 = vmul.f32 %v245, %v11595
        %v11628 = vmul.f32 %v246, %v11596
        %v11629 = vmul.f32 %v247, %v11597
        %v11630 = vmul.f32 %v248, %v11598
        %v11631 = vmul.f32 %v249, %v11595
        %v11632 = vmul.f32 %v250, %v11596
        %v11633 = vmul.f32 %v251, %v11597
        %v11634 = vmul.f32 %v252, %v11598
        %v11635 = vmul.f32 %v253, %v11595
        %v11636 = vmul.f32 %v254, %v11596
        %v11637 = vmul.f32 %v255, %v11597
        %v11638 = vmul.f32 %v256, %v11598
        %v11639 = vmul.f32 %v257, %v11595
        %v11640 = vmul.f32 %v258, %v11596
        %v11641 = vmul.f32 %v259, %v11597
        %v11642 = vmul.f32 %v260, %v11598
        %v11643 = vmul.f32 %v261, %v11595
        %v11644 = vmul.f32 %v262, %v11596
        %v11645 = vmul.f32 %v263, %v11597
        %v11646 = vmul.f32 %v264, %v11598
        %v11647 = vmul.f32 %v265, %v11595
        %v11648 = vmul.f32 %v266, %v11596
        %v11649 = vmul.f32 %v267, %v11597
        %v11650 = vmul.f32 %v268, %v11598
        %v11651 = vmul.f32 %v269, %v11595
        %v11652 = vmul.f32 %v270, %v11596
        %v11653 = vmul.f32 %v271, %v11597
        %v11654 = vmul.f32 %v272, %v11598
        %v11655 = vmul.f32 %v273, %v11595
        %v11656 = vmul.f32 %v274, %v11596
        %v11657 = vmul.f32 %v275, %v11597
        %v11658 = vmul.f32 %v276, %v11598
        %v11659 = vmul.f32 %v277, %v11595
        %v11660 = vmul.f32 %v278, %v11596
        %v11661 = vmul.f32 %v279, %v11597
        %v11662 = vmul.f32 %v280, %v11598
        %v11727 = vrot.slane %v11599, 2
        %v11728 = vrot.slane %v11603, 2
        %v11729 = vsel %vm802, %v11727, %v11728
        %v11730 = vrot.slane %v11600, 2
        %v11731 = vrot.slane %v11604, 2
        %v11732 = vsel %vm802, %v11730, %v11731
        %v11733 = vrot.slane %v11601, 2
        %v11734 = vrot.slane %v11605, 2
        %v11735 = vsel %vm802, %v11733, %v11734
        %v11736 = vrot.slane %v11602, 2
        %v11737 = vrot.slane %v11606, 2
        %v11738 = vsel %vm802, %v11736, %v11737
        %v11739 = vrot.slane %v11607, 2
        %v11740 = vrot.slane %v11611, 2
        %v11741 = vsel %vm802, %v11739, %v11740
        %v11742 = vrot.slane %v11608, 2
        %v11743 = vrot.slane %v11612, 2
        %v11744 = vsel %vm802, %v11742, %v11743
        %v11745 = vrot.slane %v11609, 2
        %v11746 = vrot.slane %v11613, 2
        %v11747 = vsel %vm802, %v11745, %v11746
        %v11748 = vrot.slane %v11610, 2
        %v11749 = vrot.slane %v11614, 2
        %v11750 = vsel %vm802, %v11748, %v11749
        %v11751 = vrot.slane %v11615, 2
        %v11752 = vrot.slane %v11619, 2
        %v11753 = vsel %vm802, %v11751, %v11752
        %v11754 = vrot.slane %v11616, 2
        %v11755 = vrot.slane %v11620, 2
        %v11756 = vsel %vm802, %v11754, %v11755
        %v11757 = vrot.slane %v11617, 2
        %v11758 = vrot.slane %v11621, 2
        %v11759 = vsel %vm802, %v11757, %v11758
        %v11760 = vrot.slane %v11618, 2
        %v11761 = vrot.slane %v11622, 2
        %v11762 = vsel %vm802, %v11760, %v11761
        %v11763 = vrot.slane %v11623, 2
        %v11764 = vrot.slane %v11627, 2
        %v11765 = vsel %vm802, %v11763, %v11764
        %v11766 = vrot.slane %v11624, 2
        %v11767 = vrot.slane %v11628, 2
        %v11768 = vsel %vm802, %v11766, %v11767
        %v11769 = vrot.slane %v11625, 2
        %v11770 = vrot.slane %v11629, 2
        %v11771 = vsel %vm802, %v11769, %v11770
        %v11772 = vrot.slane %v11626, 2
        %v11773 = vrot.slane %v11630, 2
        %v11774 = vsel %vm802, %v11772, %v11773
        %v11775 = vrot.slane %v11631, 2
        %v11776 = vrot.slane %v11635, 2
        %v11777 = vsel %vm802, %v11775, %v11776
        %v11778 = vrot.slane %v11632, 2
        %v11779 = vrot.slane %v11636, 2
        %v11780 = vsel %vm802, %v11778, %v11779
        %v11781 = vrot.slane %v11633, 2
        %v11782 = vrot.slane %v11637, 2
        %v11783 = vsel %vm802, %v11781, %v11782
        %v11784 = vrot.slane %v11634, 2
        %v11785 = vrot.slane %v11638, 2
        %v11786 = vsel %vm802, %v11784, %v11785
        %v11787 = vrot.slane %v11639, 2
        %v11788 = vrot.slane %v11643, 2
        %v11789 = vsel %vm802, %v11787, %v11788
        %v11790 = vrot.slane %v11640, 2
        %v11791 = vrot.slane %v11644, 2
        %v11792 = vsel %vm802, %v11790, %v11791
        %v11793 = vrot.slane %v11641, 2
        %v11794 = vrot.slane %v11645, 2
        %v11795 = vsel %vm802, %v11793, %v11794
        %v11796 = vrot.slane %v11642, 2
        %v11797 = vrot.slane %v11646, 2
        %v11798 = vsel %vm802, %v11796, %v11797
        %v11799 = vrot.slane %v11647, 2
        %v11800 = vrot.slane %v11651, 2
        %v11801 = vsel %vm802, %v11799, %v11800
        %v11802 = vrot.slane %v11648, 2
        %v11803 = vrot.slane %v11652, 2
        %v11804 = vsel %vm802, %v11802, %v11803
        %v11805 = vrot.slane %v11649, 2
        %v11806 = vrot.slane %v11653, 2
        %v11807 = vsel %vm802, %v11805, %v11806
        %v11808 = vrot.slane %v11650, 2
        %v11809 = vrot.slane %v11654, 2
        %v11810 = vsel %vm802, %v11808, %v11809
        %v11811 = vrot.slane %v11655, 2
        %v11812 = vrot.slane %v11659, 2
        %v11813 = vsel %vm802, %v11811, %v11812
        %v11814 = vrot.slane %v11656, 2
        %v11815 = vrot.slane %v11660, 2
        %v11816 = vsel %vm802, %v11814, %v11815
        %v11817 = vrot.slane %v11657, 2
        %v11818 = vrot.slane %v11661, 2
        %v11819 = vsel %vm802, %v11817, %v11818
        %v11820 = vrot.slane %v11658, 2
        %v11821 = vrot.slane %v11662, 2
        %v11822 = vsel %vm802, %v11820, %v11821
        %v11855 = vadd.f32 %v11563, %v11729
        %v11856 = vadd.f32 %v11564, %v11732
        %v11857 = vadd.f32 %v11565, %v11735
        %v11858 = vadd.f32 %v11566, %v11738
        %v11859 = vadd.f32 %v11567, %v11741
        %v11860 = vadd.f32 %v11568, %v11744
        %v11861 = vadd.f32 %v11569, %v11747
        %v11862 = vadd.f32 %v11570, %v11750
        %v11863 = vadd.f32 %v11571, %v11753
        %v11864 = vadd.f32 %v11572, %v11756
        %v11865 = vadd.f32 %v11573, %v11759
        %v11866 = vadd.f32 %v11574, %v11762
        %v11867 = vadd.f32 %v11575, %v11765
        %v11868 = vadd.f32 %v11576, %v11768
        %v11869 = vadd.f32 %v11577, %v11771
        %v11870 = vadd.f32 %v11578, %v11774
        %v11871 = vadd.f32 %v11579, %v11777
        %v11872 = vadd.f32 %v11580, %v11780
        %v11873 = vadd.f32 %v11581, %v11783
        %v11874 = vadd.f32 %v11582, %v11786
        %v11875 = vadd.f32 %v11583, %v11789
        %v11876 = vadd.f32 %v11584, %v11792
        %v11877 = vadd.f32 %v11585, %v11795
        %v11878 = vadd.f32 %v11586, %v11798
        %v11879 = vadd.f32 %v11587, %v11801
        %v11880 = vadd.f32 %v11588, %v11804
        %v11881 = vadd.f32 %v11589, %v11807
        %v11882 = vadd.f32 %v11590, %v11810
        %v11883 = vadd.f32 %v11591, %v11813
        %v11884 = vadd.f32 %v11592, %v11816
        %v11885 = vadd.f32 %v11593, %v11819
        %v11886 = vadd.f32 %v11594, %v11822
        %v11887 = vperm.slane %v305, 3
        %v11888 = vperm.slane %v306, 3
        %v11889 = vperm.slane %v307, 3
        %v11890 = vperm.slane %v308, 3
        %v11891 = vmul.f32 %v217, %v11887
        %v11892 = vmul.f32 %v218, %v11888
        %v11893 = vmul.f32 %v219, %v11889
        %v11894 = vmul.f32 %v220, %v11890
        %v11895 = vmul.f32 %v221, %v11887
        %v11896 = vmul.f32 %v222, %v11888
        %v11897 = vmul.f32 %v223, %v11889
        %v11898 = vmul.f32 %v224, %v11890
        %v11899 = vmul.f32 %v225, %v11887
        %v11900 = vmul.f32 %v226, %v11888
        %v11901 = vmul.f32 %v227, %v11889
        %v11902 = vmul.f32 %v228, %v11890
        %v11903 = vmul.f32 %v229, %v11887
        %v11904 = vmul.f32 %v230, %v11888
        %v11905 = vmul.f32 %v231, %v11889
        %v11906 = vmul.f32 %v232, %v11890
        %v11907 = vmul.f32 %v233, %v11887
        %v11908 = vmul.f32 %v234, %v11888
        %v11909 = vmul.f32 %v235, %v11889
        %v11910 = vmul.f32 %v236, %v11890
        %v11911 = vmul.f32 %v237, %v11887
        %v11912 = vmul.f32 %v238, %v11888
        %v11913 = vmul.f32 %v239, %v11889
        %v11914 = vmul.f32 %v240, %v11890
        %v11915 = vmul.f32 %v241, %v11887
        %v11916 = vmul.f32 %v242, %v11888
        %v11917 = vmul.f32 %v243, %v11889
        %v11918 = vmul.f32 %v244, %v11890
        %v11919 = vmul.f32 %v245, %v11887
        %v11920 = vmul.f32 %v246, %v11888
        %v11921 = vmul.f32 %v247, %v11889
        %v11922 = vmul.f32 %v248, %v11890
        %v11923 = vmul.f32 %v249, %v11887
        %v11924 = vmul.f32 %v250, %v11888
        %v11925 = vmul.f32 %v251, %v11889
        %v11926 = vmul.f32 %v252, %v11890
        %v11927 = vmul.f32 %v253, %v11887
        %v11928 = vmul.f32 %v254, %v11888
        %v11929 = vmul.f32 %v255, %v11889
        %v11930 = vmul.f32 %v256, %v11890
        %v11931 = vmul.f32 %v257, %v11887
        %v11932 = vmul.f32 %v258, %v11888
        %v11933 = vmul.f32 %v259, %v11889
        %v11934 = vmul.f32 %v260, %v11890
        %v11935 = vmul.f32 %v261, %v11887
        %v11936 = vmul.f32 %v262, %v11888
        %v11937 = vmul.f32 %v263, %v11889
        %v11938 = vmul.f32 %v264, %v11890
        %v11939 = vmul.f32 %v265, %v11887
        %v11940 = vmul.f32 %v266, %v11888
        %v11941 = vmul.f32 %v267, %v11889
        %v11942 = vmul.f32 %v268, %v11890
        %v11943 = vmul.f32 %v269, %v11887
        %v11944 = vmul.f32 %v270, %v11888
        %v11945 = vmul.f32 %v271, %v11889
        %v11946 = vmul.f32 %v272, %v11890
        %v11947 = vmul.f32 %v273, %v11887
        %v11948 = vmul.f32 %v274, %v11888
        %v11949 = vmul.f32 %v275, %v11889
        %v11950 = vmul.f32 %v276, %v11890
        %v11951 = vmul.f32 %v277, %v11887
        %v11952 = vmul.f32 %v278, %v11888
        %v11953 = vmul.f32 %v279, %v11889
        %v11954 = vmul.f32 %v280, %v11890
        %v12019 = vrot.slane %v11891, 3
        %v12020 = vrot.slane %v11895, 3
        %v12021 = vsel %vm1095, %v12019, %v12020
        %v12022 = vrot.slane %v11892, 3
        %v12023 = vrot.slane %v11896, 3
        %v12024 = vsel %vm1095, %v12022, %v12023
        %v12025 = vrot.slane %v11893, 3
        %v12026 = vrot.slane %v11897, 3
        %v12027 = vsel %vm1095, %v12025, %v12026
        %v12028 = vrot.slane %v11894, 3
        %v12029 = vrot.slane %v11898, 3
        %v12030 = vsel %vm1095, %v12028, %v12029
        %v12031 = vrot.slane %v11899, 3
        %v12032 = vrot.slane %v11903, 3
        %v12033 = vsel %vm1095, %v12031, %v12032
        %v12034 = vrot.slane %v11900, 3
        %v12035 = vrot.slane %v11904, 3
        %v12036 = vsel %vm1095, %v12034, %v12035
        %v12037 = vrot.slane %v11901, 3
        %v12038 = vrot.slane %v11905, 3
        %v12039 = vsel %vm1095, %v12037, %v12038
        %v12040 = vrot.slane %v11902, 3
        %v12041 = vrot.slane %v11906, 3
        %v12042 = vsel %vm1095, %v12040, %v12041
        %v12043 = vrot.slane %v11907, 3
        %v12044 = vrot.slane %v11911, 3
        %v12045 = vsel %vm1095, %v12043, %v12044
        %v12046 = vrot.slane %v11908, 3
        %v12047 = vrot.slane %v11912, 3
        %v12048 = vsel %vm1095, %v12046, %v12047
        %v12049 = vrot.slane %v11909, 3
        %v12050 = vrot.slane %v11913, 3
        %v12051 = vsel %vm1095, %v12049, %v12050
        %v12052 = vrot.slane %v11910, 3
        %v12053 = vrot.slane %v11914, 3
        %v12054 = vsel %vm1095, %v12052, %v12053
        %v12055 = vrot.slane %v11915, 3
        %v12056 = vrot.slane %v11919, 3
        %v12057 = vsel %vm1095, %v12055, %v12056
        %v12058 = vrot.slane %v11916, 3
        %v12059 = vrot.slane %v11920, 3
        %v12060 = vsel %vm1095, %v12058, %v12059
        %v12061 = vrot.slane %v11917, 3
        %v12062 = vrot.slane %v11921, 3
        %v12063 = vsel %vm1095, %v12061, %v12062
        %v12064 = vrot.slane %v11918, 3
        %v12065 = vrot.slane %v11922, 3
        %v12066 = vsel %vm1095, %v12064, %v12065
        %v12067 = vrot.slane %v11923, 3
        %v12068 = vrot.slane %v11927, 3
        %v12069 = vsel %vm1095, %v12067, %v12068
        %v12070 = vrot.slane %v11924, 3
        %v12071 = vrot.slane %v11928, 3
        %v12072 = vsel %vm1095, %v12070, %v12071
        %v12073 = vrot.slane %v11925, 3
        %v12074 = vrot.slane %v11929, 3
        %v12075 = vsel %vm1095, %v12073, %v12074
        %v12076 = vrot.slane %v11926, 3
        %v12077 = vrot.slane %v11930, 3
        %v12078 = vsel %vm1095, %v12076, %v12077
        %v12079 = vrot.slane %v11931, 3
        %v12080 = vrot.slane %v11935, 3
        %v12081 = vsel %vm1095, %v12079, %v12080
        %v12082 = vrot.slane %v11932, 3
        %v12083 = vrot.slane %v11936, 3
        %v12084 = vsel %vm1095, %v12082, %v12083
        %v12085 = vrot.slane %v11933, 3
        %v12086 = vrot.slane %v11937, 3
        %v12087 = vsel %vm1095, %v12085, %v12086
        %v12088 = vrot.slane %v11934, 3
        %v12089 = vrot.slane %v11938, 3
        %v12090 = vsel %vm1095, %v12088, %v12089
        %v12091 = vrot.slane %v11939, 3
        %v12092 = vrot.slane %v11943, 3
        %v12093 = vsel %vm1095, %v12091, %v12092
        %v12094 = vrot.slane %v11940, 3
        %v12095 = vrot.slane %v11944, 3
        %v12096 = vsel %vm1095, %v12094, %v12095
        %v12097 = vrot.slane %v11941, 3
        %v12098 = vrot.slane %v11945, 3
        %v12099 = vsel %vm1095, %v12097, %v12098
        %v12100 = vrot.slane %v11942, 3
        %v12101 = vrot.slane %v11946, 3
        %v12102 = vsel %vm1095, %v12100, %v12101
        %v12103 = vrot.slane %v11947, 3
        %v12104 = vrot.slane %v11951, 3
        %v12105 = vsel %vm1095, %v12103, %v12104
        %v12106 = vrot.slane %v11948, 3
        %v12107 = vrot.slane %v11952, 3
        %v12108 = vsel %vm1095, %v12106, %v12107
        %v12109 = vrot.slane %v11949, 3
        %v12110 = vrot.slane %v11953, 3
        %v12111 = vsel %vm1095, %v12109, %v12110
        %v12112 = vrot.slane %v11950, 3
        %v12113 = vrot.slane %v11954, 3
        %v12114 = vsel %vm1095, %v12112, %v12113
        %v12147 = vadd.f32 %v11855, %v12021
        %v12148 = vadd.f32 %v11856, %v12024
        %v12149 = vadd.f32 %v11857, %v12027
        %v12150 = vadd.f32 %v11858, %v12030
        %v12151 = vadd.f32 %v11859, %v12033
        %v12152 = vadd.f32 %v11860, %v12036
        %v12153 = vadd.f32 %v11861, %v12039
        %v12154 = vadd.f32 %v11862, %v12042
        %v12155 = vadd.f32 %v11863, %v12045
        %v12156 = vadd.f32 %v11864, %v12048
        %v12157 = vadd.f32 %v11865, %v12051
        %v12158 = vadd.f32 %v11866, %v12054
        %v12159 = vadd.f32 %v11867, %v12057
        %v12160 = vadd.f32 %v11868, %v12060
        %v12161 = vadd.f32 %v11869, %v12063
        %v12162 = vadd.f32 %v11870, %v12066
        %v12163 = vadd.f32 %v11871, %v12069
        %v12164 = vadd.f32 %v11872, %v12072
        %v12165 = vadd.f32 %v11873, %v12075
        %v12166 = vadd.f32 %v11874, %v12078
        %v12167 = vadd.f32 %v11875, %v12081
        %v12168 = vadd.f32 %v11876, %v12084
        %v12169 = vadd.f32 %v11877, %v12087
        %v12170 = vadd.f32 %v11878, %v12090
        %v12171 = vadd.f32 %v11879, %v12093
        %v12172 = vadd.f32 %v11880, %v12096
        %v12173 = vadd.f32 %v11881, %v12099
        %v12174 = vadd.f32 %v11882, %v12102
        %v12175 = vadd.f32 %v11883, %v12105
        %v12176 = vadd.f32 %v11884, %v12108
        %v12177 = vadd.f32 %v11885, %v12111
        %v12178 = vadd.f32 %v11886, %v12114
        %v12179 = vperm.slane %v305, 4
        %v12180 = vperm.slane %v306, 4
        %v12181 = vperm.slane %v307, 4
        %v12182 = vperm.slane %v308, 4
        %v12183 = vmul.f32 %v217, %v12179
        %v12184 = vmul.f32 %v218, %v12180
        %v12185 = vmul.f32 %v219, %v12181
        %v12186 = vmul.f32 %v220, %v12182
        %v12187 = vmul.f32 %v221, %v12179
        %v12188 = vmul.f32 %v222, %v12180
        %v12189 = vmul.f32 %v223, %v12181
        %v12190 = vmul.f32 %v224, %v12182
        %v12191 = vmul.f32 %v225, %v12179
        %v12192 = vmul.f32 %v226, %v12180
        %v12193 = vmul.f32 %v227, %v12181
        %v12194 = vmul.f32 %v228, %v12182
        %v12195 = vmul.f32 %v229, %v12179
        %v12196 = vmul.f32 %v230, %v12180
        %v12197 = vmul.f32 %v231, %v12181
        %v12198 = vmul.f32 %v232, %v12182
        %v12199 = vmul.f32 %v233, %v12179
        %v12200 = vmul.f32 %v234, %v12180
        %v12201 = vmul.f32 %v235, %v12181
        %v12202 = vmul.f32 %v236, %v12182
        %v12203 = vmul.f32 %v237, %v12179
        %v12204 = vmul.f32 %v238, %v12180
        %v12205 = vmul.f32 %v239, %v12181
        %v12206 = vmul.f32 %v240, %v12182
        %v12207 = vmul.f32 %v241, %v12179
        %v12208 = vmul.f32 %v242, %v12180
        %v12209 = vmul.f32 %v243, %v12181
        %v12210 = vmul.f32 %v244, %v12182
        %v12211 = vmul.f32 %v245, %v12179
        %v12212 = vmul.f32 %v246, %v12180
        %v12213 = vmul.f32 %v247, %v12181
        %v12214 = vmul.f32 %v248, %v12182
        %v12215 = vmul.f32 %v249, %v12179
        %v12216 = vmul.f32 %v250, %v12180
        %v12217 = vmul.f32 %v251, %v12181
        %v12218 = vmul.f32 %v252, %v12182
        %v12219 = vmul.f32 %v253, %v12179
        %v12220 = vmul.f32 %v254, %v12180
        %v12221 = vmul.f32 %v255, %v12181
        %v12222 = vmul.f32 %v256, %v12182
        %v12223 = vmul.f32 %v257, %v12179
        %v12224 = vmul.f32 %v258, %v12180
        %v12225 = vmul.f32 %v259, %v12181
        %v12226 = vmul.f32 %v260, %v12182
        %v12227 = vmul.f32 %v261, %v12179
        %v12228 = vmul.f32 %v262, %v12180
        %v12229 = vmul.f32 %v263, %v12181
        %v12230 = vmul.f32 %v264, %v12182
        %v12231 = vmul.f32 %v265, %v12179
        %v12232 = vmul.f32 %v266, %v12180
        %v12233 = vmul.f32 %v267, %v12181
        %v12234 = vmul.f32 %v268, %v12182
        %v12235 = vmul.f32 %v269, %v12179
        %v12236 = vmul.f32 %v270, %v12180
        %v12237 = vmul.f32 %v271, %v12181
        %v12238 = vmul.f32 %v272, %v12182
        %v12239 = vmul.f32 %v273, %v12179
        %v12240 = vmul.f32 %v274, %v12180
        %v12241 = vmul.f32 %v275, %v12181
        %v12242 = vmul.f32 %v276, %v12182
        %v12243 = vmul.f32 %v277, %v12179
        %v12244 = vmul.f32 %v278, %v12180
        %v12245 = vmul.f32 %v279, %v12181
        %v12246 = vmul.f32 %v280, %v12182
        %v12311 = vrot.slane %v12183, 4
        %v12312 = vrot.slane %v12187, 4
        %v12313 = vsel %vm1388, %v12311, %v12312
        %v12314 = vrot.slane %v12184, 4
        %v12315 = vrot.slane %v12188, 4
        %v12316 = vsel %vm1388, %v12314, %v12315
        %v12317 = vrot.slane %v12185, 4
        %v12318 = vrot.slane %v12189, 4
        %v12319 = vsel %vm1388, %v12317, %v12318
        %v12320 = vrot.slane %v12186, 4
        %v12321 = vrot.slane %v12190, 4
        %v12322 = vsel %vm1388, %v12320, %v12321
        %v12323 = vrot.slane %v12191, 4
        %v12324 = vrot.slane %v12195, 4
        %v12325 = vsel %vm1388, %v12323, %v12324
        %v12326 = vrot.slane %v12192, 4
        %v12327 = vrot.slane %v12196, 4
        %v12328 = vsel %vm1388, %v12326, %v12327
        %v12329 = vrot.slane %v12193, 4
        %v12330 = vrot.slane %v12197, 4
        %v12331 = vsel %vm1388, %v12329, %v12330
        %v12332 = vrot.slane %v12194, 4
        %v12333 = vrot.slane %v12198, 4
        %v12334 = vsel %vm1388, %v12332, %v12333
        %v12335 = vrot.slane %v12199, 4
        %v12336 = vrot.slane %v12203, 4
        %v12337 = vsel %vm1388, %v12335, %v12336
        %v12338 = vrot.slane %v12200, 4
        %v12339 = vrot.slane %v12204, 4
        %v12340 = vsel %vm1388, %v12338, %v12339
        %v12341 = vrot.slane %v12201, 4
        %v12342 = vrot.slane %v12205, 4
        %v12343 = vsel %vm1388, %v12341, %v12342
        %v12344 = vrot.slane %v12202, 4
        %v12345 = vrot.slane %v12206, 4
        %v12346 = vsel %vm1388, %v12344, %v12345
        %v12347 = vrot.slane %v12207, 4
        %v12348 = vrot.slane %v12211, 4
        %v12349 = vsel %vm1388, %v12347, %v12348
        %v12350 = vrot.slane %v12208, 4
        %v12351 = vrot.slane %v12212, 4
        %v12352 = vsel %vm1388, %v12350, %v12351
        %v12353 = vrot.slane %v12209, 4
        %v12354 = vrot.slane %v12213, 4
        %v12355 = vsel %vm1388, %v12353, %v12354
        %v12356 = vrot.slane %v12210, 4
        %v12357 = vrot.slane %v12214, 4
        %v12358 = vsel %vm1388, %v12356, %v12357
        %v12359 = vrot.slane %v12215, 4
        %v12360 = vrot.slane %v12219, 4
        %v12361 = vsel %vm1388, %v12359, %v12360
        %v12362 = vrot.slane %v12216, 4
        %v12363 = vrot.slane %v12220, 4
        %v12364 = vsel %vm1388, %v12362, %v12363
        %v12365 = vrot.slane %v12217, 4
        %v12366 = vrot.slane %v12221, 4
        %v12367 = vsel %vm1388, %v12365, %v12366
        %v12368 = vrot.slane %v12218, 4
        %v12369 = vrot.slane %v12222, 4
        %v12370 = vsel %vm1388, %v12368, %v12369
        %v12371 = vrot.slane %v12223, 4
        %v12372 = vrot.slane %v12227, 4
        %v12373 = vsel %vm1388, %v12371, %v12372
        %v12374 = vrot.slane %v12224, 4
        %v12375 = vrot.slane %v12228, 4
        %v12376 = vsel %vm1388, %v12374, %v12375
        %v12377 = vrot.slane %v12225, 4
        %v12378 = vrot.slane %v12229, 4
        %v12379 = vsel %vm1388, %v12377, %v12378
        %v12380 = vrot.slane %v12226, 4
        %v12381 = vrot.slane %v12230, 4
        %v12382 = vsel %vm1388, %v12380, %v12381
        %v12383 = vrot.slane %v12231, 4
        %v12384 = vrot.slane %v12235, 4
        %v12385 = vsel %vm1388, %v12383, %v12384
        %v12386 = vrot.slane %v12232, 4
        %v12387 = vrot.slane %v12236, 4
        %v12388 = vsel %vm1388, %v12386, %v12387
        %v12389 = vrot.slane %v12233, 4
        %v12390 = vrot.slane %v12237, 4
        %v12391 = vsel %vm1388, %v12389, %v12390
        %v12392 = vrot.slane %v12234, 4
        %v12393 = vrot.slane %v12238, 4
        %v12394 = vsel %vm1388, %v12392, %v12393
        %v12395 = vrot.slane %v12239, 4
        %v12396 = vrot.slane %v12243, 4
        %v12397 = vsel %vm1388, %v12395, %v12396
        %v12398 = vrot.slane %v12240, 4
        %v12399 = vrot.slane %v12244, 4
        %v12400 = vsel %vm1388, %v12398, %v12399
        %v12401 = vrot.slane %v12241, 4
        %v12402 = vrot.slane %v12245, 4
        %v12403 = vsel %vm1388, %v12401, %v12402
        %v12404 = vrot.slane %v12242, 4
        %v12405 = vrot.slane %v12246, 4
        %v12406 = vsel %vm1388, %v12404, %v12405
        %v12439 = vadd.f32 %v12147, %v12313
        %v12440 = vadd.f32 %v12148, %v12316
        %v12441 = vadd.f32 %v12149, %v12319
        %v12442 = vadd.f32 %v12150, %v12322
        %v12443 = vadd.f32 %v12151, %v12325
        %v12444 = vadd.f32 %v12152, %v12328
        %v12445 = vadd.f32 %v12153, %v12331
        %v12446 = vadd.f32 %v12154, %v12334
        %v12447 = vadd.f32 %v12155, %v12337
        %v12448 = vadd.f32 %v12156, %v12340
        %v12449 = vadd.f32 %v12157, %v12343
        %v12450 = vadd.f32 %v12158, %v12346
        %v12451 = vadd.f32 %v12159, %v12349
        %v12452 = vadd.f32 %v12160, %v12352
        %v12453 = vadd.f32 %v12161, %v12355
        %v12454 = vadd.f32 %v12162, %v12358
        %v12455 = vadd.f32 %v12163, %v12361
        %v12456 = vadd.f32 %v12164, %v12364
        %v12457 = vadd.f32 %v12165, %v12367
        %v12458 = vadd.f32 %v12166, %v12370
        %v12459 = vadd.f32 %v12167, %v12373
        %v12460 = vadd.f32 %v12168, %v12376
        %v12461 = vadd.f32 %v12169, %v12379
        %v12462 = vadd.f32 %v12170, %v12382
        %v12463 = vadd.f32 %v12171, %v12385
        %v12464 = vadd.f32 %v12172, %v12388
        %v12465 = vadd.f32 %v12173, %v12391
        %v12466 = vadd.f32 %v12174, %v12394
        %v12467 = vadd.f32 %v12175, %v12397
        %v12468 = vadd.f32 %v12176, %v12400
        %v12469 = vadd.f32 %v12177, %v12403
        %v12470 = vadd.f32 %v12178, %v12406
        %v12471 = vperm.slane %v305, 5
        %v12472 = vperm.slane %v306, 5
        %v12473 = vperm.slane %v307, 5
        %v12474 = vperm.slane %v308, 5
        %v12475 = vmul.f32 %v217, %v12471
        %v12476 = vmul.f32 %v218, %v12472
        %v12477 = vmul.f32 %v219, %v12473
        %v12478 = vmul.f32 %v220, %v12474
        %v12479 = vmul.f32 %v221, %v12471
        %v12480 = vmul.f32 %v222, %v12472
        %v12481 = vmul.f32 %v223, %v12473
        %v12482 = vmul.f32 %v224, %v12474
        %v12483 = vmul.f32 %v225, %v12471
        %v12484 = vmul.f32 %v226, %v12472
        %v12485 = vmul.f32 %v227, %v12473
        %v12486 = vmul.f32 %v228, %v12474
        %v12487 = vmul.f32 %v229, %v12471
        %v12488 = vmul.f32 %v230, %v12472
        %v12489 = vmul.f32 %v231, %v12473
        %v12490 = vmul.f32 %v232, %v12474
        %v12491 = vmul.f32 %v233, %v12471
        %v12492 = vmul.f32 %v234, %v12472
        %v12493 = vmul.f32 %v235, %v12473
        %v12494 = vmul.f32 %v236, %v12474
        %v12495 = vmul.f32 %v237, %v12471
        %v12496 = vmul.f32 %v238, %v12472
        %v12497 = vmul.f32 %v239, %v12473
        %v12498 = vmul.f32 %v240, %v12474
        %v12499 = vmul.f32 %v241, %v12471
        %v12500 = vmul.f32 %v242, %v12472
        %v12501 = vmul.f32 %v243, %v12473
        %v12502 = vmul.f32 %v244, %v12474
        %v12503 = vmul.f32 %v245, %v12471
        %v12504 = vmul.f32 %v246, %v12472
        %v12505 = vmul.f32 %v247, %v12473
        %v12506 = vmul.f32 %v248, %v12474
        %v12507 = vmul.f32 %v249, %v12471
        %v12508 = vmul.f32 %v250, %v12472
        %v12509 = vmul.f32 %v251, %v12473
        %v12510 = vmul.f32 %v252, %v12474
        %v12511 = vmul.f32 %v253, %v12471
        %v12512 = vmul.f32 %v254, %v12472
        %v12513 = vmul.f32 %v255, %v12473
        %v12514 = vmul.f32 %v256, %v12474
        %v12515 = vmul.f32 %v257, %v12471
        %v12516 = vmul.f32 %v258, %v12472
        %v12517 = vmul.f32 %v259, %v12473
        %v12518 = vmul.f32 %v260, %v12474
        %v12519 = vmul.f32 %v261, %v12471
        %v12520 = vmul.f32 %v262, %v12472
        %v12521 = vmul.f32 %v263, %v12473
        %v12522 = vmul.f32 %v264, %v12474
        %v12523 = vmul.f32 %v265, %v12471
        %v12524 = vmul.f32 %v266, %v12472
        %v12525 = vmul.f32 %v267, %v12473
        %v12526 = vmul.f32 %v268, %v12474
        %v12527 = vmul.f32 %v269, %v12471
        %v12528 = vmul.f32 %v270, %v12472
        %v12529 = vmul.f32 %v271, %v12473
        %v12530 = vmul.f32 %v272, %v12474
        %v12531 = vmul.f32 %v273, %v12471
        %v12532 = vmul.f32 %v274, %v12472
        %v12533 = vmul.f32 %v275, %v12473
        %v12534 = vmul.f32 %v276, %v12474
        %v12535 = vmul.f32 %v277, %v12471
        %v12536 = vmul.f32 %v278, %v12472
        %v12537 = vmul.f32 %v279, %v12473
        %v12538 = vmul.f32 %v280, %v12474
        %v12603 = vrot.slane %v12475, 5
        %v12604 = vrot.slane %v12479, 5
        %v12605 = vsel %vm1681, %v12603, %v12604
        %v12606 = vrot.slane %v12476, 5
        %v12607 = vrot.slane %v12480, 5
        %v12608 = vsel %vm1681, %v12606, %v12607
        %v12609 = vrot.slane %v12477, 5
        %v12610 = vrot.slane %v12481, 5
        %v12611 = vsel %vm1681, %v12609, %v12610
        %v12612 = vrot.slane %v12478, 5
        %v12613 = vrot.slane %v12482, 5
        %v12614 = vsel %vm1681, %v12612, %v12613
        %v12615 = vrot.slane %v12483, 5
        %v12616 = vrot.slane %v12487, 5
        %v12617 = vsel %vm1681, %v12615, %v12616
        %v12618 = vrot.slane %v12484, 5
        %v12619 = vrot.slane %v12488, 5
        %v12620 = vsel %vm1681, %v12618, %v12619
        %v12621 = vrot.slane %v12485, 5
        %v12622 = vrot.slane %v12489, 5
        %v12623 = vsel %vm1681, %v12621, %v12622
        %v12624 = vrot.slane %v12486, 5
        %v12625 = vrot.slane %v12490, 5
        %v12626 = vsel %vm1681, %v12624, %v12625
        %v12627 = vrot.slane %v12491, 5
        %v12628 = vrot.slane %v12495, 5
        %v12629 = vsel %vm1681, %v12627, %v12628
        %v12630 = vrot.slane %v12492, 5
        %v12631 = vrot.slane %v12496, 5
        %v12632 = vsel %vm1681, %v12630, %v12631
        %v12633 = vrot.slane %v12493, 5
        %v12634 = vrot.slane %v12497, 5
        %v12635 = vsel %vm1681, %v12633, %v12634
        %v12636 = vrot.slane %v12494, 5
        %v12637 = vrot.slane %v12498, 5
        %v12638 = vsel %vm1681, %v12636, %v12637
        %v12639 = vrot.slane %v12499, 5
        %v12640 = vrot.slane %v12503, 5
        %v12641 = vsel %vm1681, %v12639, %v12640
        %v12642 = vrot.slane %v12500, 5
        %v12643 = vrot.slane %v12504, 5
        %v12644 = vsel %vm1681, %v12642, %v12643
        %v12645 = vrot.slane %v12501, 5
        %v12646 = vrot.slane %v12505, 5
        %v12647 = vsel %vm1681, %v12645, %v12646
        %v12648 = vrot.slane %v12502, 5
        %v12649 = vrot.slane %v12506, 5
        %v12650 = vsel %vm1681, %v12648, %v12649
        %v12651 = vrot.slane %v12507, 5
        %v12652 = vrot.slane %v12511, 5
        %v12653 = vsel %vm1681, %v12651, %v12652
        %v12654 = vrot.slane %v12508, 5
        %v12655 = vrot.slane %v12512, 5
        %v12656 = vsel %vm1681, %v12654, %v12655
        %v12657 = vrot.slane %v12509, 5
        %v12658 = vrot.slane %v12513, 5
        %v12659 = vsel %vm1681, %v12657, %v12658
        %v12660 = vrot.slane %v12510, 5
        %v12661 = vrot.slane %v12514, 5
        %v12662 = vsel %vm1681, %v12660, %v12661
        %v12663 = vrot.slane %v12515, 5
        %v12664 = vrot.slane %v12519, 5
        %v12665 = vsel %vm1681, %v12663, %v12664
        %v12666 = vrot.slane %v12516, 5
        %v12667 = vrot.slane %v12520, 5
        %v12668 = vsel %vm1681, %v12666, %v12667
        %v12669 = vrot.slane %v12517, 5
        %v12670 = vrot.slane %v12521, 5
        %v12671 = vsel %vm1681, %v12669, %v12670
        %v12672 = vrot.slane %v12518, 5
        %v12673 = vrot.slane %v12522, 5
        %v12674 = vsel %vm1681, %v12672, %v12673
        %v12675 = vrot.slane %v12523, 5
        %v12676 = vrot.slane %v12527, 5
        %v12677 = vsel %vm1681, %v12675, %v12676
        %v12678 = vrot.slane %v12524, 5
        %v12679 = vrot.slane %v12528, 5
        %v12680 = vsel %vm1681, %v12678, %v12679
        %v12681 = vrot.slane %v12525, 5
        %v12682 = vrot.slane %v12529, 5
        %v12683 = vsel %vm1681, %v12681, %v12682
        %v12684 = vrot.slane %v12526, 5
        %v12685 = vrot.slane %v12530, 5
        %v12686 = vsel %vm1681, %v12684, %v12685
        %v12687 = vrot.slane %v12531, 5
        %v12688 = vrot.slane %v12535, 5
        %v12689 = vsel %vm1681, %v12687, %v12688
        %v12690 = vrot.slane %v12532, 5
        %v12691 = vrot.slane %v12536, 5
        %v12692 = vsel %vm1681, %v12690, %v12691
        %v12693 = vrot.slane %v12533, 5
        %v12694 = vrot.slane %v12537, 5
        %v12695 = vsel %vm1681, %v12693, %v12694
        %v12696 = vrot.slane %v12534, 5
        %v12697 = vrot.slane %v12538, 5
        %v12698 = vsel %vm1681, %v12696, %v12697
        %v12731 = vadd.f32 %v12439, %v12605
        %v12732 = vadd.f32 %v12440, %v12608
        %v12733 = vadd.f32 %v12441, %v12611
        %v12734 = vadd.f32 %v12442, %v12614
        %v12735 = vadd.f32 %v12443, %v12617
        %v12736 = vadd.f32 %v12444, %v12620
        %v12737 = vadd.f32 %v12445, %v12623
        %v12738 = vadd.f32 %v12446, %v12626
        %v12739 = vadd.f32 %v12447, %v12629
        %v12740 = vadd.f32 %v12448, %v12632
        %v12741 = vadd.f32 %v12449, %v12635
        %v12742 = vadd.f32 %v12450, %v12638
        %v12743 = vadd.f32 %v12451, %v12641
        %v12744 = vadd.f32 %v12452, %v12644
        %v12745 = vadd.f32 %v12453, %v12647
        %v12746 = vadd.f32 %v12454, %v12650
        %v12747 = vadd.f32 %v12455, %v12653
        %v12748 = vadd.f32 %v12456, %v12656
        %v12749 = vadd.f32 %v12457, %v12659
        %v12750 = vadd.f32 %v12458, %v12662
        %v12751 = vadd.f32 %v12459, %v12665
        %v12752 = vadd.f32 %v12460, %v12668
        %v12753 = vadd.f32 %v12461, %v12671
        %v12754 = vadd.f32 %v12462, %v12674
        %v12755 = vadd.f32 %v12463, %v12677
        %v12756 = vadd.f32 %v12464, %v12680
        %v12757 = vadd.f32 %v12465, %v12683
        %v12758 = vadd.f32 %v12466, %v12686
        %v12759 = vadd.f32 %v12467, %v12689
        %v12760 = vadd.f32 %v12468, %v12692
        %v12761 = vadd.f32 %v12469, %v12695
        %v12762 = vadd.f32 %v12470, %v12698
        %v12763 = vperm.slane %v305, 6
        %v12764 = vperm.slane %v306, 6
        %v12765 = vperm.slane %v307, 6
        %v12766 = vperm.slane %v308, 6
        %v12767 = vmul.f32 %v217, %v12763
        %v12768 = vmul.f32 %v218, %v12764
        %v12769 = vmul.f32 %v219, %v12765
        %v12770 = vmul.f32 %v220, %v12766
        %v12771 = vmul.f32 %v221, %v12763
        %v12772 = vmul.f32 %v222, %v12764
        %v12773 = vmul.f32 %v223, %v12765
        %v12774 = vmul.f32 %v224, %v12766
        %v12775 = vmul.f32 %v225, %v12763
        %v12776 = vmul.f32 %v226, %v12764
        %v12777 = vmul.f32 %v227, %v12765
        %v12778 = vmul.f32 %v228, %v12766
        %v12779 = vmul.f32 %v229, %v12763
        %v12780 = vmul.f32 %v230, %v12764
        %v12781 = vmul.f32 %v231, %v12765
        %v12782 = vmul.f32 %v232, %v12766
        %v12783 = vmul.f32 %v233, %v12763
        %v12784 = vmul.f32 %v234, %v12764
        %v12785 = vmul.f32 %v235, %v12765
        %v12786 = vmul.f32 %v236, %v12766
        %v12787 = vmul.f32 %v237, %v12763
        %v12788 = vmul.f32 %v238, %v12764
        %v12789 = vmul.f32 %v239, %v12765
        %v12790 = vmul.f32 %v240, %v12766
        %v12791 = vmul.f32 %v241, %v12763
        %v12792 = vmul.f32 %v242, %v12764
        %v12793 = vmul.f32 %v243, %v12765
        %v12794 = vmul.f32 %v244, %v12766
        %v12795 = vmul.f32 %v245, %v12763
        %v12796 = vmul.f32 %v246, %v12764
        %v12797 = vmul.f32 %v247, %v12765
        %v12798 = vmul.f32 %v248, %v12766
        %v12799 = vmul.f32 %v249, %v12763
        %v12800 = vmul.f32 %v250, %v12764
        %v12801 = vmul.f32 %v251, %v12765
        %v12802 = vmul.f32 %v252, %v12766
        %v12803 = vmul.f32 %v253, %v12763
        %v12804 = vmul.f32 %v254, %v12764
        %v12805 = vmul.f32 %v255, %v12765
        %v12806 = vmul.f32 %v256, %v12766
        %v12807 = vmul.f32 %v257, %v12763
        %v12808 = vmul.f32 %v258, %v12764
        %v12809 = vmul.f32 %v259, %v12765
        %v12810 = vmul.f32 %v260, %v12766
        %v12811 = vmul.f32 %v261, %v12763
        %v12812 = vmul.f32 %v262, %v12764
        %v12813 = vmul.f32 %v263, %v12765
        %v12814 = vmul.f32 %v264, %v12766
        %v12815 = vmul.f32 %v265, %v12763
        %v12816 = vmul.f32 %v266, %v12764
        %v12817 = vmul.f32 %v267, %v12765
        %v12818 = vmul.f32 %v268, %v12766
        %v12819 = vmul.f32 %v269, %v12763
        %v12820 = vmul.f32 %v270, %v12764
        %v12821 = vmul.f32 %v271, %v12765
        %v12822 = vmul.f32 %v272, %v12766
        %v12823 = vmul.f32 %v273, %v12763
        %v12824 = vmul.f32 %v274, %v12764
        %v12825 = vmul.f32 %v275, %v12765
        %v12826 = vmul.f32 %v276, %v12766
        %v12827 = vmul.f32 %v277, %v12763
        %v12828 = vmul.f32 %v278, %v12764
        %v12829 = vmul.f32 %v279, %v12765
        %v12830 = vmul.f32 %v280, %v12766
        %v12895 = vrot.slane %v12767, 6
        %v12896 = vrot.slane %v12771, 6
        %v12897 = vsel %vm1974, %v12895, %v12896
        %v12898 = vrot.slane %v12768, 6
        %v12899 = vrot.slane %v12772, 6
        %v12900 = vsel %vm1974, %v12898, %v12899
        %v12901 = vrot.slane %v12769, 6
        %v12902 = vrot.slane %v12773, 6
        %v12903 = vsel %vm1974, %v12901, %v12902
        %v12904 = vrot.slane %v12770, 6
        %v12905 = vrot.slane %v12774, 6
        %v12906 = vsel %vm1974, %v12904, %v12905
        %v12907 = vrot.slane %v12775, 6
        %v12908 = vrot.slane %v12779, 6
        %v12909 = vsel %vm1974, %v12907, %v12908
        %v12910 = vrot.slane %v12776, 6
        %v12911 = vrot.slane %v12780, 6
        %v12912 = vsel %vm1974, %v12910, %v12911
        %v12913 = vrot.slane %v12777, 6
        %v12914 = vrot.slane %v12781, 6
        %v12915 = vsel %vm1974, %v12913, %v12914
        %v12916 = vrot.slane %v12778, 6
        %v12917 = vrot.slane %v12782, 6
        %v12918 = vsel %vm1974, %v12916, %v12917
        %v12919 = vrot.slane %v12783, 6
        %v12920 = vrot.slane %v12787, 6
        %v12921 = vsel %vm1974, %v12919, %v12920
        %v12922 = vrot.slane %v12784, 6
        %v12923 = vrot.slane %v12788, 6
        %v12924 = vsel %vm1974, %v12922, %v12923
        %v12925 = vrot.slane %v12785, 6
        %v12926 = vrot.slane %v12789, 6
        %v12927 = vsel %vm1974, %v12925, %v12926
        %v12928 = vrot.slane %v12786, 6
        %v12929 = vrot.slane %v12790, 6
        %v12930 = vsel %vm1974, %v12928, %v12929
        %v12931 = vrot.slane %v12791, 6
        %v12932 = vrot.slane %v12795, 6
        %v12933 = vsel %vm1974, %v12931, %v12932
        %v12934 = vrot.slane %v12792, 6
        %v12935 = vrot.slane %v12796, 6
        %v12936 = vsel %vm1974, %v12934, %v12935
        %v12937 = vrot.slane %v12793, 6
        %v12938 = vrot.slane %v12797, 6
        %v12939 = vsel %vm1974, %v12937, %v12938
        %v12940 = vrot.slane %v12794, 6
        %v12941 = vrot.slane %v12798, 6
        %v12942 = vsel %vm1974, %v12940, %v12941
        %v12943 = vrot.slane %v12799, 6
        %v12944 = vrot.slane %v12803, 6
        %v12945 = vsel %vm1974, %v12943, %v12944
        %v12946 = vrot.slane %v12800, 6
        %v12947 = vrot.slane %v12804, 6
        %v12948 = vsel %vm1974, %v12946, %v12947
        %v12949 = vrot.slane %v12801, 6
        %v12950 = vrot.slane %v12805, 6
        %v12951 = vsel %vm1974, %v12949, %v12950
        %v12952 = vrot.slane %v12802, 6
        %v12953 = vrot.slane %v12806, 6
        %v12954 = vsel %vm1974, %v12952, %v12953
        %v12955 = vrot.slane %v12807, 6
        %v12956 = vrot.slane %v12811, 6
        %v12957 = vsel %vm1974, %v12955, %v12956
        %v12958 = vrot.slane %v12808, 6
        %v12959 = vrot.slane %v12812, 6
        %v12960 = vsel %vm1974, %v12958, %v12959
        %v12961 = vrot.slane %v12809, 6
        %v12962 = vrot.slane %v12813, 6
        %v12963 = vsel %vm1974, %v12961, %v12962
        %v12964 = vrot.slane %v12810, 6
        %v12965 = vrot.slane %v12814, 6
        %v12966 = vsel %vm1974, %v12964, %v12965
        %v12967 = vrot.slane %v12815, 6
        %v12968 = vrot.slane %v12819, 6
        %v12969 = vsel %vm1974, %v12967, %v12968
        %v12970 = vrot.slane %v12816, 6
        %v12971 = vrot.slane %v12820, 6
        %v12972 = vsel %vm1974, %v12970, %v12971
        %v12973 = vrot.slane %v12817, 6
        %v12974 = vrot.slane %v12821, 6
        %v12975 = vsel %vm1974, %v12973, %v12974
        %v12976 = vrot.slane %v12818, 6
        %v12977 = vrot.slane %v12822, 6
        %v12978 = vsel %vm1974, %v12976, %v12977
        %v12979 = vrot.slane %v12823, 6
        %v12980 = vrot.slane %v12827, 6
        %v12981 = vsel %vm1974, %v12979, %v12980
        %v12982 = vrot.slane %v12824, 6
        %v12983 = vrot.slane %v12828, 6
        %v12984 = vsel %vm1974, %v12982, %v12983
        %v12985 = vrot.slane %v12825, 6
        %v12986 = vrot.slane %v12829, 6
        %v12987 = vsel %vm1974, %v12985, %v12986
        %v12988 = vrot.slane %v12826, 6
        %v12989 = vrot.slane %v12830, 6
        %v12990 = vsel %vm1974, %v12988, %v12989
        %v13023 = vadd.f32 %v12731, %v12897
        %v13024 = vadd.f32 %v12732, %v12900
        %v13025 = vadd.f32 %v12733, %v12903
        %v13026 = vadd.f32 %v12734, %v12906
        %v13027 = vadd.f32 %v12735, %v12909
        %v13028 = vadd.f32 %v12736, %v12912
        %v13029 = vadd.f32 %v12737, %v12915
        %v13030 = vadd.f32 %v12738, %v12918
        %v13031 = vadd.f32 %v12739, %v12921
        %v13032 = vadd.f32 %v12740, %v12924
        %v13033 = vadd.f32 %v12741, %v12927
        %v13034 = vadd.f32 %v12742, %v12930
        %v13035 = vadd.f32 %v12743, %v12933
        %v13036 = vadd.f32 %v12744, %v12936
        %v13037 = vadd.f32 %v12745, %v12939
        %v13038 = vadd.f32 %v12746, %v12942
        %v13039 = vadd.f32 %v12747, %v12945
        %v13040 = vadd.f32 %v12748, %v12948
        %v13041 = vadd.f32 %v12749, %v12951
        %v13042 = vadd.f32 %v12750, %v12954
        %v13043 = vadd.f32 %v12751, %v12957
        %v13044 = vadd.f32 %v12752, %v12960
        %v13045 = vadd.f32 %v12753, %v12963
        %v13046 = vadd.f32 %v12754, %v12966
        %v13047 = vadd.f32 %v12755, %v12969
        %v13048 = vadd.f32 %v12756, %v12972
        %v13049 = vadd.f32 %v12757, %v12975
        %v13050 = vadd.f32 %v12758, %v12978
        %v13051 = vadd.f32 %v12759, %v12981
        %v13052 = vadd.f32 %v12760, %v12984
        %v13053 = vadd.f32 %v12761, %v12987
        %v13054 = vadd.f32 %v12762, %v12990
        %v13055 = vld [vmem:[%s2] sm:$0xf]
        %v13057 = vperm.slane %v13055, 0
        %v13058 = vperm.slane %v13055, 1
        %v13059 = vperm.slane %v13055, 2
        %v13060 = vperm.slane %v13055, 3
        %v13065 = vadd.f32 %v13023, %v13057
        %v13066 = vadd.f32 %v13024, %v13058
        %v13067 = vadd.f32 %v13025, %v13059
        %v13068 = vadd.f32 %v13026, %v13060
        %v13069 = vadd.f32 %v13027, %v13057
        %v13070 = vadd.f32 %v13028, %v13058
        %v13071 = vadd.f32 %v13029, %v13059
        %v13072 = vadd.f32 %v13030, %v13060
        %v13073 = vadd.f32 %v13031, %v13057
        %v13074 = vadd.f32 %v13032, %v13058
        %v13075 = vadd.f32 %v13033, %v13059
        %v13076 = vadd.f32 %v13034, %v13060
        %v13077 = vadd.f32 %v13035, %v13057
        %v13078 = vadd.f32 %v13036, %v13058
        %v13079 = vadd.f32 %v13037, %v13059
        %v13080 = vadd.f32 %v13038, %v13060
        %v13081 = vadd.f32 %v13039, %v13057
        %v13082 = vadd.f32 %v13040, %v13058
        %v13083 = vadd.f32 %v13041, %v13059
        %v13084 = vadd.f32 %v13042, %v13060
        %v13085 = vadd.f32 %v13043, %v13057
        %v13086 = vadd.f32 %v13044, %v13058
        %v13087 = vadd.f32 %v13045, %v13059
        %v13088 = vadd.f32 %v13046, %v13060
        %v13089 = vadd.f32 %v13047, %v13057
        %v13090 = vadd.f32 %v13048, %v13058
        %v13091 = vadd.f32 %v13049, %v13059
        %v13092 = vadd.f32 %v13050, %v13060
        %v13093 = vadd.f32 %v13051, %v13057
        %v13094 = vadd.f32 %v13052, %v13058
        %v13095 = vadd.f32 %v13053, %v13059
        %v13096 = vadd.f32 %v13054, %v13060
        %13097 = vst [vmem:[%s163] sm:$0xff] %v13065
        %13098 = vst [vmem:[%s163 + $0x8] sm:$0xff] %v13066
        %13099 = vst [vmem:[%s163 + $0x10] sm:$0xff] %v13067
        %13100 = vst [vmem:[%s163 + $0x18] sm:$0xff] %v13068
        %13101 = vst [vmem:[%s163 + $0x20] sm:$0xff] %v13069
        %13102 = vst [vmem:[%s163 + $0x28] sm:$0xff] %v13070
        %13103 = vst [vmem:[%s163 + $0x30] sm:$0xff] %v13071
        %13104 = vst [vmem:[%s163 + $0x38] sm:$0xff] %v13072
        %13105 = vst [vmem:[%s163 + $0x40] sm:$0xff] %v13073
        %13106 = vst [vmem:[%s163 + $0x48] sm:$0xff] %v13074
        %13107 = vst [vmem:[%s163 + $0x50] sm:$0xff] %v13075
        %13108 = vst [vmem:[%s163 + $0x58] sm:$0xff] %v13076
        %13109 = vst [vmem:[%s163 + $0x60] sm:$0xff] %v13077
        %13110 = vst [vmem:[%s163 + $0x68] sm:$0xff] %v13078
        %13111 = vst [vmem:[%s163 + $0x70] sm:$0xff] %v13079
        %13112 = vst [vmem:[%s163 + $0x78] sm:$0xff] %v13080
        %13113 = vst [vmem:[%s163 + $0x80] sm:$0xff] %v13081
        %13114 = vst [vmem:[%s163 + $0x88] sm:$0xff] %v13082
        %13115 = vst [vmem:[%s163 + $0x90] sm:$0xff] %v13083
        %13116 = vst [vmem:[%s163 + $0x98] sm:$0xff] %v13084
        %13117 = vst [vmem:[%s163 + $0xa0] sm:$0xff] %v13085
        %13118 = vst [vmem:[%s163 + $0xa8] sm:$0xff] %v13086
        %13119 = vst [vmem:[%s163 + $0xb0] sm:$0xff] %v13087
        %13120 = vst [vmem:[%s163 + $0xb8] sm:$0xff] %v13088
        %13121 = vst [vmem:[%s163 + $0xc0] sm:$0xff] %v13089
        %13122 = vst [vmem:[%s163 + $0xc8] sm:$0xff] %v13090
        %13123 = vst [vmem:[%s163 + $0xd0] sm:$0xff] %v13091
        %13124 = vst [vmem:[%s163 + $0xd8] sm:$0xff] %v13092
        %13125 = vst [vmem:[%s163 + $0xe0] sm:$0xff] %v13093
        %13126 = vst [vmem:[%s163 + $0xe8] sm:$0xff] %v13094
        %13127 = vst [vmem:[%s163 + $0xf0] sm:$0xff] %v13095
        %13128 = vst [vmem:[%s163 + $0xf8] sm:$0xff] %v13096
        %s13129 = sand.u32 %s93, 1
        %s13130 = scalar_lea.sflag [#allocation3], %s13129
        %s13131 = sand.u32 %s93, 1
        %s13132 = smul.addr %s13131, 256
        %s13133 = scalar_lea.vmem [#allocation2], %s13132
        // Predicated region
        $region33: #{tpu_custom_call.1} parent=31 // pred_check
          %p13134 = pneg %p103
        $region34: #{tpu_custom_call.1} parent=31 // pred_check_branch
          %13136 = sbr.rel (%p13134) target = $region36
        $region35: #{tpu_custom_call.1} parent=31 // pred_region
          %13138 = vsyncadd %s13130, 0
          %s13139 = smul.addr %s17, 32
          %s13140 = smul.addr %s13139, 8
          %s13141 = scalar_lea.hbm %s3, %s13140
          %s13142 = sshll.u32 %s13133, 4
          %s13143 = int_to_ptr.vmem [resolvable:$true] %s13142
          %s13144 = sshll.u32 %s13141, 4
          %s13145 = int_to_ptr.hbm [resolvable:$true] %s13144
          %13150 = dma.vmem_to_hbm [thread:$0]  %s13143, 4096, %s13145, %s13130, 512, 512, 32
        $region36: #{tpu_custom_call.1} parent=31 // pred_fallthru
          _
      $region32: #{tpu_custom_call.1} parent=5 // pred_fallthru
        _
      %p13151 = scmp.le.s32.totalorder 2, %s12
      // Predicated region
      $region37: #{tpu_custom_call.1} parent=5 // pred_check
        %p13152 = pneg %p13151
      $region38: #{tpu_custom_call.1} parent=5 // pred_check_branch
        %13154 = sbr.rel (%p13152) target = $region40
      $region39: #{tpu_custom_call.1} parent=5 // pred_region
        %s13155 = ssub.s32 %s12, 2
        // Predicated region
        $region41: #{tpu_custom_call.1} parent=39 // pred_check
          %p13156 = pneg %p109
        $region42: #{tpu_custom_call.1} parent=39 // pred_check_branch
          %13158 = sbr.rel (%p13156) target = $region44
        $region43: #{tpu_custom_call.1} parent=39 // pred_region
          %s13159 = sand.u32 %s94, 1
          %s13160 = scalar_lea.sflag [#allocation3], %s13159
          %s13161 = sand.u32 %s94, 1
          %s13162 = smul.addr %s13161, 256
          %s13163 = scalar_lea.vmem [#allocation2], %s13162
          %13165 = dma.done %s13160, 4096
        $region44: #{tpu_custom_call.1} parent=39 // pred_fallthru
          _
      $region40: #{tpu_custom_call.1} parent=5 // pred_fallthru
        _
    $region6: #{tpu_custom_call.1} parent=1 // loop_footer
      %s16 = sadd.s32 1, %s12
    $region7: #{tpu_custom_call.1} parent=1 // loop_footer_branch
      %11 = sbr.rel target = $region3
    $region8: #{tpu_custom_call.1} parent=1 // loop_exit
      _
    %13166 = vsyncpa [#allocation3], 1
    %s13167 = scalar_lea.sflag [#allocation3], 1
    %13168 = vsyncpa %s13167, 1

</llo_original>
